<compile_context>
chip_gen: v5e
topology: v5e:2x2
jax: 0.10.0
libtpu: 0.0.40
codegen_flags: <defaults>
</compile_context>

<pallas_src>
import jax
import jax.numpy as jnp
from jax.experimental import pallas as pl
from jax.experimental.pallas import tpu as pltpu


# ----------------------------------------------------------------------------
# Fused encoder kernel:  conv(8x8/4)+relu -> conv(4x4/2)+relu -> conv(3x3/1)
# +relu -> linear+relu, one batch element per grid step.
# ----------------------------------------------------------------------------
def _enc_kernel_factory(C, H, W, hidden):
    qh, qw = H // 4, W // 4
    ho1, wo1 = (H - 8) // 4 + 1, (W - 8) // 4 + 1
    ho2, wo2 = (ho1 - 4) // 2 + 1, (wo1 - 4) // 2 + 1
    ho3, wo3 = ho2 - 2, wo2 - 2
    K1, K2, K3 = 8 * 8 * C, 4 * 4 * 32, 3 * 3 * 64
    bf16, f32 = jnp.bfloat16, jnp.float32

    def kernel(x_ref, w1_ref, b1_ref, w2_ref, b2_ref, w3_ref, b3_ref,
               wf_ref, bf_ref, o_ref, a1, o1, a2, o2, a3, o3):
        # ----- conv1: 8x8 stride 4, Cin=C -> 32 ------------------------------
        # x_ref is stride-blocked NHWC: x_ref[0, q, r, p, d*C+c] = x[4q+r, 4p+d, c]
        # A1[i, j, (kh*8+kw)*C + c] = x[4i+kh, 4j+kw, c]
        for kh in range(8):
            a_, r_ = kh // 4, kh % 4
            for b_ in range(2):                       # kw = 4*b_ + d
                col = kh * (8 * C) + b_ * (4 * C)
                a1[:, :, col:col + 4 * C] = x_ref[0, a_:a_ + ho1, r_,
                                                  b_:b_ + wo1, :]
        w1 = w1_ref[...]                              # (K1, 32) bf16, /255 folded
        bias1 = b1_ref[...]                           # (1, 32) f32
        for i in range(ho1):                          # (wo1, K1) @ (K1, 32)
            acc = jnp.dot(a1[i].astype(bf16), w1, preferred_element_type=f32)
            o1[i] = jnp.maximum(acc + bias1, 0.0)     # o1[h, w, c]

        # ----- conv2: 4x4 stride 2, 32 -> 64 ---------------------------------
        # A2 rows ordered [j2 (leading), i2 (sublane)]; cols (kh, kw, c).
        # Stride-2 gather done as (1, 32) ref->ref copies (all static/contiguous).
        for kh in range(4):
            for kw in range(4):
                col = (kh * 4 + kw) * 32
                for i in range(ho2):
                    for j in range(wo2):
                        a2[j, i:i + 1, col:col + 32] = \
                            o1[2 * i + kh, 2 * j + kw:2 * j + kw + 1, :]
        w2 = w2_ref[...]                              # (K2, 64) bf16
        bias2 = b2_ref[...]                           # (1, 64) f32
        for j in range(wo2):                          # (ho2, K2) @ (K2, 64)
            acc = jnp.dot(a2[j].astype(bf16), w2, preferred_element_type=f32)
            o2[j] = jnp.maximum(acc + bias2, 0.0)     # o2[w, h, c]

        # ----- conv3: 3x3 stride 1, 64 -> 32 ---------------------------------
        # A3 rows ordered [j3 (leading), i3 (sublane)]; cols (kh, kw, c).
        for kh in range(3):
            for kw in range(3):
                col = (kh * 3 + kw) * 64
                a3[:, :, col:col + 64] = o2[kw:kw + wo3, kh:kh + ho3, :]
        w3 = w3_ref[...]                              # (K3, 32) bf16
        bias3 = b3_ref[...]                           # (1, 32) f32
        for j in range(wo3):                          # (ho3, K3) @ (K3, 32)
            acc = jnp.dot(a3[j].astype(bf16), w3, preferred_element_type=f32)
            o3[j] = jnp.maximum(acc + bias3, 0.0)     # o3[w, h, c]

        # ----- fc: PyTorch NCHW flatten order is absorbed into wf's layout ---
        acc = bf_ref[...]                             # (1, hidden) f32
        for j3 in range(wo3):
            for i3 in range(ho3):
                vec = o3[j3, i3:i3 + 1, :].astype(bf16)        # (1, 32)
                acc = acc + jnp.dot(vec, wf_ref[j3, i3],
                                    preferred_element_type=f32)
        o_ref[0] = jnp.maximum(acc, 0.0)

    dims = (qh, qw, ho1, wo1, ho2, wo2, ho3, wo3, K1, K2, K3)
    return kernel, dims


def deepmind_enc_forward(params, x_nchw):
    B, C, H, W = x_nchw.shape
    assert H % 4 == 0 and W % 4 == 0, "spatial dims must be multiples of 4"
    hidden = params["bf"].shape[0]
    kernel, dims = _enc_kernel_factory(C, H, W, hidden)
    qh, qw, ho1, wo1, ho2, wo2, ho3, wo3, K1, K2, K3 = dims
    bf16 = jnp.bfloat16

    # Input: NCHW -> NHWC -> stride-blocked (B, H/4, 4, W/4, 4*C).
    xb = jnp.transpose(x_nchw, (0, 2, 3, 1)).reshape(B, qh, 4, qw, 4 * C)

    # Weights: HWIO -> (K, N) GEMM form; fold 1/255 into conv1; bf16 for MXU.
    w1 = (params["w1"].reshape(K1, 32) * (1.0 / 255.0)).astype(bf16)
    w2 = params["w2"].reshape(K2, 64).astype(bf16)
    w3 = params["w3"].reshape(K3, 32).astype(bf16)
    # fc rows are in PyTorch (c, h, w) flatten order; regroup to [w, h, c, N]
    # to match the kernel's (w, h, c) conv3 output layout.
    wf = jnp.transpose(params["wf"].reshape(32, ho3, wo3, hidden),
                       (2, 1, 0, 3)).astype(bf16)
    b1 = params["b1"].reshape(1, 32).astype(jnp.float32)
    b2 = params["b2"].reshape(1, 64).astype(jnp.float32)
    b3 = params["b3"].reshape(1, 32).astype(jnp.float32)
    bfc = params["bf"].reshape(1, hidden).astype(jnp.float32)

    def _const_spec(shape):
        zeros = (0,) * len(shape)
        return pl.BlockSpec(shape, lambda b, zeros=zeros: zeros)

    out = pl.pallas_call(
        kernel,
        out_shape=jax.ShapeDtypeStruct((B, 1, hidden), jnp.float32),
        grid=(B,),
        in_specs=[
            pl.BlockSpec((1, qh, 4, qw, 4 * C), lambda b: (b, 0, 0, 0, 0)),
            _const_spec((K1, 32)), _const_spec((1, 32)),
            _const_spec((K2, 64)), _const_spec((1, 64)),
            _const_spec((K3, 32)), _const_spec((1, 32)),
            _const_spec((wo3, ho3, 32, hidden)), _const_spec((1, hidden)),
        ],
        out_specs=pl.BlockSpec((1, 1, hidden), lambda b: (b, 0, 0)),
        scratch_shapes=[
            pltpu.VMEM((ho1, wo1, K1), jnp.float32),   # A1 (conv1 im2col)
            pltpu.VMEM((ho1, wo1, 32), jnp.float32),   # conv1 out  [h, w, c]
            pltpu.VMEM((wo2, ho2, K2), jnp.float32),   # A2
            pltpu.VMEM((wo2, ho2, 64), jnp.float32),   # conv2 out  [w, h, c]
            pltpu.VMEM((wo3, ho3, K3), jnp.float32),   # A3
            pltpu.VMEM((wo3, ho3, 32), jnp.float32),   # conv3 out  [w, h, c]
        ],
        compiler_params=pltpu.CompilerParams(
            dimension_semantics=("parallel",),
            vmem_limit_bytes=32 * 1024 * 1024),
    )(xb, w1, b1, w2, b2, w3, b3, wf, bfc)
    return out.reshape(B, hidden)


# ----------------------------------------------------------------------------
# Params + pure-JAX reference (for a correctness sanity check)
# ----------------------------------------------------------------------------
def init_params(key, in_channels, flat_dim, hidden_dim):
    ks = jax.random.split(key, 8)

    def _w(k, shape):
        fan_in = 1
        for d in shape[:-1]:
            fan_in *= d
        return jax.random.normal(k, shape, jnp.float32) / jnp.sqrt(float(fan_in))

    return {
        "w1": _w(ks[0], (8, 8, in_channels, 32)),
        "b1": 0.01 * jax.random.normal(ks[1], (32,), jnp.float32),
        "w2": _w(ks[2], (4, 4, 32, 64)),
        "b2": 0.01 * jax.random.normal(ks[3], (64,), jnp.float32),
        "w3": _w(ks[4], (3, 3, 64, 32)),
        "b3": 0.01 * jax.random.normal(ks[5], (32,), jnp.float32),
        "wf": _w(ks[6], (flat_dim, hidden_dim)),
        "bf": 0.01 * jax.random.normal(ks[7], (hidden_dim,), jnp.float32),
    }


def reference_forward(params, x_nchw):
    x = jnp.transpose(x_nchw, (0, 2, 3, 1)) / 255.0

    def conv(h, w, b, s):
        y = jax.lax.conv_general_dilated(
            h, w, window_strides=(s, s), padding="VALID",
            dimension_numbers=("NHWC", "HWIO", "NHWC"))
        return jax.nn.relu(y + b)

    h = conv(x, params["w1"], params["b1"], 4)
    h = conv(h, params["w2"], params["b2"], 2)
    h = conv(h, params["w3"], params["b3"], 1)
    flat = jnp.transpose(h, (0, 3, 1, 2)).reshape(h.shape[0], -1)
    return jax.nn.relu(flat @ params["wf"] + params["bf"])


if __name__ == "__main__":
    # Conv chain 8/s4 -> 4/s2 -> 3/s1 on 44x44:  44 -> 10 -> 4 -> 2 spatial,
    # so flat dim = 32 * 2 * 2 = 128.  Small hidden for the test.
    B, C, H, W = 2, 4, 44, 44
    hidden_dim = 32
    flat_dim = 32 * 2 * 2

    key = jax.random.PRNGKey(0)
    kx, kp = jax.random.split(key)
    x = jax.random.uniform(kx, (B, C, H, W), jnp.float32, 0.0, 255.0)
    params = init_params(kp, C, flat_dim, hidden_dim)

    fwd = jax.jit(deepmind_enc_forward)
    out = jax.block_until_ready(fwd(params, x))
    assert out.shape == (B, hidden_dim), out.shape

    ref = jax.block_until_ready(reference_forward(params, x))
    max_err = float(jnp.max(jnp.abs(out - ref)))
    # bf16 matmul operands (f32 accumulation) -> slightly wider tolerance.
    assert jnp.allclose(out, ref, atol=5e-2, rtol=5e-2), max_err

    print("KERNEL_OK")
</pallas_src>

<mosaic_0001>
module attributes {stable_mosaic.version = 11 : i64} {
  func.func @kernel(%arg0: i32, %arg1: memref<1x11x4x11x16xf32, #tpu.memory_space<vmem>>, %arg2: memref<256x32xbf16, #tpu.memory_space<vmem>>, %arg3: memref<1x32xf32, #tpu.memory_space<vmem>>, %arg4: memref<512x64xbf16, #tpu.memory_space<vmem>>, %arg5: memref<1x64xf32, #tpu.memory_space<vmem>>, %arg6: memref<576x32xbf16, #tpu.memory_space<vmem>>, %arg7: memref<1x32xf32, #tpu.memory_space<vmem>>, %arg8: memref<2x2x32x32xbf16, #tpu.memory_space<vmem>>, %arg9: memref<1x32xf32, #tpu.memory_space<vmem>>, %arg10: memref<1x1x32xf32, #tpu.memory_space<vmem>>, %arg11: memref<10x10x256xf32, #tpu.memory_space<vmem>>, %arg12: memref<10x10x32xf32, #tpu.memory_space<vmem>>, %arg13: memref<4x4x512xf32, #tpu.memory_space<vmem>>, %arg14: memref<4x4x64xf32, #tpu.memory_space<vmem>>, %arg15: memref<2x2x576xf32, #tpu.memory_space<vmem>>, %arg16: memref<2x2x32xf32, #tpu.memory_space<vmem>>) attributes {dimension_semantics = [#tpu.dimension_semantics<parallel>], iteration_bounds = array<i64: 2>, scalar_prefetch = 0 : i64, scratch_operands = 6 : i64, tpu.core_type = #tpu.core_type<tc>, window_params = [{transform_indices = @transform_0, window_bounds = array<i64: 1, 11, 4, 11, 16>}, {pipeline_mode = #tpu.pipeline_mode<synchronous>, transform_indices = @transform_1, window_bounds = array<i64: 256, 32>}, {pipeline_mode = #tpu.pipeline_mode<synchronous>, transform_indices = @transform_2, window_bounds = array<i64: 1, 32>}, {pipeline_mode = #tpu.pipeline_mode<synchronous>, transform_indices = @transform_3, window_bounds = array<i64: 512, 64>}, {pipeline_mode = #tpu.pipeline_mode<synchronous>, transform_indices = @transform_4, window_bounds = array<i64: 1, 64>}, {pipeline_mode = #tpu.pipeline_mode<synchronous>, transform_indices = @transform_5, window_bounds = array<i64: 576, 32>}, {pipeline_mode = #tpu.pipeline_mode<synchronous>, transform_indices = @transform_6, window_bounds = array<i64: 1, 32>}, {pipeline_mode = #tpu.pipeline_mode<synchronous>, transform_indices = @transform_7, window_bounds = array<i64: 2, 2, 32, 32>}, {pipeline_mode = #tpu.pipeline_mode<synchronous>, transform_indices = @transform_8, window_bounds = array<i64: 1, 32>}, {transform_indices = @transform_9, window_bounds = array<i64: 1, 1, 32>}]} {
    %c0 = arith.constant 0 : index
    %c0_0 = arith.constant 0 : index
    %c0_1 = arith.constant 0 : index
    %c0_2 = arith.constant 0 : index
    %c0_3 = arith.constant 0 : index
    %0 = vector.load %arg1[%c0, %c0_0, %c0_1, %c0_2, %c0_3] : memref<1x11x4x11x16xf32, #tpu.memory_space<vmem>>, vector<1x10x1x10x16xf32>
    %1 = vector.shape_cast %0 : vector<1x10x1x10x16xf32> to vector<10x10x16xf32>
    %c0_4 = arith.constant 0 : index
    %c0_5 = arith.constant 0 : index
    %c0_6 = arith.constant 0 : index
    %2 = vector.load %arg11[%c0_4, %c0_5, %c0_6] : memref<10x10x256xf32, #tpu.memory_space<vmem>>, vector<10x10x16xf32>
    tpu.vector_store %arg11[%c0_4, %c0_5, %c0_6], %1 {strides = array<i32>} : memref<10x10x256xf32, #tpu.memory_space<vmem>>, vector<10x10x16xf32>,
    %c0_7 = arith.constant 0 : index
    %c0_8 = arith.constant 0 : index
    %c0_9 = arith.constant 0 : index
    %c1 = arith.constant 1 : index
    %c0_10 = arith.constant 0 : index
    %3 = vector.load %arg1[%c0_7, %c0_8, %c0_9, %c1, %c0_10] : memref<1x11x4x11x16xf32, #tpu.memory_space<vmem>>, vector<1x10x1x10x16xf32>
    %4 = vector.shape_cast %3 : vector<1x10x1x10x16xf32> to vector<10x10x16xf32>
    %c0_11 = arith.constant 0 : index
    %c0_12 = arith.constant 0 : index
    %c16 = arith.constant 16 : index
    %5 = vector.load %arg11[%c0_11, %c0_12, %c16] : memref<10x10x256xf32, #tpu.memory_space<vmem>>, vector<10x10x16xf32>
    tpu.vector_store %arg11[%c0_11, %c0_12, %c16], %4 {strides = array<i32>} : memref<10x10x256xf32, #tpu.memory_space<vmem>>, vector<10x10x16xf32>,
    %c0_13 = arith.constant 0 : index
    %c0_14 = arith.constant 0 : index
    %c1_15 = arith.constant 1 : index
    %c0_16 = arith.constant 0 : index
    %c0_17 = arith.constant 0 : index
    %6 = vector.load %arg1[%c0_13, %c0_14, %c1_15, %c0_16, %c0_17] : memref<1x11x4x11x16xf32, #tpu.memory_space<vmem>>, vector<1x10x1x10x16xf32>
    %7 = vector.shape_cast %6 : vector<1x10x1x10x16xf32> to vector<10x10x16xf32>
    %c0_18 = arith.constant 0 : index
    %c0_19 = arith.constant 0 : index
    %c32 = arith.constant 32 : index
    %8 = vector.load %arg11[%c0_18, %c0_19, %c32] : memref<10x10x256xf32, #tpu.memory_space<vmem>>, vector<10x10x16xf32>
    tpu.vector_store %arg11[%c0_18, %c0_19, %c32], %7 {strides = array<i32>} : memref<10x10x256xf32, #tpu.memory_space<vmem>>, vector<10x10x16xf32>,
    %c0_20 = arith.constant 0 : index
    %c0_21 = arith.constant 0 : index
    %c1_22 = arith.constant 1 : index
    %c1_23 = arith.constant 1 : index
    %c0_24 = arith.constant 0 : index
    %9 = vector.load %arg1[%c0_20, %c0_21, %c1_22, %c1_23, %c0_24] : memref<1x11x4x11x16xf32, #tpu.memory_space<vmem>>, vector<1x10x1x10x16xf32>
    %10 = vector.shape_cast %9 : vector<1x10x1x10x16xf32> to vector<10x10x16xf32>
    %c0_25 = arith.constant 0 : index
    %c0_26 = arith.constant 0 : index
    %c48 = arith.constant 48 : index
    %11 = vector.load %arg11[%c0_25, %c0_26, %c48] : memref<10x10x256xf32, #tpu.memory_space<vmem>>, vector<10x10x16xf32>
    tpu.vector_store %arg11[%c0_25, %c0_26, %c48], %10 {strides = array<i32>} : memref<10x10x256xf32, #tpu.memory_space<vmem>>, vector<10x10x16xf32>,
    %c0_27 = arith.constant 0 : index
    %c0_28 = arith.constant 0 : index
    %c2 = arith.constant 2 : index
    %c0_29 = arith.constant 0 : index
    %c0_30 = arith.constant 0 : index
    %12 = vector.load %arg1[%c0_27, %c0_28, %c2, %c0_29, %c0_30] : memref<1x11x4x11x16xf32, #tpu.memory_space<vmem>>, vector<1x10x1x10x16xf32>
    %13 = vector.shape_cast %12 : vector<1x10x1x10x16xf32> to vector<10x10x16xf32>
    %c0_31 = arith.constant 0 : index
    %c0_32 = arith.constant 0 : index
    %c64 = arith.constant 64 : index
    %14 = vector.load %arg11[%c0_31, %c0_32, %c64] : memref<10x10x256xf32, #tpu.memory_space<vmem>>, vector<10x10x16xf32>
    tpu.vector_store %arg11[%c0_31, %c0_32, %c64], %13 {strides = array<i32>} : memref<10x10x256xf32, #tpu.memory_space<vmem>>, vector<10x10x16xf32>,
    %c0_33 = arith.constant 0 : index
    %c0_34 = arith.constant 0 : index
    %c2_35 = arith.constant 2 : index
    %c1_36 = arith.constant 1 : index
    %c0_37 = arith.constant 0 : index
    %15 = vector.load %arg1[%c0_33, %c0_34, %c2_35, %c1_36, %c0_37] : memref<1x11x4x11x16xf32, #tpu.memory_space<vmem>>, vector<1x10x1x10x16xf32>
    %16 = vector.shape_cast %15 : vector<1x10x1x10x16xf32> to vector<10x10x16xf32>
    %c0_38 = arith.constant 0 : index
    %c0_39 = arith.constant 0 : index
    %c80 = arith.constant 80 : index
    %17 = vector.load %arg11[%c0_38, %c0_39, %c80] : memref<10x10x256xf32, #tpu.memory_space<vmem>>, vector<10x10x16xf32>
    tpu.vector_store %arg11[%c0_38, %c0_39, %c80], %16 {strides = array<i32>} : memref<10x10x256xf32, #tpu.memory_space<vmem>>, vector<10x10x16xf32>,
    %c0_40 = arith.constant 0 : index
    %c0_41 = arith.constant 0 : index
    %c3 = arith.constant 3 : index
    %c0_42 = arith.constant 0 : index
    %c0_43 = arith.constant 0 : index
    %18 = vector.load %arg1[%c0_40, %c0_41, %c3, %c0_42, %c0_43] : memref<1x11x4x11x16xf32, #tpu.memory_space<vmem>>, vector<1x10x1x10x16xf32>
    %19 = vector.shape_cast %18 : vector<1x10x1x10x16xf32> to vector<10x10x16xf32>
    %c0_44 = arith.constant 0 : index
    %c0_45 = arith.constant 0 : index
    %c96 = arith.constant 96 : index
    %20 = vector.load %arg11[%c0_44, %c0_45, %c96] : memref<10x10x256xf32, #tpu.memory_space<vmem>>, vector<10x10x16xf32>
    tpu.vector_store %arg11[%c0_44, %c0_45, %c96], %19 {strides = array<i32>} : memref<10x10x256xf32, #tpu.memory_space<vmem>>, vector<10x10x16xf32>,
    %c0_46 = arith.constant 0 : index
    %c0_47 = arith.constant 0 : index
    %c3_48 = arith.constant 3 : index
    %c1_49 = arith.constant 1 : index
    %c0_50 = arith.constant 0 : index
    %21 = vector.load %arg1[%c0_46, %c0_47, %c3_48, %c1_49, %c0_50] : memref<1x11x4x11x16xf32, #tpu.memory_space<vmem>>, vector<1x10x1x10x16xf32>
    %22 = vector.shape_cast %21 : vector<1x10x1x10x16xf32> to vector<10x10x16xf32>
    %c0_51 = arith.constant 0 : index
    %c0_52 = arith.constant 0 : index
    %c112 = arith.constant 112 : index
    %23 = vector.load %arg11[%c0_51, %c0_52, %c112] : memref<10x10x256xf32, #tpu.memory_space<vmem>>, vector<10x10x16xf32>
    tpu.vector_store %arg11[%c0_51, %c0_52, %c112], %22 {strides = array<i32>} : memref<10x10x256xf32, #tpu.memory_space<vmem>>, vector<10x10x16xf32>,
    %c0_53 = arith.constant 0 : index
    %c1_54 = arith.constant 1 : index
    %c0_55 = arith.constant 0 : index
    %c0_56 = arith.constant 0 : index
    %c0_57 = arith.constant 0 : index
    %24 = vector.load %arg1[%c0_53, %c1_54, %c0_55, %c0_56, %c0_57] : memref<1x11x4x11x16xf32, #tpu.memory_space<vmem>>, vector<1x10x1x10x16xf32>
    %25 = vector.shape_cast %24 : vector<1x10x1x10x16xf32> to vector<10x10x16xf32>
    %c0_58 = arith.constant 0 : index
    %c0_59 = arith.constant 0 : index
    %c128 = arith.constant 128 : index
    %26 = vector.load %arg11[%c0_58, %c0_59, %c128] : memref<10x10x256xf32, #tpu.memory_space<vmem>>, vector<10x10x16xf32>
    tpu.vector_store %arg11[%c0_58, %c0_59, %c128], %25 {strides = array<i32>} : memref<10x10x256xf32, #tpu.memory_space<vmem>>, vector<10x10x16xf32>,
    %c0_60 = arith.constant 0 : index
    %c1_61 = arith.constant 1 : index
    %c0_62 = arith.constant 0 : index
    %c1_63 = arith.constant 1 : index
    %c0_64 = arith.constant 0 : index
    %27 = vector.load %arg1[%c0_60, %c1_61, %c0_62, %c1_63, %c0_64] : memref<1x11x4x11x16xf32, #tpu.memory_space<vmem>>, vector<1x10x1x10x16xf32>
    %28 = vector.shape_cast %27 : vector<1x10x1x10x16xf32> to vector<10x10x16xf32>
    %c0_65 = arith.constant 0 : index
    %c0_66 = arith.constant 0 : index
    %c144 = arith.constant 144 : index
    %29 = vector.load %arg11[%c0_65, %c0_66, %c144] : memref<10x10x256xf32, #tpu.memory_space<vmem>>, vector<10x10x16xf32>
    tpu.vector_store %arg11[%c0_65, %c0_66, %c144], %28 {strides = array<i32>} : memref<10x10x256xf32, #tpu.memory_space<vmem>>, vector<10x10x16xf32>,
    %c0_67 = arith.constant 0 : index
    %c1_68 = arith.constant 1 : index
    %c1_69 = arith.constant 1 : index
    %c0_70 = arith.constant 0 : index
    %c0_71 = arith.constant 0 : index
    %30 = vector.load %arg1[%c0_67, %c1_68, %c1_69, %c0_70, %c0_71] : memref<1x11x4x11x16xf32, #tpu.memory_space<vmem>>, vector<1x10x1x10x16xf32>
    %31 = vector.shape_cast %30 : vector<1x10x1x10x16xf32> to vector<10x10x16xf32>
    %c0_72 = arith.constant 0 : index
    %c0_73 = arith.constant 0 : index
    %c160 = arith.constant 160 : index
    %32 = vector.load %arg11[%c0_72, %c0_73, %c160] : memref<10x10x256xf32, #tpu.memory_space<vmem>>, vector<10x10x16xf32>
    tpu.vector_store %arg11[%c0_72, %c0_73, %c160], %31 {strides = array<i32>} : memref<10x10x256xf32, #tpu.memory_space<vmem>>, vector<10x10x16xf32>,
    %c0_74 = arith.constant 0 : index
    %c1_75 = arith.constant 1 : index
    %c1_76 = arith.constant 1 : index
    %c1_77 = arith.constant 1 : index
    %c0_78 = arith.constant 0 : index
    %33 = vector.load %arg1[%c0_74, %c1_75, %c1_76, %c1_77, %c0_78] : memref<1x11x4x11x16xf32, #tpu.memory_space<vmem>>, vector<1x10x1x10x16xf32>
    %34 = vector.shape_cast %33 : vector<1x10x1x10x16xf32> to vector<10x10x16xf32>
    %c0_79 = arith.constant 0 : index
    %c0_80 = arith.constant 0 : index
    %c176 = arith.constant 176 : index
    %35 = vector.load %arg11[%c0_79, %c0_80, %c176] : memref<10x10x256xf32, #tpu.memory_space<vmem>>, vector<10x10x16xf32>
    tpu.vector_store %arg11[%c0_79, %c0_80, %c176], %34 {strides = array<i32>} : memref<10x10x256xf32, #tpu.memory_space<vmem>>, vector<10x10x16xf32>,
    %c0_81 = arith.constant 0 : index
    %c1_82 = arith.constant 1 : index
    %c2_83 = arith.constant 2 : index
    %c0_84 = arith.constant 0 : index
    %c0_85 = arith.constant 0 : index
    %36 = vector.load %arg1[%c0_81, %c1_82, %c2_83, %c0_84, %c0_85] : memref<1x11x4x11x16xf32, #tpu.memory_space<vmem>>, vector<1x10x1x10x16xf32>
    %37 = vector.shape_cast %36 : vector<1x10x1x10x16xf32> to vector<10x10x16xf32>
    %c0_86 = arith.constant 0 : index
    %c0_87 = arith.constant 0 : index
    %c192 = arith.constant 192 : index
    %38 = vector.load %arg11[%c0_86, %c0_87, %c192] : memref<10x10x256xf32, #tpu.memory_space<vmem>>, vector<10x10x16xf32>
    tpu.vector_store %arg11[%c0_86, %c0_87, %c192], %37 {strides = array<i32>} : memref<10x10x256xf32, #tpu.memory_space<vmem>>, vector<10x10x16xf32>,
    %c0_88 = arith.constant 0 : index
    %c1_89 = arith.constant 1 : index
    %c2_90 = arith.constant 2 : index
    %c1_91 = arith.constant 1 : index
    %c0_92 = arith.constant 0 : index
    %39 = vector.load %arg1[%c0_88, %c1_89, %c2_90, %c1_91, %c0_92] : memref<1x11x4x11x16xf32, #tpu.memory_space<vmem>>, vector<1x10x1x10x16xf32>
    %40 = vector.shape_cast %39 : vector<1x10x1x10x16xf32> to vector<10x10x16xf32>
    %c0_93 = arith.constant 0 : index
    %c0_94 = arith.constant 0 : index
    %c208 = arith.constant 208 : index
    %41 = vector.load %arg11[%c0_93, %c0_94, %c208] : memref<10x10x256xf32, #tpu.memory_space<vmem>>, vector<10x10x16xf32>
    tpu.vector_store %arg11[%c0_93, %c0_94, %c208], %40 {strides = array<i32>} : memref<10x10x256xf32, #tpu.memory_space<vmem>>, vector<10x10x16xf32>,
    %c0_95 = arith.constant 0 : index
    %c1_96 = arith.constant 1 : index
    %c3_97 = arith.constant 3 : index
    %c0_98 = arith.constant 0 : index
    %c0_99 = arith.constant 0 : index
    %42 = vector.load %arg1[%c0_95, %c1_96, %c3_97, %c0_98, %c0_99] : memref<1x11x4x11x16xf32, #tpu.memory_space<vmem>>, vector<1x10x1x10x16xf32>
    %43 = vector.shape_cast %42 : vector<1x10x1x10x16xf32> to vector<10x10x16xf32>
    %c0_100 = arith.constant 0 : index
    %c0_101 = arith.constant 0 : index
    %c224 = arith.constant 224 : index
    %44 = vector.load %arg11[%c0_100, %c0_101, %c224] : memref<10x10x256xf32, #tpu.memory_space<vmem>>, vector<10x10x16xf32>
    tpu.vector_store %arg11[%c0_100, %c0_101, %c224], %43 {strides = array<i32>} : memref<10x10x256xf32, #tpu.memory_space<vmem>>, vector<10x10x16xf32>,
    %c0_102 = arith.constant 0 : index
    %c1_103 = arith.constant 1 : index
    %c3_104 = arith.constant 3 : index
    %c1_105 = arith.constant 1 : index
    %c0_106 = arith.constant 0 : index
    %45 = vector.load %arg1[%c0_102, %c1_103, %c3_104, %c1_105, %c0_106] : memref<1x11x4x11x16xf32, #tpu.memory_space<vmem>>, vector<1x10x1x10x16xf32>
    %46 = vector.shape_cast %45 : vector<1x10x1x10x16xf32> to vector<10x10x16xf32>
    %c0_107 = arith.constant 0 : index
    %c0_108 = arith.constant 0 : index
    %c240 = arith.constant 240 : index
    %47 = vector.load %arg11[%c0_107, %c0_108, %c240] : memref<10x10x256xf32, #tpu.memory_space<vmem>>, vector<10x10x16xf32>
    tpu.vector_store %arg11[%c0_107, %c0_108, %c240], %46 {strides = array<i32>} : memref<10x10x256xf32, #tpu.memory_space<vmem>>, vector<10x10x16xf32>,
    %c0_109 = arith.constant 0 : index
    %c0_110 = arith.constant 0 : index
    %48 = vector.load %arg2[%c0_109, %c0_110] : memref<256x32xbf16, #tpu.memory_space<vmem>>, vector<256x32xbf16>
    %c0_111 = arith.constant 0 : index
    %c0_112 = arith.constant 0 : index
    %49 = vector.load %arg3[%c0_111, %c0_112] : memref<1x32xf32, #tpu.memory_space<vmem>>, vector<1x32xf32>
    %c0_113 = arith.constant 0 : index
    %c0_114 = arith.constant 0 : index
    %c0_115 = arith.constant 0 : index
    %50 = vector.load %arg11[%c0_113, %c0_114, %c0_115] : memref<10x10x256xf32, #tpu.memory_space<vmem>>, vector<1x10x256xf32>
    %51 = vector.shape_cast %50 : vector<1x10x256xf32> to vector<10x256xf32>
    %52 = arith.truncf %51 : vector<10x256xf32> to vector<10x256xbf16>
    %cst = arith.constant dense<0.000000e+00> : vector<10x32xf32>
    %53 = tpu.matmul %52, %48, %cst {dimension_numbers = #tpu.dot_dimension_numbers<[1], [0], [0], [1], [0, 0, 1, 1], [], []>} : vector<10x256xbf16>, vector<256x32xbf16>, vector<10x32xf32> -> vector<10x32xf32>
    %54 = vector.broadcast %49 : vector<1x32xf32> to vector<10x32xf32>
    %55 = arith.addf %53, %54 : vector<10x32xf32>
    %cst_116 = arith.constant 0.000000e+00 : f32
    %56 = vector.broadcast %cst_116 : f32 to vector<10x32xf32>
    %57 = arith.maximumf %55, %56 : vector<10x32xf32>
    %c0_117 = arith.constant 0 : index
    %c0_118 = arith.constant 0 : index
    %c0_119 = arith.constant 0 : index
    %58 = vector.load %arg12[%c0_117, %c0_118, %c0_119] : memref<10x10x32xf32, #tpu.memory_space<vmem>>, vector<1x10x32xf32>
    %59 = vector.shape_cast %58 : vector<1x10x32xf32> to vector<10x32xf32>
    %60 = vector.shape_cast %57 : vector<10x32xf32> to vector<1x10x32xf32>
    tpu.vector_store %arg12[%c0_117, %c0_118, %c0_119], %60 {strides = array<i32>} : memref<10x10x32xf32, #tpu.memory_space<vmem>>, vector<1x10x32xf32>,
    %c1_120 = arith.constant 1 : index
    %c0_121 = arith.constant 0 : index
    %c0_122 = arith.constant 0 : index
    %61 = vector.load %arg11[%c1_120, %c0_121, %c0_122] : memref<10x10x256xf32, #tpu.memory_space<vmem>>, vector<1x10x256xf32>
    %62 = vector.shape_cast %61 : vector<1x10x256xf32> to vector<10x256xf32>
    %63 = arith.truncf %62 : vector<10x256xf32> to vector<10x256xbf16>
    %cst_123 = arith.constant dense<0.000000e+00> : vector<10x32xf32>
    %64 = tpu.matmul %63, %48, %cst_123 {dimension_numbers = #tpu.dot_dimension_numbers<[1], [0], [0], [1], [0, 0, 1, 1], [], []>} : vector<10x256xbf16>, vector<256x32xbf16>, vector<10x32xf32> -> vector<10x32xf32>
    %65 = vector.broadcast %49 : vector<1x32xf32> to vector<10x32xf32>
    %66 = arith.addf %64, %65 : vector<10x32xf32>
    %cst_124 = arith.constant 0.000000e+00 : f32
    %67 = vector.broadcast %cst_124 : f32 to vector<10x32xf32>
    %68 = arith.maximumf %66, %67 : vector<10x32xf32>
    %c1_125 = arith.constant 1 : index
    %c0_126 = arith.constant 0 : index
    %c0_127 = arith.constant 0 : index
    %69 = vector.load %arg12[%c1_125, %c0_126, %c0_127] : memref<10x10x32xf32, #tpu.memory_space<vmem>>, vector<1x10x32xf32>
    %70 = vector.shape_cast %69 : vector<1x10x32xf32> to vector<10x32xf32>
    %71 = vector.shape_cast %68 : vector<10x32xf32> to vector<1x10x32xf32>
    tpu.vector_store %arg12[%c1_125, %c0_126, %c0_127], %71 {strides = array<i32>} : memref<10x10x32xf32, #tpu.memory_space<vmem>>, vector<1x10x32xf32>,
    %c2_128 = arith.constant 2 : index
    %c0_129 = arith.constant 0 : index
    %c0_130 = arith.constant 0 : index
    %72 = vector.load %arg11[%c2_128, %c0_129, %c0_130] : memref<10x10x256xf32, #tpu.memory_space<vmem>>, vector<1x10x256xf32>
    %73 = vector.shape_cast %72 : vector<1x10x256xf32> to vector<10x256xf32>
    %74 = arith.truncf %73 : vector<10x256xf32> to vector<10x256xbf16>
    %cst_131 = arith.constant dense<0.000000e+00> : vector<10x32xf32>
    %75 = tpu.matmul %74, %48, %cst_131 {dimension_numbers = #tpu.dot_dimension_numbers<[1], [0], [0], [1], [0, 0, 1, 1], [], []>} : vector<10x256xbf16>, vector<256x32xbf16>, vector<10x32xf32> -> vector<10x32xf32>
    %76 = vector.broadcast %49 : vector<1x32xf32> to vector<10x32xf32>
    %77 = arith.addf %75, %76 : vector<10x32xf32>
    %cst_132 = arith.constant 0.000000e+00 : f32
    %78 = vector.broadcast %cst_132 : f32 to vector<10x32xf32>
    %79 = arith.maximumf %77, %78 : vector<10x32xf32>
    %c2_133 = arith.constant 2 : index
    %c0_134 = arith.constant 0 : index
    %c0_135 = arith.constant 0 : index
    %80 = vector.load %arg12[%c2_133, %c0_134, %c0_135] : memref<10x10x32xf32, #tpu.memory_space<vmem>>, vector<1x10x32xf32>
    %81 = vector.shape_cast %80 : vector<1x10x32xf32> to vector<10x32xf32>
    %82 = vector.shape_cast %79 : vector<10x32xf32> to vector<1x10x32xf32>
    tpu.vector_store %arg12[%c2_133, %c0_134, %c0_135], %82 {strides = array<i32>} : memref<10x10x32xf32, #tpu.memory_space<vmem>>, vector<1x10x32xf32>,
    %c3_136 = arith.constant 3 : index
    %c0_137 = arith.constant 0 : index
    %c0_138 = arith.constant 0 : index
    %83 = vector.load %arg11[%c3_136, %c0_137, %c0_138] : memref<10x10x256xf32, #tpu.memory_space<vmem>>, vector<1x10x256xf32>
    %84 = vector.shape_cast %83 : vector<1x10x256xf32> to vector<10x256xf32>
    %85 = arith.truncf %84 : vector<10x256xf32> to vector<10x256xbf16>
    %cst_139 = arith.constant dense<0.000000e+00> : vector<10x32xf32>
    %86 = tpu.matmul %85, %48, %cst_139 {dimension_numbers = #tpu.dot_dimension_numbers<[1], [0], [0], [1], [0, 0, 1, 1], [], []>} : vector<10x256xbf16>, vector<256x32xbf16>, vector<10x32xf32> -> vector<10x32xf32>
    %87 = vector.broadcast %49 : vector<1x32xf32> to vector<10x32xf32>
    %88 = arith.addf %86, %87 : vector<10x32xf32>
    %cst_140 = arith.constant 0.000000e+00 : f32
    %89 = vector.broadcast %cst_140 : f32 to vector<10x32xf32>
    %90 = arith.maximumf %88, %89 : vector<10x32xf32>
    %c3_141 = arith.constant 3 : index
    %c0_142 = arith.constant 0 : index
    %c0_143 = arith.constant 0 : index
    %91 = vector.load %arg12[%c3_141, %c0_142, %c0_143] : memref<10x10x32xf32, #tpu.memory_space<vmem>>, vector<1x10x32xf32>
    %92 = vector.shape_cast %91 : vector<1x10x32xf32> to vector<10x32xf32>
    %93 = vector.shape_cast %90 : vector<10x32xf32> to vector<1x10x32xf32>
    tpu.vector_store %arg12[%c3_141, %c0_142, %c0_143], %93 {strides = array<i32>} : memref<10x10x32xf32, #tpu.memory_space<vmem>>, vector<1x10x32xf32>,
    %c4 = arith.constant 4 : index
    %c0_144 = arith.constant 0 : index
    %c0_145 = arith.constant 0 : index
    %94 = vector.load %arg11[%c4, %c0_144, %c0_145] : memref<10x10x256xf32, #tpu.memory_space<vmem>>, vector<1x10x256xf32>
    %95 = vector.shape_cast %94 : vector<1x10x256xf32> to vector<10x256xf32>
    %96 = arith.truncf %95 : vector<10x256xf32> to vector<10x256xbf16>
    %cst_146 = arith.constant dense<0.000000e+00> : vector<10x32xf32>
    %97 = tpu.matmul %96, %48, %cst_146 {dimension_numbers = #tpu.dot_dimension_numbers<[1], [0], [0], [1], [0, 0, 1, 1], [], []>} : vector<10x256xbf16>, vector<256x32xbf16>, vector<10x32xf32> -> vector<10x32xf32>
    %98 = vector.broadcast %49 : vector<1x32xf32> to vector<10x32xf32>
    %99 = arith.addf %97, %98 : vector<10x32xf32>
    %cst_147 = arith.constant 0.000000e+00 : f32
    %100 = vector.broadcast %cst_147 : f32 to vector<10x32xf32>
    %101 = arith.maximumf %99, %100 : vector<10x32xf32>
    %c4_148 = arith.constant 4 : index
    %c0_149 = arith.constant 0 : index
    %c0_150 = arith.constant 0 : index
    %102 = vector.load %arg12[%c4_148, %c0_149, %c0_150] : memref<10x10x32xf32, #tpu.memory_space<vmem>>, vector<1x10x32xf32>
    %103 = vector.shape_cast %102 : vector<1x10x32xf32> to vector<10x32xf32>
    %104 = vector.shape_cast %101 : vector<10x32xf32> to vector<1x10x32xf32>
    tpu.vector_store %arg12[%c4_148, %c0_149, %c0_150], %104 {strides = array<i32>} : memref<10x10x32xf32, #tpu.memory_space<vmem>>, vector<1x10x32xf32>,
    %c5 = arith.constant 5 : index
    %c0_151 = arith.constant 0 : index
    %c0_152 = arith.constant 0 : index
    %105 = vector.load %arg11[%c5, %c0_151, %c0_152] : memref<10x10x256xf32, #tpu.memory_space<vmem>>, vector<1x10x256xf32>
    %106 = vector.shape_cast %105 : vector<1x10x256xf32> to vector<10x256xf32>
    %107 = arith.truncf %106 : vector<10x256xf32> to vector<10x256xbf16>
    %cst_153 = arith.constant dense<0.000000e+00> : vector<10x32xf32>
    %108 = tpu.matmul %107, %48, %cst_153 {dimension_numbers = #tpu.dot_dimension_numbers<[1], [0], [0], [1], [0, 0, 1, 1], [], []>} : vector<10x256xbf16>, vector<256x32xbf16>, vector<10x32xf32> -> vector<10x32xf32>
    %109 = vector.broadcast %49 : vector<1x32xf32> to vector<10x32xf32>
    %110 = arith.addf %108, %109 : vector<10x32xf32>
    %cst_154 = arith.constant 0.000000e+00 : f32
    %111 = vector.broadcast %cst_154 : f32 to vector<10x32xf32>
    %112 = arith.maximumf %110, %111 : vector<10x32xf32>
    %c5_155 = arith.constant 5 : index
    %c0_156 = arith.constant 0 : index
    %c0_157 = arith.constant 0 : index
    %113 = vector.load %arg12[%c5_155, %c0_156, %c0_157] : memref<10x10x32xf32, #tpu.memory_space<vmem>>, vector<1x10x32xf32>
    %114 = vector.shape_cast %113 : vector<1x10x32xf32> to vector<10x32xf32>
    %115 = vector.shape_cast %112 : vector<10x32xf32> to vector<1x10x32xf32>
    tpu.vector_store %arg12[%c5_155, %c0_156, %c0_157], %115 {strides = array<i32>} : memref<10x10x32xf32, #tpu.memory_space<vmem>>, vector<1x10x32xf32>,
    %c6 = arith.constant 6 : index
    %c0_158 = arith.constant 0 : index
    %c0_159 = arith.constant 0 : index
    %116 = vector.load %arg11[%c6, %c0_158, %c0_159] : memref<10x10x256xf32, #tpu.memory_space<vmem>>, vector<1x10x256xf32>
    %117 = vector.shape_cast %116 : vector<1x10x256xf32> to vector<10x256xf32>
    %118 = arith.truncf %117 : vector<10x256xf32> to vector<10x256xbf16>
    %cst_160 = arith.constant dense<0.000000e+00> : vector<10x32xf32>
    %119 = tpu.matmul %118, %48, %cst_160 {dimension_numbers = #tpu.dot_dimension_numbers<[1], [0], [0], [1], [0, 0, 1, 1], [], []>} : vector<10x256xbf16>, vector<256x32xbf16>, vector<10x32xf32> -> vector<10x32xf32>
    %120 = vector.broadcast %49 : vector<1x32xf32> to vector<10x32xf32>
    %121 = arith.addf %119, %120 : vector<10x32xf32>
    %cst_161 = arith.constant 0.000000e+00 : f32
    %122 = vector.broadcast %cst_161 : f32 to vector<10x32xf32>
    %123 = arith.maximumf %121, %122 : vector<10x32xf32>
    %c6_162 = arith.constant 6 : index
    %c0_163 = arith.constant 0 : index
    %c0_164 = arith.constant 0 : index
    %124 = vector.load %arg12[%c6_162, %c0_163, %c0_164] : memref<10x10x32xf32, #tpu.memory_space<vmem>>, vector<1x10x32xf32>
    %125 = vector.shape_cast %124 : vector<1x10x32xf32> to vector<10x32xf32>
    %126 = vector.shape_cast %123 : vector<10x32xf32> to vector<1x10x32xf32>
    tpu.vector_store %arg12[%c6_162, %c0_163, %c0_164], %126 {strides = array<i32>} : memref<10x10x32xf32, #tpu.memory_space<vmem>>, vector<1x10x32xf32>,
    %c7 = arith.constant 7 : index
    %c0_165 = arith.constant 0 : index
    %c0_166 = arith.constant 0 : index
    %127 = vector.load %arg11[%c7, %c0_165, %c0_166] : memref<10x10x256xf32, #tpu.memory_space<vmem>>, vector<1x10x256xf32>
    %128 = vector.shape_cast %127 : vector<1x10x256xf32> to vector<10x256xf32>
    %129 = arith.truncf %128 : vector<10x256xf32> to vector<10x256xbf16>
    %cst_167 = arith.constant dense<0.000000e+00> : vector<10x32xf32>
    %130 = tpu.matmul %129, %48, %cst_167 {dimension_numbers = #tpu.dot_dimension_numbers<[1], [0], [0], [1], [0, 0, 1, 1], [], []>} : vector<10x256xbf16>, vector<256x32xbf16>, vector<10x32xf32> -> vector<10x32xf32>
    %131 = vector.broadcast %49 : vector<1x32xf32> to vector<10x32xf32>
    %132 = arith.addf %130, %131 : vector<10x32xf32>
    %cst_168 = arith.constant 0.000000e+00 : f32
    %133 = vector.broadcast %cst_168 : f32 to vector<10x32xf32>
    %134 = arith.maximumf %132, %133 : vector<10x32xf32>
    %c7_169 = arith.constant 7 : index
    %c0_170 = arith.constant 0 : index
    %c0_171 = arith.constant 0 : index
    %135 = vector.load %arg12[%c7_169, %c0_170, %c0_171] : memref<10x10x32xf32, #tpu.memory_space<vmem>>, vector<1x10x32xf32>
    %136 = vector.shape_cast %135 : vector<1x10x32xf32> to vector<10x32xf32>
    %137 = vector.shape_cast %134 : vector<10x32xf32> to vector<1x10x32xf32>
    tpu.vector_store %arg12[%c7_169, %c0_170, %c0_171], %137 {strides = array<i32>} : memref<10x10x32xf32, #tpu.memory_space<vmem>>, vector<1x10x32xf32>,
    %c8 = arith.constant 8 : index
    %c0_172 = arith.constant 0 : index
    %c0_173 = arith.constant 0 : index
    %138 = vector.load %arg11[%c8, %c0_172, %c0_173] : memref<10x10x256xf32, #tpu.memory_space<vmem>>, vector<1x10x256xf32>
    %139 = vector.shape_cast %138 : vector<1x10x256xf32> to vector<10x256xf32>
    %140 = arith.truncf %139 : vector<10x256xf32> to vector<10x256xbf16>
    %cst_174 = arith.constant dense<0.000000e+00> : vector<10x32xf32>
    %141 = tpu.matmul %140, %48, %cst_174 {dimension_numbers = #tpu.dot_dimension_numbers<[1], [0], [0], [1], [0, 0, 1, 1], [], []>} : vector<10x256xbf16>, vector<256x32xbf16>, vector<10x32xf32> -> vector<10x32xf32>
    %142 = vector.broadcast %49 : vector<1x32xf32> to vector<10x32xf32>
    %143 = arith.addf %141, %142 : vector<10x32xf32>
    %cst_175 = arith.constant 0.000000e+00 : f32
    %144 = vector.broadcast %cst_175 : f32 to vector<10x32xf32>
    %145 = arith.maximumf %143, %144 : vector<10x32xf32>
    %c8_176 = arith.constant 8 : index
    %c0_177 = arith.constant 0 : index
    %c0_178 = arith.constant 0 : index
    %146 = vector.load %arg12[%c8_176, %c0_177, %c0_178] : memref<10x10x32xf32, #tpu.memory_space<vmem>>, vector<1x10x32xf32>
    %147 = vector.shape_cast %146 : vector<1x10x32xf32> to vector<10x32xf32>
    %148 = vector.shape_cast %145 : vector<10x32xf32> to vector<1x10x32xf32>
    tpu.vector_store %arg12[%c8_176, %c0_177, %c0_178], %148 {strides = array<i32>} : memref<10x10x32xf32, #tpu.memory_space<vmem>>, vector<1x10x32xf32>,
    %c9 = arith.constant 9 : index
    %c0_179 = arith.constant 0 : index
    %c0_180 = arith.constant 0 : index
    %149 = vector.load %arg11[%c9, %c0_179, %c0_180] : memref<10x10x256xf32, #tpu.memory_space<vmem>>, vector<1x10x256xf32>
    %150 = vector.shape_cast %149 : vector<1x10x256xf32> to vector<10x256xf32>
    %151 = arith.truncf %150 : vector<10x256xf32> to vector<10x256xbf16>
    %cst_181 = arith.constant dense<0.000000e+00> : vector<10x32xf32>
    %152 = tpu.matmul %151, %48, %cst_181 {dimension_numbers = #tpu.dot_dimension_numbers<[1], [0], [0], [1], [0, 0, 1, 1], [], []>} : vector<10x256xbf16>, vector<256x32xbf16>, vector<10x32xf32> -> vector<10x32xf32>
    %153 = vector.broadcast %49 : vector<1x32xf32> to vector<10x32xf32>
    %154 = arith.addf %152, %153 : vector<10x32xf32>
    %cst_182 = arith.constant 0.000000e+00 : f32
    %155 = vector.broadcast %cst_182 : f32 to vector<10x32xf32>
    %156 = arith.maximumf %154, %155 : vector<10x32xf32>
    %c9_183 = arith.constant 9 : index
    %c0_184 = arith.constant 0 : index
    %c0_185 = arith.constant 0 : index
    %157 = vector.load %arg12[%c9_183, %c0_184, %c0_185] : memref<10x10x32xf32, #tpu.memory_space<vmem>>, vector<1x10x32xf32>
    %158 = vector.shape_cast %157 : vector<1x10x32xf32> to vector<10x32xf32>
    %159 = vector.shape_cast %156 : vector<10x32xf32> to vector<1x10x32xf32>
    tpu.vector_store %arg12[%c9_183, %c0_184, %c0_185], %159 {strides = array<i32>} : memref<10x10x32xf32, #tpu.memory_space<vmem>>, vector<1x10x32xf32>,
    %c0_186 = arith.constant 0 : index
    %c0_187 = arith.constant 0 : index
    %c0_188 = arith.constant 0 : index
    %160 = vector.load %arg12[%c0_186, %c0_187, %c0_188] : memref<10x10x32xf32, #tpu.memory_space<vmem>>, vector<1x1x32xf32>
    %161 = vector.shape_cast %160 : vector<1x1x32xf32> to vector<1x32xf32>
    %c0_189 = arith.constant 0 : index
    %c0_190 = arith.constant 0 : index
    %c0_191 = arith.constant 0 : index
    %162 = vector.load %arg13[%c0_189, %c0_190, %c0_191] : memref<4x4x512xf32, #tpu.memory_space<vmem>>, vector<1x1x32xf32>
    %163 = vector.shape_cast %162 : vector<1x1x32xf32> to vector<1x32xf32>
    %164 = vector.shape_cast %161 : vector<1x32xf32> to vector<1x1x32xf32>
    tpu.vector_store %arg13[%c0_189, %c0_190, %c0_191], %164 {strides = array<i32>} : memref<4x4x512xf32, #tpu.memory_space<vmem>>, vector<1x1x32xf32>,
    %c0_192 = arith.constant 0 : index
    %c2_193 = arith.constant 2 : index
    %c0_194 = arith.constant 0 : index
    %165 = vector.load %arg12[%c0_192, %c2_193, %c0_194] : memref<10x10x32xf32, #tpu.memory_space<vmem>>, vector<1x1x32xf32>
    %166 = vector.shape_cast %165 : vector<1x1x32xf32> to vector<1x32xf32>
    %c1_195 = arith.constant 1 : index
    %c0_196 = arith.constant 0 : index
    %c0_197 = arith.constant 0 : index
    %167 = vector.load %arg13[%c1_195, %c0_196, %c0_197] : memref<4x4x512xf32, #tpu.memory_space<vmem>>, vector<1x1x32xf32>
    %168 = vector.shape_cast %167 : vector<1x1x32xf32> to vector<1x32xf32>
    %169 = vector.shape_cast %166 : vector<1x32xf32> to vector<1x1x32xf32>
    tpu.vector_store %arg13[%c1_195, %c0_196, %c0_197], %169 {strides = array<i32>} : memref<4x4x512xf32, #tpu.memory_space<vmem>>, vector<1x1x32xf32>,
    %c0_198 = arith.constant 0 : index
    %c4_199 = arith.constant 4 : index
    %c0_200 = arith.constant 0 : index
    %170 = vector.load %arg12[%c0_198, %c4_199, %c0_200] : memref<10x10x32xf32, #tpu.memory_space<vmem>>, vector<1x1x32xf32>
    %171 = vector.shape_cast %170 : vector<1x1x32xf32> to vector<1x32xf32>
    %c2_201 = arith.constant 2 : index
    %c0_202 = arith.constant 0 : index
    %c0_203 = arith.constant 0 : index
    %172 = vector.load %arg13[%c2_201, %c0_202, %c0_203] : memref<4x4x512xf32, #tpu.memory_space<vmem>>, vector<1x1x32xf32>
    %173 = vector.shape_cast %172 : vector<1x1x32xf32> to vector<1x32xf32>
    %174 = vector.shape_cast %171 : vector<1x32xf32> to vector<1x1x32xf32>
    tpu.vector_store %arg13[%c2_201, %c0_202, %c0_203], %174 {strides = array<i32>} : memref<4x4x512xf32, #tpu.memory_space<vmem>>, vector<1x1x32xf32>,
    %c0_204 = arith.constant 0 : index
    %c6_205 = arith.constant 6 : index
    %c0_206 = arith.constant 0 : index
    %175 = vector.load %arg12[%c0_204, %c6_205, %c0_206] : memref<10x10x32xf32, #tpu.memory_space<vmem>>, vector<1x1x32xf32>
    %176 = vector.shape_cast %175 : vector<1x1x32xf32> to vector<1x32xf32>
    %c3_207 = arith.constant 3 : index
    %c0_208 = arith.constant 0 : index
    %c0_209 = arith.constant 0 : index
    %177 = vector.load %arg13[%c3_207, %c0_208, %c0_209] : memref<4x4x512xf32, #tpu.memory_space<vmem>>, vector<1x1x32xf32>
    %178 = vector.shape_cast %177 : vector<1x1x32xf32> to vector<1x32xf32>
    %179 = vector.shape_cast %176 : vector<1x32xf32> to vector<1x1x32xf32>
    tpu.vector_store %arg13[%c3_207, %c0_208, %c0_209], %179 {strides = array<i32>} : memref<4x4x512xf32, #tpu.memory_space<vmem>>, vector<1x1x32xf32>,
    %c2_210 = arith.constant 2 : index
    %c0_211 = arith.constant 0 : index
    %c0_212 = arith.constant 0 : index
    %180 = vector.load %arg12[%c2_210, %c0_211, %c0_212] : memref<10x10x32xf32, #tpu.memory_space<vmem>>, vector<1x1x32xf32>
    %181 = vector.shape_cast %180 : vector<1x1x32xf32> to vector<1x32xf32>
    %c0_213 = arith.constant 0 : index
    %c1_214 = arith.constant 1 : index
    %c0_215 = arith.constant 0 : index
    %182 = vector.load %arg13[%c0_213, %c1_214, %c0_215] : memref<4x4x512xf32, #tpu.memory_space<vmem>>, vector<1x1x32xf32>
    %183 = vector.shape_cast %182 : vector<1x1x32xf32> to vector<1x32xf32>
    %184 = vector.shape_cast %181 : vector<1x32xf32> to vector<1x1x32xf32>
    tpu.vector_store %arg13[%c0_213, %c1_214, %c0_215], %184 {strides = array<i32>} : memref<4x4x512xf32, #tpu.memory_space<vmem>>, vector<1x1x32xf32>,
    %c2_216 = arith.constant 2 : index
    %c2_217 = arith.constant 2 : index
    %c0_218 = arith.constant 0 : index
    %185 = vector.load %arg12[%c2_216, %c2_217, %c0_218] : memref<10x10x32xf32, #tpu.memory_space<vmem>>, vector<1x1x32xf32>
    %186 = vector.shape_cast %185 : vector<1x1x32xf32> to vector<1x32xf32>
    %c1_219 = arith.constant 1 : index
    %c1_220 = arith.constant 1 : index
    %c0_221 = arith.constant 0 : index
    %187 = vector.load %arg13[%c1_219, %c1_220, %c0_221] : memref<4x4x512xf32, #tpu.memory_space<vmem>>, vector<1x1x32xf32>
    %188 = vector.shape_cast %187 : vector<1x1x32xf32> to vector<1x32xf32>
    %189 = vector.shape_cast %186 : vector<1x32xf32> to vector<1x1x32xf32>
    tpu.vector_store %arg13[%c1_219, %c1_220, %c0_221], %189 {strides = array<i32>} : memref<4x4x512xf32, #tpu.memory_space<vmem>>, vector<1x1x32xf32>,
    %c2_222 = arith.constant 2 : index
    %c4_223 = arith.constant 4 : index
    %c0_224 = arith.constant 0 : index
    %190 = vector.load %arg12[%c2_222, %c4_223, %c0_224] : memref<10x10x32xf32, #tpu.memory_space<vmem>>, vector<1x1x32xf32>
    %191 = vector.shape_cast %190 : vector<1x1x32xf32> to vector<1x32xf32>
    %c2_225 = arith.constant 2 : index
    %c1_226 = arith.constant 1 : index
    %c0_227 = arith.constant 0 : index
    %192 = vector.load %arg13[%c2_225, %c1_226, %c0_227] : memref<4x4x512xf32, #tpu.memory_space<vmem>>, vector<1x1x32xf32>
    %193 = vector.shape_cast %192 : vector<1x1x32xf32> to vector<1x32xf32>
    %194 = vector.shape_cast %191 : vector<1x32xf32> to vector<1x1x32xf32>
    tpu.vector_store %arg13[%c2_225, %c1_226, %c0_227], %194 {strides = array<i32>} : memref<4x4x512xf32, #tpu.memory_space<vmem>>, vector<1x1x32xf32>,
    %c2_228 = arith.constant 2 : index
    %c6_229 = arith.constant 6 : index
    %c0_230 = arith.constant 0 : index
    %195 = vector.load %arg12[%c2_228, %c6_229, %c0_230] : memref<10x10x32xf32, #tpu.memory_space<vmem>>, vector<1x1x32xf32>
    %196 = vector.shape_cast %195 : vector<1x1x32xf32> to vector<1x32xf32>
    %c3_231 = arith.constant 3 : index
    %c1_232 = arith.constant 1 : index
    %c0_233 = arith.constant 0 : index
    %197 = vector.load %arg13[%c3_231, %c1_232, %c0_233] : memref<4x4x512xf32, #tpu.memory_space<vmem>>, vector<1x1x32xf32>
    %198 = vector.shape_cast %197 : vector<1x1x32xf32> to vector<1x32xf32>
    %199 = vector.shape_cast %196 : vector<1x32xf32> to vector<1x1x32xf32>
    tpu.vector_store %arg13[%c3_231, %c1_232, %c0_233], %199 {strides = array<i32>} : memref<4x4x512xf32, #tpu.memory_space<vmem>>, vector<1x1x32xf32>,
    %c4_234 = arith.constant 4 : index
    %c0_235 = arith.constant 0 : index
    %c0_236 = arith.constant 0 : index
    %200 = vector.load %arg12[%c4_234, %c0_235, %c0_236] : memref<10x10x32xf32, #tpu.memory_space<vmem>>, vector<1x1x32xf32>
    %201 = vector.shape_cast %200 : vector<1x1x32xf32> to vector<1x32xf32>
    %c0_237 = arith.constant 0 : index
    %c2_238 = arith.constant 2 : index
    %c0_239 = arith.constant 0 : index
    %202 = vector.load %arg13[%c0_237, %c2_238, %c0_239] : memref<4x4x512xf32, #tpu.memory_space<vmem>>, vector<1x1x32xf32>
    %203 = vector.shape_cast %202 : vector<1x1x32xf32> to vector<1x32xf32>
    %204 = vector.shape_cast %201 : vector<1x32xf32> to vector<1x1x32xf32>
    tpu.vector_store %arg13[%c0_237, %c2_238, %c0_239], %204 {strides = array<i32>} : memref<4x4x512xf32, #tpu.memory_space<vmem>>, vector<1x1x32xf32>,
    %c4_240 = arith.constant 4 : index
    %c2_241 = arith.constant 2 : index
    %c0_242 = arith.constant 0 : index
    %205 = vector.load %arg12[%c4_240, %c2_241, %c0_242] : memref<10x10x32xf32, #tpu.memory_space<vmem>>, vector<1x1x32xf32>
    %206 = vector.shape_cast %205 : vector<1x1x32xf32> to vector<1x32xf32>
    %c1_243 = arith.constant 1 : index
    %c2_244 = arith.constant 2 : index
    %c0_245 = arith.constant 0 : index
    %207 = vector.load %arg13[%c1_243, %c2_244, %c0_245] : memref<4x4x512xf32, #tpu.memory_space<vmem>>, vector<1x1x32xf32>
    %208 = vector.shape_cast %207 : vector<1x1x32xf32> to vector<1x32xf32>
    %209 = vector.shape_cast %206 : vector<1x32xf32> to vector<1x1x32xf32>
    tpu.vector_store %arg13[%c1_243, %c2_244, %c0_245], %209 {strides = array<i32>} : memref<4x4x512xf32, #tpu.memory_space<vmem>>, vector<1x1x32xf32>,
    %c4_246 = arith.constant 4 : index
    %c4_247 = arith.constant 4 : index
    %c0_248 = arith.constant 0 : index
    %210 = vector.load %arg12[%c4_246, %c4_247, %c0_248] : memref<10x10x32xf32, #tpu.memory_space<vmem>>, vector<1x1x32xf32>
    %211 = vector.shape_cast %210 : vector<1x1x32xf32> to vector<1x32xf32>
    %c2_249 = arith.constant 2 : index
    %c2_250 = arith.constant 2 : index
    %c0_251 = arith.constant 0 : index
    %212 = vector.load %arg13[%c2_249, %c2_250, %c0_251] : memref<4x4x512xf32, #tpu.memory_space<vmem>>, vector<1x1x32xf32>
    %213 = vector.shape_cast %212 : vector<1x1x32xf32> to vector<1x32xf32>
    %214 = vector.shape_cast %211 : vector<1x32xf32> to vector<1x1x32xf32>
    tpu.vector_store %arg13[%c2_249, %c2_250, %c0_251], %214 {strides = array<i32>} : memref<4x4x512xf32, #tpu.memory_space<vmem>>, vector<1x1x32xf32>,
    %c4_252 = arith.constant 4 : index
    %c6_253 = arith.constant 6 : index
    %c0_254 = arith.constant 0 : index
    %215 = vector.load %arg12[%c4_252, %c6_253, %c0_254] : memref<10x10x32xf32, #tpu.memory_space<vmem>>, vector<1x1x32xf32>
    %216 = vector.shape_cast %215 : vector<1x1x32xf32> to vector<1x32xf32>
    %c3_255 = arith.constant 3 : index
    %c2_256 = arith.constant 2 : index
    %c0_257 = arith.constant 0 : index
    %217 = vector.load %arg13[%c3_255, %c2_256, %c0_257] : memref<4x4x512xf32, #tpu.memory_space<vmem>>, vector<1x1x32xf32>
    %218 = vector.shape_cast %217 : vector<1x1x32xf32> to vector<1x32xf32>
    %219 = vector.shape_cast %216 : vector<1x32xf32> to vector<1x1x32xf32>
    tpu.vector_store %arg13[%c3_255, %c2_256, %c0_257], %219 {strides = array<i32>} : memref<4x4x512xf32, #tpu.memory_space<vmem>>, vector<1x1x32xf32>,
    %c6_258 = arith.constant 6 : index
    %c0_259 = arith.constant 0 : index
    %c0_260 = arith.constant 0 : index
    %220 = vector.load %arg12[%c6_258, %c0_259, %c0_260] : memref<10x10x32xf32, #tpu.memory_space<vmem>>, vector<1x1x32xf32>
    %221 = vector.shape_cast %220 : vector<1x1x32xf32> to vector<1x32xf32>
    %c0_261 = arith.constant 0 : index
    %c3_262 = arith.constant 3 : index
    %c0_263 = arith.constant 0 : index
    %222 = vector.load %arg13[%c0_261, %c3_262, %c0_263] : memref<4x4x512xf32, #tpu.memory_space<vmem>>, vector<1x1x32xf32>
    %223 = vector.shape_cast %222 : vector<1x1x32xf32> to vector<1x32xf32>
    %224 = vector.shape_cast %221 : vector<1x32xf32> to vector<1x1x32xf32>
    tpu.vector_store %arg13[%c0_261, %c3_262, %c0_263], %224 {strides = array<i32>} : memref<4x4x512xf32, #tpu.memory_space<vmem>>, vector<1x1x32xf32>,
    %c6_264 = arith.constant 6 : index
    %c2_265 = arith.constant 2 : index
    %c0_266 = arith.constant 0 : index
    %225 = vector.load %arg12[%c6_264, %c2_265, %c0_266] : memref<10x10x32xf32, #tpu.memory_space<vmem>>, vector<1x1x32xf32>
    %226 = vector.shape_cast %225 : vector<1x1x32xf32> to vector<1x32xf32>
    %c1_267 = arith.constant 1 : index
    %c3_268 = arith.constant 3 : index
    %c0_269 = arith.constant 0 : index
    %227 = vector.load %arg13[%c1_267, %c3_268, %c0_269] : memref<4x4x512xf32, #tpu.memory_space<vmem>>, vector<1x1x32xf32>
    %228 = vector.shape_cast %227 : vector<1x1x32xf32> to vector<1x32xf32>
    %229 = vector.shape_cast %226 : vector<1x32xf32> to vector<1x1x32xf32>
    tpu.vector_store %arg13[%c1_267, %c3_268, %c0_269], %229 {strides = array<i32>} : memref<4x4x512xf32, #tpu.memory_space<vmem>>, vector<1x1x32xf32>,
    %c6_270 = arith.constant 6 : index
    %c4_271 = arith.constant 4 : index
    %c0_272 = arith.constant 0 : index
    %230 = vector.load %arg12[%c6_270, %c4_271, %c0_272] : memref<10x10x32xf32, #tpu.memory_space<vmem>>, vector<1x1x32xf32>
    %231 = vector.shape_cast %230 : vector<1x1x32xf32> to vector<1x32xf32>
    %c2_273 = arith.constant 2 : index
    %c3_274 = arith.constant 3 : index
    %c0_275 = arith.constant 0 : index
    %232 = vector.load %arg13[%c2_273, %c3_274, %c0_275] : memref<4x4x512xf32, #tpu.memory_space<vmem>>, vector<1x1x32xf32>
    %233 = vector.shape_cast %232 : vector<1x1x32xf32> to vector<1x32xf32>
    %234 = vector.shape_cast %231 : vector<1x32xf32> to vector<1x1x32xf32>
    tpu.vector_store %arg13[%c2_273, %c3_274, %c0_275], %234 {strides = array<i32>} : memref<4x4x512xf32, #tpu.memory_space<vmem>>, vector<1x1x32xf32>,
    %c6_276 = arith.constant 6 : index
    %c6_277 = arith.constant 6 : index
    %c0_278 = arith.constant 0 : index
    %235 = vector.load %arg12[%c6_276, %c6_277, %c0_278] : memref<10x10x32xf32, #tpu.memory_space<vmem>>, vector<1x1x32xf32>
    %236 = vector.shape_cast %235 : vector<1x1x32xf32> to vector<1x32xf32>
    %c3_279 = arith.constant 3 : index
    %c3_280 = arith.constant 3 : index
    %c0_281 = arith.constant 0 : index
    %237 = vector.load %arg13[%c3_279, %c3_280, %c0_281] : memref<4x4x512xf32, #tpu.memory_space<vmem>>, vector<1x1x32xf32>
    %238 = vector.shape_cast %237 : vector<1x1x32xf32> to vector<1x32xf32>
    %239 = vector.shape_cast %236 : vector<1x32xf32> to vector<1x1x32xf32>
    tpu.vector_store %arg13[%c3_279, %c3_280, %c0_281], %239 {strides = array<i32>} : memref<4x4x512xf32, #tpu.memory_space<vmem>>, vector<1x1x32xf32>,
    %c0_282 = arith.constant 0 : index
    %c1_283 = arith.constant 1 : index
    %c0_284 = arith.constant 0 : index
    %240 = vector.load %arg12[%c0_282, %c1_283, %c0_284] : memref<10x10x32xf32, #tpu.memory_space<vmem>>, vector<1x1x32xf32>
    %241 = vector.shape_cast %240 : vector<1x1x32xf32> to vector<1x32xf32>
    %c0_285 = arith.constant 0 : index
    %c0_286 = arith.constant 0 : index
    %c32_287 = arith.constant 32 : index
    %242 = vector.load %arg13[%c0_285, %c0_286, %c32_287] : memref<4x4x512xf32, #tpu.memory_space<vmem>>, vector<1x1x32xf32>
    %243 = vector.shape_cast %242 : vector<1x1x32xf32> to vector<1x32xf32>
    %244 = vector.shape_cast %241 : vector<1x32xf32> to vector<1x1x32xf32>
    tpu.vector_store %arg13[%c0_285, %c0_286, %c32_287], %244 {strides = array<i32>} : memref<4x4x512xf32, #tpu.memory_space<vmem>>, vector<1x1x32xf32>,
    %c0_288 = arith.constant 0 : index
    %c3_289 = arith.constant 3 : index
    %c0_290 = arith.constant 0 : index
    %245 = vector.load %arg12[%c0_288, %c3_289, %c0_290] : memref<10x10x32xf32, #tpu.memory_space<vmem>>, vector<1x1x32xf32>
    %246 = vector.shape_cast %245 : vector<1x1x32xf32> to vector<1x32xf32>
    %c1_291 = arith.constant 1 : index
    %c0_292 = arith.constant 0 : index
    %c32_293 = arith.constant 32 : index
    %247 = vector.load %arg13[%c1_291, %c0_292, %c32_293] : memref<4x4x512xf32, #tpu.memory_space<vmem>>, vector<1x1x32xf32>
    %248 = vector.shape_cast %247 : vector<1x1x32xf32> to vector<1x32xf32>
    %249 = vector.shape_cast %246 : vector<1x32xf32> to vector<1x1x32xf32>
    tpu.vector_store %arg13[%c1_291, %c0_292, %c32_293], %249 {strides = array<i32>} : memref<4x4x512xf32, #tpu.memory_space<vmem>>, vector<1x1x32xf32>,
    %c0_294 = arith.constant 0 : index
    %c5_295 = arith.constant 5 : index
    %c0_296 = arith.constant 0 : index
    %250 = vector.load %arg12[%c0_294, %c5_295, %c0_296] : memref<10x10x32xf32, #tpu.memory_space<vmem>>, vector<1x1x32xf32>
    %251 = vector.shape_cast %250 : vector<1x1x32xf32> to vector<1x32xf32>
    %c2_297 = arith.constant 2 : index
    %c0_298 = arith.constant 0 : index
    %c32_299 = arith.constant 32 : index
    %252 = vector.load %arg13[%c2_297, %c0_298, %c32_299] : memref<4x4x512xf32, #tpu.memory_space<vmem>>, vector<1x1x32xf32>
    %253 = vector.shape_cast %252 : vector<1x1x32xf32> to vector<1x32xf32>
    %254 = vector.shape_cast %251 : vector<1x32xf32> to vector<1x1x32xf32>
    tpu.vector_store %arg13[%c2_297, %c0_298, %c32_299], %254 {strides = array<i32>} : memref<4x4x512xf32, #tpu.memory_space<vmem>>, vector<1x1x32xf32>,
    %c0_300 = arith.constant 0 : index
    %c7_301 = arith.constant 7 : index
    %c0_302 = arith.constant 0 : index
    %255 = vector.load %arg12[%c0_300, %c7_301, %c0_302] : memref<10x10x32xf32, #tpu.memory_space<vmem>>, vector<1x1x32xf32>
    %256 = vector.shape_cast %255 : vector<1x1x32xf32> to vector<1x32xf32>
    %c3_303 = arith.constant 3 : index
    %c0_304 = arith.constant 0 : index
    %c32_305 = arith.constant 32 : index
    %257 = vector.load %arg13[%c3_303, %c0_304, %c32_305] : memref<4x4x512xf32, #tpu.memory_space<vmem>>, vector<1x1x32xf32>
    %258 = vector.shape_cast %257 : vector<1x1x32xf32> to vector<1x32xf32>
    %259 = vector.shape_cast %256 : vector<1x32xf32> to vector<1x1x32xf32>
    tpu.vector_store %arg13[%c3_303, %c0_304, %c32_305], %259 {strides = array<i32>} : memref<4x4x512xf32, #tpu.memory_space<vmem>>, vector<1x1x32xf32>,
    %c2_306 = arith.constant 2 : index
    %c1_307 = arith.constant 1 : index
    %c0_308 = arith.constant 0 : index
    %260 = vector.load %arg12[%c2_306, %c1_307, %c0_308] : memref<10x10x32xf32, #tpu.memory_space<vmem>>, vector<1x1x32xf32>
    %261 = vector.shape_cast %260 : vector<1x1x32xf32> to vector<1x32xf32>
    %c0_309 = arith.constant 0 : index
    %c1_310 = arith.constant 1 : index
    %c32_311 = arith.constant 32 : index
    %262 = vector.load %arg13[%c0_309, %c1_310, %c32_311] : memref<4x4x512xf32, #tpu.memory_space<vmem>>, vector<1x1x32xf32>
    %263 = vector.shape_cast %262 : vector<1x1x32xf32> to vector<1x32xf32>
    %264 = vector.shape_cast %261 : vector<1x32xf32> to vector<1x1x32xf32>
    tpu.vector_store %arg13[%c0_309, %c1_310, %c32_311], %264 {strides = array<i32>} : memref<4x4x512xf32, #tpu.memory_space<vmem>>, vector<1x1x32xf32>,
    %c2_312 = arith.constant 2 : index
    %c3_313 = arith.constant 3 : index
    %c0_314 = arith.constant 0 : index
    %265 = vector.load %arg12[%c2_312, %c3_313, %c0_314] : memref<10x10x32xf32, #tpu.memory_space<vmem>>, vector<1x1x32xf32>
    %266 = vector.shape_cast %265 : vector<1x1x32xf32> to vector<1x32xf32>
    %c1_315 = arith.constant 1 : index
    %c1_316 = arith.constant 1 : index
    %c32_317 = arith.constant 32 : index
    %267 = vector.load %arg13[%c1_315, %c1_316, %c32_317] : memref<4x4x512xf32, #tpu.memory_space<vmem>>, vector<1x1x32xf32>
    %268 = vector.shape_cast %267 : vector<1x1x32xf32> to vector<1x32xf32>
    %269 = vector.shape_cast %266 : vector<1x32xf32> to vector<1x1x32xf32>
    tpu.vector_store %arg13[%c1_315, %c1_316, %c32_317], %269 {strides = array<i32>} : memref<4x4x512xf32, #tpu.memory_space<vmem>>, vector<1x1x32xf32>,
    %c2_318 = arith.constant 2 : index
    %c5_319 = arith.constant 5 : index
    %c0_320 = arith.constant 0 : index
    %270 = vector.load %arg12[%c2_318, %c5_319, %c0_320] : memref<10x10x32xf32, #tpu.memory_space<vmem>>, vector<1x1x32xf32>
    %271 = vector.shape_cast %270 : vector<1x1x32xf32> to vector<1x32xf32>
    %c2_321 = arith.constant 2 : index
    %c1_322 = arith.constant 1 : index
    %c32_323 = arith.constant 32 : index
    %272 = vector.load %arg13[%c2_321, %c1_322, %c32_323] : memref<4x4x512xf32, #tpu.memory_space<vmem>>, vector<1x1x32xf32>
    %273 = vector.shape_cast %272 : vector<1x1x32xf32> to vector<1x32xf32>
    %274 = vector.shape_cast %271 : vector<1x32xf32> to vector<1x1x32xf32>
    tpu.vector_store %arg13[%c2_321, %c1_322, %c32_323], %274 {strides = array<i32>} : memref<4x4x512xf32, #tpu.memory_space<vmem>>, vector<1x1x32xf32>,
    %c2_324 = arith.constant 2 : index
    %c7_325 = arith.constant 7 : index
    %c0_326 = arith.constant 0 : index
    %275 = vector.load %arg12[%c2_324, %c7_325, %c0_326] : memref<10x10x32xf32, #tpu.memory_space<vmem>>, vector<1x1x32xf32>
    %276 = vector.shape_cast %275 : vector<1x1x32xf32> to vector<1x32xf32>
    %c3_327 = arith.constant 3 : index
    %c1_328 = arith.constant 1 : index
    %c32_329 = arith.constant 32 : index
    %277 = vector.load %arg13[%c3_327, %c1_328, %c32_329] : memref<4x4x512xf32, #tpu.memory_space<vmem>>, vector<1x1x32xf32>
    %278 = vector.shape_cast %277 : vector<1x1x32xf32> to vector<1x32xf32>
    %279 = vector.shape_cast %276 : vector<1x32xf32> to vector<1x1x32xf32>
    tpu.vector_store %arg13[%c3_327, %c1_328, %c32_329], %279 {strides = array<i32>} : memref<4x4x512xf32, #tpu.memory_space<vmem>>, vector<1x1x32xf32>,
    %c4_330 = arith.constant 4 : index
    %c1_331 = arith.constant 1 : index
    %c0_332 = arith.constant 0 : index
    %280 = vector.load %arg12[%c4_330, %c1_331, %c0_332] : memref<10x10x32xf32, #tpu.memory_space<vmem>>, vector<1x1x32xf32>
    %281 = vector.shape_cast %280 : vector<1x1x32xf32> to vector<1x32xf32>
    %c0_333 = arith.constant 0 : index
    %c2_334 = arith.constant 2 : index
    %c32_335 = arith.constant 32 : index
    %282 = vector.load %arg13[%c0_333, %c2_334, %c32_335] : memref<4x4x512xf32, #tpu.memory_space<vmem>>, vector<1x1x32xf32>
    %283 = vector.shape_cast %282 : vector<1x1x32xf32> to vector<1x32xf32>
    %284 = vector.shape_cast %281 : vector<1x32xf32> to vector<1x1x32xf32>
    tpu.vector_store %arg13[%c0_333, %c2_334, %c32_335], %284 {strides = array<i32>} : memref<4x4x512xf32, #tpu.memory_space<vmem>>, vector<1x1x32xf32>,
    %c4_336 = arith.constant 4 : index
    %c3_337 = arith.constant 3 : index
    %c0_338 = arith.constant 0 : index
    %285 = vector.load %arg12[%c4_336, %c3_337, %c0_338] : memref<10x10x32xf32, #tpu.memory_space<vmem>>, vector<1x1x32xf32>
    %286 = vector.shape_cast %285 : vector<1x1x32xf32> to vector<1x32xf32>
    %c1_339 = arith.constant 1 : index
    %c2_340 = arith.constant 2 : index
    %c32_341 = arith.constant 32 : index
    %287 = vector.load %arg13[%c1_339, %c2_340, %c32_341] : memref<4x4x512xf32, #tpu.memory_space<vmem>>, vector<1x1x32xf32>
    %288 = vector.shape_cast %287 : vector<1x1x32xf32> to vector<1x32xf32>
    %289 = vector.shape_cast %286 : vector<1x32xf32> to vector<1x1x32xf32>
    tpu.vector_store %arg13[%c1_339, %c2_340, %c32_341], %289 {strides = array<i32>} : memref<4x4x512xf32, #tpu.memory_space<vmem>>, vector<1x1x32xf32>,
    %c4_342 = arith.constant 4 : index
    %c5_343 = arith.constant 5 : index
    %c0_344 = arith.constant 0 : index
    %290 = vector.load %arg12[%c4_342, %c5_343, %c0_344] : memref<10x10x32xf32, #tpu.memory_space<vmem>>, vector<1x1x32xf32>
    %291 = vector.shape_cast %290 : vector<1x1x32xf32> to vector<1x32xf32>
    %c2_345 = arith.constant 2 : index
    %c2_346 = arith.constant 2 : index
    %c32_347 = arith.constant 32 : index
    %292 = vector.load %arg13[%c2_345, %c2_346, %c32_347] : memref<4x4x512xf32, #tpu.memory_space<vmem>>, vector<1x1x32xf32>
    %293 = vector.shape_cast %292 : vector<1x1x32xf32> to vector<1x32xf32>
    %294 = vector.shape_cast %291 : vector<1x32xf32> to vector<1x1x32xf32>
    tpu.vector_store %arg13[%c2_345, %c2_346, %c32_347], %294 {strides = array<i32>} : memref<4x4x512xf32, #tpu.memory_space<vmem>>, vector<1x1x32xf32>,
    %c4_348 = arith.constant 4 : index
    %c7_349 = arith.constant 7 : index
    %c0_350 = arith.constant 0 : index
    %295 = vector.load %arg12[%c4_348, %c7_349, %c0_350] : memref<10x10x32xf32, #tpu.memory_space<vmem>>, vector<1x1x32xf32>
    %296 = vector.shape_cast %295 : vector<1x1x32xf32> to vector<1x32xf32>
    %c3_351 = arith.constant 3 : index
    %c2_352 = arith.constant 2 : index
    %c32_353 = arith.constant 32 : index
    %297 = vector.load %arg13[%c3_351, %c2_352, %c32_353] : memref<4x4x512xf32, #tpu.memory_space<vmem>>, vector<1x1x32xf32>
    %298 = vector.shape_cast %297 : vector<1x1x32xf32> to vector<1x32xf32>
    %299 = vector.shape_cast %296 : vector<1x32xf32> to vector<1x1x32xf32>
    tpu.vector_store %arg13[%c3_351, %c2_352, %c32_353], %299 {strides = array<i32>} : memref<4x4x512xf32, #tpu.memory_space<vmem>>, vector<1x1x32xf32>,
    %c6_354 = arith.constant 6 : index
    %c1_355 = arith.constant 1 : index
    %c0_356 = arith.constant 0 : index
    %300 = vector.load %arg12[%c6_354, %c1_355, %c0_356] : memref<10x10x32xf32, #tpu.memory_space<vmem>>, vector<1x1x32xf32>
    %301 = vector.shape_cast %300 : vector<1x1x32xf32> to vector<1x32xf32>
    %c0_357 = arith.constant 0 : index
    %c3_358 = arith.constant 3 : index
    %c32_359 = arith.constant 32 : index
    %302 = vector.load %arg13[%c0_357, %c3_358, %c32_359] : memref<4x4x512xf32, #tpu.memory_space<vmem>>, vector<1x1x32xf32>
    %303 = vector.shape_cast %302 : vector<1x1x32xf32> to vector<1x32xf32>
    %304 = vector.shape_cast %301 : vector<1x32xf32> to vector<1x1x32xf32>
    tpu.vector_store %arg13[%c0_357, %c3_358, %c32_359], %304 {strides = array<i32>} : memref<4x4x512xf32, #tpu.memory_space<vmem>>, vector<1x1x32xf32>,
    %c6_360 = arith.constant 6 : index
    %c3_361 = arith.constant 3 : index
    %c0_362 = arith.constant 0 : index
    %305 = vector.load %arg12[%c6_360, %c3_361, %c0_362] : memref<10x10x32xf32, #tpu.memory_space<vmem>>, vector<1x1x32xf32>
    %306 = vector.shape_cast %305 : vector<1x1x32xf32> to vector<1x32xf32>
    %c1_363 = arith.constant 1 : index
    %c3_364 = arith.constant 3 : index
    %c32_365 = arith.constant 32 : index
    %307 = vector.load %arg13[%c1_363, %c3_364, %c32_365] : memref<4x4x512xf32, #tpu.memory_space<vmem>>, vector<1x1x32xf32>
    %308 = vector.shape_cast %307 : vector<1x1x32xf32> to vector<1x32xf32>
    %309 = vector.shape_cast %306 : vector<1x32xf32> to vector<1x1x32xf32>
    tpu.vector_store %arg13[%c1_363, %c3_364, %c32_365], %309 {strides = array<i32>} : memref<4x4x512xf32, #tpu.memory_space<vmem>>, vector<1x1x32xf32>,
    %c6_366 = arith.constant 6 : index
    %c5_367 = arith.constant 5 : index
    %c0_368 = arith.constant 0 : index
    %310 = vector.load %arg12[%c6_366, %c5_367, %c0_368] : memref<10x10x32xf32, #tpu.memory_space<vmem>>, vector<1x1x32xf32>
    %311 = vector.shape_cast %310 : vector<1x1x32xf32> to vector<1x32xf32>
    %c2_369 = arith.constant 2 : index
    %c3_370 = arith.constant 3 : index
    %c32_371 = arith.constant 32 : index
    %312 = vector.load %arg13[%c2_369, %c3_370, %c32_371] : memref<4x4x512xf32, #tpu.memory_space<vmem>>, vector<1x1x32xf32>
    %313 = vector.shape_cast %312 : vector<1x1x32xf32> to vector<1x32xf32>
    %314 = vector.shape_cast %311 : vector<1x32xf32> to vector<1x1x32xf32>
    tpu.vector_store %arg13[%c2_369, %c3_370, %c32_371], %314 {strides = array<i32>} : memref<4x4x512xf32, #tpu.memory_space<vmem>>, vector<1x1x32xf32>,
    %c6_372 = arith.constant 6 : index
    %c7_373 = arith.constant 7 : index
    %c0_374 = arith.constant 0 : index
    %315 = vector.load %arg12[%c6_372, %c7_373, %c0_374] : memref<10x10x32xf32, #tpu.memory_space<vmem>>, vector<1x1x32xf32>
    %316 = vector.shape_cast %315 : vector<1x1x32xf32> to vector<1x32xf32>
    %c3_375 = arith.constant 3 : index
    %c3_376 = arith.constant 3 : index
    %c32_377 = arith.constant 32 : index
    %317 = vector.load %arg13[%c3_375, %c3_376, %c32_377] : memref<4x4x512xf32, #tpu.memory_space<vmem>>, vector<1x1x32xf32>
    %318 = vector.shape_cast %317 : vector<1x1x32xf32> to vector<1x32xf32>
    %319 = vector.shape_cast %316 : vector<1x32xf32> to vector<1x1x32xf32>
    tpu.vector_store %arg13[%c3_375, %c3_376, %c32_377], %319 {strides = array<i32>} : memref<4x4x512xf32, #tpu.memory_space<vmem>>, vector<1x1x32xf32>,
    %c0_378 = arith.constant 0 : index
    %c2_379 = arith.constant 2 : index
    %c0_380 = arith.constant 0 : index
    %320 = vector.load %arg12[%c0_378, %c2_379, %c0_380] : memref<10x10x32xf32, #tpu.memory_space<vmem>>, vector<1x1x32xf32>
    %321 = vector.shape_cast %320 : vector<1x1x32xf32> to vector<1x32xf32>
    %c0_381 = arith.constant 0 : index
    %c0_382 = arith.constant 0 : index
    %c64_383 = arith.constant 64 : index
    %322 = vector.load %arg13[%c0_381, %c0_382, %c64_383] : memref<4x4x512xf32, #tpu.memory_space<vmem>>, vector<1x1x32xf32>
    %323 = vector.shape_cast %322 : vector<1x1x32xf32> to vector<1x32xf32>
    %324 = vector.shape_cast %321 : vector<1x32xf32> to vector<1x1x32xf32>
    tpu.vector_store %arg13[%c0_381, %c0_382, %c64_383], %324 {strides = array<i32>} : memref<4x4x512xf32, #tpu.memory_space<vmem>>, vector<1x1x32xf32>,
    %c0_384 = arith.constant 0 : index
    %c4_385 = arith.constant 4 : index
    %c0_386 = arith.constant 0 : index
    %325 = vector.load %arg12[%c0_384, %c4_385, %c0_386] : memref<10x10x32xf32, #tpu.memory_space<vmem>>, vector<1x1x32xf32>
    %326 = vector.shape_cast %325 : vector<1x1x32xf32> to vector<1x32xf32>
    %c1_387 = arith.constant 1 : index
    %c0_388 = arith.constant 0 : index
    %c64_389 = arith.constant 64 : index
    %327 = vector.load %arg13[%c1_387, %c0_388, %c64_389] : memref<4x4x512xf32, #tpu.memory_space<vmem>>, vector<1x1x32xf32>
    %328 = vector.shape_cast %327 : vector<1x1x32xf32> to vector<1x32xf32>
    %329 = vector.shape_cast %326 : vector<1x32xf32> to vector<1x1x32xf32>
    tpu.vector_store %arg13[%c1_387, %c0_388, %c64_389], %329 {strides = array<i32>} : memref<4x4x512xf32, #tpu.memory_space<vmem>>, vector<1x1x32xf32>,
    %c0_390 = arith.constant 0 : index
    %c6_391 = arith.constant 6 : index
    %c0_392 = arith.constant 0 : index
    %330 = vector.load %arg12[%c0_390, %c6_391, %c0_392] : memref<10x10x32xf32, #tpu.memory_space<vmem>>, vector<1x1x32xf32>
    %331 = vector.shape_cast %330 : vector<1x1x32xf32> to vector<1x32xf32>
    %c2_393 = arith.constant 2 : index
    %c0_394 = arith.constant 0 : index
    %c64_395 = arith.constant 64 : index
    %332 = vector.load %arg13[%c2_393, %c0_394, %c64_395] : memref<4x4x512xf32, #tpu.memory_space<vmem>>, vector<1x1x32xf32>
    %333 = vector.shape_cast %332 : vector<1x1x32xf32> to vector<1x32xf32>
    %334 = vector.shape_cast %331 : vector<1x32xf32> to vector<1x1x32xf32>
    tpu.vector_store %arg13[%c2_393, %c0_394, %c64_395], %334 {strides = array<i32>} : memref<4x4x512xf32, #tpu.memory_space<vmem>>, vector<1x1x32xf32>,
    %c0_396 = arith.constant 0 : index
    %c8_397 = arith.constant 8 : index
    %c0_398 = arith.constant 0 : index
    %335 = vector.load %arg12[%c0_396, %c8_397, %c0_398] : memref<10x10x32xf32, #tpu.memory_space<vmem>>, vector<1x1x32xf32>
    %336 = vector.shape_cast %335 : vector<1x1x32xf32> to vector<1x32xf32>
    %c3_399 = arith.constant 3 : index
    %c0_400 = arith.constant 0 : index
    %c64_401 = arith.constant 64 : index
    %337 = vector.load %arg13[%c3_399, %c0_400, %c64_401] : memref<4x4x512xf32, #tpu.memory_space<vmem>>, vector<1x1x32xf32>
    %338 = vector.shape_cast %337 : vector<1x1x32xf32> to vector<1x32xf32>
    %339 = vector.shape_cast %336 : vector<1x32xf32> to vector<1x1x32xf32>
    tpu.vector_store %arg13[%c3_399, %c0_400, %c64_401], %339 {strides = array<i32>} : memref<4x4x512xf32, #tpu.memory_space<vmem>>, vector<1x1x32xf32>,
    %c2_402 = arith.constant 2 : index
    %c2_403 = arith.constant 2 : index
    %c0_404 = arith.constant 0 : index
    %340 = vector.load %arg12[%c2_402, %c2_403, %c0_404] : memref<10x10x32xf32, #tpu.memory_space<vmem>>, vector<1x1x32xf32>
    %341 = vector.shape_cast %340 : vector<1x1x32xf32> to vector<1x32xf32>
    %c0_405 = arith.constant 0 : index
    %c1_406 = arith.constant 1 : index
    %c64_407 = arith.constant 64 : index
    %342 = vector.load %arg13[%c0_405, %c1_406, %c64_407] : memref<4x4x512xf32, #tpu.memory_space<vmem>>, vector<1x1x32xf32>
    %343 = vector.shape_cast %342 : vector<1x1x32xf32> to vector<1x32xf32>
    %344 = vector.shape_cast %341 : vector<1x32xf32> to vector<1x1x32xf32>
    tpu.vector_store %arg13[%c0_405, %c1_406, %c64_407], %344 {strides = array<i32>} : memref<4x4x512xf32, #tpu.memory_space<vmem>>, vector<1x1x32xf32>,
    %c2_408 = arith.constant 2 : index
    %c4_409 = arith.constant 4 : index
    %c0_410 = arith.constant 0 : index
    %345 = vector.load %arg12[%c2_408, %c4_409, %c0_410] : memref<10x10x32xf32, #tpu.memory_space<vmem>>, vector<1x1x32xf32>
    %346 = vector.shape_cast %345 : vector<1x1x32xf32> to vector<1x32xf32>
    %c1_411 = arith.constant 1 : index
    %c1_412 = arith.constant 1 : index
    %c64_413 = arith.constant 64 : index
    %347 = vector.load %arg13[%c1_411, %c1_412, %c64_413] : memref<4x4x512xf32, #tpu.memory_space<vmem>>, vector<1x1x32xf32>
    %348 = vector.shape_cast %347 : vector<1x1x32xf32> to vector<1x32xf32>
    %349 = vector.shape_cast %346 : vector<1x32xf32> to vector<1x1x32xf32>
    tpu.vector_store %arg13[%c1_411, %c1_412, %c64_413], %349 {strides = array<i32>} : memref<4x4x512xf32, #tpu.memory_space<vmem>>, vector<1x1x32xf32>,
    %c2_414 = arith.constant 2 : index
    %c6_415 = arith.constant 6 : index
    %c0_416 = arith.constant 0 : index
    %350 = vector.load %arg12[%c2_414, %c6_415, %c0_416] : memref<10x10x32xf32, #tpu.memory_space<vmem>>, vector<1x1x32xf32>
    %351 = vector.shape_cast %350 : vector<1x1x32xf32> to vector<1x32xf32>
    %c2_417 = arith.constant 2 : index
    %c1_418 = arith.constant 1 : index
    %c64_419 = arith.constant 64 : index
    %352 = vector.load %arg13[%c2_417, %c1_418, %c64_419] : memref<4x4x512xf32, #tpu.memory_space<vmem>>, vector<1x1x32xf32>
    %353 = vector.shape_cast %352 : vector<1x1x32xf32> to vector<1x32xf32>
    %354 = vector.shape_cast %351 : vector<1x32xf32> to vector<1x1x32xf32>
    tpu.vector_store %arg13[%c2_417, %c1_418, %c64_419], %354 {strides = array<i32>} : memref<4x4x512xf32, #tpu.memory_space<vmem>>, vector<1x1x32xf32>,
    %c2_420 = arith.constant 2 : index
    %c8_421 = arith.constant 8 : index
    %c0_422 = arith.constant 0 : index
    %355 = vector.load %arg12[%c2_420, %c8_421, %c0_422] : memref<10x10x32xf32, #tpu.memory_space<vmem>>, vector<1x1x32xf32>
    %356 = vector.shape_cast %355 : vector<1x1x32xf32> to vector<1x32xf32>
    %c3_423 = arith.constant 3 : index
    %c1_424 = arith.constant 1 : index
    %c64_425 = arith.constant 64 : index
    %357 = vector.load %arg13[%c3_423, %c1_424, %c64_425] : memref<4x4x512xf32, #tpu.memory_space<vmem>>, vector<1x1x32xf32>
    %358 = vector.shape_cast %357 : vector<1x1x32xf32> to vector<1x32xf32>
    %359 = vector.shape_cast %356 : vector<1x32xf32> to vector<1x1x32xf32>
    tpu.vector_store %arg13[%c3_423, %c1_424, %c64_425], %359 {strides = array<i32>} : memref<4x4x512xf32, #tpu.memory_space<vmem>>, vector<1x1x32xf32>,
    %c4_426 = arith.constant 4 : index
    %c2_427 = arith.constant 2 : index
    %c0_428 = arith.constant 0 : index
    %360 = vector.load %arg12[%c4_426, %c2_427, %c0_428] : memref<10x10x32xf32, #tpu.memory_space<vmem>>, vector<1x1x32xf32>
    %361 = vector.shape_cast %360 : vector<1x1x32xf32> to vector<1x32xf32>
    %c0_429 = arith.constant 0 : index
    %c2_430 = arith.constant 2 : index
    %c64_431 = arith.constant 64 : index
    %362 = vector.load %arg13[%c0_429, %c2_430, %c64_431] : memref<4x4x512xf32, #tpu.memory_space<vmem>>, vector<1x1x32xf32>
    %363 = vector.shape_cast %362 : vector<1x1x32xf32> to vector<1x32xf32>
    %364 = vector.shape_cast %361 : vector<1x32xf32> to vector<1x1x32xf32>
    tpu.vector_store %arg13[%c0_429, %c2_430, %c64_431], %364 {strides = array<i32>} : memref<4x4x512xf32, #tpu.memory_space<vmem>>, vector<1x1x32xf32>,
    %c4_432 = arith.constant 4 : index
    %c4_433 = arith.constant 4 : index
    %c0_434 = arith.constant 0 : index
    %365 = vector.load %arg12[%c4_432, %c4_433, %c0_434] : memref<10x10x32xf32, #tpu.memory_space<vmem>>, vector<1x1x32xf32>
    %366 = vector.shape_cast %365 : vector<1x1x32xf32> to vector<1x32xf32>
    %c1_435 = arith.constant 1 : index
    %c2_436 = arith.constant 2 : index
    %c64_437 = arith.constant 64 : index
    %367 = vector.load %arg13[%c1_435, %c2_436, %c64_437] : memref<4x4x512xf32, #tpu.memory_space<vmem>>, vector<1x1x32xf32>
    %368 = vector.shape_cast %367 : vector<1x1x32xf32> to vector<1x32xf32>
    %369 = vector.shape_cast %366 : vector<1x32xf32> to vector<1x1x32xf32>
    tpu.vector_store %arg13[%c1_435, %c2_436, %c64_437], %369 {strides = array<i32>} : memref<4x4x512xf32, #tpu.memory_space<vmem>>, vector<1x1x32xf32>,
    %c4_438 = arith.constant 4 : index
    %c6_439 = arith.constant 6 : index
    %c0_440 = arith.constant 0 : index
    %370 = vector.load %arg12[%c4_438, %c6_439, %c0_440] : memref<10x10x32xf32, #tpu.memory_space<vmem>>, vector<1x1x32xf32>
    %371 = vector.shape_cast %370 : vector<1x1x32xf32> to vector<1x32xf32>
    %c2_441 = arith.constant 2 : index
    %c2_442 = arith.constant 2 : index
    %c64_443 = arith.constant 64 : index
    %372 = vector.load %arg13[%c2_441, %c2_442, %c64_443] : memref<4x4x512xf32, #tpu.memory_space<vmem>>, vector<1x1x32xf32>
    %373 = vector.shape_cast %372 : vector<1x1x32xf32> to vector<1x32xf32>
    %374 = vector.shape_cast %371 : vector<1x32xf32> to vector<1x1x32xf32>
    tpu.vector_store %arg13[%c2_441, %c2_442, %c64_443], %374 {strides = array<i32>} : memref<4x4x512xf32, #tpu.memory_space<vmem>>, vector<1x1x32xf32>,
    %c4_444 = arith.constant 4 : index
    %c8_445 = arith.constant 8 : index
    %c0_446 = arith.constant 0 : index
    %375 = vector.load %arg12[%c4_444, %c8_445, %c0_446] : memref<10x10x32xf32, #tpu.memory_space<vmem>>, vector<1x1x32xf32>
    %376 = vector.shape_cast %375 : vector<1x1x32xf32> to vector<1x32xf32>
    %c3_447 = arith.constant 3 : index
    %c2_448 = arith.constant 2 : index
    %c64_449 = arith.constant 64 : index
    %377 = vector.load %arg13[%c3_447, %c2_448, %c64_449] : memref<4x4x512xf32, #tpu.memory_space<vmem>>, vector<1x1x32xf32>
    %378 = vector.shape_cast %377 : vector<1x1x32xf32> to vector<1x32xf32>
    %379 = vector.shape_cast %376 : vector<1x32xf32> to vector<1x1x32xf32>
    tpu.vector_store %arg13[%c3_447, %c2_448, %c64_449], %379 {strides = array<i32>} : memref<4x4x512xf32, #tpu.memory_space<vmem>>, vector<1x1x32xf32>,
    %c6_450 = arith.constant 6 : index
    %c2_451 = arith.constant 2 : index
    %c0_452 = arith.constant 0 : index
    %380 = vector.load %arg12[%c6_450, %c2_451, %c0_452] : memref<10x10x32xf32, #tpu.memory_space<vmem>>, vector<1x1x32xf32>
    %381 = vector.shape_cast %380 : vector<1x1x32xf32> to vector<1x32xf32>
    %c0_453 = arith.constant 0 : index
    %c3_454 = arith.constant 3 : index
    %c64_455 = arith.constant 64 : index
    %382 = vector.load %arg13[%c0_453, %c3_454, %c64_455] : memref<4x4x512xf32, #tpu.memory_space<vmem>>, vector<1x1x32xf32>
    %383 = vector.shape_cast %382 : vector<1x1x32xf32> to vector<1x32xf32>
    %384 = vector.shape_cast %381 : vector<1x32xf32> to vector<1x1x32xf32>
    tpu.vector_store %arg13[%c0_453, %c3_454, %c64_455], %384 {strides = array<i32>} : memref<4x4x512xf32, #tpu.memory_space<vmem>>, vector<1x1x32xf32>,
    %c6_456 = arith.constant 6 : index
    %c4_457 = arith.constant 4 : index
    %c0_458 = arith.constant 0 : index
    %385 = vector.load %arg12[%c6_456, %c4_457, %c0_458] : memref<10x10x32xf32, #tpu.memory_space<vmem>>, vector<1x1x32xf32>
    %386 = vector.shape_cast %385 : vector<1x1x32xf32> to vector<1x32xf32>
    %c1_459 = arith.constant 1 : index
    %c3_460 = arith.constant 3 : index
    %c64_461 = arith.constant 64 : index
    %387 = vector.load %arg13[%c1_459, %c3_460, %c64_461] : memref<4x4x512xf32, #tpu.memory_space<vmem>>, vector<1x1x32xf32>
    %388 = vector.shape_cast %387 : vector<1x1x32xf32> to vector<1x32xf32>
    %389 = vector.shape_cast %386 : vector<1x32xf32> to vector<1x1x32xf32>
    tpu.vector_store %arg13[%c1_459, %c3_460, %c64_461], %389 {strides = array<i32>} : memref<4x4x512xf32, #tpu.memory_space<vmem>>, vector<1x1x32xf32>,
    %c6_462 = arith.constant 6 : index
    %c6_463 = arith.constant 6 : index
    %c0_464 = arith.constant 0 : index
    %390 = vector.load %arg12[%c6_462, %c6_463, %c0_464] : memref<10x10x32xf32, #tpu.memory_space<vmem>>, vector<1x1x32xf32>
    %391 = vector.shape_cast %390 : vector<1x1x32xf32> to vector<1x32xf32>
    %c2_465 = arith.constant 2 : index
    %c3_466 = arith.constant 3 : index
    %c64_467 = arith.constant 64 : index
    %392 = vector.load %arg13[%c2_465, %c3_466, %c64_467] : memref<4x4x512xf32, #tpu.memory_space<vmem>>, vector<1x1x32xf32>
    %393 = vector.shape_cast %392 : vector<1x1x32xf32> to vector<1x32xf32>
    %394 = vector.shape_cast %391 : vector<1x32xf32> to vector<1x1x32xf32>
    tpu.vector_store %arg13[%c2_465, %c3_466, %c64_467], %394 {strides = array<i32>} : memref<4x4x512xf32, #tpu.memory_space<vmem>>, vector<1x1x32xf32>,
    %c6_468 = arith.constant 6 : index
    %c8_469 = arith.constant 8 : index
    %c0_470 = arith.constant 0 : index
    %395 = vector.load %arg12[%c6_468, %c8_469, %c0_470] : memref<10x10x32xf32, #tpu.memory_space<vmem>>, vector<1x1x32xf32>
    %396 = vector.shape_cast %395 : vector<1x1x32xf32> to vector<1x32xf32>
    %c3_471 = arith.constant 3 : index
    %c3_472 = arith.constant 3 : index
    %c64_473 = arith.constant 64 : index
    %397 = vector.load %arg13[%c3_471, %c3_472, %c64_473] : memref<4x4x512xf32, #tpu.memory_space<vmem>>, vector<1x1x32xf32>
    %398 = vector.shape_cast %397 : vector<1x1x32xf32> to vector<1x32xf32>
    %399 = vector.shape_cast %396 : vector<1x32xf32> to vector<1x1x32xf32>
    tpu.vector_store %arg13[%c3_471, %c3_472, %c64_473], %399 {strides = array<i32>} : memref<4x4x512xf32, #tpu.memory_space<vmem>>, vector<1x1x32xf32>,
    %c0_474 = arith.constant 0 : index
    %c3_475 = arith.constant 3 : index
    %c0_476 = arith.constant 0 : index
    %400 = vector.load %arg12[%c0_474, %c3_475, %c0_476] : memref<10x10x32xf32, #tpu.memory_space<vmem>>, vector<1x1x32xf32>
    %401 = vector.shape_cast %400 : vector<1x1x32xf32> to vector<1x32xf32>
    %c0_477 = arith.constant 0 : index
    %c0_478 = arith.constant 0 : index
    %c96_479 = arith.constant 96 : index
    %402 = vector.load %arg13[%c0_477, %c0_478, %c96_479] : memref<4x4x512xf32, #tpu.memory_space<vmem>>, vector<1x1x32xf32>
    %403 = vector.shape_cast %402 : vector<1x1x32xf32> to vector<1x32xf32>
    %404 = vector.shape_cast %401 : vector<1x32xf32> to vector<1x1x32xf32>
    tpu.vector_store %arg13[%c0_477, %c0_478, %c96_479], %404 {strides = array<i32>} : memref<4x4x512xf32, #tpu.memory_space<vmem>>, vector<1x1x32xf32>,
    %c0_480 = arith.constant 0 : index
    %c5_481 = arith.constant 5 : index
    %c0_482 = arith.constant 0 : index
    %405 = vector.load %arg12[%c0_480, %c5_481, %c0_482] : memref<10x10x32xf32, #tpu.memory_space<vmem>>, vector<1x1x32xf32>
    %406 = vector.shape_cast %405 : vector<1x1x32xf32> to vector<1x32xf32>
    %c1_483 = arith.constant 1 : index
    %c0_484 = arith.constant 0 : index
    %c96_485 = arith.constant 96 : index
    %407 = vector.load %arg13[%c1_483, %c0_484, %c96_485] : memref<4x4x512xf32, #tpu.memory_space<vmem>>, vector<1x1x32xf32>
    %408 = vector.shape_cast %407 : vector<1x1x32xf32> to vector<1x32xf32>
    %409 = vector.shape_cast %406 : vector<1x32xf32> to vector<1x1x32xf32>
    tpu.vector_store %arg13[%c1_483, %c0_484, %c96_485], %409 {strides = array<i32>} : memref<4x4x512xf32, #tpu.memory_space<vmem>>, vector<1x1x32xf32>,
    %c0_486 = arith.constant 0 : index
    %c7_487 = arith.constant 7 : index
    %c0_488 = arith.constant 0 : index
    %410 = vector.load %arg12[%c0_486, %c7_487, %c0_488] : memref<10x10x32xf32, #tpu.memory_space<vmem>>, vector<1x1x32xf32>
    %411 = vector.shape_cast %410 : vector<1x1x32xf32> to vector<1x32xf32>
    %c2_489 = arith.constant 2 : index
    %c0_490 = arith.constant 0 : index
    %c96_491 = arith.constant 96 : index
    %412 = vector.load %arg13[%c2_489, %c0_490, %c96_491] : memref<4x4x512xf32, #tpu.memory_space<vmem>>, vector<1x1x32xf32>
    %413 = vector.shape_cast %412 : vector<1x1x32xf32> to vector<1x32xf32>
    %414 = vector.shape_cast %411 : vector<1x32xf32> to vector<1x1x32xf32>
    tpu.vector_store %arg13[%c2_489, %c0_490, %c96_491], %414 {strides = array<i32>} : memref<4x4x512xf32, #tpu.memory_space<vmem>>, vector<1x1x32xf32>,
    %c0_492 = arith.constant 0 : index
    %c9_493 = arith.constant 9 : index
    %c0_494 = arith.constant 0 : index
    %415 = vector.load %arg12[%c0_492, %c9_493, %c0_494] : memref<10x10x32xf32, #tpu.memory_space<vmem>>, vector<1x1x32xf32>
    %416 = vector.shape_cast %415 : vector<1x1x32xf32> to vector<1x32xf32>
    %c3_495 = arith.constant 3 : index
    %c0_496 = arith.constant 0 : index
    %c96_497 = arith.constant 96 : index
    %417 = vector.load %arg13[%c3_495, %c0_496, %c96_497] : memref<4x4x512xf32, #tpu.memory_space<vmem>>, vector<1x1x32xf32>
    %418 = vector.shape_cast %417 : vector<1x1x32xf32> to vector<1x32xf32>
    %419 = vector.shape_cast %416 : vector<1x32xf32> to vector<1x1x32xf32>
    tpu.vector_store %arg13[%c3_495, %c0_496, %c96_497], %419 {strides = array<i32>} : memref<4x4x512xf32, #tpu.memory_space<vmem>>, vector<1x1x32xf32>,
    %c2_498 = arith.constant 2 : index
    %c3_499 = arith.constant 3 : index
    %c0_500 = arith.constant 0 : index
    %420 = vector.load %arg12[%c2_498, %c3_499, %c0_500] : memref<10x10x32xf32, #tpu.memory_space<vmem>>, vector<1x1x32xf32>
    %421 = vector.shape_cast %420 : vector<1x1x32xf32> to vector<1x32xf32>
    %c0_501 = arith.constant 0 : index
    %c1_502 = arith.constant 1 : index
    %c96_503 = arith.constant 96 : index
    %422 = vector.load %arg13[%c0_501, %c1_502, %c96_503] : memref<4x4x512xf32, #tpu.memory_space<vmem>>, vector<1x1x32xf32>
    %423 = vector.shape_cast %422 : vector<1x1x32xf32> to vector<1x32xf32>
    %424 = vector.shape_cast %421 : vector<1x32xf32> to vector<1x1x32xf32>
    tpu.vector_store %arg13[%c0_501, %c1_502, %c96_503], %424 {strides = array<i32>} : memref<4x4x512xf32, #tpu.memory_space<vmem>>, vector<1x1x32xf32>,
    %c2_504 = arith.constant 2 : index
    %c5_505 = arith.constant 5 : index
    %c0_506 = arith.constant 0 : index
    %425 = vector.load %arg12[%c2_504, %c5_505, %c0_506] : memref<10x10x32xf32, #tpu.memory_space<vmem>>, vector<1x1x32xf32>
    %426 = vector.shape_cast %425 : vector<1x1x32xf32> to vector<1x32xf32>
    %c1_507 = arith.constant 1 : index
    %c1_508 = arith.constant 1 : index
    %c96_509 = arith.constant 96 : index
    %427 = vector.load %arg13[%c1_507, %c1_508, %c96_509] : memref<4x4x512xf32, #tpu.memory_space<vmem>>, vector<1x1x32xf32>
    %428 = vector.shape_cast %427 : vector<1x1x32xf32> to vector<1x32xf32>
    %429 = vector.shape_cast %426 : vector<1x32xf32> to vector<1x1x32xf32>
    tpu.vector_store %arg13[%c1_507, %c1_508, %c96_509], %429 {strides = array<i32>} : memref<4x4x512xf32, #tpu.memory_space<vmem>>, vector<1x1x32xf32>,
    %c2_510 = arith.constant 2 : index
    %c7_511 = arith.constant 7 : index
    %c0_512 = arith.constant 0 : index
    %430 = vector.load %arg12[%c2_510, %c7_511, %c0_512] : memref<10x10x32xf32, #tpu.memory_space<vmem>>, vector<1x1x32xf32>
    %431 = vector.shape_cast %430 : vector<1x1x32xf32> to vector<1x32xf32>
    %c2_513 = arith.constant 2 : index
    %c1_514 = arith.constant 1 : index
    %c96_515 = arith.constant 96 : index
    %432 = vector.load %arg13[%c2_513, %c1_514, %c96_515] : memref<4x4x512xf32, #tpu.memory_space<vmem>>, vector<1x1x32xf32>
    %433 = vector.shape_cast %432 : vector<1x1x32xf32> to vector<1x32xf32>
    %434 = vector.shape_cast %431 : vector<1x32xf32> to vector<1x1x32xf32>
    tpu.vector_store %arg13[%c2_513, %c1_514, %c96_515], %434 {strides = array<i32>} : memref<4x4x512xf32, #tpu.memory_space<vmem>>, vector<1x1x32xf32>,
    %c2_516 = arith.constant 2 : index
    %c9_517 = arith.constant 9 : index
    %c0_518 = arith.constant 0 : index
    %435 = vector.load %arg12[%c2_516, %c9_517, %c0_518] : memref<10x10x32xf32, #tpu.memory_space<vmem>>, vector<1x1x32xf32>
    %436 = vector.shape_cast %435 : vector<1x1x32xf32> to vector<1x32xf32>
    %c3_519 = arith.constant 3 : index
    %c1_520 = arith.constant 1 : index
    %c96_521 = arith.constant 96 : index
    %437 = vector.load %arg13[%c3_519, %c1_520, %c96_521] : memref<4x4x512xf32, #tpu.memory_space<vmem>>, vector<1x1x32xf32>
    %438 = vector.shape_cast %437 : vector<1x1x32xf32> to vector<1x32xf32>
    %439 = vector.shape_cast %436 : vector<1x32xf32> to vector<1x1x32xf32>
    tpu.vector_store %arg13[%c3_519, %c1_520, %c96_521], %439 {strides = array<i32>} : memref<4x4x512xf32, #tpu.memory_space<vmem>>, vector<1x1x32xf32>,
    %c4_522 = arith.constant 4 : index
    %c3_523 = arith.constant 3 : index
    %c0_524 = arith.constant 0 : index
    %440 = vector.load %arg12[%c4_522, %c3_523, %c0_524] : memref<10x10x32xf32, #tpu.memory_space<vmem>>, vector<1x1x32xf32>
    %441 = vector.shape_cast %440 : vector<1x1x32xf32> to vector<1x32xf32>
    %c0_525 = arith.constant 0 : index
    %c2_526 = arith.constant 2 : index
    %c96_527 = arith.constant 96 : index
    %442 = vector.load %arg13[%c0_525, %c2_526, %c96_527] : memref<4x4x512xf32, #tpu.memory_space<vmem>>, vector<1x1x32xf32>
    %443 = vector.shape_cast %442 : vector<1x1x32xf32> to vector<1x32xf32>
    %444 = vector.shape_cast %441 : vector<1x32xf32> to vector<1x1x32xf32>
    tpu.vector_store %arg13[%c0_525, %c2_526, %c96_527], %444 {strides = array<i32>} : memref<4x4x512xf32, #tpu.memory_space<vmem>>, vector<1x1x32xf32>,
    %c4_528 = arith.constant 4 : index
    %c5_529 = arith.constant 5 : index
    %c0_530 = arith.constant 0 : index
    %445 = vector.load %arg12[%c4_528, %c5_529, %c0_530] : memref<10x10x32xf32, #tpu.memory_space<vmem>>, vector<1x1x32xf32>
    %446 = vector.shape_cast %445 : vector<1x1x32xf32> to vector<1x32xf32>
    %c1_531 = arith.constant 1 : index
    %c2_532 = arith.constant 2 : index
    %c96_533 = arith.constant 96 : index
    %447 = vector.load %arg13[%c1_531, %c2_532, %c96_533] : memref<4x4x512xf32, #tpu.memory_space<vmem>>, vector<1x1x32xf32>
    %448 = vector.shape_cast %447 : vector<1x1x32xf32> to vector<1x32xf32>
    %449 = vector.shape_cast %446 : vector<1x32xf32> to vector<1x1x32xf32>
    tpu.vector_store %arg13[%c1_531, %c2_532, %c96_533], %449 {strides = array<i32>} : memref<4x4x512xf32, #tpu.memory_space<vmem>>, vector<1x1x32xf32>,
    %c4_534 = arith.constant 4 : index
    %c7_535 = arith.constant 7 : index
    %c0_536 = arith.constant 0 : index
    %450 = vector.load %arg12[%c4_534, %c7_535, %c0_536] : memref<10x10x32xf32, #tpu.memory_space<vmem>>, vector<1x1x32xf32>
    %451 = vector.shape_cast %450 : vector<1x1x32xf32> to vector<1x32xf32>
    %c2_537 = arith.constant 2 : index
    %c2_538 = arith.constant 2 : index
    %c96_539 = arith.constant 96 : index
    %452 = vector.load %arg13[%c2_537, %c2_538, %c96_539] : memref<4x4x512xf32, #tpu.memory_space<vmem>>, vector<1x1x32xf32>
    %453 = vector.shape_cast %452 : vector<1x1x32xf32> to vector<1x32xf32>
    %454 = vector.shape_cast %451 : vector<1x32xf32> to vector<1x1x32xf32>
    tpu.vector_store %arg13[%c2_537, %c2_538, %c96_539], %454 {strides = array<i32>} : memref<4x4x512xf32, #tpu.memory_space<vmem>>, vector<1x1x32xf32>,
    %c4_540 = arith.constant 4 : index
    %c9_541 = arith.constant 9 : index
    %c0_542 = arith.constant 0 : index
    %455 = vector.load %arg12[%c4_540, %c9_541, %c0_542] : memref<10x10x32xf32, #tpu.memory_space<vmem>>, vector<1x1x32xf32>
    %456 = vector.shape_cast %455 : vector<1x1x32xf32> to vector<1x32xf32>
    %c3_543 = arith.constant 3 : index
    %c2_544 = arith.constant 2 : index
    %c96_545 = arith.constant 96 : index
    %457 = vector.load %arg13[%c3_543, %c2_544, %c96_545] : memref<4x4x512xf32, #tpu.memory_space<vmem>>, vector<1x1x32xf32>
    %458 = vector.shape_cast %457 : vector<1x1x32xf32> to vector<1x32xf32>
    %459 = vector.shape_cast %456 : vector<1x32xf32> to vector<1x1x32xf32>
    tpu.vector_store %arg13[%c3_543, %c2_544, %c96_545], %459 {strides = array<i32>} : memref<4x4x512xf32, #tpu.memory_space<vmem>>, vector<1x1x32xf32>,
    %c6_546 = arith.constant 6 : index
    %c3_547 = arith.constant 3 : index
    %c0_548 = arith.constant 0 : index
    %460 = vector.load %arg12[%c6_546, %c3_547, %c0_548] : memref<10x10x32xf32, #tpu.memory_space<vmem>>, vector<1x1x32xf32>
    %461 = vector.shape_cast %460 : vector<1x1x32xf32> to vector<1x32xf32>
    %c0_549 = arith.constant 0 : index
    %c3_550 = arith.constant 3 : index
    %c96_551 = arith.constant 96 : index
    %462 = vector.load %arg13[%c0_549, %c3_550, %c96_551] : memref<4x4x512xf32, #tpu.memory_space<vmem>>, vector<1x1x32xf32>
    %463 = vector.shape_cast %462 : vector<1x1x32xf32> to vector<1x32xf32>
    %464 = vector.shape_cast %461 : vector<1x32xf32> to vector<1x1x32xf32>
    tpu.vector_store %arg13[%c0_549, %c3_550, %c96_551], %464 {strides = array<i32>} : memref<4x4x512xf32, #tpu.memory_space<vmem>>, vector<1x1x32xf32>,
    %c6_552 = arith.constant 6 : index
    %c5_553 = arith.constant 5 : index
    %c0_554 = arith.constant 0 : index
    %465 = vector.load %arg12[%c6_552, %c5_553, %c0_554] : memref<10x10x32xf32, #tpu.memory_space<vmem>>, vector<1x1x32xf32>
    %466 = vector.shape_cast %465 : vector<1x1x32xf32> to vector<1x32xf32>
    %c1_555 = arith.constant 1 : index
    %c3_556 = arith.constant 3 : index
    %c96_557 = arith.constant 96 : index
    %467 = vector.load %arg13[%c1_555, %c3_556, %c96_557] : memref<4x4x512xf32, #tpu.memory_space<vmem>>, vector<1x1x32xf32>
    %468 = vector.shape_cast %467 : vector<1x1x32xf32> to vector<1x32xf32>
    %469 = vector.shape_cast %466 : vector<1x32xf32> to vector<1x1x32xf32>
    tpu.vector_store %arg13[%c1_555, %c3_556, %c96_557], %469 {strides = array<i32>} : memref<4x4x512xf32, #tpu.memory_space<vmem>>, vector<1x1x32xf32>,
    %c6_558 = arith.constant 6 : index
    %c7_559 = arith.constant 7 : index
    %c0_560 = arith.constant 0 : index
    %470 = vector.load %arg12[%c6_558, %c7_559, %c0_560] : memref<10x10x32xf32, #tpu.memory_space<vmem>>, vector<1x1x32xf32>
    %471 = vector.shape_cast %470 : vector<1x1x32xf32> to vector<1x32xf32>
    %c2_561 = arith.constant 2 : index
    %c3_562 = arith.constant 3 : index
    %c96_563 = arith.constant 96 : index
    %472 = vector.load %arg13[%c2_561, %c3_562, %c96_563] : memref<4x4x512xf32, #tpu.memory_space<vmem>>, vector<1x1x32xf32>
    %473 = vector.shape_cast %472 : vector<1x1x32xf32> to vector<1x32xf32>
    %474 = vector.shape_cast %471 : vector<1x32xf32> to vector<1x1x32xf32>
    tpu.vector_store %arg13[%c2_561, %c3_562, %c96_563], %474 {strides = array<i32>} : memref<4x4x512xf32, #tpu.memory_space<vmem>>, vector<1x1x32xf32>,
    %c6_564 = arith.constant 6 : index
    %c9_565 = arith.constant 9 : index
    %c0_566 = arith.constant 0 : index
    %475 = vector.load %arg12[%c6_564, %c9_565, %c0_566] : memref<10x10x32xf32, #tpu.memory_space<vmem>>, vector<1x1x32xf32>
    %476 = vector.shape_cast %475 : vector<1x1x32xf32> to vector<1x32xf32>
    %c3_567 = arith.constant 3 : index
    %c3_568 = arith.constant 3 : index
    %c96_569 = arith.constant 96 : index
    %477 = vector.load %arg13[%c3_567, %c3_568, %c96_569] : memref<4x4x512xf32, #tpu.memory_space<vmem>>, vector<1x1x32xf32>
    %478 = vector.shape_cast %477 : vector<1x1x32xf32> to vector<1x32xf32>
    %479 = vector.shape_cast %476 : vector<1x32xf32> to vector<1x1x32xf32>
    tpu.vector_store %arg13[%c3_567, %c3_568, %c96_569], %479 {strides = array<i32>} : memref<4x4x512xf32, #tpu.memory_space<vmem>>, vector<1x1x32xf32>,
    %c1_570 = arith.constant 1 : index
    %c0_571 = arith.constant 0 : index
    %c0_572 = arith.constant 0 : index
    %480 = vector.load %arg12[%c1_570, %c0_571, %c0_572] : memref<10x10x32xf32, #tpu.memory_space<vmem>>, vector<1x1x32xf32>
    %481 = vector.shape_cast %480 : vector<1x1x32xf32> to vector<1x32xf32>
    %c0_573 = arith.constant 0 : index
    %c0_574 = arith.constant 0 : index
    %c128_575 = arith.constant 128 : index
    %482 = vector.load %arg13[%c0_573, %c0_574, %c128_575] : memref<4x4x512xf32, #tpu.memory_space<vmem>>, vector<1x1x32xf32>
    %483 = vector.shape_cast %482 : vector<1x1x32xf32> to vector<1x32xf32>
    %484 = vector.shape_cast %481 : vector<1x32xf32> to vector<1x1x32xf32>
    tpu.vector_store %arg13[%c0_573, %c0_574, %c128_575], %484 {strides = array<i32>} : memref<4x4x512xf32, #tpu.memory_space<vmem>>, vector<1x1x32xf32>,
    %c1_576 = arith.constant 1 : index
    %c2_577 = arith.constant 2 : index
    %c0_578 = arith.constant 0 : index
    %485 = vector.load %arg12[%c1_576, %c2_577, %c0_578] : memref<10x10x32xf32, #tpu.memory_space<vmem>>, vector<1x1x32xf32>
    %486 = vector.shape_cast %485 : vector<1x1x32xf32> to vector<1x32xf32>
    %c1_579 = arith.constant 1 : index
    %c0_580 = arith.constant 0 : index
    %c128_581 = arith.constant 128 : index
    %487 = vector.load %arg13[%c1_579, %c0_580, %c128_581] : memref<4x4x512xf32, #tpu.memory_space<vmem>>, vector<1x1x32xf32>
    %488 = vector.shape_cast %487 : vector<1x1x32xf32> to vector<1x32xf32>
    %489 = vector.shape_cast %486 : vector<1x32xf32> to vector<1x1x32xf32>
    tpu.vector_store %arg13[%c1_579, %c0_580, %c128_581], %489 {strides = array<i32>} : memref<4x4x512xf32, #tpu.memory_space<vmem>>, vector<1x1x32xf32>,
    %c1_582 = arith.constant 1 : index
    %c4_583 = arith.constant 4 : index
    %c0_584 = arith.constant 0 : index
    %490 = vector.load %arg12[%c1_582, %c4_583, %c0_584] : memref<10x10x32xf32, #tpu.memory_space<vmem>>, vector<1x1x32xf32>
    %491 = vector.shape_cast %490 : vector<1x1x32xf32> to vector<1x32xf32>
    %c2_585 = arith.constant 2 : index
    %c0_586 = arith.constant 0 : index
    %c128_587 = arith.constant 128 : index
    %492 = vector.load %arg13[%c2_585, %c0_586, %c128_587] : memref<4x4x512xf32, #tpu.memory_space<vmem>>, vector<1x1x32xf32>
    %493 = vector.shape_cast %492 : vector<1x1x32xf32> to vector<1x32xf32>
    %494 = vector.shape_cast %491 : vector<1x32xf32> to vector<1x1x32xf32>
    tpu.vector_store %arg13[%c2_585, %c0_586, %c128_587], %494 {strides = array<i32>} : memref<4x4x512xf32, #tpu.memory_space<vmem>>, vector<1x1x32xf32>,
    %c1_588 = arith.constant 1 : index
    %c6_589 = arith.constant 6 : index
    %c0_590 = arith.constant 0 : index
    %495 = vector.load %arg12[%c1_588, %c6_589, %c0_590] : memref<10x10x32xf32, #tpu.memory_space<vmem>>, vector<1x1x32xf32>
    %496 = vector.shape_cast %495 : vector<1x1x32xf32> to vector<1x32xf32>
    %c3_591 = arith.constant 3 : index
    %c0_592 = arith.constant 0 : index
    %c128_593 = arith.constant 128 : index
    %497 = vector.load %arg13[%c3_591, %c0_592, %c128_593] : memref<4x4x512xf32, #tpu.memory_space<vmem>>, vector<1x1x32xf32>
    %498 = vector.shape_cast %497 : vector<1x1x32xf32> to vector<1x32xf32>
    %499 = vector.shape_cast %496 : vector<1x32xf32> to vector<1x1x32xf32>
    tpu.vector_store %arg13[%c3_591, %c0_592, %c128_593], %499 {strides = array<i32>} : memref<4x4x512xf32, #tpu.memory_space<vmem>>, vector<1x1x32xf32>,
    %c3_594 = arith.constant 3 : index
    %c0_595 = arith.constant 0 : index
    %c0_596 = arith.constant 0 : index
    %500 = vector.load %arg12[%c3_594, %c0_595, %c0_596] : memref<10x10x32xf32, #tpu.memory_space<vmem>>, vector<1x1x32xf32>
    %501 = vector.shape_cast %500 : vector<1x1x32xf32> to vector<1x32xf32>
    %c0_597 = arith.constant 0 : index
    %c1_598 = arith.constant 1 : index
    %c128_599 = arith.constant 128 : index
    %502 = vector.load %arg13[%c0_597, %c1_598, %c128_599] : memref<4x4x512xf32, #tpu.memory_space<vmem>>, vector<1x1x32xf32>
    %503 = vector.shape_cast %502 : vector<1x1x32xf32> to vector<1x32xf32>
    %504 = vector.shape_cast %501 : vector<1x32xf32> to vector<1x1x32xf32>
    tpu.vector_store %arg13[%c0_597, %c1_598, %c128_599], %504 {strides = array<i32>} : memref<4x4x512xf32, #tpu.memory_space<vmem>>, vector<1x1x32xf32>,
    %c3_600 = arith.constant 3 : index
    %c2_601 = arith.constant 2 : index
    %c0_602 = arith.constant 0 : index
    %505 = vector.load %arg12[%c3_600, %c2_601, %c0_602] : memref<10x10x32xf32, #tpu.memory_space<vmem>>, vector<1x1x32xf32>
    %506 = vector.shape_cast %505 : vector<1x1x32xf32> to vector<1x32xf32>
    %c1_603 = arith.constant 1 : index
    %c1_604 = arith.constant 1 : index
    %c128_605 = arith.constant 128 : index
    %507 = vector.load %arg13[%c1_603, %c1_604, %c128_605] : memref<4x4x512xf32, #tpu.memory_space<vmem>>, vector<1x1x32xf32>
    %508 = vector.shape_cast %507 : vector<1x1x32xf32> to vector<1x32xf32>
    %509 = vector.shape_cast %506 : vector<1x32xf32> to vector<1x1x32xf32>
    tpu.vector_store %arg13[%c1_603, %c1_604, %c128_605], %509 {strides = array<i32>} : memref<4x4x512xf32, #tpu.memory_space<vmem>>, vector<1x1x32xf32>,
    %c3_606 = arith.constant 3 : index
    %c4_607 = arith.constant 4 : index
    %c0_608 = arith.constant 0 : index
    %510 = vector.load %arg12[%c3_606, %c4_607, %c0_608] : memref<10x10x32xf32, #tpu.memory_space<vmem>>, vector<1x1x32xf32>
    %511 = vector.shape_cast %510 : vector<1x1x32xf32> to vector<1x32xf32>
    %c2_609 = arith.constant 2 : index
    %c1_610 = arith.constant 1 : index
    %c128_611 = arith.constant 128 : index
    %512 = vector.load %arg13[%c2_609, %c1_610, %c128_611] : memref<4x4x512xf32, #tpu.memory_space<vmem>>, vector<1x1x32xf32>
    %513 = vector.shape_cast %512 : vector<1x1x32xf32> to vector<1x32xf32>
    %514 = vector.shape_cast %511 : vector<1x32xf32> to vector<1x1x32xf32>
    tpu.vector_store %arg13[%c2_609, %c1_610, %c128_611], %514 {strides = array<i32>} : memref<4x4x512xf32, #tpu.memory_space<vmem>>, vector<1x1x32xf32>,
    %c3_612 = arith.constant 3 : index
    %c6_613 = arith.constant 6 : index
    %c0_614 = arith.constant 0 : index
    %515 = vector.load %arg12[%c3_612, %c6_613, %c0_614] : memref<10x10x32xf32, #tpu.memory_space<vmem>>, vector<1x1x32xf32>
    %516 = vector.shape_cast %515 : vector<1x1x32xf32> to vector<1x32xf32>
    %c3_615 = arith.constant 3 : index
    %c1_616 = arith.constant 1 : index
    %c128_617 = arith.constant 128 : index
    %517 = vector.load %arg13[%c3_615, %c1_616, %c128_617] : memref<4x4x512xf32, #tpu.memory_space<vmem>>, vector<1x1x32xf32>
    %518 = vector.shape_cast %517 : vector<1x1x32xf32> to vector<1x32xf32>
    %519 = vector.shape_cast %516 : vector<1x32xf32> to vector<1x1x32xf32>
    tpu.vector_store %arg13[%c3_615, %c1_616, %c128_617], %519 {strides = array<i32>} : memref<4x4x512xf32, #tpu.memory_space<vmem>>, vector<1x1x32xf32>,
    %c5_618 = arith.constant 5 : index
    %c0_619 = arith.constant 0 : index
    %c0_620 = arith.constant 0 : index
    %520 = vector.load %arg12[%c5_618, %c0_619, %c0_620] : memref<10x10x32xf32, #tpu.memory_space<vmem>>, vector<1x1x32xf32>
    %521 = vector.shape_cast %520 : vector<1x1x32xf32> to vector<1x32xf32>
    %c0_621 = arith.constant 0 : index
    %c2_622 = arith.constant 2 : index
    %c128_623 = arith.constant 128 : index
    %522 = vector.load %arg13[%c0_621, %c2_622, %c128_623] : memref<4x4x512xf32, #tpu.memory_space<vmem>>, vector<1x1x32xf32>
    %523 = vector.shape_cast %522 : vector<1x1x32xf32> to vector<1x32xf32>
    %524 = vector.shape_cast %521 : vector<1x32xf32> to vector<1x1x32xf32>
    tpu.vector_store %arg13[%c0_621, %c2_622, %c128_623], %524 {strides = array<i32>} : memref<4x4x512xf32, #tpu.memory_space<vmem>>, vector<1x1x32xf32>,
    %c5_624 = arith.constant 5 : index
    %c2_625 = arith.constant 2 : index
    %c0_626 = arith.constant 0 : index
    %525 = vector.load %arg12[%c5_624, %c2_625, %c0_626] : memref<10x10x32xf32, #tpu.memory_space<vmem>>, vector<1x1x32xf32>
    %526 = vector.shape_cast %525 : vector<1x1x32xf32> to vector<1x32xf32>
    %c1_627 = arith.constant 1 : index
    %c2_628 = arith.constant 2 : index
    %c128_629 = arith.constant 128 : index
    %527 = vector.load %arg13[%c1_627, %c2_628, %c128_629] : memref<4x4x512xf32, #tpu.memory_space<vmem>>, vector<1x1x32xf32>
    %528 = vector.shape_cast %527 : vector<1x1x32xf32> to vector<1x32xf32>
    %529 = vector.shape_cast %526 : vector<1x32xf32> to vector<1x1x32xf32>
    tpu.vector_store %arg13[%c1_627, %c2_628, %c128_629], %529 {strides = array<i32>} : memref<4x4x512xf32, #tpu.memory_space<vmem>>, vector<1x1x32xf32>,
    %c5_630 = arith.constant 5 : index
    %c4_631 = arith.constant 4 : index
    %c0_632 = arith.constant 0 : index
    %530 = vector.load %arg12[%c5_630, %c4_631, %c0_632] : memref<10x10x32xf32, #tpu.memory_space<vmem>>, vector<1x1x32xf32>
    %531 = vector.shape_cast %530 : vector<1x1x32xf32> to vector<1x32xf32>
    %c2_633 = arith.constant 2 : index
    %c2_634 = arith.constant 2 : index
    %c128_635 = arith.constant 128 : index
    %532 = vector.load %arg13[%c2_633, %c2_634, %c128_635] : memref<4x4x512xf32, #tpu.memory_space<vmem>>, vector<1x1x32xf32>
    %533 = vector.shape_cast %532 : vector<1x1x32xf32> to vector<1x32xf32>
    %534 = vector.shape_cast %531 : vector<1x32xf32> to vector<1x1x32xf32>
    tpu.vector_store %arg13[%c2_633, %c2_634, %c128_635], %534 {strides = array<i32>} : memref<4x4x512xf32, #tpu.memory_space<vmem>>, vector<1x1x32xf32>,
    %c5_636 = arith.constant 5 : index
    %c6_637 = arith.constant 6 : index
    %c0_638 = arith.constant 0 : index
    %535 = vector.load %arg12[%c5_636, %c6_637, %c0_638] : memref<10x10x32xf32, #tpu.memory_space<vmem>>, vector<1x1x32xf32>
    %536 = vector.shape_cast %535 : vector<1x1x32xf32> to vector<1x32xf32>
    %c3_639 = arith.constant 3 : index
    %c2_640 = arith.constant 2 : index
    %c128_641 = arith.constant 128 : index
    %537 = vector.load %arg13[%c3_639, %c2_640, %c128_641] : memref<4x4x512xf32, #tpu.memory_space<vmem>>, vector<1x1x32xf32>
    %538 = vector.shape_cast %537 : vector<1x1x32xf32> to vector<1x32xf32>
    %539 = vector.shape_cast %536 : vector<1x32xf32> to vector<1x1x32xf32>
    tpu.vector_store %arg13[%c3_639, %c2_640, %c128_641], %539 {strides = array<i32>} : memref<4x4x512xf32, #tpu.memory_space<vmem>>, vector<1x1x32xf32>,
    %c7_642 = arith.constant 7 : index
    %c0_643 = arith.constant 0 : index
    %c0_644 = arith.constant 0 : index
    %540 = vector.load %arg12[%c7_642, %c0_643, %c0_644] : memref<10x10x32xf32, #tpu.memory_space<vmem>>, vector<1x1x32xf32>
    %541 = vector.shape_cast %540 : vector<1x1x32xf32> to vector<1x32xf32>
    %c0_645 = arith.constant 0 : index
    %c3_646 = arith.constant 3 : index
    %c128_647 = arith.constant 128 : index
    %542 = vector.load %arg13[%c0_645, %c3_646, %c128_647] : memref<4x4x512xf32, #tpu.memory_space<vmem>>, vector<1x1x32xf32>
    %543 = vector.shape_cast %542 : vector<1x1x32xf32> to vector<1x32xf32>
    %544 = vector.shape_cast %541 : vector<1x32xf32> to vector<1x1x32xf32>
    tpu.vector_store %arg13[%c0_645, %c3_646, %c128_647], %544 {strides = array<i32>} : memref<4x4x512xf32, #tpu.memory_space<vmem>>, vector<1x1x32xf32>,
    %c7_648 = arith.constant 7 : index
    %c2_649 = arith.constant 2 : index
    %c0_650 = arith.constant 0 : index
    %545 = vector.load %arg12[%c7_648, %c2_649, %c0_650] : memref<10x10x32xf32, #tpu.memory_space<vmem>>, vector<1x1x32xf32>
    %546 = vector.shape_cast %545 : vector<1x1x32xf32> to vector<1x32xf32>
    %c1_651 = arith.constant 1 : index
    %c3_652 = arith.constant 3 : index
    %c128_653 = arith.constant 128 : index
    %547 = vector.load %arg13[%c1_651, %c3_652, %c128_653] : memref<4x4x512xf32, #tpu.memory_space<vmem>>, vector<1x1x32xf32>
    %548 = vector.shape_cast %547 : vector<1x1x32xf32> to vector<1x32xf32>
    %549 = vector.shape_cast %546 : vector<1x32xf32> to vector<1x1x32xf32>
    tpu.vector_store %arg13[%c1_651, %c3_652, %c128_653], %549 {strides = array<i32>} : memref<4x4x512xf32, #tpu.memory_space<vmem>>, vector<1x1x32xf32>,
    %c7_654 = arith.constant 7 : index
    %c4_655 = arith.constant 4 : index
    %c0_656 = arith.constant 0 : index
    %550 = vector.load %arg12[%c7_654, %c4_655, %c0_656] : memref<10x10x32xf32, #tpu.memory_space<vmem>>, vector<1x1x32xf32>
    %551 = vector.shape_cast %550 : vector<1x1x32xf32> to vector<1x32xf32>
    %c2_657 = arith.constant 2 : index
    %c3_658 = arith.constant 3 : index
    %c128_659 = arith.constant 128 : index
    %552 = vector.load %arg13[%c2_657, %c3_658, %c128_659] : memref<4x4x512xf32, #tpu.memory_space<vmem>>, vector<1x1x32xf32>
    %553 = vector.shape_cast %552 : vector<1x1x32xf32> to vector<1x32xf32>
    %554 = vector.shape_cast %551 : vector<1x32xf32> to vector<1x1x32xf32>
    tpu.vector_store %arg13[%c2_657, %c3_658, %c128_659], %554 {strides = array<i32>} : memref<4x4x512xf32, #tpu.memory_space<vmem>>, vector<1x1x32xf32>,
    %c7_660 = arith.constant 7 : index
    %c6_661 = arith.constant 6 : index
    %c0_662 = arith.constant 0 : index
    %555 = vector.load %arg12[%c7_660, %c6_661, %c0_662] : memref<10x10x32xf32, #tpu.memory_space<vmem>>, vector<1x1x32xf32>
    %556 = vector.shape_cast %555 : vector<1x1x32xf32> to vector<1x32xf32>
    %c3_663 = arith.constant 3 : index
    %c3_664 = arith.constant 3 : index
    %c128_665 = arith.constant 128 : index
    %557 = vector.load %arg13[%c3_663, %c3_664, %c128_665] : memref<4x4x512xf32, #tpu.memory_space<vmem>>, vector<1x1x32xf32>
    %558 = vector.shape_cast %557 : vector<1x1x32xf32> to vector<1x32xf32>
    %559 = vector.shape_cast %556 : vector<1x32xf32> to vector<1x1x32xf32>
    tpu.vector_store %arg13[%c3_663, %c3_664, %c128_665], %559 {strides = array<i32>} : memref<4x4x512xf32, #tpu.memory_space<vmem>>, vector<1x1x32xf32>,
    %c1_666 = arith.constant 1 : index
    %c1_667 = arith.constant 1 : index
    %c0_668 = arith.constant 0 : index
    %560 = vector.load %arg12[%c1_666, %c1_667, %c0_668] : memref<10x10x32xf32, #tpu.memory_space<vmem>>, vector<1x1x32xf32>
    %561 = vector.shape_cast %560 : vector<1x1x32xf32> to vector<1x32xf32>
    %c0_669 = arith.constant 0 : index
    %c0_670 = arith.constant 0 : index
    %c160_671 = arith.constant 160 : index
    %562 = vector.load %arg13[%c0_669, %c0_670, %c160_671] : memref<4x4x512xf32, #tpu.memory_space<vmem>>, vector<1x1x32xf32>
    %563 = vector.shape_cast %562 : vector<1x1x32xf32> to vector<1x32xf32>
    %564 = vector.shape_cast %561 : vector<1x32xf32> to vector<1x1x32xf32>
    tpu.vector_store %arg13[%c0_669, %c0_670, %c160_671], %564 {strides = array<i32>} : memref<4x4x512xf32, #tpu.memory_space<vmem>>, vector<1x1x32xf32>,
    %c1_672 = arith.constant 1 : index
    %c3_673 = arith.constant 3 : index
    %c0_674 = arith.constant 0 : index
    %565 = vector.load %arg12[%c1_672, %c3_673, %c0_674] : memref<10x10x32xf32, #tpu.memory_space<vmem>>, vector<1x1x32xf32>
    %566 = vector.shape_cast %565 : vector<1x1x32xf32> to vector<1x32xf32>
    %c1_675 = arith.constant 1 : index
    %c0_676 = arith.constant 0 : index
    %c160_677 = arith.constant 160 : index
    %567 = vector.load %arg13[%c1_675, %c0_676, %c160_677] : memref<4x4x512xf32, #tpu.memory_space<vmem>>, vector<1x1x32xf32>
    %568 = vector.shape_cast %567 : vector<1x1x32xf32> to vector<1x32xf32>
    %569 = vector.shape_cast %566 : vector<1x32xf32> to vector<1x1x32xf32>
    tpu.vector_store %arg13[%c1_675, %c0_676, %c160_677], %569 {strides = array<i32>} : memref<4x4x512xf32, #tpu.memory_space<vmem>>, vector<1x1x32xf32>,
    %c1_678 = arith.constant 1 : index
    %c5_679 = arith.constant 5 : index
    %c0_680 = arith.constant 0 : index
    %570 = vector.load %arg12[%c1_678, %c5_679, %c0_680] : memref<10x10x32xf32, #tpu.memory_space<vmem>>, vector<1x1x32xf32>
    %571 = vector.shape_cast %570 : vector<1x1x32xf32> to vector<1x32xf32>
    %c2_681 = arith.constant 2 : index
    %c0_682 = arith.constant 0 : index
    %c160_683 = arith.constant 160 : index
    %572 = vector.load %arg13[%c2_681, %c0_682, %c160_683] : memref<4x4x512xf32, #tpu.memory_space<vmem>>, vector<1x1x32xf32>
    %573 = vector.shape_cast %572 : vector<1x1x32xf32> to vector<1x32xf32>
    %574 = vector.shape_cast %571 : vector<1x32xf32> to vector<1x1x32xf32>
    tpu.vector_store %arg13[%c2_681, %c0_682, %c160_683], %574 {strides = array<i32>} : memref<4x4x512xf32, #tpu.memory_space<vmem>>, vector<1x1x32xf32>,
    %c1_684 = arith.constant 1 : index
    %c7_685 = arith.constant 7 : index
    %c0_686 = arith.constant 0 : index
    %575 = vector.load %arg12[%c1_684, %c7_685, %c0_686] : memref<10x10x32xf32, #tpu.memory_space<vmem>>, vector<1x1x32xf32>
    %576 = vector.shape_cast %575 : vector<1x1x32xf32> to vector<1x32xf32>
    %c3_687 = arith.constant 3 : index
    %c0_688 = arith.constant 0 : index
    %c160_689 = arith.constant 160 : index
    %577 = vector.load %arg13[%c3_687, %c0_688, %c160_689] : memref<4x4x512xf32, #tpu.memory_space<vmem>>, vector<1x1x32xf32>
    %578 = vector.shape_cast %577 : vector<1x1x32xf32> to vector<1x32xf32>
    %579 = vector.shape_cast %576 : vector<1x32xf32> to vector<1x1x32xf32>
    tpu.vector_store %arg13[%c3_687, %c0_688, %c160_689], %579 {strides = array<i32>} : memref<4x4x512xf32, #tpu.memory_space<vmem>>, vector<1x1x32xf32>,
    %c3_690 = arith.constant 3 : index
    %c1_691 = arith.constant 1 : index
    %c0_692 = arith.constant 0 : index
    %580 = vector.load %arg12[%c3_690, %c1_691, %c0_692] : memref<10x10x32xf32, #tpu.memory_space<vmem>>, vector<1x1x32xf32>
    %581 = vector.shape_cast %580 : vector<1x1x32xf32> to vector<1x32xf32>
    %c0_693 = arith.constant 0 : index
    %c1_694 = arith.constant 1 : index
    %c160_695 = arith.constant 160 : index
    %582 = vector.load %arg13[%c0_693, %c1_694, %c160_695] : memref<4x4x512xf32, #tpu.memory_space<vmem>>, vector<1x1x32xf32>
    %583 = vector.shape_cast %582 : vector<1x1x32xf32> to vector<1x32xf32>
    %584 = vector.shape_cast %581 : vector<1x32xf32> to vector<1x1x32xf32>
    tpu.vector_store %arg13[%c0_693, %c1_694, %c160_695], %584 {strides = array<i32>} : memref<4x4x512xf32, #tpu.memory_space<vmem>>, vector<1x1x32xf32>,
    %c3_696 = arith.constant 3 : index
    %c3_697 = arith.constant 3 : index
    %c0_698 = arith.constant 0 : index
    %585 = vector.load %arg12[%c3_696, %c3_697, %c0_698] : memref<10x10x32xf32, #tpu.memory_space<vmem>>, vector<1x1x32xf32>
    %586 = vector.shape_cast %585 : vector<1x1x32xf32> to vector<1x32xf32>
    %c1_699 = arith.constant 1 : index
    %c1_700 = arith.constant 1 : index
    %c160_701 = arith.constant 160 : index
    %587 = vector.load %arg13[%c1_699, %c1_700, %c160_701] : memref<4x4x512xf32, #tpu.memory_space<vmem>>, vector<1x1x32xf32>
    %588 = vector.shape_cast %587 : vector<1x1x32xf32> to vector<1x32xf32>
    %589 = vector.shape_cast %586 : vector<1x32xf32> to vector<1x1x32xf32>
    tpu.vector_store %arg13[%c1_699, %c1_700, %c160_701], %589 {strides = array<i32>} : memref<4x4x512xf32, #tpu.memory_space<vmem>>, vector<1x1x32xf32>,
    %c3_702 = arith.constant 3 : index
    %c5_703 = arith.constant 5 : index
    %c0_704 = arith.constant 0 : index
    %590 = vector.load %arg12[%c3_702, %c5_703, %c0_704] : memref<10x10x32xf32, #tpu.memory_space<vmem>>, vector<1x1x32xf32>
    %591 = vector.shape_cast %590 : vector<1x1x32xf32> to vector<1x32xf32>
    %c2_705 = arith.constant 2 : index
    %c1_706 = arith.constant 1 : index
    %c160_707 = arith.constant 160 : index
    %592 = vector.load %arg13[%c2_705, %c1_706, %c160_707] : memref<4x4x512xf32, #tpu.memory_space<vmem>>, vector<1x1x32xf32>
    %593 = vector.shape_cast %592 : vector<1x1x32xf32> to vector<1x32xf32>
    %594 = vector.shape_cast %591 : vector<1x32xf32> to vector<1x1x32xf32>
    tpu.vector_store %arg13[%c2_705, %c1_706, %c160_707], %594 {strides = array<i32>} : memref<4x4x512xf32, #tpu.memory_space<vmem>>, vector<1x1x32xf32>,
    %c3_708 = arith.constant 3 : index
    %c7_709 = arith.constant 7 : index
    %c0_710 = arith.constant 0 : index
    %595 = vector.load %arg12[%c3_708, %c7_709, %c0_710] : memref<10x10x32xf32, #tpu.memory_space<vmem>>, vector<1x1x32xf32>
    %596 = vector.shape_cast %595 : vector<1x1x32xf32> to vector<1x32xf32>
    %c3_711 = arith.constant 3 : index
    %c1_712 = arith.constant 1 : index
    %c160_713 = arith.constant 160 : index
    %597 = vector.load %arg13[%c3_711, %c1_712, %c160_713] : memref<4x4x512xf32, #tpu.memory_space<vmem>>, vector<1x1x32xf32>
    %598 = vector.shape_cast %597 : vector<1x1x32xf32> to vector<1x32xf32>
    %599 = vector.shape_cast %596 : vector<1x32xf32> to vector<1x1x32xf32>
    tpu.vector_store %arg13[%c3_711, %c1_712, %c160_713], %599 {strides = array<i32>} : memref<4x4x512xf32, #tpu.memory_space<vmem>>, vector<1x1x32xf32>,
    %c5_714 = arith.constant 5 : index
    %c1_715 = arith.constant 1 : index
    %c0_716 = arith.constant 0 : index
    %600 = vector.load %arg12[%c5_714, %c1_715, %c0_716] : memref<10x10x32xf32, #tpu.memory_space<vmem>>, vector<1x1x32xf32>
    %601 = vector.shape_cast %600 : vector<1x1x32xf32> to vector<1x32xf32>
    %c0_717 = arith.constant 0 : index
    %c2_718 = arith.constant 2 : index
    %c160_719 = arith.constant 160 : index
    %602 = vector.load %arg13[%c0_717, %c2_718, %c160_719] : memref<4x4x512xf32, #tpu.memory_space<vmem>>, vector<1x1x32xf32>
    %603 = vector.shape_cast %602 : vector<1x1x32xf32> to vector<1x32xf32>
    %604 = vector.shape_cast %601 : vector<1x32xf32> to vector<1x1x32xf32>
    tpu.vector_store %arg13[%c0_717, %c2_718, %c160_719], %604 {strides = array<i32>} : memref<4x4x512xf32, #tpu.memory_space<vmem>>, vector<1x1x32xf32>,
    %c5_720 = arith.constant 5 : index
    %c3_721 = arith.constant 3 : index
    %c0_722 = arith.constant 0 : index
    %605 = vector.load %arg12[%c5_720, %c3_721, %c0_722] : memref<10x10x32xf32, #tpu.memory_space<vmem>>, vector<1x1x32xf32>
    %606 = vector.shape_cast %605 : vector<1x1x32xf32> to vector<1x32xf32>
    %c1_723 = arith.constant 1 : index
    %c2_724 = arith.constant 2 : index
    %c160_725 = arith.constant 160 : index
    %607 = vector.load %arg13[%c1_723, %c2_724, %c160_725] : memref<4x4x512xf32, #tpu.memory_space<vmem>>, vector<1x1x32xf32>
    %608 = vector.shape_cast %607 : vector<1x1x32xf32> to vector<1x32xf32>
    %609 = vector.shape_cast %606 : vector<1x32xf32> to vector<1x1x32xf32>
    tpu.vector_store %arg13[%c1_723, %c2_724, %c160_725], %609 {strides = array<i32>} : memref<4x4x512xf32, #tpu.memory_space<vmem>>, vector<1x1x32xf32>,
    %c5_726 = arith.constant 5 : index
    %c5_727 = arith.constant 5 : index
    %c0_728 = arith.constant 0 : index
    %610 = vector.load %arg12[%c5_726, %c5_727, %c0_728] : memref<10x10x32xf32, #tpu.memory_space<vmem>>, vector<1x1x32xf32>
    %611 = vector.shape_cast %610 : vector<1x1x32xf32> to vector<1x32xf32>
    %c2_729 = arith.constant 2 : index
    %c2_730 = arith.constant 2 : index
    %c160_731 = arith.constant 160 : index
    %612 = vector.load %arg13[%c2_729, %c2_730, %c160_731] : memref<4x4x512xf32, #tpu.memory_space<vmem>>, vector<1x1x32xf32>
    %613 = vector.shape_cast %612 : vector<1x1x32xf32> to vector<1x32xf32>
    %614 = vector.shape_cast %611 : vector<1x32xf32> to vector<1x1x32xf32>
    tpu.vector_store %arg13[%c2_729, %c2_730, %c160_731], %614 {strides = array<i32>} : memref<4x4x512xf32, #tpu.memory_space<vmem>>, vector<1x1x32xf32>,
    %c5_732 = arith.constant 5 : index
    %c7_733 = arith.constant 7 : index
    %c0_734 = arith.constant 0 : index
    %615 = vector.load %arg12[%c5_732, %c7_733, %c0_734] : memref<10x10x32xf32, #tpu.memory_space<vmem>>, vector<1x1x32xf32>
    %616 = vector.shape_cast %615 : vector<1x1x32xf32> to vector<1x32xf32>
    %c3_735 = arith.constant 3 : index
    %c2_736 = arith.constant 2 : index
    %c160_737 = arith.constant 160 : index
    %617 = vector.load %arg13[%c3_735, %c2_736, %c160_737] : memref<4x4x512xf32, #tpu.memory_space<vmem>>, vector<1x1x32xf32>
    %618 = vector.shape_cast %617 : vector<1x1x32xf32> to vector<1x32xf32>
    %619 = vector.shape_cast %616 : vector<1x32xf32> to vector<1x1x32xf32>
    tpu.vector_store %arg13[%c3_735, %c2_736, %c160_737], %619 {strides = array<i32>} : memref<4x4x512xf32, #tpu.memory_space<vmem>>, vector<1x1x32xf32>,
    %c7_738 = arith.constant 7 : index
    %c1_739 = arith.constant 1 : index
    %c0_740 = arith.constant 0 : index
    %620 = vector.load %arg12[%c7_738, %c1_739, %c0_740] : memref<10x10x32xf32, #tpu.memory_space<vmem>>, vector<1x1x32xf32>
    %621 = vector.shape_cast %620 : vector<1x1x32xf32> to vector<1x32xf32>
    %c0_741 = arith.constant 0 : index
    %c3_742 = arith.constant 3 : index
    %c160_743 = arith.constant 160 : index
    %622 = vector.load %arg13[%c0_741, %c3_742, %c160_743] : memref<4x4x512xf32, #tpu.memory_space<vmem>>, vector<1x1x32xf32>
    %623 = vector.shape_cast %622 : vector<1x1x32xf32> to vector<1x32xf32>
    %624 = vector.shape_cast %621 : vector<1x32xf32> to vector<1x1x32xf32>
    tpu.vector_store %arg13[%c0_741, %c3_742, %c160_743], %624 {strides = array<i32>} : memref<4x4x512xf32, #tpu.memory_space<vmem>>, vector<1x1x32xf32>,
    %c7_744 = arith.constant 7 : index
    %c3_745 = arith.constant 3 : index
    %c0_746 = arith.constant 0 : index
    %625 = vector.load %arg12[%c7_744, %c3_745, %c0_746] : memref<10x10x32xf32, #tpu.memory_space<vmem>>, vector<1x1x32xf32>
    %626 = vector.shape_cast %625 : vector<1x1x32xf32> to vector<1x32xf32>
    %c1_747 = arith.constant 1 : index
    %c3_748 = arith.constant 3 : index
    %c160_749 = arith.constant 160 : index
    %627 = vector.load %arg13[%c1_747, %c3_748, %c160_749] : memref<4x4x512xf32, #tpu.memory_space<vmem>>, vector<1x1x32xf32>
    %628 = vector.shape_cast %627 : vector<1x1x32xf32> to vector<1x32xf32>
    %629 = vector.shape_cast %626 : vector<1x32xf32> to vector<1x1x32xf32>
    tpu.vector_store %arg13[%c1_747, %c3_748, %c160_749], %629 {strides = array<i32>} : memref<4x4x512xf32, #tpu.memory_space<vmem>>, vector<1x1x32xf32>,
    %c7_750 = arith.constant 7 : index
    %c5_751 = arith.constant 5 : index
    %c0_752 = arith.constant 0 : index
    %630 = vector.load %arg12[%c7_750, %c5_751, %c0_752] : memref<10x10x32xf32, #tpu.memory_space<vmem>>, vector<1x1x32xf32>
    %631 = vector.shape_cast %630 : vector<1x1x32xf32> to vector<1x32xf32>
    %c2_753 = arith.constant 2 : index
    %c3_754 = arith.constant 3 : index
    %c160_755 = arith.constant 160 : index
    %632 = vector.load %arg13[%c2_753, %c3_754, %c160_755] : memref<4x4x512xf32, #tpu.memory_space<vmem>>, vector<1x1x32xf32>
    %633 = vector.shape_cast %632 : vector<1x1x32xf32> to vector<1x32xf32>
    %634 = vector.shape_cast %631 : vector<1x32xf32> to vector<1x1x32xf32>
    tpu.vector_store %arg13[%c2_753, %c3_754, %c160_755], %634 {strides = array<i32>} : memref<4x4x512xf32, #tpu.memory_space<vmem>>, vector<1x1x32xf32>,
    %c7_756 = arith.constant 7 : index
    %c7_757 = arith.constant 7 : index
    %c0_758 = arith.constant 0 : index
    %635 = vector.load %arg12[%c7_756, %c7_757, %c0_758] : memref<10x10x32xf32, #tpu.memory_space<vmem>>, vector<1x1x32xf32>
    %636 = vector.shape_cast %635 : vector<1x1x32xf32> to vector<1x32xf32>
    %c3_759 = arith.constant 3 : index
    %c3_760 = arith.constant 3 : index
    %c160_761 = arith.constant 160 : index
    %637 = vector.load %arg13[%c3_759, %c3_760, %c160_761] : memref<4x4x512xf32, #tpu.memory_space<vmem>>, vector<1x1x32xf32>
    %638 = vector.shape_cast %637 : vector<1x1x32xf32> to vector<1x32xf32>
    %639 = vector.shape_cast %636 : vector<1x32xf32> to vector<1x1x32xf32>
    tpu.vector_store %arg13[%c3_759, %c3_760, %c160_761], %639 {strides = array<i32>} : memref<4x4x512xf32, #tpu.memory_space<vmem>>, vector<1x1x32xf32>,
    %c1_762 = arith.constant 1 : index
    %c2_763 = arith.constant 2 : index
    %c0_764 = arith.constant 0 : index
    %640 = vector.load %arg12[%c1_762, %c2_763, %c0_764] : memref<10x10x32xf32, #tpu.memory_space<vmem>>, vector<1x1x32xf32>
    %641 = vector.shape_cast %640 : vector<1x1x32xf32> to vector<1x32xf32>
    %c0_765 = arith.constant 0 : index
    %c0_766 = arith.constant 0 : index
    %c192_767 = arith.constant 192 : index
    %642 = vector.load %arg13[%c0_765, %c0_766, %c192_767] : memref<4x4x512xf32, #tpu.memory_space<vmem>>, vector<1x1x32xf32>
    %643 = vector.shape_cast %642 : vector<1x1x32xf32> to vector<1x32xf32>
    %644 = vector.shape_cast %641 : vector<1x32xf32> to vector<1x1x32xf32>
    tpu.vector_store %arg13[%c0_765, %c0_766, %c192_767], %644 {strides = array<i32>} : memref<4x4x512xf32, #tpu.memory_space<vmem>>, vector<1x1x32xf32>,
    %c1_768 = arith.constant 1 : index
    %c4_769 = arith.constant 4 : index
    %c0_770 = arith.constant 0 : index
    %645 = vector.load %arg12[%c1_768, %c4_769, %c0_770] : memref<10x10x32xf32, #tpu.memory_space<vmem>>, vector<1x1x32xf32>
    %646 = vector.shape_cast %645 : vector<1x1x32xf32> to vector<1x32xf32>
    %c1_771 = arith.constant 1 : index
    %c0_772 = arith.constant 0 : index
    %c192_773 = arith.constant 192 : index
    %647 = vector.load %arg13[%c1_771, %c0_772, %c192_773] : memref<4x4x512xf32, #tpu.memory_space<vmem>>, vector<1x1x32xf32>
    %648 = vector.shape_cast %647 : vector<1x1x32xf32> to vector<1x32xf32>
    %649 = vector.shape_cast %646 : vector<1x32xf32> to vector<1x1x32xf32>
    tpu.vector_store %arg13[%c1_771, %c0_772, %c192_773], %649 {strides = array<i32>} : memref<4x4x512xf32, #tpu.memory_space<vmem>>, vector<1x1x32xf32>,
    %c1_774 = arith.constant 1 : index
    %c6_775 = arith.constant 6 : index
    %c0_776 = arith.constant 0 : index
    %650 = vector.load %arg12[%c1_774, %c6_775, %c0_776] : memref<10x10x32xf32, #tpu.memory_space<vmem>>, vector<1x1x32xf32>
    %651 = vector.shape_cast %650 : vector<1x1x32xf32> to vector<1x32xf32>
    %c2_777 = arith.constant 2 : index
    %c0_778 = arith.constant 0 : index
    %c192_779 = arith.constant 192 : index
    %652 = vector.load %arg13[%c2_777, %c0_778, %c192_779] : memref<4x4x512xf32, #tpu.memory_space<vmem>>, vector<1x1x32xf32>
    %653 = vector.shape_cast %652 : vector<1x1x32xf32> to vector<1x32xf32>
    %654 = vector.shape_cast %651 : vector<1x32xf32> to vector<1x1x32xf32>
    tpu.vector_store %arg13[%c2_777, %c0_778, %c192_779], %654 {strides = array<i32>} : memref<4x4x512xf32, #tpu.memory_space<vmem>>, vector<1x1x32xf32>,
    %c1_780 = arith.constant 1 : index
    %c8_781 = arith.constant 8 : index
    %c0_782 = arith.constant 0 : index
    %655 = vector.load %arg12[%c1_780, %c8_781, %c0_782] : memref<10x10x32xf32, #tpu.memory_space<vmem>>, vector<1x1x32xf32>
    %656 = vector.shape_cast %655 : vector<1x1x32xf32> to vector<1x32xf32>
    %c3_783 = arith.constant 3 : index
    %c0_784 = arith.constant 0 : index
    %c192_785 = arith.constant 192 : index
    %657 = vector.load %arg13[%c3_783, %c0_784, %c192_785] : memref<4x4x512xf32, #tpu.memory_space<vmem>>, vector<1x1x32xf32>
    %658 = vector.shape_cast %657 : vector<1x1x32xf32> to vector<1x32xf32>
    %659 = vector.shape_cast %656 : vector<1x32xf32> to vector<1x1x32xf32>
    tpu.vector_store %arg13[%c3_783, %c0_784, %c192_785], %659 {strides = array<i32>} : memref<4x4x512xf32, #tpu.memory_space<vmem>>, vector<1x1x32xf32>,
    %c3_786 = arith.constant 3 : index
    %c2_787 = arith.constant 2 : index
    %c0_788 = arith.constant 0 : index
    %660 = vector.load %arg12[%c3_786, %c2_787, %c0_788] : memref<10x10x32xf32, #tpu.memory_space<vmem>>, vector<1x1x32xf32>
    %661 = vector.shape_cast %660 : vector<1x1x32xf32> to vector<1x32xf32>
    %c0_789 = arith.constant 0 : index
    %c1_790 = arith.constant 1 : index
    %c192_791 = arith.constant 192 : index
    %662 = vector.load %arg13[%c0_789, %c1_790, %c192_791] : memref<4x4x512xf32, #tpu.memory_space<vmem>>, vector<1x1x32xf32>
    %663 = vector.shape_cast %662 : vector<1x1x32xf32> to vector<1x32xf32>
    %664 = vector.shape_cast %661 : vector<1x32xf32> to vector<1x1x32xf32>
    tpu.vector_store %arg13[%c0_789, %c1_790, %c192_791], %664 {strides = array<i32>} : memref<4x4x512xf32, #tpu.memory_space<vmem>>, vector<1x1x32xf32>,
    %c3_792 = arith.constant 3 : index
    %c4_793 = arith.constant 4 : index
    %c0_794 = arith.constant 0 : index
    %665 = vector.load %arg12[%c3_792, %c4_793, %c0_794] : memref<10x10x32xf32, #tpu.memory_space<vmem>>, vector<1x1x32xf32>
    %666 = vector.shape_cast %665 : vector<1x1x32xf32> to vector<1x32xf32>
    %c1_795 = arith.constant 1 : index
    %c1_796 = arith.constant 1 : index
    %c192_797 = arith.constant 192 : index
    %667 = vector.load %arg13[%c1_795, %c1_796, %c192_797] : memref<4x4x512xf32, #tpu.memory_space<vmem>>, vector<1x1x32xf32>
    %668 = vector.shape_cast %667 : vector<1x1x32xf32> to vector<1x32xf32>
    %669 = vector.shape_cast %666 : vector<1x32xf32> to vector<1x1x32xf32>
    tpu.vector_store %arg13[%c1_795, %c1_796, %c192_797], %669 {strides = array<i32>} : memref<4x4x512xf32, #tpu.memory_space<vmem>>, vector<1x1x32xf32>,
    %c3_798 = arith.constant 3 : index
    %c6_799 = arith.constant 6 : index
    %c0_800 = arith.constant 0 : index
    %670 = vector.load %arg12[%c3_798, %c6_799, %c0_800] : memref<10x10x32xf32, #tpu.memory_space<vmem>>, vector<1x1x32xf32>
    %671 = vector.shape_cast %670 : vector<1x1x32xf32> to vector<1x32xf32>
    %c2_801 = arith.constant 2 : index
    %c1_802 = arith.constant 1 : index
    %c192_803 = arith.constant 192 : index
    %672 = vector.load %arg13[%c2_801, %c1_802, %c192_803] : memref<4x4x512xf32, #tpu.memory_space<vmem>>, vector<1x1x32xf32>
    %673 = vector.shape_cast %672 : vector<1x1x32xf32> to vector<1x32xf32>
    %674 = vector.shape_cast %671 : vector<1x32xf32> to vector<1x1x32xf32>
    tpu.vector_store %arg13[%c2_801, %c1_802, %c192_803], %674 {strides = array<i32>} : memref<4x4x512xf32, #tpu.memory_space<vmem>>, vector<1x1x32xf32>,
    %c3_804 = arith.constant 3 : index
    %c8_805 = arith.constant 8 : index
    %c0_806 = arith.constant 0 : index
    %675 = vector.load %arg12[%c3_804, %c8_805, %c0_806] : memref<10x10x32xf32, #tpu.memory_space<vmem>>, vector<1x1x32xf32>
    %676 = vector.shape_cast %675 : vector<1x1x32xf32> to vector<1x32xf32>
    %c3_807 = arith.constant 3 : index
    %c1_808 = arith.constant 1 : index
    %c192_809 = arith.constant 192 : index
    %677 = vector.load %arg13[%c3_807, %c1_808, %c192_809] : memref<4x4x512xf32, #tpu.memory_space<vmem>>, vector<1x1x32xf32>
    %678 = vector.shape_cast %677 : vector<1x1x32xf32> to vector<1x32xf32>
    %679 = vector.shape_cast %676 : vector<1x32xf32> to vector<1x1x32xf32>
    tpu.vector_store %arg13[%c3_807, %c1_808, %c192_809], %679 {strides = array<i32>} : memref<4x4x512xf32, #tpu.memory_space<vmem>>, vector<1x1x32xf32>,
    %c5_810 = arith.constant 5 : index
    %c2_811 = arith.constant 2 : index
    %c0_812 = arith.constant 0 : index
    %680 = vector.load %arg12[%c5_810, %c2_811, %c0_812] : memref<10x10x32xf32, #tpu.memory_space<vmem>>, vector<1x1x32xf32>
    %681 = vector.shape_cast %680 : vector<1x1x32xf32> to vector<1x32xf32>
    %c0_813 = arith.constant 0 : index
    %c2_814 = arith.constant 2 : index
    %c192_815 = arith.constant 192 : index
    %682 = vector.load %arg13[%c0_813, %c2_814, %c192_815] : memref<4x4x512xf32, #tpu.memory_space<vmem>>, vector<1x1x32xf32>
    %683 = vector.shape_cast %682 : vector<1x1x32xf32> to vector<1x32xf32>
    %684 = vector.shape_cast %681 : vector<1x32xf32> to vector<1x1x32xf32>
    tpu.vector_store %arg13[%c0_813, %c2_814, %c192_815], %684 {strides = array<i32>} : memref<4x4x512xf32, #tpu.memory_space<vmem>>, vector<1x1x32xf32>,
    %c5_816 = arith.constant 5 : index
    %c4_817 = arith.constant 4 : index
    %c0_818 = arith.constant 0 : index
    %685 = vector.load %arg12[%c5_816, %c4_817, %c0_818] : memref<10x10x32xf32, #tpu.memory_space<vmem>>, vector<1x1x32xf32>
    %686 = vector.shape_cast %685 : vector<1x1x32xf32> to vector<1x32xf32>
    %c1_819 = arith.constant 1 : index
    %c2_820 = arith.constant 2 : index
    %c192_821 = arith.constant 192 : index
    %687 = vector.load %arg13[%c1_819, %c2_820, %c192_821] : memref<4x4x512xf32, #tpu.memory_space<vmem>>, vector<1x1x32xf32>
    %688 = vector.shape_cast %687 : vector<1x1x32xf32> to vector<1x32xf32>
    %689 = vector.shape_cast %686 : vector<1x32xf32> to vector<1x1x32xf32>
    tpu.vector_store %arg13[%c1_819, %c2_820, %c192_821], %689 {strides = array<i32>} : memref<4x4x512xf32, #tpu.memory_space<vmem>>, vector<1x1x32xf32>,
    %c5_822 = arith.constant 5 : index
    %c6_823 = arith.constant 6 : index
    %c0_824 = arith.constant 0 : index
    %690 = vector.load %arg12[%c5_822, %c6_823, %c0_824] : memref<10x10x32xf32, #tpu.memory_space<vmem>>, vector<1x1x32xf32>
    %691 = vector.shape_cast %690 : vector<1x1x32xf32> to vector<1x32xf32>
    %c2_825 = arith.constant 2 : index
    %c2_826 = arith.constant 2 : index
    %c192_827 = arith.constant 192 : index
    %692 = vector.load %arg13[%c2_825, %c2_826, %c192_827] : memref<4x4x512xf32, #tpu.memory_space<vmem>>, vector<1x1x32xf32>
    %693 = vector.shape_cast %692 : vector<1x1x32xf32> to vector<1x32xf32>
    %694 = vector.shape_cast %691 : vector<1x32xf32> to vector<1x1x32xf32>
    tpu.vector_store %arg13[%c2_825, %c2_826, %c192_827], %694 {strides = array<i32>} : memref<4x4x512xf32, #tpu.memory_space<vmem>>, vector<1x1x32xf32>,
    %c5_828 = arith.constant 5 : index
    %c8_829 = arith.constant 8 : index
    %c0_830 = arith.constant 0 : index
    %695 = vector.load %arg12[%c5_828, %c8_829, %c0_830] : memref<10x10x32xf32, #tpu.memory_space<vmem>>, vector<1x1x32xf32>
    %696 = vector.shape_cast %695 : vector<1x1x32xf32> to vector<1x32xf32>
    %c3_831 = arith.constant 3 : index
    %c2_832 = arith.constant 2 : index
    %c192_833 = arith.constant 192 : index
    %697 = vector.load %arg13[%c3_831, %c2_832, %c192_833] : memref<4x4x512xf32, #tpu.memory_space<vmem>>, vector<1x1x32xf32>
    %698 = vector.shape_cast %697 : vector<1x1x32xf32> to vector<1x32xf32>
    %699 = vector.shape_cast %696 : vector<1x32xf32> to vector<1x1x32xf32>
    tpu.vector_store %arg13[%c3_831, %c2_832, %c192_833], %699 {strides = array<i32>} : memref<4x4x512xf32, #tpu.memory_space<vmem>>, vector<1x1x32xf32>,
    %c7_834 = arith.constant 7 : index
    %c2_835 = arith.constant 2 : index
    %c0_836 = arith.constant 0 : index
    %700 = vector.load %arg12[%c7_834, %c2_835, %c0_836] : memref<10x10x32xf32, #tpu.memory_space<vmem>>, vector<1x1x32xf32>
    %701 = vector.shape_cast %700 : vector<1x1x32xf32> to vector<1x32xf32>
    %c0_837 = arith.constant 0 : index
    %c3_838 = arith.constant 3 : index
    %c192_839 = arith.constant 192 : index
    %702 = vector.load %arg13[%c0_837, %c3_838, %c192_839] : memref<4x4x512xf32, #tpu.memory_space<vmem>>, vector<1x1x32xf32>
    %703 = vector.shape_cast %702 : vector<1x1x32xf32> to vector<1x32xf32>
    %704 = vector.shape_cast %701 : vector<1x32xf32> to vector<1x1x32xf32>
    tpu.vector_store %arg13[%c0_837, %c3_838, %c192_839], %704 {strides = array<i32>} : memref<4x4x512xf32, #tpu.memory_space<vmem>>, vector<1x1x32xf32>,
    %c7_840 = arith.constant 7 : index
    %c4_841 = arith.constant 4 : index
    %c0_842 = arith.constant 0 : index
    %705 = vector.load %arg12[%c7_840, %c4_841, %c0_842] : memref<10x10x32xf32, #tpu.memory_space<vmem>>, vector<1x1x32xf32>
    %706 = vector.shape_cast %705 : vector<1x1x32xf32> to vector<1x32xf32>
    %c1_843 = arith.constant 1 : index
    %c3_844 = arith.constant 3 : index
    %c192_845 = arith.constant 192 : index
    %707 = vector.load %arg13[%c1_843, %c3_844, %c192_845] : memref<4x4x512xf32, #tpu.memory_space<vmem>>, vector<1x1x32xf32>
    %708 = vector.shape_cast %707 : vector<1x1x32xf32> to vector<1x32xf32>
    %709 = vector.shape_cast %706 : vector<1x32xf32> to vector<1x1x32xf32>
    tpu.vector_store %arg13[%c1_843, %c3_844, %c192_845], %709 {strides = array<i32>} : memref<4x4x512xf32, #tpu.memory_space<vmem>>, vector<1x1x32xf32>,
    %c7_846 = arith.constant 7 : index
    %c6_847 = arith.constant 6 : index
    %c0_848 = arith.constant 0 : index
    %710 = vector.load %arg12[%c7_846, %c6_847, %c0_848] : memref<10x10x32xf32, #tpu.memory_space<vmem>>, vector<1x1x32xf32>
    %711 = vector.shape_cast %710 : vector<1x1x32xf32> to vector<1x32xf32>
    %c2_849 = arith.constant 2 : index
    %c3_850 = arith.constant 3 : index
    %c192_851 = arith.constant 192 : index
    %712 = vector.load %arg13[%c2_849, %c3_850, %c192_851] : memref<4x4x512xf32, #tpu.memory_space<vmem>>, vector<1x1x32xf32>
    %713 = vector.shape_cast %712 : vector<1x1x32xf32> to vector<1x32xf32>
    %714 = vector.shape_cast %711 : vector<1x32xf32> to vector<1x1x32xf32>
    tpu.vector_store %arg13[%c2_849, %c3_850, %c192_851], %714 {strides = array<i32>} : memref<4x4x512xf32, #tpu.memory_space<vmem>>, vector<1x1x32xf32>,
    %c7_852 = arith.constant 7 : index
    %c8_853 = arith.constant 8 : index
    %c0_854 = arith.constant 0 : index
    %715 = vector.load %arg12[%c7_852, %c8_853, %c0_854] : memref<10x10x32xf32, #tpu.memory_space<vmem>>, vector<1x1x32xf32>
    %716 = vector.shape_cast %715 : vector<1x1x32xf32> to vector<1x32xf32>
    %c3_855 = arith.constant 3 : index
    %c3_856 = arith.constant 3 : index
    %c192_857 = arith.constant 192 : index
    %717 = vector.load %arg13[%c3_855, %c3_856, %c192_857] : memref<4x4x512xf32, #tpu.memory_space<vmem>>, vector<1x1x32xf32>
    %718 = vector.shape_cast %717 : vector<1x1x32xf32> to vector<1x32xf32>
    %719 = vector.shape_cast %716 : vector<1x32xf32> to vector<1x1x32xf32>
    tpu.vector_store %arg13[%c3_855, %c3_856, %c192_857], %719 {strides = array<i32>} : memref<4x4x512xf32, #tpu.memory_space<vmem>>, vector<1x1x32xf32>,
    %c1_858 = arith.constant 1 : index
    %c3_859 = arith.constant 3 : index
    %c0_860 = arith.constant 0 : index
    %720 = vector.load %arg12[%c1_858, %c3_859, %c0_860] : memref<10x10x32xf32, #tpu.memory_space<vmem>>, vector<1x1x32xf32>
    %721 = vector.shape_cast %720 : vector<1x1x32xf32> to vector<1x32xf32>
    %c0_861 = arith.constant 0 : index
    %c0_862 = arith.constant 0 : index
    %c224_863 = arith.constant 224 : index
    %722 = vector.load %arg13[%c0_861, %c0_862, %c224_863] : memref<4x4x512xf32, #tpu.memory_space<vmem>>, vector<1x1x32xf32>
    %723 = vector.shape_cast %722 : vector<1x1x32xf32> to vector<1x32xf32>
    %724 = vector.shape_cast %721 : vector<1x32xf32> to vector<1x1x32xf32>
    tpu.vector_store %arg13[%c0_861, %c0_862, %c224_863], %724 {strides = array<i32>} : memref<4x4x512xf32, #tpu.memory_space<vmem>>, vector<1x1x32xf32>,
    %c1_864 = arith.constant 1 : index
    %c5_865 = arith.constant 5 : index
    %c0_866 = arith.constant 0 : index
    %725 = vector.load %arg12[%c1_864, %c5_865, %c0_866] : memref<10x10x32xf32, #tpu.memory_space<vmem>>, vector<1x1x32xf32>
    %726 = vector.shape_cast %725 : vector<1x1x32xf32> to vector<1x32xf32>
    %c1_867 = arith.constant 1 : index
    %c0_868 = arith.constant 0 : index
    %c224_869 = arith.constant 224 : index
    %727 = vector.load %arg13[%c1_867, %c0_868, %c224_869] : memref<4x4x512xf32, #tpu.memory_space<vmem>>, vector<1x1x32xf32>
    %728 = vector.shape_cast %727 : vector<1x1x32xf32> to vector<1x32xf32>
    %729 = vector.shape_cast %726 : vector<1x32xf32> to vector<1x1x32xf32>
    tpu.vector_store %arg13[%c1_867, %c0_868, %c224_869], %729 {strides = array<i32>} : memref<4x4x512xf32, #tpu.memory_space<vmem>>, vector<1x1x32xf32>,
    %c1_870 = arith.constant 1 : index
    %c7_871 = arith.constant 7 : index
    %c0_872 = arith.constant 0 : index
    %730 = vector.load %arg12[%c1_870, %c7_871, %c0_872] : memref<10x10x32xf32, #tpu.memory_space<vmem>>, vector<1x1x32xf32>
    %731 = vector.shape_cast %730 : vector<1x1x32xf32> to vector<1x32xf32>
    %c2_873 = arith.constant 2 : index
    %c0_874 = arith.constant 0 : index
    %c224_875 = arith.constant 224 : index
    %732 = vector.load %arg13[%c2_873, %c0_874, %c224_875] : memref<4x4x512xf32, #tpu.memory_space<vmem>>, vector<1x1x32xf32>
    %733 = vector.shape_cast %732 : vector<1x1x32xf32> to vector<1x32xf32>
    %734 = vector.shape_cast %731 : vector<1x32xf32> to vector<1x1x32xf32>
    tpu.vector_store %arg13[%c2_873, %c0_874, %c224_875], %734 {strides = array<i32>} : memref<4x4x512xf32, #tpu.memory_space<vmem>>, vector<1x1x32xf32>,
    %c1_876 = arith.constant 1 : index
    %c9_877 = arith.constant 9 : index
    %c0_878 = arith.constant 0 : index
    %735 = vector.load %arg12[%c1_876, %c9_877, %c0_878] : memref<10x10x32xf32, #tpu.memory_space<vmem>>, vector<1x1x32xf32>
    %736 = vector.shape_cast %735 : vector<1x1x32xf32> to vector<1x32xf32>
    %c3_879 = arith.constant 3 : index
    %c0_880 = arith.constant 0 : index
    %c224_881 = arith.constant 224 : index
    %737 = vector.load %arg13[%c3_879, %c0_880, %c224_881] : memref<4x4x512xf32, #tpu.memory_space<vmem>>, vector<1x1x32xf32>
    %738 = vector.shape_cast %737 : vector<1x1x32xf32> to vector<1x32xf32>
    %739 = vector.shape_cast %736 : vector<1x32xf32> to vector<1x1x32xf32>
    tpu.vector_store %arg13[%c3_879, %c0_880, %c224_881], %739 {strides = array<i32>} : memref<4x4x512xf32, #tpu.memory_space<vmem>>, vector<1x1x32xf32>,
    %c3_882 = arith.constant 3 : index
    %c3_883 = arith.constant 3 : index
    %c0_884 = arith.constant 0 : index
    %740 = vector.load %arg12[%c3_882, %c3_883, %c0_884] : memref<10x10x32xf32, #tpu.memory_space<vmem>>, vector<1x1x32xf32>
    %741 = vector.shape_cast %740 : vector<1x1x32xf32> to vector<1x32xf32>
    %c0_885 = arith.constant 0 : index
    %c1_886 = arith.constant 1 : index
    %c224_887 = arith.constant 224 : index
    %742 = vector.load %arg13[%c0_885, %c1_886, %c224_887] : memref<4x4x512xf32, #tpu.memory_space<vmem>>, vector<1x1x32xf32>
    %743 = vector.shape_cast %742 : vector<1x1x32xf32> to vector<1x32xf32>
    %744 = vector.shape_cast %741 : vector<1x32xf32> to vector<1x1x32xf32>
    tpu.vector_store %arg13[%c0_885, %c1_886, %c224_887], %744 {strides = array<i32>} : memref<4x4x512xf32, #tpu.memory_space<vmem>>, vector<1x1x32xf32>,
    %c3_888 = arith.constant 3 : index
    %c5_889 = arith.constant 5 : index
    %c0_890 = arith.constant 0 : index
    %745 = vector.load %arg12[%c3_888, %c5_889, %c0_890] : memref<10x10x32xf32, #tpu.memory_space<vmem>>, vector<1x1x32xf32>
    %746 = vector.shape_cast %745 : vector<1x1x32xf32> to vector<1x32xf32>
    %c1_891 = arith.constant 1 : index
    %c1_892 = arith.constant 1 : index
    %c224_893 = arith.constant 224 : index
    %747 = vector.load %arg13[%c1_891, %c1_892, %c224_893] : memref<4x4x512xf32, #tpu.memory_space<vmem>>, vector<1x1x32xf32>
    %748 = vector.shape_cast %747 : vector<1x1x32xf32> to vector<1x32xf32>
    %749 = vector.shape_cast %746 : vector<1x32xf32> to vector<1x1x32xf32>
    tpu.vector_store %arg13[%c1_891, %c1_892, %c224_893], %749 {strides = array<i32>} : memref<4x4x512xf32, #tpu.memory_space<vmem>>, vector<1x1x32xf32>,
    %c3_894 = arith.constant 3 : index
    %c7_895 = arith.constant 7 : index
    %c0_896 = arith.constant 0 : index
    %750 = vector.load %arg12[%c3_894, %c7_895, %c0_896] : memref<10x10x32xf32, #tpu.memory_space<vmem>>, vector<1x1x32xf32>
    %751 = vector.shape_cast %750 : vector<1x1x32xf32> to vector<1x32xf32>
    %c2_897 = arith.constant 2 : index
    %c1_898 = arith.constant 1 : index
    %c224_899 = arith.constant 224 : index
    %752 = vector.load %arg13[%c2_897, %c1_898, %c224_899] : memref<4x4x512xf32, #tpu.memory_space<vmem>>, vector<1x1x32xf32>
    %753 = vector.shape_cast %752 : vector<1x1x32xf32> to vector<1x32xf32>
    %754 = vector.shape_cast %751 : vector<1x32xf32> to vector<1x1x32xf32>
    tpu.vector_store %arg13[%c2_897, %c1_898, %c224_899], %754 {strides = array<i32>} : memref<4x4x512xf32, #tpu.memory_space<vmem>>, vector<1x1x32xf32>,
    %c3_900 = arith.constant 3 : index
    %c9_901 = arith.constant 9 : index
    %c0_902 = arith.constant 0 : index
    %755 = vector.load %arg12[%c3_900, %c9_901, %c0_902] : memref<10x10x32xf32, #tpu.memory_space<vmem>>, vector<1x1x32xf32>
    %756 = vector.shape_cast %755 : vector<1x1x32xf32> to vector<1x32xf32>
    %c3_903 = arith.constant 3 : index
    %c1_904 = arith.constant 1 : index
    %c224_905 = arith.constant 224 : index
    %757 = vector.load %arg13[%c3_903, %c1_904, %c224_905] : memref<4x4x512xf32, #tpu.memory_space<vmem>>, vector<1x1x32xf32>
    %758 = vector.shape_cast %757 : vector<1x1x32xf32> to vector<1x32xf32>
    %759 = vector.shape_cast %756 : vector<1x32xf32> to vector<1x1x32xf32>
    tpu.vector_store %arg13[%c3_903, %c1_904, %c224_905], %759 {strides = array<i32>} : memref<4x4x512xf32, #tpu.memory_space<vmem>>, vector<1x1x32xf32>,
    %c5_906 = arith.constant 5 : index
    %c3_907 = arith.constant 3 : index
    %c0_908 = arith.constant 0 : index
    %760 = vector.load %arg12[%c5_906, %c3_907, %c0_908] : memref<10x10x32xf32, #tpu.memory_space<vmem>>, vector<1x1x32xf32>
    %761 = vector.shape_cast %760 : vector<1x1x32xf32> to vector<1x32xf32>
    %c0_909 = arith.constant 0 : index
    %c2_910 = arith.constant 2 : index
    %c224_911 = arith.constant 224 : index
    %762 = vector.load %arg13[%c0_909, %c2_910, %c224_911] : memref<4x4x512xf32, #tpu.memory_space<vmem>>, vector<1x1x32xf32>
    %763 = vector.shape_cast %762 : vector<1x1x32xf32> to vector<1x32xf32>
    %764 = vector.shape_cast %761 : vector<1x32xf32> to vector<1x1x32xf32>
    tpu.vector_store %arg13[%c0_909, %c2_910, %c224_911], %764 {strides = array<i32>} : memref<4x4x512xf32, #tpu.memory_space<vmem>>, vector<1x1x32xf32>,
    %c5_912 = arith.constant 5 : index
    %c5_913 = arith.constant 5 : index
    %c0_914 = arith.constant 0 : index
    %765 = vector.load %arg12[%c5_912, %c5_913, %c0_914] : memref<10x10x32xf32, #tpu.memory_space<vmem>>, vector<1x1x32xf32>
    %766 = vector.shape_cast %765 : vector<1x1x32xf32> to vector<1x32xf32>
    %c1_915 = arith.constant 1 : index
    %c2_916 = arith.constant 2 : index
    %c224_917 = arith.constant 224 : index
    %767 = vector.load %arg13[%c1_915, %c2_916, %c224_917] : memref<4x4x512xf32, #tpu.memory_space<vmem>>, vector<1x1x32xf32>
    %768 = vector.shape_cast %767 : vector<1x1x32xf32> to vector<1x32xf32>
    %769 = vector.shape_cast %766 : vector<1x32xf32> to vector<1x1x32xf32>
    tpu.vector_store %arg13[%c1_915, %c2_916, %c224_917], %769 {strides = array<i32>} : memref<4x4x512xf32, #tpu.memory_space<vmem>>, vector<1x1x32xf32>,
    %c5_918 = arith.constant 5 : index
    %c7_919 = arith.constant 7 : index
    %c0_920 = arith.constant 0 : index
    %770 = vector.load %arg12[%c5_918, %c7_919, %c0_920] : memref<10x10x32xf32, #tpu.memory_space<vmem>>, vector<1x1x32xf32>
    %771 = vector.shape_cast %770 : vector<1x1x32xf32> to vector<1x32xf32>
    %c2_921 = arith.constant 2 : index
    %c2_922 = arith.constant 2 : index
    %c224_923 = arith.constant 224 : index
    %772 = vector.load %arg13[%c2_921, %c2_922, %c224_923] : memref<4x4x512xf32, #tpu.memory_space<vmem>>, vector<1x1x32xf32>
    %773 = vector.shape_cast %772 : vector<1x1x32xf32> to vector<1x32xf32>
    %774 = vector.shape_cast %771 : vector<1x32xf32> to vector<1x1x32xf32>
    tpu.vector_store %arg13[%c2_921, %c2_922, %c224_923], %774 {strides = array<i32>} : memref<4x4x512xf32, #tpu.memory_space<vmem>>, vector<1x1x32xf32>,
    %c5_924 = arith.constant 5 : index
    %c9_925 = arith.constant 9 : index
    %c0_926 = arith.constant 0 : index
    %775 = vector.load %arg12[%c5_924, %c9_925, %c0_926] : memref<10x10x32xf32, #tpu.memory_space<vmem>>, vector<1x1x32xf32>
    %776 = vector.shape_cast %775 : vector<1x1x32xf32> to vector<1x32xf32>
    %c3_927 = arith.constant 3 : index
    %c2_928 = arith.constant 2 : index
    %c224_929 = arith.constant 224 : index
    %777 = vector.load %arg13[%c3_927, %c2_928, %c224_929] : memref<4x4x512xf32, #tpu.memory_space<vmem>>, vector<1x1x32xf32>
    %778 = vector.shape_cast %777 : vector<1x1x32xf32> to vector<1x32xf32>
    %779 = vector.shape_cast %776 : vector<1x32xf32> to vector<1x1x32xf32>
    tpu.vector_store %arg13[%c3_927, %c2_928, %c224_929], %779 {strides = array<i32>} : memref<4x4x512xf32, #tpu.memory_space<vmem>>, vector<1x1x32xf32>,
    %c7_930 = arith.constant 7 : index
    %c3_931 = arith.constant 3 : index
    %c0_932 = arith.constant 0 : index
    %780 = vector.load %arg12[%c7_930, %c3_931, %c0_932] : memref<10x10x32xf32, #tpu.memory_space<vmem>>, vector<1x1x32xf32>
    %781 = vector.shape_cast %780 : vector<1x1x32xf32> to vector<1x32xf32>
    %c0_933 = arith.constant 0 : index
    %c3_934 = arith.constant 3 : index
    %c224_935 = arith.constant 224 : index
    %782 = vector.load %arg13[%c0_933, %c3_934, %c224_935] : memref<4x4x512xf32, #tpu.memory_space<vmem>>, vector<1x1x32xf32>
    %783 = vector.shape_cast %782 : vector<1x1x32xf32> to vector<1x32xf32>
    %784 = vector.shape_cast %781 : vector<1x32xf32> to vector<1x1x32xf32>
    tpu.vector_store %arg13[%c0_933, %c3_934, %c224_935], %784 {strides = array<i32>} : memref<4x4x512xf32, #tpu.memory_space<vmem>>, vector<1x1x32xf32>,
    %c7_936 = arith.constant 7 : index
    %c5_937 = arith.constant 5 : index
    %c0_938 = arith.constant 0 : index
    %785 = vector.load %arg12[%c7_936, %c5_937, %c0_938] : memref<10x10x32xf32, #tpu.memory_space<vmem>>, vector<1x1x32xf32>
    %786 = vector.shape_cast %785 : vector<1x1x32xf32> to vector<1x32xf32>
    %c1_939 = arith.constant 1 : index
    %c3_940 = arith.constant 3 : index
    %c224_941 = arith.constant 224 : index
    %787 = vector.load %arg13[%c1_939, %c3_940, %c224_941] : memref<4x4x512xf32, #tpu.memory_space<vmem>>, vector<1x1x32xf32>
    %788 = vector.shape_cast %787 : vector<1x1x32xf32> to vector<1x32xf32>
    %789 = vector.shape_cast %786 : vector<1x32xf32> to vector<1x1x32xf32>
    tpu.vector_store %arg13[%c1_939, %c3_940, %c224_941], %789 {strides = array<i32>} : memref<4x4x512xf32, #tpu.memory_space<vmem>>, vector<1x1x32xf32>,
    %c7_942 = arith.constant 7 : index
    %c7_943 = arith.constant 7 : index
    %c0_944 = arith.constant 0 : index
    %790 = vector.load %arg12[%c7_942, %c7_943, %c0_944] : memref<10x10x32xf32, #tpu.memory_space<vmem>>, vector<1x1x32xf32>
    %791 = vector.shape_cast %790 : vector<1x1x32xf32> to vector<1x32xf32>
    %c2_945 = arith.constant 2 : index
    %c3_946 = arith.constant 3 : index
    %c224_947 = arith.constant 224 : index
    %792 = vector.load %arg13[%c2_945, %c3_946, %c224_947] : memref<4x4x512xf32, #tpu.memory_space<vmem>>, vector<1x1x32xf32>
    %793 = vector.shape_cast %792 : vector<1x1x32xf32> to vector<1x32xf32>
    %794 = vector.shape_cast %791 : vector<1x32xf32> to vector<1x1x32xf32>
    tpu.vector_store %arg13[%c2_945, %c3_946, %c224_947], %794 {strides = array<i32>} : memref<4x4x512xf32, #tpu.memory_space<vmem>>, vector<1x1x32xf32>,
    %c7_948 = arith.constant 7 : index
    %c9_949 = arith.constant 9 : index
    %c0_950 = arith.constant 0 : index
    %795 = vector.load %arg12[%c7_948, %c9_949, %c0_950] : memref<10x10x32xf32, #tpu.memory_space<vmem>>, vector<1x1x32xf32>
    %796 = vector.shape_cast %795 : vector<1x1x32xf32> to vector<1x32xf32>
    %c3_951 = arith.constant 3 : index
    %c3_952 = arith.constant 3 : index
    %c224_953 = arith.constant 224 : index
    %797 = vector.load %arg13[%c3_951, %c3_952, %c224_953] : memref<4x4x512xf32, #tpu.memory_space<vmem>>, vector<1x1x32xf32>
    %798 = vector.shape_cast %797 : vector<1x1x32xf32> to vector<1x32xf32>
    %799 = vector.shape_cast %796 : vector<1x32xf32> to vector<1x1x32xf32>
    tpu.vector_store %arg13[%c3_951, %c3_952, %c224_953], %799 {strides = array<i32>} : memref<4x4x512xf32, #tpu.memory_space<vmem>>, vector<1x1x32xf32>,
    %c2_954 = arith.constant 2 : index
    %c0_955 = arith.constant 0 : index
    %c0_956 = arith.constant 0 : index
    %800 = vector.load %arg12[%c2_954, %c0_955, %c0_956] : memref<10x10x32xf32, #tpu.memory_space<vmem>>, vector<1x1x32xf32>
    %801 = vector.shape_cast %800 : vector<1x1x32xf32> to vector<1x32xf32>
    %c0_957 = arith.constant 0 : index
    %c0_958 = arith.constant 0 : index
    %c256 = arith.constant 256 : index
    %802 = vector.load %arg13[%c0_957, %c0_958, %c256] : memref<4x4x512xf32, #tpu.memory_space<vmem>>, vector<1x1x32xf32>
    %803 = vector.shape_cast %802 : vector<1x1x32xf32> to vector<1x32xf32>
    %804 = vector.shape_cast %801 : vector<1x32xf32> to vector<1x1x32xf32>
    tpu.vector_store %arg13[%c0_957, %c0_958, %c256], %804 {strides = array<i32>} : memref<4x4x512xf32, #tpu.memory_space<vmem>>, vector<1x1x32xf32>,
    %c2_959 = arith.constant 2 : index
    %c2_960 = arith.constant 2 : index
    %c0_961 = arith.constant 0 : index
    %805 = vector.load %arg12[%c2_959, %c2_960, %c0_961] : memref<10x10x32xf32, #tpu.memory_space<vmem>>, vector<1x1x32xf32>
    %806 = vector.shape_cast %805 : vector<1x1x32xf32> to vector<1x32xf32>
    %c1_962 = arith.constant 1 : index
    %c0_963 = arith.constant 0 : index
    %c256_964 = arith.constant 256 : index
    %807 = vector.load %arg13[%c1_962, %c0_963, %c256_964] : memref<4x4x512xf32, #tpu.memory_space<vmem>>, vector<1x1x32xf32>
    %808 = vector.shape_cast %807 : vector<1x1x32xf32> to vector<1x32xf32>
    %809 = vector.shape_cast %806 : vector<1x32xf32> to vector<1x1x32xf32>
    tpu.vector_store %arg13[%c1_962, %c0_963, %c256_964], %809 {strides = array<i32>} : memref<4x4x512xf32, #tpu.memory_space<vmem>>, vector<1x1x32xf32>,
    %c2_965 = arith.constant 2 : index
    %c4_966 = arith.constant 4 : index
    %c0_967 = arith.constant 0 : index
    %810 = vector.load %arg12[%c2_965, %c4_966, %c0_967] : memref<10x10x32xf32, #tpu.memory_space<vmem>>, vector<1x1x32xf32>
    %811 = vector.shape_cast %810 : vector<1x1x32xf32> to vector<1x32xf32>
    %c2_968 = arith.constant 2 : index
    %c0_969 = arith.constant 0 : index
    %c256_970 = arith.constant 256 : index
    %812 = vector.load %arg13[%c2_968, %c0_969, %c256_970] : memref<4x4x512xf32, #tpu.memory_space<vmem>>, vector<1x1x32xf32>
    %813 = vector.shape_cast %812 : vector<1x1x32xf32> to vector<1x32xf32>
    %814 = vector.shape_cast %811 : vector<1x32xf32> to vector<1x1x32xf32>
    tpu.vector_store %arg13[%c2_968, %c0_969, %c256_970], %814 {strides = array<i32>} : memref<4x4x512xf32, #tpu.memory_space<vmem>>, vector<1x1x32xf32>,
    %c2_971 = arith.constant 2 : index
    %c6_972 = arith.constant 6 : index
    %c0_973 = arith.constant 0 : index
    %815 = vector.load %arg12[%c2_971, %c6_972, %c0_973] : memref<10x10x32xf32, #tpu.memory_space<vmem>>, vector<1x1x32xf32>
    %816 = vector.shape_cast %815 : vector<1x1x32xf32> to vector<1x32xf32>
    %c3_974 = arith.constant 3 : index
    %c0_975 = arith.constant 0 : index
    %c256_976 = arith.constant 256 : index
    %817 = vector.load %arg13[%c3_974, %c0_975, %c256_976] : memref<4x4x512xf32, #tpu.memory_space<vmem>>, vector<1x1x32xf32>
    %818 = vector.shape_cast %817 : vector<1x1x32xf32> to vector<1x32xf32>
    %819 = vector.shape_cast %816 : vector<1x32xf32> to vector<1x1x32xf32>
    tpu.vector_store %arg13[%c3_974, %c0_975, %c256_976], %819 {strides = array<i32>} : memref<4x4x512xf32, #tpu.memory_space<vmem>>, vector<1x1x32xf32>,
    %c4_977 = arith.constant 4 : index
    %c0_978 = arith.constant 0 : index
    %c0_979 = arith.constant 0 : index
    %820 = vector.load %arg12[%c4_977, %c0_978, %c0_979] : memref<10x10x32xf32, #tpu.memory_space<vmem>>, vector<1x1x32xf32>
    %821 = vector.shape_cast %820 : vector<1x1x32xf32> to vector<1x32xf32>
    %c0_980 = arith.constant 0 : index
    %c1_981 = arith.constant 1 : index
    %c256_982 = arith.constant 256 : index
    %822 = vector.load %arg13[%c0_980, %c1_981, %c256_982] : memref<4x4x512xf32, #tpu.memory_space<vmem>>, vector<1x1x32xf32>
    %823 = vector.shape_cast %822 : vector<1x1x32xf32> to vector<1x32xf32>
    %824 = vector.shape_cast %821 : vector<1x32xf32> to vector<1x1x32xf32>
    tpu.vector_store %arg13[%c0_980, %c1_981, %c256_982], %824 {strides = array<i32>} : memref<4x4x512xf32, #tpu.memory_space<vmem>>, vector<1x1x32xf32>,
    %c4_983 = arith.constant 4 : index
    %c2_984 = arith.constant 2 : index
    %c0_985 = arith.constant 0 : index
    %825 = vector.load %arg12[%c4_983, %c2_984, %c0_985] : memref<10x10x32xf32, #tpu.memory_space<vmem>>, vector<1x1x32xf32>
    %826 = vector.shape_cast %825 : vector<1x1x32xf32> to vector<1x32xf32>
    %c1_986 = arith.constant 1 : index
    %c1_987 = arith.constant 1 : index
    %c256_988 = arith.constant 256 : index
    %827 = vector.load %arg13[%c1_986, %c1_987, %c256_988] : memref<4x4x512xf32, #tpu.memory_space<vmem>>, vector<1x1x32xf32>
    %828 = vector.shape_cast %827 : vector<1x1x32xf32> to vector<1x32xf32>
    %829 = vector.shape_cast %826 : vector<1x32xf32> to vector<1x1x32xf32>
    tpu.vector_store %arg13[%c1_986, %c1_987, %c256_988], %829 {strides = array<i32>} : memref<4x4x512xf32, #tpu.memory_space<vmem>>, vector<1x1x32xf32>,
    %c4_989 = arith.constant 4 : index
    %c4_990 = arith.constant 4 : index
    %c0_991 = arith.constant 0 : index
    %830 = vector.load %arg12[%c4_989, %c4_990, %c0_991] : memref<10x10x32xf32, #tpu.memory_space<vmem>>, vector<1x1x32xf32>
    %831 = vector.shape_cast %830 : vector<1x1x32xf32> to vector<1x32xf32>
    %c2_992 = arith.constant 2 : index
    %c1_993 = arith.constant 1 : index
    %c256_994 = arith.constant 256 : index
    %832 = vector.load %arg13[%c2_992, %c1_993, %c256_994] : memref<4x4x512xf32, #tpu.memory_space<vmem>>, vector<1x1x32xf32>
    %833 = vector.shape_cast %832 : vector<1x1x32xf32> to vector<1x32xf32>
    %834 = vector.shape_cast %831 : vector<1x32xf32> to vector<1x1x32xf32>
    tpu.vector_store %arg13[%c2_992, %c1_993, %c256_994], %834 {strides = array<i32>} : memref<4x4x512xf32, #tpu.memory_space<vmem>>, vector<1x1x32xf32>,
    %c4_995 = arith.constant 4 : index
    %c6_996 = arith.constant 6 : index
    %c0_997 = arith.constant 0 : index
    %835 = vector.load %arg12[%c4_995, %c6_996, %c0_997] : memref<10x10x32xf32, #tpu.memory_space<vmem>>, vector<1x1x32xf32>
    %836 = vector.shape_cast %835 : vector<1x1x32xf32> to vector<1x32xf32>
    %c3_998 = arith.constant 3 : index
    %c1_999 = arith.constant 1 : index
    %c256_1000 = arith.constant 256 : index
    %837 = vector.load %arg13[%c3_998, %c1_999, %c256_1000] : memref<4x4x512xf32, #tpu.memory_space<vmem>>, vector<1x1x32xf32>
    %838 = vector.shape_cast %837 : vector<1x1x32xf32> to vector<1x32xf32>
    %839 = vector.shape_cast %836 : vector<1x32xf32> to vector<1x1x32xf32>
    tpu.vector_store %arg13[%c3_998, %c1_999, %c256_1000], %839 {strides = array<i32>} : memref<4x4x512xf32, #tpu.memory_space<vmem>>, vector<1x1x32xf32>,
    %c6_1001 = arith.constant 6 : index
    %c0_1002 = arith.constant 0 : index
    %c0_1003 = arith.constant 0 : index
    %840 = vector.load %arg12[%c6_1001, %c0_1002, %c0_1003] : memref<10x10x32xf32, #tpu.memory_space<vmem>>, vector<1x1x32xf32>
    %841 = vector.shape_cast %840 : vector<1x1x32xf32> to vector<1x32xf32>
    %c0_1004 = arith.constant 0 : index
    %c2_1005 = arith.constant 2 : index
    %c256_1006 = arith.constant 256 : index
    %842 = vector.load %arg13[%c0_1004, %c2_1005, %c256_1006] : memref<4x4x512xf32, #tpu.memory_space<vmem>>, vector<1x1x32xf32>
    %843 = vector.shape_cast %842 : vector<1x1x32xf32> to vector<1x32xf32>
    %844 = vector.shape_cast %841 : vector<1x32xf32> to vector<1x1x32xf32>
    tpu.vector_store %arg13[%c0_1004, %c2_1005, %c256_1006], %844 {strides = array<i32>} : memref<4x4x512xf32, #tpu.memory_space<vmem>>, vector<1x1x32xf32>,
    %c6_1007 = arith.constant 6 : index
    %c2_1008 = arith.constant 2 : index
    %c0_1009 = arith.constant 0 : index
    %845 = vector.load %arg12[%c6_1007, %c2_1008, %c0_1009] : memref<10x10x32xf32, #tpu.memory_space<vmem>>, vector<1x1x32xf32>
    %846 = vector.shape_cast %845 : vector<1x1x32xf32> to vector<1x32xf32>
    %c1_1010 = arith.constant 1 : index
    %c2_1011 = arith.constant 2 : index
    %c256_1012 = arith.constant 256 : index
    %847 = vector.load %arg13[%c1_1010, %c2_1011, %c256_1012] : memref<4x4x512xf32, #tpu.memory_space<vmem>>, vector<1x1x32xf32>
    %848 = vector.shape_cast %847 : vector<1x1x32xf32> to vector<1x32xf32>
    %849 = vector.shape_cast %846 : vector<1x32xf32> to vector<1x1x32xf32>
    tpu.vector_store %arg13[%c1_1010, %c2_1011, %c256_1012], %849 {strides = array<i32>} : memref<4x4x512xf32, #tpu.memory_space<vmem>>, vector<1x1x32xf32>,
    %c6_1013 = arith.constant 6 : index
    %c4_1014 = arith.constant 4 : index
    %c0_1015 = arith.constant 0 : index
    %850 = vector.load %arg12[%c6_1013, %c4_1014, %c0_1015] : memref<10x10x32xf32, #tpu.memory_space<vmem>>, vector<1x1x32xf32>
    %851 = vector.shape_cast %850 : vector<1x1x32xf32> to vector<1x32xf32>
    %c2_1016 = arith.constant 2 : index
    %c2_1017 = arith.constant 2 : index
    %c256_1018 = arith.constant 256 : index
    %852 = vector.load %arg13[%c2_1016, %c2_1017, %c256_1018] : memref<4x4x512xf32, #tpu.memory_space<vmem>>, vector<1x1x32xf32>
    %853 = vector.shape_cast %852 : vector<1x1x32xf32> to vector<1x32xf32>
    %854 = vector.shape_cast %851 : vector<1x32xf32> to vector<1x1x32xf32>
    tpu.vector_store %arg13[%c2_1016, %c2_1017, %c256_1018], %854 {strides = array<i32>} : memref<4x4x512xf32, #tpu.memory_space<vmem>>, vector<1x1x32xf32>,
    %c6_1019 = arith.constant 6 : index
    %c6_1020 = arith.constant 6 : index
    %c0_1021 = arith.constant 0 : index
    %855 = vector.load %arg12[%c6_1019, %c6_1020, %c0_1021] : memref<10x10x32xf32, #tpu.memory_space<vmem>>, vector<1x1x32xf32>
    %856 = vector.shape_cast %855 : vector<1x1x32xf32> to vector<1x32xf32>
    %c3_1022 = arith.constant 3 : index
    %c2_1023 = arith.constant 2 : index
    %c256_1024 = arith.constant 256 : index
    %857 = vector.load %arg13[%c3_1022, %c2_1023, %c256_1024] : memref<4x4x512xf32, #tpu.memory_space<vmem>>, vector<1x1x32xf32>
    %858 = vector.shape_cast %857 : vector<1x1x32xf32> to vector<1x32xf32>
    %859 = vector.shape_cast %856 : vector<1x32xf32> to vector<1x1x32xf32>
    tpu.vector_store %arg13[%c3_1022, %c2_1023, %c256_1024], %859 {strides = array<i32>} : memref<4x4x512xf32, #tpu.memory_space<vmem>>, vector<1x1x32xf32>,
    %c8_1025 = arith.constant 8 : index
    %c0_1026 = arith.constant 0 : index
    %c0_1027 = arith.constant 0 : index
    %860 = vector.load %arg12[%c8_1025, %c0_1026, %c0_1027] : memref<10x10x32xf32, #tpu.memory_space<vmem>>, vector<1x1x32xf32>
    %861 = vector.shape_cast %860 : vector<1x1x32xf32> to vector<1x32xf32>
    %c0_1028 = arith.constant 0 : index
    %c3_1029 = arith.constant 3 : index
    %c256_1030 = arith.constant 256 : index
    %862 = vector.load %arg13[%c0_1028, %c3_1029, %c256_1030] : memref<4x4x512xf32, #tpu.memory_space<vmem>>, vector<1x1x32xf32>
    %863 = vector.shape_cast %862 : vector<1x1x32xf32> to vector<1x32xf32>
    %864 = vector.shape_cast %861 : vector<1x32xf32> to vector<1x1x32xf32>
    tpu.vector_store %arg13[%c0_1028, %c3_1029, %c256_1030], %864 {strides = array<i32>} : memref<4x4x512xf32, #tpu.memory_space<vmem>>, vector<1x1x32xf32>,
    %c8_1031 = arith.constant 8 : index
    %c2_1032 = arith.constant 2 : index
    %c0_1033 = arith.constant 0 : index
    %865 = vector.load %arg12[%c8_1031, %c2_1032, %c0_1033] : memref<10x10x32xf32, #tpu.memory_space<vmem>>, vector<1x1x32xf32>
    %866 = vector.shape_cast %865 : vector<1x1x32xf32> to vector<1x32xf32>
    %c1_1034 = arith.constant 1 : index
    %c3_1035 = arith.constant 3 : index
    %c256_1036 = arith.constant 256 : index
    %867 = vector.load %arg13[%c1_1034, %c3_1035, %c256_1036] : memref<4x4x512xf32, #tpu.memory_space<vmem>>, vector<1x1x32xf32>
    %868 = vector.shape_cast %867 : vector<1x1x32xf32> to vector<1x32xf32>
    %869 = vector.shape_cast %866 : vector<1x32xf32> to vector<1x1x32xf32>
    tpu.vector_store %arg13[%c1_1034, %c3_1035, %c256_1036], %869 {strides = array<i32>} : memref<4x4x512xf32, #tpu.memory_space<vmem>>, vector<1x1x32xf32>,
    %c8_1037 = arith.constant 8 : index
    %c4_1038 = arith.constant 4 : index
    %c0_1039 = arith.constant 0 : index
    %870 = vector.load %arg12[%c8_1037, %c4_1038, %c0_1039] : memref<10x10x32xf32, #tpu.memory_space<vmem>>, vector<1x1x32xf32>
    %871 = vector.shape_cast %870 : vector<1x1x32xf32> to vector<1x32xf32>
    %c2_1040 = arith.constant 2 : index
    %c3_1041 = arith.constant 3 : index
    %c256_1042 = arith.constant 256 : index
    %872 = vector.load %arg13[%c2_1040, %c3_1041, %c256_1042] : memref<4x4x512xf32, #tpu.memory_space<vmem>>, vector<1x1x32xf32>
    %873 = vector.shape_cast %872 : vector<1x1x32xf32> to vector<1x32xf32>
    %874 = vector.shape_cast %871 : vector<1x32xf32> to vector<1x1x32xf32>
    tpu.vector_store %arg13[%c2_1040, %c3_1041, %c256_1042], %874 {strides = array<i32>} : memref<4x4x512xf32, #tpu.memory_space<vmem>>, vector<1x1x32xf32>,
    %c8_1043 = arith.constant 8 : index
    %c6_1044 = arith.constant 6 : index
    %c0_1045 = arith.constant 0 : index
    %875 = vector.load %arg12[%c8_1043, %c6_1044, %c0_1045] : memref<10x10x32xf32, #tpu.memory_space<vmem>>, vector<1x1x32xf32>
    %876 = vector.shape_cast %875 : vector<1x1x32xf32> to vector<1x32xf32>
    %c3_1046 = arith.constant 3 : index
    %c3_1047 = arith.constant 3 : index
    %c256_1048 = arith.constant 256 : index
    %877 = vector.load %arg13[%c3_1046, %c3_1047, %c256_1048] : memref<4x4x512xf32, #tpu.memory_space<vmem>>, vector<1x1x32xf32>
    %878 = vector.shape_cast %877 : vector<1x1x32xf32> to vector<1x32xf32>
    %879 = vector.shape_cast %876 : vector<1x32xf32> to vector<1x1x32xf32>
    tpu.vector_store %arg13[%c3_1046, %c3_1047, %c256_1048], %879 {strides = array<i32>} : memref<4x4x512xf32, #tpu.memory_space<vmem>>, vector<1x1x32xf32>,
    %c2_1049 = arith.constant 2 : index
    %c1_1050 = arith.constant 1 : index
    %c0_1051 = arith.constant 0 : index
    %880 = vector.load %arg12[%c2_1049, %c1_1050, %c0_1051] : memref<10x10x32xf32, #tpu.memory_space<vmem>>, vector<1x1x32xf32>
    %881 = vector.shape_cast %880 : vector<1x1x32xf32> to vector<1x32xf32>
    %c0_1052 = arith.constant 0 : index
    %c0_1053 = arith.constant 0 : index
    %c288 = arith.constant 288 : index
    %882 = vector.load %arg13[%c0_1052, %c0_1053, %c288] : memref<4x4x512xf32, #tpu.memory_space<vmem>>, vector<1x1x32xf32>
    %883 = vector.shape_cast %882 : vector<1x1x32xf32> to vector<1x32xf32>
    %884 = vector.shape_cast %881 : vector<1x32xf32> to vector<1x1x32xf32>
    tpu.vector_store %arg13[%c0_1052, %c0_1053, %c288], %884 {strides = array<i32>} : memref<4x4x512xf32, #tpu.memory_space<vmem>>, vector<1x1x32xf32>,
    %c2_1054 = arith.constant 2 : index
    %c3_1055 = arith.constant 3 : index
    %c0_1056 = arith.constant 0 : index
    %885 = vector.load %arg12[%c2_1054, %c3_1055, %c0_1056] : memref<10x10x32xf32, #tpu.memory_space<vmem>>, vector<1x1x32xf32>
    %886 = vector.shape_cast %885 : vector<1x1x32xf32> to vector<1x32xf32>
    %c1_1057 = arith.constant 1 : index
    %c0_1058 = arith.constant 0 : index
    %c288_1059 = arith.constant 288 : index
    %887 = vector.load %arg13[%c1_1057, %c0_1058, %c288_1059] : memref<4x4x512xf32, #tpu.memory_space<vmem>>, vector<1x1x32xf32>
    %888 = vector.shape_cast %887 : vector<1x1x32xf32> to vector<1x32xf32>
    %889 = vector.shape_cast %886 : vector<1x32xf32> to vector<1x1x32xf32>
    tpu.vector_store %arg13[%c1_1057, %c0_1058, %c288_1059], %889 {strides = array<i32>} : memref<4x4x512xf32, #tpu.memory_space<vmem>>, vector<1x1x32xf32>,
    %c2_1060 = arith.constant 2 : index
    %c5_1061 = arith.constant 5 : index
    %c0_1062 = arith.constant 0 : index
    %890 = vector.load %arg12[%c2_1060, %c5_1061, %c0_1062] : memref<10x10x32xf32, #tpu.memory_space<vmem>>, vector<1x1x32xf32>
    %891 = vector.shape_cast %890 : vector<1x1x32xf32> to vector<1x32xf32>
    %c2_1063 = arith.constant 2 : index
    %c0_1064 = arith.constant 0 : index
    %c288_1065 = arith.constant 288 : index
    %892 = vector.load %arg13[%c2_1063, %c0_1064, %c288_1065] : memref<4x4x512xf32, #tpu.memory_space<vmem>>, vector<1x1x32xf32>
    %893 = vector.shape_cast %892 : vector<1x1x32xf32> to vector<1x32xf32>
    %894 = vector.shape_cast %891 : vector<1x32xf32> to vector<1x1x32xf32>
    tpu.vector_store %arg13[%c2_1063, %c0_1064, %c288_1065], %894 {strides = array<i32>} : memref<4x4x512xf32, #tpu.memory_space<vmem>>, vector<1x1x32xf32>,
    %c2_1066 = arith.constant 2 : index
    %c7_1067 = arith.constant 7 : index
    %c0_1068 = arith.constant 0 : index
    %895 = vector.load %arg12[%c2_1066, %c7_1067, %c0_1068] : memref<10x10x32xf32, #tpu.memory_space<vmem>>, vector<1x1x32xf32>
    %896 = vector.shape_cast %895 : vector<1x1x32xf32> to vector<1x32xf32>
    %c3_1069 = arith.constant 3 : index
    %c0_1070 = arith.constant 0 : index
    %c288_1071 = arith.constant 288 : index
    %897 = vector.load %arg13[%c3_1069, %c0_1070, %c288_1071] : memref<4x4x512xf32, #tpu.memory_space<vmem>>, vector<1x1x32xf32>
    %898 = vector.shape_cast %897 : vector<1x1x32xf32> to vector<1x32xf32>
    %899 = vector.shape_cast %896 : vector<1x32xf32> to vector<1x1x32xf32>
    tpu.vector_store %arg13[%c3_1069, %c0_1070, %c288_1071], %899 {strides = array<i32>} : memref<4x4x512xf32, #tpu.memory_space<vmem>>, vector<1x1x32xf32>,
    %c4_1072 = arith.constant 4 : index
    %c1_1073 = arith.constant 1 : index
    %c0_1074 = arith.constant 0 : index
    %900 = vector.load %arg12[%c4_1072, %c1_1073, %c0_1074] : memref<10x10x32xf32, #tpu.memory_space<vmem>>, vector<1x1x32xf32>
    %901 = vector.shape_cast %900 : vector<1x1x32xf32> to vector<1x32xf32>
    %c0_1075 = arith.constant 0 : index
    %c1_1076 = arith.constant 1 : index
    %c288_1077 = arith.constant 288 : index
    %902 = vector.load %arg13[%c0_1075, %c1_1076, %c288_1077] : memref<4x4x512xf32, #tpu.memory_space<vmem>>, vector<1x1x32xf32>
    %903 = vector.shape_cast %902 : vector<1x1x32xf32> to vector<1x32xf32>
    %904 = vector.shape_cast %901 : vector<1x32xf32> to vector<1x1x32xf32>
    tpu.vector_store %arg13[%c0_1075, %c1_1076, %c288_1077], %904 {strides = array<i32>} : memref<4x4x512xf32, #tpu.memory_space<vmem>>, vector<1x1x32xf32>,
    %c4_1078 = arith.constant 4 : index
    %c3_1079 = arith.constant 3 : index
    %c0_1080 = arith.constant 0 : index
    %905 = vector.load %arg12[%c4_1078, %c3_1079, %c0_1080] : memref<10x10x32xf32, #tpu.memory_space<vmem>>, vector<1x1x32xf32>
    %906 = vector.shape_cast %905 : vector<1x1x32xf32> to vector<1x32xf32>
    %c1_1081 = arith.constant 1 : index
    %c1_1082 = arith.constant 1 : index
    %c288_1083 = arith.constant 288 : index
    %907 = vector.load %arg13[%c1_1081, %c1_1082, %c288_1083] : memref<4x4x512xf32, #tpu.memory_space<vmem>>, vector<1x1x32xf32>
    %908 = vector.shape_cast %907 : vector<1x1x32xf32> to vector<1x32xf32>
    %909 = vector.shape_cast %906 : vector<1x32xf32> to vector<1x1x32xf32>
    tpu.vector_store %arg13[%c1_1081, %c1_1082, %c288_1083], %909 {strides = array<i32>} : memref<4x4x512xf32, #tpu.memory_space<vmem>>, vector<1x1x32xf32>,
    %c4_1084 = arith.constant 4 : index
    %c5_1085 = arith.constant 5 : index
    %c0_1086 = arith.constant 0 : index
    %910 = vector.load %arg12[%c4_1084, %c5_1085, %c0_1086] : memref<10x10x32xf32, #tpu.memory_space<vmem>>, vector<1x1x32xf32>
    %911 = vector.shape_cast %910 : vector<1x1x32xf32> to vector<1x32xf32>
    %c2_1087 = arith.constant 2 : index
    %c1_1088 = arith.constant 1 : index
    %c288_1089 = arith.constant 288 : index
    %912 = vector.load %arg13[%c2_1087, %c1_1088, %c288_1089] : memref<4x4x512xf32, #tpu.memory_space<vmem>>, vector<1x1x32xf32>
    %913 = vector.shape_cast %912 : vector<1x1x32xf32> to vector<1x32xf32>
    %914 = vector.shape_cast %911 : vector<1x32xf32> to vector<1x1x32xf32>
    tpu.vector_store %arg13[%c2_1087, %c1_1088, %c288_1089], %914 {strides = array<i32>} : memref<4x4x512xf32, #tpu.memory_space<vmem>>, vector<1x1x32xf32>,
    %c4_1090 = arith.constant 4 : index
    %c7_1091 = arith.constant 7 : index
    %c0_1092 = arith.constant 0 : index
    %915 = vector.load %arg12[%c4_1090, %c7_1091, %c0_1092] : memref<10x10x32xf32, #tpu.memory_space<vmem>>, vector<1x1x32xf32>
    %916 = vector.shape_cast %915 : vector<1x1x32xf32> to vector<1x32xf32>
    %c3_1093 = arith.constant 3 : index
    %c1_1094 = arith.constant 1 : index
    %c288_1095 = arith.constant 288 : index
    %917 = vector.load %arg13[%c3_1093, %c1_1094, %c288_1095] : memref<4x4x512xf32, #tpu.memory_space<vmem>>, vector<1x1x32xf32>
    %918 = vector.shape_cast %917 : vector<1x1x32xf32> to vector<1x32xf32>
    %919 = vector.shape_cast %916 : vector<1x32xf32> to vector<1x1x32xf32>
    tpu.vector_store %arg13[%c3_1093, %c1_1094, %c288_1095], %919 {strides = array<i32>} : memref<4x4x512xf32, #tpu.memory_space<vmem>>, vector<1x1x32xf32>,
    %c6_1096 = arith.constant 6 : index
    %c1_1097 = arith.constant 1 : index
    %c0_1098 = arith.constant 0 : index
    %920 = vector.load %arg12[%c6_1096, %c1_1097, %c0_1098] : memref<10x10x32xf32, #tpu.memory_space<vmem>>, vector<1x1x32xf32>
    %921 = vector.shape_cast %920 : vector<1x1x32xf32> to vector<1x32xf32>
    %c0_1099 = arith.constant 0 : index
    %c2_1100 = arith.constant 2 : index
    %c288_1101 = arith.constant 288 : index
    %922 = vector.load %arg13[%c0_1099, %c2_1100, %c288_1101] : memref<4x4x512xf32, #tpu.memory_space<vmem>>, vector<1x1x32xf32>
    %923 = vector.shape_cast %922 : vector<1x1x32xf32> to vector<1x32xf32>
    %924 = vector.shape_cast %921 : vector<1x32xf32> to vector<1x1x32xf32>
    tpu.vector_store %arg13[%c0_1099, %c2_1100, %c288_1101], %924 {strides = array<i32>} : memref<4x4x512xf32, #tpu.memory_space<vmem>>, vector<1x1x32xf32>,
    %c6_1102 = arith.constant 6 : index
    %c3_1103 = arith.constant 3 : index
    %c0_1104 = arith.constant 0 : index
    %925 = vector.load %arg12[%c6_1102, %c3_1103, %c0_1104] : memref<10x10x32xf32, #tpu.memory_space<vmem>>, vector<1x1x32xf32>
    %926 = vector.shape_cast %925 : vector<1x1x32xf32> to vector<1x32xf32>
    %c1_1105 = arith.constant 1 : index
    %c2_1106 = arith.constant 2 : index
    %c288_1107 = arith.constant 288 : index
    %927 = vector.load %arg13[%c1_1105, %c2_1106, %c288_1107] : memref<4x4x512xf32, #tpu.memory_space<vmem>>, vector<1x1x32xf32>
    %928 = vector.shape_cast %927 : vector<1x1x32xf32> to vector<1x32xf32>
    %929 = vector.shape_cast %926 : vector<1x32xf32> to vector<1x1x32xf32>
    tpu.vector_store %arg13[%c1_1105, %c2_1106, %c288_1107], %929 {strides = array<i32>} : memref<4x4x512xf32, #tpu.memory_space<vmem>>, vector<1x1x32xf32>,
    %c6_1108 = arith.constant 6 : index
    %c5_1109 = arith.constant 5 : index
    %c0_1110 = arith.constant 0 : index
    %930 = vector.load %arg12[%c6_1108, %c5_1109, %c0_1110] : memref<10x10x32xf32, #tpu.memory_space<vmem>>, vector<1x1x32xf32>
    %931 = vector.shape_cast %930 : vector<1x1x32xf32> to vector<1x32xf32>
    %c2_1111 = arith.constant 2 : index
    %c2_1112 = arith.constant 2 : index
    %c288_1113 = arith.constant 288 : index
    %932 = vector.load %arg13[%c2_1111, %c2_1112, %c288_1113] : memref<4x4x512xf32, #tpu.memory_space<vmem>>, vector<1x1x32xf32>
    %933 = vector.shape_cast %932 : vector<1x1x32xf32> to vector<1x32xf32>
    %934 = vector.shape_cast %931 : vector<1x32xf32> to vector<1x1x32xf32>
    tpu.vector_store %arg13[%c2_1111, %c2_1112, %c288_1113], %934 {strides = array<i32>} : memref<4x4x512xf32, #tpu.memory_space<vmem>>, vector<1x1x32xf32>,
    %c6_1114 = arith.constant 6 : index
    %c7_1115 = arith.constant 7 : index
    %c0_1116 = arith.constant 0 : index
    %935 = vector.load %arg12[%c6_1114, %c7_1115, %c0_1116] : memref<10x10x32xf32, #tpu.memory_space<vmem>>, vector<1x1x32xf32>
    %936 = vector.shape_cast %935 : vector<1x1x32xf32> to vector<1x32xf32>
    %c3_1117 = arith.constant 3 : index
    %c2_1118 = arith.constant 2 : index
    %c288_1119 = arith.constant 288 : index
    %937 = vector.load %arg13[%c3_1117, %c2_1118, %c288_1119] : memref<4x4x512xf32, #tpu.memory_space<vmem>>, vector<1x1x32xf32>
    %938 = vector.shape_cast %937 : vector<1x1x32xf32> to vector<1x32xf32>
    %939 = vector.shape_cast %936 : vector<1x32xf32> to vector<1x1x32xf32>
    tpu.vector_store %arg13[%c3_1117, %c2_1118, %c288_1119], %939 {strides = array<i32>} : memref<4x4x512xf32, #tpu.memory_space<vmem>>, vector<1x1x32xf32>,
    %c8_1120 = arith.constant 8 : index
    %c1_1121 = arith.constant 1 : index
    %c0_1122 = arith.constant 0 : index
    %940 = vector.load %arg12[%c8_1120, %c1_1121, %c0_1122] : memref<10x10x32xf32, #tpu.memory_space<vmem>>, vector<1x1x32xf32>
    %941 = vector.shape_cast %940 : vector<1x1x32xf32> to vector<1x32xf32>
    %c0_1123 = arith.constant 0 : index
    %c3_1124 = arith.constant 3 : index
    %c288_1125 = arith.constant 288 : index
    %942 = vector.load %arg13[%c0_1123, %c3_1124, %c288_1125] : memref<4x4x512xf32, #tpu.memory_space<vmem>>, vector<1x1x32xf32>
    %943 = vector.shape_cast %942 : vector<1x1x32xf32> to vector<1x32xf32>
    %944 = vector.shape_cast %941 : vector<1x32xf32> to vector<1x1x32xf32>
    tpu.vector_store %arg13[%c0_1123, %c3_1124, %c288_1125], %944 {strides = array<i32>} : memref<4x4x512xf32, #tpu.memory_space<vmem>>, vector<1x1x32xf32>,
    %c8_1126 = arith.constant 8 : index
    %c3_1127 = arith.constant 3 : index
    %c0_1128 = arith.constant 0 : index
    %945 = vector.load %arg12[%c8_1126, %c3_1127, %c0_1128] : memref<10x10x32xf32, #tpu.memory_space<vmem>>, vector<1x1x32xf32>
    %946 = vector.shape_cast %945 : vector<1x1x32xf32> to vector<1x32xf32>
    %c1_1129 = arith.constant 1 : index
    %c3_1130 = arith.constant 3 : index
    %c288_1131 = arith.constant 288 : index
    %947 = vector.load %arg13[%c1_1129, %c3_1130, %c288_1131] : memref<4x4x512xf32, #tpu.memory_space<vmem>>, vector<1x1x32xf32>
    %948 = vector.shape_cast %947 : vector<1x1x32xf32> to vector<1x32xf32>
    %949 = vector.shape_cast %946 : vector<1x32xf32> to vector<1x1x32xf32>
    tpu.vector_store %arg13[%c1_1129, %c3_1130, %c288_1131], %949 {strides = array<i32>} : memref<4x4x512xf32, #tpu.memory_space<vmem>>, vector<1x1x32xf32>,
    %c8_1132 = arith.constant 8 : index
    %c5_1133 = arith.constant 5 : index
    %c0_1134 = arith.constant 0 : index
    %950 = vector.load %arg12[%c8_1132, %c5_1133, %c0_1134] : memref<10x10x32xf32, #tpu.memory_space<vmem>>, vector<1x1x32xf32>
    %951 = vector.shape_cast %950 : vector<1x1x32xf32> to vector<1x32xf32>
    %c2_1135 = arith.constant 2 : index
    %c3_1136 = arith.constant 3 : index
    %c288_1137 = arith.constant 288 : index
    %952 = vector.load %arg13[%c2_1135, %c3_1136, %c288_1137] : memref<4x4x512xf32, #tpu.memory_space<vmem>>, vector<1x1x32xf32>
    %953 = vector.shape_cast %952 : vector<1x1x32xf32> to vector<1x32xf32>
    %954 = vector.shape_cast %951 : vector<1x32xf32> to vector<1x1x32xf32>
    tpu.vector_store %arg13[%c2_1135, %c3_1136, %c288_1137], %954 {strides = array<i32>} : memref<4x4x512xf32, #tpu.memory_space<vmem>>, vector<1x1x32xf32>,
    %c8_1138 = arith.constant 8 : index
    %c7_1139 = arith.constant 7 : index
    %c0_1140 = arith.constant 0 : index
    %955 = vector.load %arg12[%c8_1138, %c7_1139, %c0_1140] : memref<10x10x32xf32, #tpu.memory_space<vmem>>, vector<1x1x32xf32>
    %956 = vector.shape_cast %955 : vector<1x1x32xf32> to vector<1x32xf32>
    %c3_1141 = arith.constant 3 : index
    %c3_1142 = arith.constant 3 : index
    %c288_1143 = arith.constant 288 : index
    %957 = vector.load %arg13[%c3_1141, %c3_1142, %c288_1143] : memref<4x4x512xf32, #tpu.memory_space<vmem>>, vector<1x1x32xf32>
    %958 = vector.shape_cast %957 : vector<1x1x32xf32> to vector<1x32xf32>
    %959 = vector.shape_cast %956 : vector<1x32xf32> to vector<1x1x32xf32>
    tpu.vector_store %arg13[%c3_1141, %c3_1142, %c288_1143], %959 {strides = array<i32>} : memref<4x4x512xf32, #tpu.memory_space<vmem>>, vector<1x1x32xf32>,
    %c2_1144 = arith.constant 2 : index
    %c2_1145 = arith.constant 2 : index
    %c0_1146 = arith.constant 0 : index
    %960 = vector.load %arg12[%c2_1144, %c2_1145, %c0_1146] : memref<10x10x32xf32, #tpu.memory_space<vmem>>, vector<1x1x32xf32>
    %961 = vector.shape_cast %960 : vector<1x1x32xf32> to vector<1x32xf32>
    %c0_1147 = arith.constant 0 : index
    %c0_1148 = arith.constant 0 : index
    %c320 = arith.constant 320 : index
    %962 = vector.load %arg13[%c0_1147, %c0_1148, %c320] : memref<4x4x512xf32, #tpu.memory_space<vmem>>, vector<1x1x32xf32>
    %963 = vector.shape_cast %962 : vector<1x1x32xf32> to vector<1x32xf32>
    %964 = vector.shape_cast %961 : vector<1x32xf32> to vector<1x1x32xf32>
    tpu.vector_store %arg13[%c0_1147, %c0_1148, %c320], %964 {strides = array<i32>} : memref<4x4x512xf32, #tpu.memory_space<vmem>>, vector<1x1x32xf32>,
    %c2_1149 = arith.constant 2 : index
    %c4_1150 = arith.constant 4 : index
    %c0_1151 = arith.constant 0 : index
    %965 = vector.load %arg12[%c2_1149, %c4_1150, %c0_1151] : memref<10x10x32xf32, #tpu.memory_space<vmem>>, vector<1x1x32xf32>
    %966 = vector.shape_cast %965 : vector<1x1x32xf32> to vector<1x32xf32>
    %c1_1152 = arith.constant 1 : index
    %c0_1153 = arith.constant 0 : index
    %c320_1154 = arith.constant 320 : index
    %967 = vector.load %arg13[%c1_1152, %c0_1153, %c320_1154] : memref<4x4x512xf32, #tpu.memory_space<vmem>>, vector<1x1x32xf32>
    %968 = vector.shape_cast %967 : vector<1x1x32xf32> to vector<1x32xf32>
    %969 = vector.shape_cast %966 : vector<1x32xf32> to vector<1x1x32xf32>
    tpu.vector_store %arg13[%c1_1152, %c0_1153, %c320_1154], %969 {strides = array<i32>} : memref<4x4x512xf32, #tpu.memory_space<vmem>>, vector<1x1x32xf32>,
    %c2_1155 = arith.constant 2 : index
    %c6_1156 = arith.constant 6 : index
    %c0_1157 = arith.constant 0 : index
    %970 = vector.load %arg12[%c2_1155, %c6_1156, %c0_1157] : memref<10x10x32xf32, #tpu.memory_space<vmem>>, vector<1x1x32xf32>
    %971 = vector.shape_cast %970 : vector<1x1x32xf32> to vector<1x32xf32>
    %c2_1158 = arith.constant 2 : index
    %c0_1159 = arith.constant 0 : index
    %c320_1160 = arith.constant 320 : index
    %972 = vector.load %arg13[%c2_1158, %c0_1159, %c320_1160] : memref<4x4x512xf32, #tpu.memory_space<vmem>>, vector<1x1x32xf32>
    %973 = vector.shape_cast %972 : vector<1x1x32xf32> to vector<1x32xf32>
    %974 = vector.shape_cast %971 : vector<1x32xf32> to vector<1x1x32xf32>
    tpu.vector_store %arg13[%c2_1158, %c0_1159, %c320_1160], %974 {strides = array<i32>} : memref<4x4x512xf32, #tpu.memory_space<vmem>>, vector<1x1x32xf32>,
    %c2_1161 = arith.constant 2 : index
    %c8_1162 = arith.constant 8 : index
    %c0_1163 = arith.constant 0 : index
    %975 = vector.load %arg12[%c2_1161, %c8_1162, %c0_1163] : memref<10x10x32xf32, #tpu.memory_space<vmem>>, vector<1x1x32xf32>
    %976 = vector.shape_cast %975 : vector<1x1x32xf32> to vector<1x32xf32>
    %c3_1164 = arith.constant 3 : index
    %c0_1165 = arith.constant 0 : index
    %c320_1166 = arith.constant 320 : index
    %977 = vector.load %arg13[%c3_1164, %c0_1165, %c320_1166] : memref<4x4x512xf32, #tpu.memory_space<vmem>>, vector<1x1x32xf32>
    %978 = vector.shape_cast %977 : vector<1x1x32xf32> to vector<1x32xf32>
    %979 = vector.shape_cast %976 : vector<1x32xf32> to vector<1x1x32xf32>
    tpu.vector_store %arg13[%c3_1164, %c0_1165, %c320_1166], %979 {strides = array<i32>} : memref<4x4x512xf32, #tpu.memory_space<vmem>>, vector<1x1x32xf32>,
    %c4_1167 = arith.constant 4 : index
    %c2_1168 = arith.constant 2 : index
    %c0_1169 = arith.constant 0 : index
    %980 = vector.load %arg12[%c4_1167, %c2_1168, %c0_1169] : memref<10x10x32xf32, #tpu.memory_space<vmem>>, vector<1x1x32xf32>
    %981 = vector.shape_cast %980 : vector<1x1x32xf32> to vector<1x32xf32>
    %c0_1170 = arith.constant 0 : index
    %c1_1171 = arith.constant 1 : index
    %c320_1172 = arith.constant 320 : index
    %982 = vector.load %arg13[%c0_1170, %c1_1171, %c320_1172] : memref<4x4x512xf32, #tpu.memory_space<vmem>>, vector<1x1x32xf32>
    %983 = vector.shape_cast %982 : vector<1x1x32xf32> to vector<1x32xf32>
    %984 = vector.shape_cast %981 : vector<1x32xf32> to vector<1x1x32xf32>
    tpu.vector_store %arg13[%c0_1170, %c1_1171, %c320_1172], %984 {strides = array<i32>} : memref<4x4x512xf32, #tpu.memory_space<vmem>>, vector<1x1x32xf32>,
    %c4_1173 = arith.constant 4 : index
    %c4_1174 = arith.constant 4 : index
    %c0_1175 = arith.constant 0 : index
    %985 = vector.load %arg12[%c4_1173, %c4_1174, %c0_1175] : memref<10x10x32xf32, #tpu.memory_space<vmem>>, vector<1x1x32xf32>
    %986 = vector.shape_cast %985 : vector<1x1x32xf32> to vector<1x32xf32>
    %c1_1176 = arith.constant 1 : index
    %c1_1177 = arith.constant 1 : index
    %c320_1178 = arith.constant 320 : index
    %987 = vector.load %arg13[%c1_1176, %c1_1177, %c320_1178] : memref<4x4x512xf32, #tpu.memory_space<vmem>>, vector<1x1x32xf32>
    %988 = vector.shape_cast %987 : vector<1x1x32xf32> to vector<1x32xf32>
    %989 = vector.shape_cast %986 : vector<1x32xf32> to vector<1x1x32xf32>
    tpu.vector_store %arg13[%c1_1176, %c1_1177, %c320_1178], %989 {strides = array<i32>} : memref<4x4x512xf32, #tpu.memory_space<vmem>>, vector<1x1x32xf32>,
    %c4_1179 = arith.constant 4 : index
    %c6_1180 = arith.constant 6 : index
    %c0_1181 = arith.constant 0 : index
    %990 = vector.load %arg12[%c4_1179, %c6_1180, %c0_1181] : memref<10x10x32xf32, #tpu.memory_space<vmem>>, vector<1x1x32xf32>
    %991 = vector.shape_cast %990 : vector<1x1x32xf32> to vector<1x32xf32>
    %c2_1182 = arith.constant 2 : index
    %c1_1183 = arith.constant 1 : index
    %c320_1184 = arith.constant 320 : index
    %992 = vector.load %arg13[%c2_1182, %c1_1183, %c320_1184] : memref<4x4x512xf32, #tpu.memory_space<vmem>>, vector<1x1x32xf32>
    %993 = vector.shape_cast %992 : vector<1x1x32xf32> to vector<1x32xf32>
    %994 = vector.shape_cast %991 : vector<1x32xf32> to vector<1x1x32xf32>
    tpu.vector_store %arg13[%c2_1182, %c1_1183, %c320_1184], %994 {strides = array<i32>} : memref<4x4x512xf32, #tpu.memory_space<vmem>>, vector<1x1x32xf32>,
    %c4_1185 = arith.constant 4 : index
    %c8_1186 = arith.constant 8 : index
    %c0_1187 = arith.constant 0 : index
    %995 = vector.load %arg12[%c4_1185, %c8_1186, %c0_1187] : memref<10x10x32xf32, #tpu.memory_space<vmem>>, vector<1x1x32xf32>
    %996 = vector.shape_cast %995 : vector<1x1x32xf32> to vector<1x32xf32>
    %c3_1188 = arith.constant 3 : index
    %c1_1189 = arith.constant 1 : index
    %c320_1190 = arith.constant 320 : index
    %997 = vector.load %arg13[%c3_1188, %c1_1189, %c320_1190] : memref<4x4x512xf32, #tpu.memory_space<vmem>>, vector<1x1x32xf32>
    %998 = vector.shape_cast %997 : vector<1x1x32xf32> to vector<1x32xf32>
    %999 = vector.shape_cast %996 : vector<1x32xf32> to vector<1x1x32xf32>
    tpu.vector_store %arg13[%c3_1188, %c1_1189, %c320_1190], %999 {strides = array<i32>} : memref<4x4x512xf32, #tpu.memory_space<vmem>>, vector<1x1x32xf32>,
    %c6_1191 = arith.constant 6 : index
    %c2_1192 = arith.constant 2 : index
    %c0_1193 = arith.constant 0 : index
    %1000 = vector.load %arg12[%c6_1191, %c2_1192, %c0_1193] : memref<10x10x32xf32, #tpu.memory_space<vmem>>, vector<1x1x32xf32>
    %1001 = vector.shape_cast %1000 : vector<1x1x32xf32> to vector<1x32xf32>
    %c0_1194 = arith.constant 0 : index
    %c2_1195 = arith.constant 2 : index
    %c320_1196 = arith.constant 320 : index
    %1002 = vector.load %arg13[%c0_1194, %c2_1195, %c320_1196] : memref<4x4x512xf32, #tpu.memory_space<vmem>>, vector<1x1x32xf32>
    %1003 = vector.shape_cast %1002 : vector<1x1x32xf32> to vector<1x32xf32>
    %1004 = vector.shape_cast %1001 : vector<1x32xf32> to vector<1x1x32xf32>
    tpu.vector_store %arg13[%c0_1194, %c2_1195, %c320_1196], %1004 {strides = array<i32>} : memref<4x4x512xf32, #tpu.memory_space<vmem>>, vector<1x1x32xf32>,
    %c6_1197 = arith.constant 6 : index
    %c4_1198 = arith.constant 4 : index
    %c0_1199 = arith.constant 0 : index
    %1005 = vector.load %arg12[%c6_1197, %c4_1198, %c0_1199] : memref<10x10x32xf32, #tpu.memory_space<vmem>>, vector<1x1x32xf32>
    %1006 = vector.shape_cast %1005 : vector<1x1x32xf32> to vector<1x32xf32>
    %c1_1200 = arith.constant 1 : index
    %c2_1201 = arith.constant 2 : index
    %c320_1202 = arith.constant 320 : index
    %1007 = vector.load %arg13[%c1_1200, %c2_1201, %c320_1202] : memref<4x4x512xf32, #tpu.memory_space<vmem>>, vector<1x1x32xf32>
    %1008 = vector.shape_cast %1007 : vector<1x1x32xf32> to vector<1x32xf32>
    %1009 = vector.shape_cast %1006 : vector<1x32xf32> to vector<1x1x32xf32>
    tpu.vector_store %arg13[%c1_1200, %c2_1201, %c320_1202], %1009 {strides = array<i32>} : memref<4x4x512xf32, #tpu.memory_space<vmem>>, vector<1x1x32xf32>,
    %c6_1203 = arith.constant 6 : index
    %c6_1204 = arith.constant 6 : index
    %c0_1205 = arith.constant 0 : index
    %1010 = vector.load %arg12[%c6_1203, %c6_1204, %c0_1205] : memref<10x10x32xf32, #tpu.memory_space<vmem>>, vector<1x1x32xf32>
    %1011 = vector.shape_cast %1010 : vector<1x1x32xf32> to vector<1x32xf32>
    %c2_1206 = arith.constant 2 : index
    %c2_1207 = arith.constant 2 : index
    %c320_1208 = arith.constant 320 : index
    %1012 = vector.load %arg13[%c2_1206, %c2_1207, %c320_1208] : memref<4x4x512xf32, #tpu.memory_space<vmem>>, vector<1x1x32xf32>
    %1013 = vector.shape_cast %1012 : vector<1x1x32xf32> to vector<1x32xf32>
    %1014 = vector.shape_cast %1011 : vector<1x32xf32> to vector<1x1x32xf32>
    tpu.vector_store %arg13[%c2_1206, %c2_1207, %c320_1208], %1014 {strides = array<i32>} : memref<4x4x512xf32, #tpu.memory_space<vmem>>, vector<1x1x32xf32>,
    %c6_1209 = arith.constant 6 : index
    %c8_1210 = arith.constant 8 : index
    %c0_1211 = arith.constant 0 : index
    %1015 = vector.load %arg12[%c6_1209, %c8_1210, %c0_1211] : memref<10x10x32xf32, #tpu.memory_space<vmem>>, vector<1x1x32xf32>
    %1016 = vector.shape_cast %1015 : vector<1x1x32xf32> to vector<1x32xf32>
    %c3_1212 = arith.constant 3 : index
    %c2_1213 = arith.constant 2 : index
    %c320_1214 = arith.constant 320 : index
    %1017 = vector.load %arg13[%c3_1212, %c2_1213, %c320_1214] : memref<4x4x512xf32, #tpu.memory_space<vmem>>, vector<1x1x32xf32>
    %1018 = vector.shape_cast %1017 : vector<1x1x32xf32> to vector<1x32xf32>
    %1019 = vector.shape_cast %1016 : vector<1x32xf32> to vector<1x1x32xf32>
    tpu.vector_store %arg13[%c3_1212, %c2_1213, %c320_1214], %1019 {strides = array<i32>} : memref<4x4x512xf32, #tpu.memory_space<vmem>>, vector<1x1x32xf32>,
    %c8_1215 = arith.constant 8 : index
    %c2_1216 = arith.constant 2 : index
    %c0_1217 = arith.constant 0 : index
    %1020 = vector.load %arg12[%c8_1215, %c2_1216, %c0_1217] : memref<10x10x32xf32, #tpu.memory_space<vmem>>, vector<1x1x32xf32>
    %1021 = vector.shape_cast %1020 : vector<1x1x32xf32> to vector<1x32xf32>
    %c0_1218 = arith.constant 0 : index
    %c3_1219 = arith.constant 3 : index
    %c320_1220 = arith.constant 320 : index
    %1022 = vector.load %arg13[%c0_1218, %c3_1219, %c320_1220] : memref<4x4x512xf32, #tpu.memory_space<vmem>>, vector<1x1x32xf32>
    %1023 = vector.shape_cast %1022 : vector<1x1x32xf32> to vector<1x32xf32>
    %1024 = vector.shape_cast %1021 : vector<1x32xf32> to vector<1x1x32xf32>
    tpu.vector_store %arg13[%c0_1218, %c3_1219, %c320_1220], %1024 {strides = array<i32>} : memref<4x4x512xf32, #tpu.memory_space<vmem>>, vector<1x1x32xf32>,
    %c8_1221 = arith.constant 8 : index
    %c4_1222 = arith.constant 4 : index
    %c0_1223 = arith.constant 0 : index
    %1025 = vector.load %arg12[%c8_1221, %c4_1222, %c0_1223] : memref<10x10x32xf32, #tpu.memory_space<vmem>>, vector<1x1x32xf32>
    %1026 = vector.shape_cast %1025 : vector<1x1x32xf32> to vector<1x32xf32>
    %c1_1224 = arith.constant 1 : index
    %c3_1225 = arith.constant 3 : index
    %c320_1226 = arith.constant 320 : index
    %1027 = vector.load %arg13[%c1_1224, %c3_1225, %c320_1226] : memref<4x4x512xf32, #tpu.memory_space<vmem>>, vector<1x1x32xf32>
    %1028 = vector.shape_cast %1027 : vector<1x1x32xf32> to vector<1x32xf32>
    %1029 = vector.shape_cast %1026 : vector<1x32xf32> to vector<1x1x32xf32>
    tpu.vector_store %arg13[%c1_1224, %c3_1225, %c320_1226], %1029 {strides = array<i32>} : memref<4x4x512xf32, #tpu.memory_space<vmem>>, vector<1x1x32xf32>,
    %c8_1227 = arith.constant 8 : index
    %c6_1228 = arith.constant 6 : index
    %c0_1229 = arith.constant 0 : index
    %1030 = vector.load %arg12[%c8_1227, %c6_1228, %c0_1229] : memref<10x10x32xf32, #tpu.memory_space<vmem>>, vector<1x1x32xf32>
    %1031 = vector.shape_cast %1030 : vector<1x1x32xf32> to vector<1x32xf32>
    %c2_1230 = arith.constant 2 : index
    %c3_1231 = arith.constant 3 : index
    %c320_1232 = arith.constant 320 : index
    %1032 = vector.load %arg13[%c2_1230, %c3_1231, %c320_1232] : memref<4x4x512xf32, #tpu.memory_space<vmem>>, vector<1x1x32xf32>
    %1033 = vector.shape_cast %1032 : vector<1x1x32xf32> to vector<1x32xf32>
    %1034 = vector.shape_cast %1031 : vector<1x32xf32> to vector<1x1x32xf32>
    tpu.vector_store %arg13[%c2_1230, %c3_1231, %c320_1232], %1034 {strides = array<i32>} : memref<4x4x512xf32, #tpu.memory_space<vmem>>, vector<1x1x32xf32>,
    %c8_1233 = arith.constant 8 : index
    %c8_1234 = arith.constant 8 : index
    %c0_1235 = arith.constant 0 : index
    %1035 = vector.load %arg12[%c8_1233, %c8_1234, %c0_1235] : memref<10x10x32xf32, #tpu.memory_space<vmem>>, vector<1x1x32xf32>
    %1036 = vector.shape_cast %1035 : vector<1x1x32xf32> to vector<1x32xf32>
    %c3_1236 = arith.constant 3 : index
    %c3_1237 = arith.constant 3 : index
    %c320_1238 = arith.constant 320 : index
    %1037 = vector.load %arg13[%c3_1236, %c3_1237, %c320_1238] : memref<4x4x512xf32, #tpu.memory_space<vmem>>, vector<1x1x32xf32>
    %1038 = vector.shape_cast %1037 : vector<1x1x32xf32> to vector<1x32xf32>
    %1039 = vector.shape_cast %1036 : vector<1x32xf32> to vector<1x1x32xf32>
    tpu.vector_store %arg13[%c3_1236, %c3_1237, %c320_1238], %1039 {strides = array<i32>} : memref<4x4x512xf32, #tpu.memory_space<vmem>>, vector<1x1x32xf32>,
    %c2_1239 = arith.constant 2 : index
    %c3_1240 = arith.constant 3 : index
    %c0_1241 = arith.constant 0 : index
    %1040 = vector.load %arg12[%c2_1239, %c3_1240, %c0_1241] : memref<10x10x32xf32, #tpu.memory_space<vmem>>, vector<1x1x32xf32>
    %1041 = vector.shape_cast %1040 : vector<1x1x32xf32> to vector<1x32xf32>
    %c0_1242 = arith.constant 0 : index
    %c0_1243 = arith.constant 0 : index
    %c352 = arith.constant 352 : index
    %1042 = vector.load %arg13[%c0_1242, %c0_1243, %c352] : memref<4x4x512xf32, #tpu.memory_space<vmem>>, vector<1x1x32xf32>
    %1043 = vector.shape_cast %1042 : vector<1x1x32xf32> to vector<1x32xf32>
    %1044 = vector.shape_cast %1041 : vector<1x32xf32> to vector<1x1x32xf32>
    tpu.vector_store %arg13[%c0_1242, %c0_1243, %c352], %1044 {strides = array<i32>} : memref<4x4x512xf32, #tpu.memory_space<vmem>>, vector<1x1x32xf32>,
    %c2_1244 = arith.constant 2 : index
    %c5_1245 = arith.constant 5 : index
    %c0_1246 = arith.constant 0 : index
    %1045 = vector.load %arg12[%c2_1244, %c5_1245, %c0_1246] : memref<10x10x32xf32, #tpu.memory_space<vmem>>, vector<1x1x32xf32>
    %1046 = vector.shape_cast %1045 : vector<1x1x32xf32> to vector<1x32xf32>
    %c1_1247 = arith.constant 1 : index
    %c0_1248 = arith.constant 0 : index
    %c352_1249 = arith.constant 352 : index
    %1047 = vector.load %arg13[%c1_1247, %c0_1248, %c352_1249] : memref<4x4x512xf32, #tpu.memory_space<vmem>>, vector<1x1x32xf32>
    %1048 = vector.shape_cast %1047 : vector<1x1x32xf32> to vector<1x32xf32>
    %1049 = vector.shape_cast %1046 : vector<1x32xf32> to vector<1x1x32xf32>
    tpu.vector_store %arg13[%c1_1247, %c0_1248, %c352_1249], %1049 {strides = array<i32>} : memref<4x4x512xf32, #tpu.memory_space<vmem>>, vector<1x1x32xf32>,
    %c2_1250 = arith.constant 2 : index
    %c7_1251 = arith.constant 7 : index
    %c0_1252 = arith.constant 0 : index
    %1050 = vector.load %arg12[%c2_1250, %c7_1251, %c0_1252] : memref<10x10x32xf32, #tpu.memory_space<vmem>>, vector<1x1x32xf32>
    %1051 = vector.shape_cast %1050 : vector<1x1x32xf32> to vector<1x32xf32>
    %c2_1253 = arith.constant 2 : index
    %c0_1254 = arith.constant 0 : index
    %c352_1255 = arith.constant 352 : index
    %1052 = vector.load %arg13[%c2_1253, %c0_1254, %c352_1255] : memref<4x4x512xf32, #tpu.memory_space<vmem>>, vector<1x1x32xf32>
    %1053 = vector.shape_cast %1052 : vector<1x1x32xf32> to vector<1x32xf32>
    %1054 = vector.shape_cast %1051 : vector<1x32xf32> to vector<1x1x32xf32>
    tpu.vector_store %arg13[%c2_1253, %c0_1254, %c352_1255], %1054 {strides = array<i32>} : memref<4x4x512xf32, #tpu.memory_space<vmem>>, vector<1x1x32xf32>,
    %c2_1256 = arith.constant 2 : index
    %c9_1257 = arith.constant 9 : index
    %c0_1258 = arith.constant 0 : index
    %1055 = vector.load %arg12[%c2_1256, %c9_1257, %c0_1258] : memref<10x10x32xf32, #tpu.memory_space<vmem>>, vector<1x1x32xf32>
    %1056 = vector.shape_cast %1055 : vector<1x1x32xf32> to vector<1x32xf32>
    %c3_1259 = arith.constant 3 : index
    %c0_1260 = arith.constant 0 : index
    %c352_1261 = arith.constant 352 : index
    %1057 = vector.load %arg13[%c3_1259, %c0_1260, %c352_1261] : memref<4x4x512xf32, #tpu.memory_space<vmem>>, vector<1x1x32xf32>
    %1058 = vector.shape_cast %1057 : vector<1x1x32xf32> to vector<1x32xf32>
    %1059 = vector.shape_cast %1056 : vector<1x32xf32> to vector<1x1x32xf32>
    tpu.vector_store %arg13[%c3_1259, %c0_1260, %c352_1261], %1059 {strides = array<i32>} : memref<4x4x512xf32, #tpu.memory_space<vmem>>, vector<1x1x32xf32>,
    %c4_1262 = arith.constant 4 : index
    %c3_1263 = arith.constant 3 : index
    %c0_1264 = arith.constant 0 : index
    %1060 = vector.load %arg12[%c4_1262, %c3_1263, %c0_1264] : memref<10x10x32xf32, #tpu.memory_space<vmem>>, vector<1x1x32xf32>
    %1061 = vector.shape_cast %1060 : vector<1x1x32xf32> to vector<1x32xf32>
    %c0_1265 = arith.constant 0 : index
    %c1_1266 = arith.constant 1 : index
    %c352_1267 = arith.constant 352 : index
    %1062 = vector.load %arg13[%c0_1265, %c1_1266, %c352_1267] : memref<4x4x512xf32, #tpu.memory_space<vmem>>, vector<1x1x32xf32>
    %1063 = vector.shape_cast %1062 : vector<1x1x32xf32> to vector<1x32xf32>
    %1064 = vector.shape_cast %1061 : vector<1x32xf32> to vector<1x1x32xf32>
    tpu.vector_store %arg13[%c0_1265, %c1_1266, %c352_1267], %1064 {strides = array<i32>} : memref<4x4x512xf32, #tpu.memory_space<vmem>>, vector<1x1x32xf32>,
    %c4_1268 = arith.constant 4 : index
    %c5_1269 = arith.constant 5 : index
    %c0_1270 = arith.constant 0 : index
    %1065 = vector.load %arg12[%c4_1268, %c5_1269, %c0_1270] : memref<10x10x32xf32, #tpu.memory_space<vmem>>, vector<1x1x32xf32>
    %1066 = vector.shape_cast %1065 : vector<1x1x32xf32> to vector<1x32xf32>
    %c1_1271 = arith.constant 1 : index
    %c1_1272 = arith.constant 1 : index
    %c352_1273 = arith.constant 352 : index
    %1067 = vector.load %arg13[%c1_1271, %c1_1272, %c352_1273] : memref<4x4x512xf32, #tpu.memory_space<vmem>>, vector<1x1x32xf32>
    %1068 = vector.shape_cast %1067 : vector<1x1x32xf32> to vector<1x32xf32>
    %1069 = vector.shape_cast %1066 : vector<1x32xf32> to vector<1x1x32xf32>
    tpu.vector_store %arg13[%c1_1271, %c1_1272, %c352_1273], %1069 {strides = array<i32>} : memref<4x4x512xf32, #tpu.memory_space<vmem>>, vector<1x1x32xf32>,
    %c4_1274 = arith.constant 4 : index
    %c7_1275 = arith.constant 7 : index
    %c0_1276 = arith.constant 0 : index
    %1070 = vector.load %arg12[%c4_1274, %c7_1275, %c0_1276] : memref<10x10x32xf32, #tpu.memory_space<vmem>>, vector<1x1x32xf32>
    %1071 = vector.shape_cast %1070 : vector<1x1x32xf32> to vector<1x32xf32>
    %c2_1277 = arith.constant 2 : index
    %c1_1278 = arith.constant 1 : index
    %c352_1279 = arith.constant 352 : index
    %1072 = vector.load %arg13[%c2_1277, %c1_1278, %c352_1279] : memref<4x4x512xf32, #tpu.memory_space<vmem>>, vector<1x1x32xf32>
    %1073 = vector.shape_cast %1072 : vector<1x1x32xf32> to vector<1x32xf32>
    %1074 = vector.shape_cast %1071 : vector<1x32xf32> to vector<1x1x32xf32>
    tpu.vector_store %arg13[%c2_1277, %c1_1278, %c352_1279], %1074 {strides = array<i32>} : memref<4x4x512xf32, #tpu.memory_space<vmem>>, vector<1x1x32xf32>,
    %c4_1280 = arith.constant 4 : index
    %c9_1281 = arith.constant 9 : index
    %c0_1282 = arith.constant 0 : index
    %1075 = vector.load %arg12[%c4_1280, %c9_1281, %c0_1282] : memref<10x10x32xf32, #tpu.memory_space<vmem>>, vector<1x1x32xf32>
    %1076 = vector.shape_cast %1075 : vector<1x1x32xf32> to vector<1x32xf32>
    %c3_1283 = arith.constant 3 : index
    %c1_1284 = arith.constant 1 : index
    %c352_1285 = arith.constant 352 : index
    %1077 = vector.load %arg13[%c3_1283, %c1_1284, %c352_1285] : memref<4x4x512xf32, #tpu.memory_space<vmem>>, vector<1x1x32xf32>
    %1078 = vector.shape_cast %1077 : vector<1x1x32xf32> to vector<1x32xf32>
    %1079 = vector.shape_cast %1076 : vector<1x32xf32> to vector<1x1x32xf32>
    tpu.vector_store %arg13[%c3_1283, %c1_1284, %c352_1285], %1079 {strides = array<i32>} : memref<4x4x512xf32, #tpu.memory_space<vmem>>, vector<1x1x32xf32>,
    %c6_1286 = arith.constant 6 : index
    %c3_1287 = arith.constant 3 : index
    %c0_1288 = arith.constant 0 : index
    %1080 = vector.load %arg12[%c6_1286, %c3_1287, %c0_1288] : memref<10x10x32xf32, #tpu.memory_space<vmem>>, vector<1x1x32xf32>
    %1081 = vector.shape_cast %1080 : vector<1x1x32xf32> to vector<1x32xf32>
    %c0_1289 = arith.constant 0 : index
    %c2_1290 = arith.constant 2 : index
    %c352_1291 = arith.constant 352 : index
    %1082 = vector.load %arg13[%c0_1289, %c2_1290, %c352_1291] : memref<4x4x512xf32, #tpu.memory_space<vmem>>, vector<1x1x32xf32>
    %1083 = vector.shape_cast %1082 : vector<1x1x32xf32> to vector<1x32xf32>
    %1084 = vector.shape_cast %1081 : vector<1x32xf32> to vector<1x1x32xf32>
    tpu.vector_store %arg13[%c0_1289, %c2_1290, %c352_1291], %1084 {strides = array<i32>} : memref<4x4x512xf32, #tpu.memory_space<vmem>>, vector<1x1x32xf32>,
    %c6_1292 = arith.constant 6 : index
    %c5_1293 = arith.constant 5 : index
    %c0_1294 = arith.constant 0 : index
    %1085 = vector.load %arg12[%c6_1292, %c5_1293, %c0_1294] : memref<10x10x32xf32, #tpu.memory_space<vmem>>, vector<1x1x32xf32>
    %1086 = vector.shape_cast %1085 : vector<1x1x32xf32> to vector<1x32xf32>
    %c1_1295 = arith.constant 1 : index
    %c2_1296 = arith.constant 2 : index
    %c352_1297 = arith.constant 352 : index
    %1087 = vector.load %arg13[%c1_1295, %c2_1296, %c352_1297] : memref<4x4x512xf32, #tpu.memory_space<vmem>>, vector<1x1x32xf32>
    %1088 = vector.shape_cast %1087 : vector<1x1x32xf32> to vector<1x32xf32>
    %1089 = vector.shape_cast %1086 : vector<1x32xf32> to vector<1x1x32xf32>
    tpu.vector_store %arg13[%c1_1295, %c2_1296, %c352_1297], %1089 {strides = array<i32>} : memref<4x4x512xf32, #tpu.memory_space<vmem>>, vector<1x1x32xf32>,
    %c6_1298 = arith.constant 6 : index
    %c7_1299 = arith.constant 7 : index
    %c0_1300 = arith.constant 0 : index
    %1090 = vector.load %arg12[%c6_1298, %c7_1299, %c0_1300] : memref<10x10x32xf32, #tpu.memory_space<vmem>>, vector<1x1x32xf32>
    %1091 = vector.shape_cast %1090 : vector<1x1x32xf32> to vector<1x32xf32>
    %c2_1301 = arith.constant 2 : index
    %c2_1302 = arith.constant 2 : index
    %c352_1303 = arith.constant 352 : index
    %1092 = vector.load %arg13[%c2_1301, %c2_1302, %c352_1303] : memref<4x4x512xf32, #tpu.memory_space<vmem>>, vector<1x1x32xf32>
    %1093 = vector.shape_cast %1092 : vector<1x1x32xf32> to vector<1x32xf32>
    %1094 = vector.shape_cast %1091 : vector<1x32xf32> to vector<1x1x32xf32>
    tpu.vector_store %arg13[%c2_1301, %c2_1302, %c352_1303], %1094 {strides = array<i32>} : memref<4x4x512xf32, #tpu.memory_space<vmem>>, vector<1x1x32xf32>,
    %c6_1304 = arith.constant 6 : index
    %c9_1305 = arith.constant 9 : index
    %c0_1306 = arith.constant 0 : index
    %1095 = vector.load %arg12[%c6_1304, %c9_1305, %c0_1306] : memref<10x10x32xf32, #tpu.memory_space<vmem>>, vector<1x1x32xf32>
    %1096 = vector.shape_cast %1095 : vector<1x1x32xf32> to vector<1x32xf32>
    %c3_1307 = arith.constant 3 : index
    %c2_1308 = arith.constant 2 : index
    %c352_1309 = arith.constant 352 : index
    %1097 = vector.load %arg13[%c3_1307, %c2_1308, %c352_1309] : memref<4x4x512xf32, #tpu.memory_space<vmem>>, vector<1x1x32xf32>
    %1098 = vector.shape_cast %1097 : vector<1x1x32xf32> to vector<1x32xf32>
    %1099 = vector.shape_cast %1096 : vector<1x32xf32> to vector<1x1x32xf32>
    tpu.vector_store %arg13[%c3_1307, %c2_1308, %c352_1309], %1099 {strides = array<i32>} : memref<4x4x512xf32, #tpu.memory_space<vmem>>, vector<1x1x32xf32>,
    %c8_1310 = arith.constant 8 : index
    %c3_1311 = arith.constant 3 : index
    %c0_1312 = arith.constant 0 : index
    %1100 = vector.load %arg12[%c8_1310, %c3_1311, %c0_1312] : memref<10x10x32xf32, #tpu.memory_space<vmem>>, vector<1x1x32xf32>
    %1101 = vector.shape_cast %1100 : vector<1x1x32xf32> to vector<1x32xf32>
    %c0_1313 = arith.constant 0 : index
    %c3_1314 = arith.constant 3 : index
    %c352_1315 = arith.constant 352 : index
    %1102 = vector.load %arg13[%c0_1313, %c3_1314, %c352_1315] : memref<4x4x512xf32, #tpu.memory_space<vmem>>, vector<1x1x32xf32>
    %1103 = vector.shape_cast %1102 : vector<1x1x32xf32> to vector<1x32xf32>
    %1104 = vector.shape_cast %1101 : vector<1x32xf32> to vector<1x1x32xf32>
    tpu.vector_store %arg13[%c0_1313, %c3_1314, %c352_1315], %1104 {strides = array<i32>} : memref<4x4x512xf32, #tpu.memory_space<vmem>>, vector<1x1x32xf32>,
    %c8_1316 = arith.constant 8 : index
    %c5_1317 = arith.constant 5 : index
    %c0_1318 = arith.constant 0 : index
    %1105 = vector.load %arg12[%c8_1316, %c5_1317, %c0_1318] : memref<10x10x32xf32, #tpu.memory_space<vmem>>, vector<1x1x32xf32>
    %1106 = vector.shape_cast %1105 : vector<1x1x32xf32> to vector<1x32xf32>
    %c1_1319 = arith.constant 1 : index
    %c3_1320 = arith.constant 3 : index
    %c352_1321 = arith.constant 352 : index
    %1107 = vector.load %arg13[%c1_1319, %c3_1320, %c352_1321] : memref<4x4x512xf32, #tpu.memory_space<vmem>>, vector<1x1x32xf32>
    %1108 = vector.shape_cast %1107 : vector<1x1x32xf32> to vector<1x32xf32>
    %1109 = vector.shape_cast %1106 : vector<1x32xf32> to vector<1x1x32xf32>
    tpu.vector_store %arg13[%c1_1319, %c3_1320, %c352_1321], %1109 {strides = array<i32>} : memref<4x4x512xf32, #tpu.memory_space<vmem>>, vector<1x1x32xf32>,
    %c8_1322 = arith.constant 8 : index
    %c7_1323 = arith.constant 7 : index
    %c0_1324 = arith.constant 0 : index
    %1110 = vector.load %arg12[%c8_1322, %c7_1323, %c0_1324] : memref<10x10x32xf32, #tpu.memory_space<vmem>>, vector<1x1x32xf32>
    %1111 = vector.shape_cast %1110 : vector<1x1x32xf32> to vector<1x32xf32>
    %c2_1325 = arith.constant 2 : index
    %c3_1326 = arith.constant 3 : index
    %c352_1327 = arith.constant 352 : index
    %1112 = vector.load %arg13[%c2_1325, %c3_1326, %c352_1327] : memref<4x4x512xf32, #tpu.memory_space<vmem>>, vector<1x1x32xf32>
    %1113 = vector.shape_cast %1112 : vector<1x1x32xf32> to vector<1x32xf32>
    %1114 = vector.shape_cast %1111 : vector<1x32xf32> to vector<1x1x32xf32>
    tpu.vector_store %arg13[%c2_1325, %c3_1326, %c352_1327], %1114 {strides = array<i32>} : memref<4x4x512xf32, #tpu.memory_space<vmem>>, vector<1x1x32xf32>,
    %c8_1328 = arith.constant 8 : index
    %c9_1329 = arith.constant 9 : index
    %c0_1330 = arith.constant 0 : index
    %1115 = vector.load %arg12[%c8_1328, %c9_1329, %c0_1330] : memref<10x10x32xf32, #tpu.memory_space<vmem>>, vector<1x1x32xf32>
    %1116 = vector.shape_cast %1115 : vector<1x1x32xf32> to vector<1x32xf32>
    %c3_1331 = arith.constant 3 : index
    %c3_1332 = arith.constant 3 : index
    %c352_1333 = arith.constant 352 : index
    %1117 = vector.load %arg13[%c3_1331, %c3_1332, %c352_1333] : memref<4x4x512xf32, #tpu.memory_space<vmem>>, vector<1x1x32xf32>
    %1118 = vector.shape_cast %1117 : vector<1x1x32xf32> to vector<1x32xf32>
    %1119 = vector.shape_cast %1116 : vector<1x32xf32> to vector<1x1x32xf32>
    tpu.vector_store %arg13[%c3_1331, %c3_1332, %c352_1333], %1119 {strides = array<i32>} : memref<4x4x512xf32, #tpu.memory_space<vmem>>, vector<1x1x32xf32>,
    %c3_1334 = arith.constant 3 : index
    %c0_1335 = arith.constant 0 : index
    %c0_1336 = arith.constant 0 : index
    %1120 = vector.load %arg12[%c3_1334, %c0_1335, %c0_1336] : memref<10x10x32xf32, #tpu.memory_space<vmem>>, vector<1x1x32xf32>
    %1121 = vector.shape_cast %1120 : vector<1x1x32xf32> to vector<1x32xf32>
    %c0_1337 = arith.constant 0 : index
    %c0_1338 = arith.constant 0 : index
    %c384 = arith.constant 384 : index
    %1122 = vector.load %arg13[%c0_1337, %c0_1338, %c384] : memref<4x4x512xf32, #tpu.memory_space<vmem>>, vector<1x1x32xf32>
    %1123 = vector.shape_cast %1122 : vector<1x1x32xf32> to vector<1x32xf32>
    %1124 = vector.shape_cast %1121 : vector<1x32xf32> to vector<1x1x32xf32>
    tpu.vector_store %arg13[%c0_1337, %c0_1338, %c384], %1124 {strides = array<i32>} : memref<4x4x512xf32, #tpu.memory_space<vmem>>, vector<1x1x32xf32>,
    %c3_1339 = arith.constant 3 : index
    %c2_1340 = arith.constant 2 : index
    %c0_1341 = arith.constant 0 : index
    %1125 = vector.load %arg12[%c3_1339, %c2_1340, %c0_1341] : memref<10x10x32xf32, #tpu.memory_space<vmem>>, vector<1x1x32xf32>
    %1126 = vector.shape_cast %1125 : vector<1x1x32xf32> to vector<1x32xf32>
    %c1_1342 = arith.constant 1 : index
    %c0_1343 = arith.constant 0 : index
    %c384_1344 = arith.constant 384 : index
    %1127 = vector.load %arg13[%c1_1342, %c0_1343, %c384_1344] : memref<4x4x512xf32, #tpu.memory_space<vmem>>, vector<1x1x32xf32>
    %1128 = vector.shape_cast %1127 : vector<1x1x32xf32> to vector<1x32xf32>
    %1129 = vector.shape_cast %1126 : vector<1x32xf32> to vector<1x1x32xf32>
    tpu.vector_store %arg13[%c1_1342, %c0_1343, %c384_1344], %1129 {strides = array<i32>} : memref<4x4x512xf32, #tpu.memory_space<vmem>>, vector<1x1x32xf32>,
    %c3_1345 = arith.constant 3 : index
    %c4_1346 = arith.constant 4 : index
    %c0_1347 = arith.constant 0 : index
    %1130 = vector.load %arg12[%c3_1345, %c4_1346, %c0_1347] : memref<10x10x32xf32, #tpu.memory_space<vmem>>, vector<1x1x32xf32>
    %1131 = vector.shape_cast %1130 : vector<1x1x32xf32> to vector<1x32xf32>
    %c2_1348 = arith.constant 2 : index
    %c0_1349 = arith.constant 0 : index
    %c384_1350 = arith.constant 384 : index
    %1132 = vector.load %arg13[%c2_1348, %c0_1349, %c384_1350] : memref<4x4x512xf32, #tpu.memory_space<vmem>>, vector<1x1x32xf32>
    %1133 = vector.shape_cast %1132 : vector<1x1x32xf32> to vector<1x32xf32>
    %1134 = vector.shape_cast %1131 : vector<1x32xf32> to vector<1x1x32xf32>
    tpu.vector_store %arg13[%c2_1348, %c0_1349, %c384_1350], %1134 {strides = array<i32>} : memref<4x4x512xf32, #tpu.memory_space<vmem>>, vector<1x1x32xf32>,
    %c3_1351 = arith.constant 3 : index
    %c6_1352 = arith.constant 6 : index
    %c0_1353 = arith.constant 0 : index
    %1135 = vector.load %arg12[%c3_1351, %c6_1352, %c0_1353] : memref<10x10x32xf32, #tpu.memory_space<vmem>>, vector<1x1x32xf32>
    %1136 = vector.shape_cast %1135 : vector<1x1x32xf32> to vector<1x32xf32>
    %c3_1354 = arith.constant 3 : index
    %c0_1355 = arith.constant 0 : index
    %c384_1356 = arith.constant 384 : index
    %1137 = vector.load %arg13[%c3_1354, %c0_1355, %c384_1356] : memref<4x4x512xf32, #tpu.memory_space<vmem>>, vector<1x1x32xf32>
    %1138 = vector.shape_cast %1137 : vector<1x1x32xf32> to vector<1x32xf32>
    %1139 = vector.shape_cast %1136 : vector<1x32xf32> to vector<1x1x32xf32>
    tpu.vector_store %arg13[%c3_1354, %c0_1355, %c384_1356], %1139 {strides = array<i32>} : memref<4x4x512xf32, #tpu.memory_space<vmem>>, vector<1x1x32xf32>,
    %c5_1357 = arith.constant 5 : index
    %c0_1358 = arith.constant 0 : index
    %c0_1359 = arith.constant 0 : index
    %1140 = vector.load %arg12[%c5_1357, %c0_1358, %c0_1359] : memref<10x10x32xf32, #tpu.memory_space<vmem>>, vector<1x1x32xf32>
    %1141 = vector.shape_cast %1140 : vector<1x1x32xf32> to vector<1x32xf32>
    %c0_1360 = arith.constant 0 : index
    %c1_1361 = arith.constant 1 : index
    %c384_1362 = arith.constant 384 : index
    %1142 = vector.load %arg13[%c0_1360, %c1_1361, %c384_1362] : memref<4x4x512xf32, #tpu.memory_space<vmem>>, vector<1x1x32xf32>
    %1143 = vector.shape_cast %1142 : vector<1x1x32xf32> to vector<1x32xf32>
    %1144 = vector.shape_cast %1141 : vector<1x32xf32> to vector<1x1x32xf32>
    tpu.vector_store %arg13[%c0_1360, %c1_1361, %c384_1362], %1144 {strides = array<i32>} : memref<4x4x512xf32, #tpu.memory_space<vmem>>, vector<1x1x32xf32>,
    %c5_1363 = arith.constant 5 : index
    %c2_1364 = arith.constant 2 : index
    %c0_1365 = arith.constant 0 : index
    %1145 = vector.load %arg12[%c5_1363, %c2_1364, %c0_1365] : memref<10x10x32xf32, #tpu.memory_space<vmem>>, vector<1x1x32xf32>
    %1146 = vector.shape_cast %1145 : vector<1x1x32xf32> to vector<1x32xf32>
    %c1_1366 = arith.constant 1 : index
    %c1_1367 = arith.constant 1 : index
    %c384_1368 = arith.constant 384 : index
    %1147 = vector.load %arg13[%c1_1366, %c1_1367, %c384_1368] : memref<4x4x512xf32, #tpu.memory_space<vmem>>, vector<1x1x32xf32>
    %1148 = vector.shape_cast %1147 : vector<1x1x32xf32> to vector<1x32xf32>
    %1149 = vector.shape_cast %1146 : vector<1x32xf32> to vector<1x1x32xf32>
    tpu.vector_store %arg13[%c1_1366, %c1_1367, %c384_1368], %1149 {strides = array<i32>} : memref<4x4x512xf32, #tpu.memory_space<vmem>>, vector<1x1x32xf32>,
    %c5_1369 = arith.constant 5 : index
    %c4_1370 = arith.constant 4 : index
    %c0_1371 = arith.constant 0 : index
    %1150 = vector.load %arg12[%c5_1369, %c4_1370, %c0_1371] : memref<10x10x32xf32, #tpu.memory_space<vmem>>, vector<1x1x32xf32>
    %1151 = vector.shape_cast %1150 : vector<1x1x32xf32> to vector<1x32xf32>
    %c2_1372 = arith.constant 2 : index
    %c1_1373 = arith.constant 1 : index
    %c384_1374 = arith.constant 384 : index
    %1152 = vector.load %arg13[%c2_1372, %c1_1373, %c384_1374] : memref<4x4x512xf32, #tpu.memory_space<vmem>>, vector<1x1x32xf32>
    %1153 = vector.shape_cast %1152 : vector<1x1x32xf32> to vector<1x32xf32>
    %1154 = vector.shape_cast %1151 : vector<1x32xf32> to vector<1x1x32xf32>
    tpu.vector_store %arg13[%c2_1372, %c1_1373, %c384_1374], %1154 {strides = array<i32>} : memref<4x4x512xf32, #tpu.memory_space<vmem>>, vector<1x1x32xf32>,
    %c5_1375 = arith.constant 5 : index
    %c6_1376 = arith.constant 6 : index
    %c0_1377 = arith.constant 0 : index
    %1155 = vector.load %arg12[%c5_1375, %c6_1376, %c0_1377] : memref<10x10x32xf32, #tpu.memory_space<vmem>>, vector<1x1x32xf32>
    %1156 = vector.shape_cast %1155 : vector<1x1x32xf32> to vector<1x32xf32>
    %c3_1378 = arith.constant 3 : index
    %c1_1379 = arith.constant 1 : index
    %c384_1380 = arith.constant 384 : index
    %1157 = vector.load %arg13[%c3_1378, %c1_1379, %c384_1380] : memref<4x4x512xf32, #tpu.memory_space<vmem>>, vector<1x1x32xf32>
    %1158 = vector.shape_cast %1157 : vector<1x1x32xf32> to vector<1x32xf32>
    %1159 = vector.shape_cast %1156 : vector<1x32xf32> to vector<1x1x32xf32>
    tpu.vector_store %arg13[%c3_1378, %c1_1379, %c384_1380], %1159 {strides = array<i32>} : memref<4x4x512xf32, #tpu.memory_space<vmem>>, vector<1x1x32xf32>,
    %c7_1381 = arith.constant 7 : index
    %c0_1382 = arith.constant 0 : index
    %c0_1383 = arith.constant 0 : index
    %1160 = vector.load %arg12[%c7_1381, %c0_1382, %c0_1383] : memref<10x10x32xf32, #tpu.memory_space<vmem>>, vector<1x1x32xf32>
    %1161 = vector.shape_cast %1160 : vector<1x1x32xf32> to vector<1x32xf32>
    %c0_1384 = arith.constant 0 : index
    %c2_1385 = arith.constant 2 : index
    %c384_1386 = arith.constant 384 : index
    %1162 = vector.load %arg13[%c0_1384, %c2_1385, %c384_1386] : memref<4x4x512xf32, #tpu.memory_space<vmem>>, vector<1x1x32xf32>
    %1163 = vector.shape_cast %1162 : vector<1x1x32xf32> to vector<1x32xf32>
    %1164 = vector.shape_cast %1161 : vector<1x32xf32> to vector<1x1x32xf32>
    tpu.vector_store %arg13[%c0_1384, %c2_1385, %c384_1386], %1164 {strides = array<i32>} : memref<4x4x512xf32, #tpu.memory_space<vmem>>, vector<1x1x32xf32>,
    %c7_1387 = arith.constant 7 : index
    %c2_1388 = arith.constant 2 : index
    %c0_1389 = arith.constant 0 : index
    %1165 = vector.load %arg12[%c7_1387, %c2_1388, %c0_1389] : memref<10x10x32xf32, #tpu.memory_space<vmem>>, vector<1x1x32xf32>
    %1166 = vector.shape_cast %1165 : vector<1x1x32xf32> to vector<1x32xf32>
    %c1_1390 = arith.constant 1 : index
    %c2_1391 = arith.constant 2 : index
    %c384_1392 = arith.constant 384 : index
    %1167 = vector.load %arg13[%c1_1390, %c2_1391, %c384_1392] : memref<4x4x512xf32, #tpu.memory_space<vmem>>, vector<1x1x32xf32>
    %1168 = vector.shape_cast %1167 : vector<1x1x32xf32> to vector<1x32xf32>
    %1169 = vector.shape_cast %1166 : vector<1x32xf32> to vector<1x1x32xf32>
    tpu.vector_store %arg13[%c1_1390, %c2_1391, %c384_1392], %1169 {strides = array<i32>} : memref<4x4x512xf32, #tpu.memory_space<vmem>>, vector<1x1x32xf32>,
    %c7_1393 = arith.constant 7 : index
    %c4_1394 = arith.constant 4 : index
    %c0_1395 = arith.constant 0 : index
    %1170 = vector.load %arg12[%c7_1393, %c4_1394, %c0_1395] : memref<10x10x32xf32, #tpu.memory_space<vmem>>, vector<1x1x32xf32>
    %1171 = vector.shape_cast %1170 : vector<1x1x32xf32> to vector<1x32xf32>
    %c2_1396 = arith.constant 2 : index
    %c2_1397 = arith.constant 2 : index
    %c384_1398 = arith.constant 384 : index
    %1172 = vector.load %arg13[%c2_1396, %c2_1397, %c384_1398] : memref<4x4x512xf32, #tpu.memory_space<vmem>>, vector<1x1x32xf32>
    %1173 = vector.shape_cast %1172 : vector<1x1x32xf32> to vector<1x32xf32>
    %1174 = vector.shape_cast %1171 : vector<1x32xf32> to vector<1x1x32xf32>
    tpu.vector_store %arg13[%c2_1396, %c2_1397, %c384_1398], %1174 {strides = array<i32>} : memref<4x4x512xf32, #tpu.memory_space<vmem>>, vector<1x1x32xf32>,
    %c7_1399 = arith.constant 7 : index
    %c6_1400 = arith.constant 6 : index
    %c0_1401 = arith.constant 0 : index
    %1175 = vector.load %arg12[%c7_1399, %c6_1400, %c0_1401] : memref<10x10x32xf32, #tpu.memory_space<vmem>>, vector<1x1x32xf32>
    %1176 = vector.shape_cast %1175 : vector<1x1x32xf32> to vector<1x32xf32>
    %c3_1402 = arith.constant 3 : index
    %c2_1403 = arith.constant 2 : index
    %c384_1404 = arith.constant 384 : index
    %1177 = vector.load %arg13[%c3_1402, %c2_1403, %c384_1404] : memref<4x4x512xf32, #tpu.memory_space<vmem>>, vector<1x1x32xf32>
    %1178 = vector.shape_cast %1177 : vector<1x1x32xf32> to vector<1x32xf32>
    %1179 = vector.shape_cast %1176 : vector<1x32xf32> to vector<1x1x32xf32>
    tpu.vector_store %arg13[%c3_1402, %c2_1403, %c384_1404], %1179 {strides = array<i32>} : memref<4x4x512xf32, #tpu.memory_space<vmem>>, vector<1x1x32xf32>,
    %c9_1405 = arith.constant 9 : index
    %c0_1406 = arith.constant 0 : index
    %c0_1407 = arith.constant 0 : index
    %1180 = vector.load %arg12[%c9_1405, %c0_1406, %c0_1407] : memref<10x10x32xf32, #tpu.memory_space<vmem>>, vector<1x1x32xf32>
    %1181 = vector.shape_cast %1180 : vector<1x1x32xf32> to vector<1x32xf32>
    %c0_1408 = arith.constant 0 : index
    %c3_1409 = arith.constant 3 : index
    %c384_1410 = arith.constant 384 : index
    %1182 = vector.load %arg13[%c0_1408, %c3_1409, %c384_1410] : memref<4x4x512xf32, #tpu.memory_space<vmem>>, vector<1x1x32xf32>
    %1183 = vector.shape_cast %1182 : vector<1x1x32xf32> to vector<1x32xf32>
    %1184 = vector.shape_cast %1181 : vector<1x32xf32> to vector<1x1x32xf32>
    tpu.vector_store %arg13[%c0_1408, %c3_1409, %c384_1410], %1184 {strides = array<i32>} : memref<4x4x512xf32, #tpu.memory_space<vmem>>, vector<1x1x32xf32>,
    %c9_1411 = arith.constant 9 : index
    %c2_1412 = arith.constant 2 : index
    %c0_1413 = arith.constant 0 : index
    %1185 = vector.load %arg12[%c9_1411, %c2_1412, %c0_1413] : memref<10x10x32xf32, #tpu.memory_space<vmem>>, vector<1x1x32xf32>
    %1186 = vector.shape_cast %1185 : vector<1x1x32xf32> to vector<1x32xf32>
    %c1_1414 = arith.constant 1 : index
    %c3_1415 = arith.constant 3 : index
    %c384_1416 = arith.constant 384 : index
    %1187 = vector.load %arg13[%c1_1414, %c3_1415, %c384_1416] : memref<4x4x512xf32, #tpu.memory_space<vmem>>, vector<1x1x32xf32>
    %1188 = vector.shape_cast %1187 : vector<1x1x32xf32> to vector<1x32xf32>
    %1189 = vector.shape_cast %1186 : vector<1x32xf32> to vector<1x1x32xf32>
    tpu.vector_store %arg13[%c1_1414, %c3_1415, %c384_1416], %1189 {strides = array<i32>} : memref<4x4x512xf32, #tpu.memory_space<vmem>>, vector<1x1x32xf32>,
    %c9_1417 = arith.constant 9 : index
    %c4_1418 = arith.constant 4 : index
    %c0_1419 = arith.constant 0 : index
    %1190 = vector.load %arg12[%c9_1417, %c4_1418, %c0_1419] : memref<10x10x32xf32, #tpu.memory_space<vmem>>, vector<1x1x32xf32>
    %1191 = vector.shape_cast %1190 : vector<1x1x32xf32> to vector<1x32xf32>
    %c2_1420 = arith.constant 2 : index
    %c3_1421 = arith.constant 3 : index
    %c384_1422 = arith.constant 384 : index
    %1192 = vector.load %arg13[%c2_1420, %c3_1421, %c384_1422] : memref<4x4x512xf32, #tpu.memory_space<vmem>>, vector<1x1x32xf32>
    %1193 = vector.shape_cast %1192 : vector<1x1x32xf32> to vector<1x32xf32>
    %1194 = vector.shape_cast %1191 : vector<1x32xf32> to vector<1x1x32xf32>
    tpu.vector_store %arg13[%c2_1420, %c3_1421, %c384_1422], %1194 {strides = array<i32>} : memref<4x4x512xf32, #tpu.memory_space<vmem>>, vector<1x1x32xf32>,
    %c9_1423 = arith.constant 9 : index
    %c6_1424 = arith.constant 6 : index
    %c0_1425 = arith.constant 0 : index
    %1195 = vector.load %arg12[%c9_1423, %c6_1424, %c0_1425] : memref<10x10x32xf32, #tpu.memory_space<vmem>>, vector<1x1x32xf32>
    %1196 = vector.shape_cast %1195 : vector<1x1x32xf32> to vector<1x32xf32>
    %c3_1426 = arith.constant 3 : index
    %c3_1427 = arith.constant 3 : index
    %c384_1428 = arith.constant 384 : index
    %1197 = vector.load %arg13[%c3_1426, %c3_1427, %c384_1428] : memref<4x4x512xf32, #tpu.memory_space<vmem>>, vector<1x1x32xf32>
    %1198 = vector.shape_cast %1197 : vector<1x1x32xf32> to vector<1x32xf32>
    %1199 = vector.shape_cast %1196 : vector<1x32xf32> to vector<1x1x32xf32>
    tpu.vector_store %arg13[%c3_1426, %c3_1427, %c384_1428], %1199 {strides = array<i32>} : memref<4x4x512xf32, #tpu.memory_space<vmem>>, vector<1x1x32xf32>,
    %c3_1429 = arith.constant 3 : index
    %c1_1430 = arith.constant 1 : index
    %c0_1431 = arith.constant 0 : index
    %1200 = vector.load %arg12[%c3_1429, %c1_1430, %c0_1431] : memref<10x10x32xf32, #tpu.memory_space<vmem>>, vector<1x1x32xf32>
    %1201 = vector.shape_cast %1200 : vector<1x1x32xf32> to vector<1x32xf32>
    %c0_1432 = arith.constant 0 : index
    %c0_1433 = arith.constant 0 : index
    %c416 = arith.constant 416 : index
    %1202 = vector.load %arg13[%c0_1432, %c0_1433, %c416] : memref<4x4x512xf32, #tpu.memory_space<vmem>>, vector<1x1x32xf32>
    %1203 = vector.shape_cast %1202 : vector<1x1x32xf32> to vector<1x32xf32>
    %1204 = vector.shape_cast %1201 : vector<1x32xf32> to vector<1x1x32xf32>
    tpu.vector_store %arg13[%c0_1432, %c0_1433, %c416], %1204 {strides = array<i32>} : memref<4x4x512xf32, #tpu.memory_space<vmem>>, vector<1x1x32xf32>,
    %c3_1434 = arith.constant 3 : index
    %c3_1435 = arith.constant 3 : index
    %c0_1436 = arith.constant 0 : index
    %1205 = vector.load %arg12[%c3_1434, %c3_1435, %c0_1436] : memref<10x10x32xf32, #tpu.memory_space<vmem>>, vector<1x1x32xf32>
    %1206 = vector.shape_cast %1205 : vector<1x1x32xf32> to vector<1x32xf32>
    %c1_1437 = arith.constant 1 : index
    %c0_1438 = arith.constant 0 : index
    %c416_1439 = arith.constant 416 : index
    %1207 = vector.load %arg13[%c1_1437, %c0_1438, %c416_1439] : memref<4x4x512xf32, #tpu.memory_space<vmem>>, vector<1x1x32xf32>
    %1208 = vector.shape_cast %1207 : vector<1x1x32xf32> to vector<1x32xf32>
    %1209 = vector.shape_cast %1206 : vector<1x32xf32> to vector<1x1x32xf32>
    tpu.vector_store %arg13[%c1_1437, %c0_1438, %c416_1439], %1209 {strides = array<i32>} : memref<4x4x512xf32, #tpu.memory_space<vmem>>, vector<1x1x32xf32>,
    %c3_1440 = arith.constant 3 : index
    %c5_1441 = arith.constant 5 : index
    %c0_1442 = arith.constant 0 : index
    %1210 = vector.load %arg12[%c3_1440, %c5_1441, %c0_1442] : memref<10x10x32xf32, #tpu.memory_space<vmem>>, vector<1x1x32xf32>
    %1211 = vector.shape_cast %1210 : vector<1x1x32xf32> to vector<1x32xf32>
    %c2_1443 = arith.constant 2 : index
    %c0_1444 = arith.constant 0 : index
    %c416_1445 = arith.constant 416 : index
    %1212 = vector.load %arg13[%c2_1443, %c0_1444, %c416_1445] : memref<4x4x512xf32, #tpu.memory_space<vmem>>, vector<1x1x32xf32>
    %1213 = vector.shape_cast %1212 : vector<1x1x32xf32> to vector<1x32xf32>
    %1214 = vector.shape_cast %1211 : vector<1x32xf32> to vector<1x1x32xf32>
    tpu.vector_store %arg13[%c2_1443, %c0_1444, %c416_1445], %1214 {strides = array<i32>} : memref<4x4x512xf32, #tpu.memory_space<vmem>>, vector<1x1x32xf32>,
    %c3_1446 = arith.constant 3 : index
    %c7_1447 = arith.constant 7 : index
    %c0_1448 = arith.constant 0 : index
    %1215 = vector.load %arg12[%c3_1446, %c7_1447, %c0_1448] : memref<10x10x32xf32, #tpu.memory_space<vmem>>, vector<1x1x32xf32>
    %1216 = vector.shape_cast %1215 : vector<1x1x32xf32> to vector<1x32xf32>
    %c3_1449 = arith.constant 3 : index
    %c0_1450 = arith.constant 0 : index
    %c416_1451 = arith.constant 416 : index
    %1217 = vector.load %arg13[%c3_1449, %c0_1450, %c416_1451] : memref<4x4x512xf32, #tpu.memory_space<vmem>>, vector<1x1x32xf32>
    %1218 = vector.shape_cast %1217 : vector<1x1x32xf32> to vector<1x32xf32>
    %1219 = vector.shape_cast %1216 : vector<1x32xf32> to vector<1x1x32xf32>
    tpu.vector_store %arg13[%c3_1449, %c0_1450, %c416_1451], %1219 {strides = array<i32>} : memref<4x4x512xf32, #tpu.memory_space<vmem>>, vector<1x1x32xf32>,
    %c5_1452 = arith.constant 5 : index
    %c1_1453 = arith.constant 1 : index
    %c0_1454 = arith.constant 0 : index
    %1220 = vector.load %arg12[%c5_1452, %c1_1453, %c0_1454] : memref<10x10x32xf32, #tpu.memory_space<vmem>>, vector<1x1x32xf32>
    %1221 = vector.shape_cast %1220 : vector<1x1x32xf32> to vector<1x32xf32>
    %c0_1455 = arith.constant 0 : index
    %c1_1456 = arith.constant 1 : index
    %c416_1457 = arith.constant 416 : index
    %1222 = vector.load %arg13[%c0_1455, %c1_1456, %c416_1457] : memref<4x4x512xf32, #tpu.memory_space<vmem>>, vector<1x1x32xf32>
    %1223 = vector.shape_cast %1222 : vector<1x1x32xf32> to vector<1x32xf32>
    %1224 = vector.shape_cast %1221 : vector<1x32xf32> to vector<1x1x32xf32>
    tpu.vector_store %arg13[%c0_1455, %c1_1456, %c416_1457], %1224 {strides = array<i32>} : memref<4x4x512xf32, #tpu.memory_space<vmem>>, vector<1x1x32xf32>,
    %c5_1458 = arith.constant 5 : index
    %c3_1459 = arith.constant 3 : index
    %c0_1460 = arith.constant 0 : index
    %1225 = vector.load %arg12[%c5_1458, %c3_1459, %c0_1460] : memref<10x10x32xf32, #tpu.memory_space<vmem>>, vector<1x1x32xf32>
    %1226 = vector.shape_cast %1225 : vector<1x1x32xf32> to vector<1x32xf32>
    %c1_1461 = arith.constant 1 : index
    %c1_1462 = arith.constant 1 : index
    %c416_1463 = arith.constant 416 : index
    %1227 = vector.load %arg13[%c1_1461, %c1_1462, %c416_1463] : memref<4x4x512xf32, #tpu.memory_space<vmem>>, vector<1x1x32xf32>
    %1228 = vector.shape_cast %1227 : vector<1x1x32xf32> to vector<1x32xf32>
    %1229 = vector.shape_cast %1226 : vector<1x32xf32> to vector<1x1x32xf32>
    tpu.vector_store %arg13[%c1_1461, %c1_1462, %c416_1463], %1229 {strides = array<i32>} : memref<4x4x512xf32, #tpu.memory_space<vmem>>, vector<1x1x32xf32>,
    %c5_1464 = arith.constant 5 : index
    %c5_1465 = arith.constant 5 : index
    %c0_1466 = arith.constant 0 : index
    %1230 = vector.load %arg12[%c5_1464, %c5_1465, %c0_1466] : memref<10x10x32xf32, #tpu.memory_space<vmem>>, vector<1x1x32xf32>
    %1231 = vector.shape_cast %1230 : vector<1x1x32xf32> to vector<1x32xf32>
    %c2_1467 = arith.constant 2 : index
    %c1_1468 = arith.constant 1 : index
    %c416_1469 = arith.constant 416 : index
    %1232 = vector.load %arg13[%c2_1467, %c1_1468, %c416_1469] : memref<4x4x512xf32, #tpu.memory_space<vmem>>, vector<1x1x32xf32>
    %1233 = vector.shape_cast %1232 : vector<1x1x32xf32> to vector<1x32xf32>
    %1234 = vector.shape_cast %1231 : vector<1x32xf32> to vector<1x1x32xf32>
    tpu.vector_store %arg13[%c2_1467, %c1_1468, %c416_1469], %1234 {strides = array<i32>} : memref<4x4x512xf32, #tpu.memory_space<vmem>>, vector<1x1x32xf32>,
    %c5_1470 = arith.constant 5 : index
    %c7_1471 = arith.constant 7 : index
    %c0_1472 = arith.constant 0 : index
    %1235 = vector.load %arg12[%c5_1470, %c7_1471, %c0_1472] : memref<10x10x32xf32, #tpu.memory_space<vmem>>, vector<1x1x32xf32>
    %1236 = vector.shape_cast %1235 : vector<1x1x32xf32> to vector<1x32xf32>
    %c3_1473 = arith.constant 3 : index
    %c1_1474 = arith.constant 1 : index
    %c416_1475 = arith.constant 416 : index
    %1237 = vector.load %arg13[%c3_1473, %c1_1474, %c416_1475] : memref<4x4x512xf32, #tpu.memory_space<vmem>>, vector<1x1x32xf32>
    %1238 = vector.shape_cast %1237 : vector<1x1x32xf32> to vector<1x32xf32>
    %1239 = vector.shape_cast %1236 : vector<1x32xf32> to vector<1x1x32xf32>
    tpu.vector_store %arg13[%c3_1473, %c1_1474, %c416_1475], %1239 {strides = array<i32>} : memref<4x4x512xf32, #tpu.memory_space<vmem>>, vector<1x1x32xf32>,
    %c7_1476 = arith.constant 7 : index
    %c1_1477 = arith.constant 1 : index
    %c0_1478 = arith.constant 0 : index
    %1240 = vector.load %arg12[%c7_1476, %c1_1477, %c0_1478] : memref<10x10x32xf32, #tpu.memory_space<vmem>>, vector<1x1x32xf32>
    %1241 = vector.shape_cast %1240 : vector<1x1x32xf32> to vector<1x32xf32>
    %c0_1479 = arith.constant 0 : index
    %c2_1480 = arith.constant 2 : index
    %c416_1481 = arith.constant 416 : index
    %1242 = vector.load %arg13[%c0_1479, %c2_1480, %c416_1481] : memref<4x4x512xf32, #tpu.memory_space<vmem>>, vector<1x1x32xf32>
    %1243 = vector.shape_cast %1242 : vector<1x1x32xf32> to vector<1x32xf32>
    %1244 = vector.shape_cast %1241 : vector<1x32xf32> to vector<1x1x32xf32>
    tpu.vector_store %arg13[%c0_1479, %c2_1480, %c416_1481], %1244 {strides = array<i32>} : memref<4x4x512xf32, #tpu.memory_space<vmem>>, vector<1x1x32xf32>,
    %c7_1482 = arith.constant 7 : index
    %c3_1483 = arith.constant 3 : index
    %c0_1484 = arith.constant 0 : index
    %1245 = vector.load %arg12[%c7_1482, %c3_1483, %c0_1484] : memref<10x10x32xf32, #tpu.memory_space<vmem>>, vector<1x1x32xf32>
    %1246 = vector.shape_cast %1245 : vector<1x1x32xf32> to vector<1x32xf32>
    %c1_1485 = arith.constant 1 : index
    %c2_1486 = arith.constant 2 : index
    %c416_1487 = arith.constant 416 : index
    %1247 = vector.load %arg13[%c1_1485, %c2_1486, %c416_1487] : memref<4x4x512xf32, #tpu.memory_space<vmem>>, vector<1x1x32xf32>
    %1248 = vector.shape_cast %1247 : vector<1x1x32xf32> to vector<1x32xf32>
    %1249 = vector.shape_cast %1246 : vector<1x32xf32> to vector<1x1x32xf32>
    tpu.vector_store %arg13[%c1_1485, %c2_1486, %c416_1487], %1249 {strides = array<i32>} : memref<4x4x512xf32, #tpu.memory_space<vmem>>, vector<1x1x32xf32>,
    %c7_1488 = arith.constant 7 : index
    %c5_1489 = arith.constant 5 : index
    %c0_1490 = arith.constant 0 : index
    %1250 = vector.load %arg12[%c7_1488, %c5_1489, %c0_1490] : memref<10x10x32xf32, #tpu.memory_space<vmem>>, vector<1x1x32xf32>
    %1251 = vector.shape_cast %1250 : vector<1x1x32xf32> to vector<1x32xf32>
    %c2_1491 = arith.constant 2 : index
    %c2_1492 = arith.constant 2 : index
    %c416_1493 = arith.constant 416 : index
    %1252 = vector.load %arg13[%c2_1491, %c2_1492, %c416_1493] : memref<4x4x512xf32, #tpu.memory_space<vmem>>, vector<1x1x32xf32>
    %1253 = vector.shape_cast %1252 : vector<1x1x32xf32> to vector<1x32xf32>
    %1254 = vector.shape_cast %1251 : vector<1x32xf32> to vector<1x1x32xf32>
    tpu.vector_store %arg13[%c2_1491, %c2_1492, %c416_1493], %1254 {strides = array<i32>} : memref<4x4x512xf32, #tpu.memory_space<vmem>>, vector<1x1x32xf32>,
    %c7_1494 = arith.constant 7 : index
    %c7_1495 = arith.constant 7 : index
    %c0_1496 = arith.constant 0 : index
    %1255 = vector.load %arg12[%c7_1494, %c7_1495, %c0_1496] : memref<10x10x32xf32, #tpu.memory_space<vmem>>, vector<1x1x32xf32>
    %1256 = vector.shape_cast %1255 : vector<1x1x32xf32> to vector<1x32xf32>
    %c3_1497 = arith.constant 3 : index
    %c2_1498 = arith.constant 2 : index
    %c416_1499 = arith.constant 416 : index
    %1257 = vector.load %arg13[%c3_1497, %c2_1498, %c416_1499] : memref<4x4x512xf32, #tpu.memory_space<vmem>>, vector<1x1x32xf32>
    %1258 = vector.shape_cast %1257 : vector<1x1x32xf32> to vector<1x32xf32>
    %1259 = vector.shape_cast %1256 : vector<1x32xf32> to vector<1x1x32xf32>
    tpu.vector_store %arg13[%c3_1497, %c2_1498, %c416_1499], %1259 {strides = array<i32>} : memref<4x4x512xf32, #tpu.memory_space<vmem>>, vector<1x1x32xf32>,
    %c9_1500 = arith.constant 9 : index
    %c1_1501 = arith.constant 1 : index
    %c0_1502 = arith.constant 0 : index
    %1260 = vector.load %arg12[%c9_1500, %c1_1501, %c0_1502] : memref<10x10x32xf32, #tpu.memory_space<vmem>>, vector<1x1x32xf32>
    %1261 = vector.shape_cast %1260 : vector<1x1x32xf32> to vector<1x32xf32>
    %c0_1503 = arith.constant 0 : index
    %c3_1504 = arith.constant 3 : index
    %c416_1505 = arith.constant 416 : index
    %1262 = vector.load %arg13[%c0_1503, %c3_1504, %c416_1505] : memref<4x4x512xf32, #tpu.memory_space<vmem>>, vector<1x1x32xf32>
    %1263 = vector.shape_cast %1262 : vector<1x1x32xf32> to vector<1x32xf32>
    %1264 = vector.shape_cast %1261 : vector<1x32xf32> to vector<1x1x32xf32>
    tpu.vector_store %arg13[%c0_1503, %c3_1504, %c416_1505], %1264 {strides = array<i32>} : memref<4x4x512xf32, #tpu.memory_space<vmem>>, vector<1x1x32xf32>,
    %c9_1506 = arith.constant 9 : index
    %c3_1507 = arith.constant 3 : index
    %c0_1508 = arith.constant 0 : index
    %1265 = vector.load %arg12[%c9_1506, %c3_1507, %c0_1508] : memref<10x10x32xf32, #tpu.memory_space<vmem>>, vector<1x1x32xf32>
    %1266 = vector.shape_cast %1265 : vector<1x1x32xf32> to vector<1x32xf32>
    %c1_1509 = arith.constant 1 : index
    %c3_1510 = arith.constant 3 : index
    %c416_1511 = arith.constant 416 : index
    %1267 = vector.load %arg13[%c1_1509, %c3_1510, %c416_1511] : memref<4x4x512xf32, #tpu.memory_space<vmem>>, vector<1x1x32xf32>
    %1268 = vector.shape_cast %1267 : vector<1x1x32xf32> to vector<1x32xf32>
    %1269 = vector.shape_cast %1266 : vector<1x32xf32> to vector<1x1x32xf32>
    tpu.vector_store %arg13[%c1_1509, %c3_1510, %c416_1511], %1269 {strides = array<i32>} : memref<4x4x512xf32, #tpu.memory_space<vmem>>, vector<1x1x32xf32>,
    %c9_1512 = arith.constant 9 : index
    %c5_1513 = arith.constant 5 : index
    %c0_1514 = arith.constant 0 : index
    %1270 = vector.load %arg12[%c9_1512, %c5_1513, %c0_1514] : memref<10x10x32xf32, #tpu.memory_space<vmem>>, vector<1x1x32xf32>
    %1271 = vector.shape_cast %1270 : vector<1x1x32xf32> to vector<1x32xf32>
    %c2_1515 = arith.constant 2 : index
    %c3_1516 = arith.constant 3 : index
    %c416_1517 = arith.constant 416 : index
    %1272 = vector.load %arg13[%c2_1515, %c3_1516, %c416_1517] : memref<4x4x512xf32, #tpu.memory_space<vmem>>, vector<1x1x32xf32>
    %1273 = vector.shape_cast %1272 : vector<1x1x32xf32> to vector<1x32xf32>
    %1274 = vector.shape_cast %1271 : vector<1x32xf32> to vector<1x1x32xf32>
    tpu.vector_store %arg13[%c2_1515, %c3_1516, %c416_1517], %1274 {strides = array<i32>} : memref<4x4x512xf32, #tpu.memory_space<vmem>>, vector<1x1x32xf32>,
    %c9_1518 = arith.constant 9 : index
    %c7_1519 = arith.constant 7 : index
    %c0_1520 = arith.constant 0 : index
    %1275 = vector.load %arg12[%c9_1518, %c7_1519, %c0_1520] : memref<10x10x32xf32, #tpu.memory_space<vmem>>, vector<1x1x32xf32>
    %1276 = vector.shape_cast %1275 : vector<1x1x32xf32> to vector<1x32xf32>
    %c3_1521 = arith.constant 3 : index
    %c3_1522 = arith.constant 3 : index
    %c416_1523 = arith.constant 416 : index
    %1277 = vector.load %arg13[%c3_1521, %c3_1522, %c416_1523] : memref<4x4x512xf32, #tpu.memory_space<vmem>>, vector<1x1x32xf32>
    %1278 = vector.shape_cast %1277 : vector<1x1x32xf32> to vector<1x32xf32>
    %1279 = vector.shape_cast %1276 : vector<1x32xf32> to vector<1x1x32xf32>
    tpu.vector_store %arg13[%c3_1521, %c3_1522, %c416_1523], %1279 {strides = array<i32>} : memref<4x4x512xf32, #tpu.memory_space<vmem>>, vector<1x1x32xf32>,
    %c3_1524 = arith.constant 3 : index
    %c2_1525 = arith.constant 2 : index
    %c0_1526 = arith.constant 0 : index
    %1280 = vector.load %arg12[%c3_1524, %c2_1525, %c0_1526] : memref<10x10x32xf32, #tpu.memory_space<vmem>>, vector<1x1x32xf32>
    %1281 = vector.shape_cast %1280 : vector<1x1x32xf32> to vector<1x32xf32>
    %c0_1527 = arith.constant 0 : index
    %c0_1528 = arith.constant 0 : index
    %c448 = arith.constant 448 : index
    %1282 = vector.load %arg13[%c0_1527, %c0_1528, %c448] : memref<4x4x512xf32, #tpu.memory_space<vmem>>, vector<1x1x32xf32>
    %1283 = vector.shape_cast %1282 : vector<1x1x32xf32> to vector<1x32xf32>
    %1284 = vector.shape_cast %1281 : vector<1x32xf32> to vector<1x1x32xf32>
    tpu.vector_store %arg13[%c0_1527, %c0_1528, %c448], %1284 {strides = array<i32>} : memref<4x4x512xf32, #tpu.memory_space<vmem>>, vector<1x1x32xf32>,
    %c3_1529 = arith.constant 3 : index
    %c4_1530 = arith.constant 4 : index
    %c0_1531 = arith.constant 0 : index
    %1285 = vector.load %arg12[%c3_1529, %c4_1530, %c0_1531] : memref<10x10x32xf32, #tpu.memory_space<vmem>>, vector<1x1x32xf32>
    %1286 = vector.shape_cast %1285 : vector<1x1x32xf32> to vector<1x32xf32>
    %c1_1532 = arith.constant 1 : index
    %c0_1533 = arith.constant 0 : index
    %c448_1534 = arith.constant 448 : index
    %1287 = vector.load %arg13[%c1_1532, %c0_1533, %c448_1534] : memref<4x4x512xf32, #tpu.memory_space<vmem>>, vector<1x1x32xf32>
    %1288 = vector.shape_cast %1287 : vector<1x1x32xf32> to vector<1x32xf32>
    %1289 = vector.shape_cast %1286 : vector<1x32xf32> to vector<1x1x32xf32>
    tpu.vector_store %arg13[%c1_1532, %c0_1533, %c448_1534], %1289 {strides = array<i32>} : memref<4x4x512xf32, #tpu.memory_space<vmem>>, vector<1x1x32xf32>,
    %c3_1535 = arith.constant 3 : index
    %c6_1536 = arith.constant 6 : index
    %c0_1537 = arith.constant 0 : index
    %1290 = vector.load %arg12[%c3_1535, %c6_1536, %c0_1537] : memref<10x10x32xf32, #tpu.memory_space<vmem>>, vector<1x1x32xf32>
    %1291 = vector.shape_cast %1290 : vector<1x1x32xf32> to vector<1x32xf32>
    %c2_1538 = arith.constant 2 : index
    %c0_1539 = arith.constant 0 : index
    %c448_1540 = arith.constant 448 : index
    %1292 = vector.load %arg13[%c2_1538, %c0_1539, %c448_1540] : memref<4x4x512xf32, #tpu.memory_space<vmem>>, vector<1x1x32xf32>
    %1293 = vector.shape_cast %1292 : vector<1x1x32xf32> to vector<1x32xf32>
    %1294 = vector.shape_cast %1291 : vector<1x32xf32> to vector<1x1x32xf32>
    tpu.vector_store %arg13[%c2_1538, %c0_1539, %c448_1540], %1294 {strides = array<i32>} : memref<4x4x512xf32, #tpu.memory_space<vmem>>, vector<1x1x32xf32>,
    %c3_1541 = arith.constant 3 : index
    %c8_1542 = arith.constant 8 : index
    %c0_1543 = arith.constant 0 : index
    %1295 = vector.load %arg12[%c3_1541, %c8_1542, %c0_1543] : memref<10x10x32xf32, #tpu.memory_space<vmem>>, vector<1x1x32xf32>
    %1296 = vector.shape_cast %1295 : vector<1x1x32xf32> to vector<1x32xf32>
    %c3_1544 = arith.constant 3 : index
    %c0_1545 = arith.constant 0 : index
    %c448_1546 = arith.constant 448 : index
    %1297 = vector.load %arg13[%c3_1544, %c0_1545, %c448_1546] : memref<4x4x512xf32, #tpu.memory_space<vmem>>, vector<1x1x32xf32>
    %1298 = vector.shape_cast %1297 : vector<1x1x32xf32> to vector<1x32xf32>
    %1299 = vector.shape_cast %1296 : vector<1x32xf32> to vector<1x1x32xf32>
    tpu.vector_store %arg13[%c3_1544, %c0_1545, %c448_1546], %1299 {strides = array<i32>} : memref<4x4x512xf32, #tpu.memory_space<vmem>>, vector<1x1x32xf32>,
    %c5_1547 = arith.constant 5 : index
    %c2_1548 = arith.constant 2 : index
    %c0_1549 = arith.constant 0 : index
    %1300 = vector.load %arg12[%c5_1547, %c2_1548, %c0_1549] : memref<10x10x32xf32, #tpu.memory_space<vmem>>, vector<1x1x32xf32>
    %1301 = vector.shape_cast %1300 : vector<1x1x32xf32> to vector<1x32xf32>
    %c0_1550 = arith.constant 0 : index
    %c1_1551 = arith.constant 1 : index
    %c448_1552 = arith.constant 448 : index
    %1302 = vector.load %arg13[%c0_1550, %c1_1551, %c448_1552] : memref<4x4x512xf32, #tpu.memory_space<vmem>>, vector<1x1x32xf32>
    %1303 = vector.shape_cast %1302 : vector<1x1x32xf32> to vector<1x32xf32>
    %1304 = vector.shape_cast %1301 : vector<1x32xf32> to vector<1x1x32xf32>
    tpu.vector_store %arg13[%c0_1550, %c1_1551, %c448_1552], %1304 {strides = array<i32>} : memref<4x4x512xf32, #tpu.memory_space<vmem>>, vector<1x1x32xf32>,
    %c5_1553 = arith.constant 5 : index
    %c4_1554 = arith.constant 4 : index
    %c0_1555 = arith.constant 0 : index
    %1305 = vector.load %arg12[%c5_1553, %c4_1554, %c0_1555] : memref<10x10x32xf32, #tpu.memory_space<vmem>>, vector<1x1x32xf32>
    %1306 = vector.shape_cast %1305 : vector<1x1x32xf32> to vector<1x32xf32>
    %c1_1556 = arith.constant 1 : index
    %c1_1557 = arith.constant 1 : index
    %c448_1558 = arith.constant 448 : index
    %1307 = vector.load %arg13[%c1_1556, %c1_1557, %c448_1558] : memref<4x4x512xf32, #tpu.memory_space<vmem>>, vector<1x1x32xf32>
    %1308 = vector.shape_cast %1307 : vector<1x1x32xf32> to vector<1x32xf32>
    %1309 = vector.shape_cast %1306 : vector<1x32xf32> to vector<1x1x32xf32>
    tpu.vector_store %arg13[%c1_1556, %c1_1557, %c448_1558], %1309 {strides = array<i32>} : memref<4x4x512xf32, #tpu.memory_space<vmem>>, vector<1x1x32xf32>,
    %c5_1559 = arith.constant 5 : index
    %c6_1560 = arith.constant 6 : index
    %c0_1561 = arith.constant 0 : index
    %1310 = vector.load %arg12[%c5_1559, %c6_1560, %c0_1561] : memref<10x10x32xf32, #tpu.memory_space<vmem>>, vector<1x1x32xf32>
    %1311 = vector.shape_cast %1310 : vector<1x1x32xf32> to vector<1x32xf32>
    %c2_1562 = arith.constant 2 : index
    %c1_1563 = arith.constant 1 : index
    %c448_1564 = arith.constant 448 : index
    %1312 = vector.load %arg13[%c2_1562, %c1_1563, %c448_1564] : memref<4x4x512xf32, #tpu.memory_space<vmem>>, vector<1x1x32xf32>
    %1313 = vector.shape_cast %1312 : vector<1x1x32xf32> to vector<1x32xf32>
    %1314 = vector.shape_cast %1311 : vector<1x32xf32> to vector<1x1x32xf32>
    tpu.vector_store %arg13[%c2_1562, %c1_1563, %c448_1564], %1314 {strides = array<i32>} : memref<4x4x512xf32, #tpu.memory_space<vmem>>, vector<1x1x32xf32>,
    %c5_1565 = arith.constant 5 : index
    %c8_1566 = arith.constant 8 : index
    %c0_1567 = arith.constant 0 : index
    %1315 = vector.load %arg12[%c5_1565, %c8_1566, %c0_1567] : memref<10x10x32xf32, #tpu.memory_space<vmem>>, vector<1x1x32xf32>
    %1316 = vector.shape_cast %1315 : vector<1x1x32xf32> to vector<1x32xf32>
    %c3_1568 = arith.constant 3 : index
    %c1_1569 = arith.constant 1 : index
    %c448_1570 = arith.constant 448 : index
    %1317 = vector.load %arg13[%c3_1568, %c1_1569, %c448_1570] : memref<4x4x512xf32, #tpu.memory_space<vmem>>, vector<1x1x32xf32>
    %1318 = vector.shape_cast %1317 : vector<1x1x32xf32> to vector<1x32xf32>
    %1319 = vector.shape_cast %1316 : vector<1x32xf32> to vector<1x1x32xf32>
    tpu.vector_store %arg13[%c3_1568, %c1_1569, %c448_1570], %1319 {strides = array<i32>} : memref<4x4x512xf32, #tpu.memory_space<vmem>>, vector<1x1x32xf32>,
    %c7_1571 = arith.constant 7 : index
    %c2_1572 = arith.constant 2 : index
    %c0_1573 = arith.constant 0 : index
    %1320 = vector.load %arg12[%c7_1571, %c2_1572, %c0_1573] : memref<10x10x32xf32, #tpu.memory_space<vmem>>, vector<1x1x32xf32>
    %1321 = vector.shape_cast %1320 : vector<1x1x32xf32> to vector<1x32xf32>
    %c0_1574 = arith.constant 0 : index
    %c2_1575 = arith.constant 2 : index
    %c448_1576 = arith.constant 448 : index
    %1322 = vector.load %arg13[%c0_1574, %c2_1575, %c448_1576] : memref<4x4x512xf32, #tpu.memory_space<vmem>>, vector<1x1x32xf32>
    %1323 = vector.shape_cast %1322 : vector<1x1x32xf32> to vector<1x32xf32>
    %1324 = vector.shape_cast %1321 : vector<1x32xf32> to vector<1x1x32xf32>
    tpu.vector_store %arg13[%c0_1574, %c2_1575, %c448_1576], %1324 {strides = array<i32>} : memref<4x4x512xf32, #tpu.memory_space<vmem>>, vector<1x1x32xf32>,
    %c7_1577 = arith.constant 7 : index
    %c4_1578 = arith.constant 4 : index
    %c0_1579 = arith.constant 0 : index
    %1325 = vector.load %arg12[%c7_1577, %c4_1578, %c0_1579] : memref<10x10x32xf32, #tpu.memory_space<vmem>>, vector<1x1x32xf32>
    %1326 = vector.shape_cast %1325 : vector<1x1x32xf32> to vector<1x32xf32>
    %c1_1580 = arith.constant 1 : index
    %c2_1581 = arith.constant 2 : index
    %c448_1582 = arith.constant 448 : index
    %1327 = vector.load %arg13[%c1_1580, %c2_1581, %c448_1582] : memref<4x4x512xf32, #tpu.memory_space<vmem>>, vector<1x1x32xf32>
    %1328 = vector.shape_cast %1327 : vector<1x1x32xf32> to vector<1x32xf32>
    %1329 = vector.shape_cast %1326 : vector<1x32xf32> to vector<1x1x32xf32>
    tpu.vector_store %arg13[%c1_1580, %c2_1581, %c448_1582], %1329 {strides = array<i32>} : memref<4x4x512xf32, #tpu.memory_space<vmem>>, vector<1x1x32xf32>,
    %c7_1583 = arith.constant 7 : index
    %c6_1584 = arith.constant 6 : index
    %c0_1585 = arith.constant 0 : index
    %1330 = vector.load %arg12[%c7_1583, %c6_1584, %c0_1585] : memref<10x10x32xf32, #tpu.memory_space<vmem>>, vector<1x1x32xf32>
    %1331 = vector.shape_cast %1330 : vector<1x1x32xf32> to vector<1x32xf32>
    %c2_1586 = arith.constant 2 : index
    %c2_1587 = arith.constant 2 : index
    %c448_1588 = arith.constant 448 : index
    %1332 = vector.load %arg13[%c2_1586, %c2_1587, %c448_1588] : memref<4x4x512xf32, #tpu.memory_space<vmem>>, vector<1x1x32xf32>
    %1333 = vector.shape_cast %1332 : vector<1x1x32xf32> to vector<1x32xf32>
    %1334 = vector.shape_cast %1331 : vector<1x32xf32> to vector<1x1x32xf32>
    tpu.vector_store %arg13[%c2_1586, %c2_1587, %c448_1588], %1334 {strides = array<i32>} : memref<4x4x512xf32, #tpu.memory_space<vmem>>, vector<1x1x32xf32>,
    %c7_1589 = arith.constant 7 : index
    %c8_1590 = arith.constant 8 : index
    %c0_1591 = arith.constant 0 : index
    %1335 = vector.load %arg12[%c7_1589, %c8_1590, %c0_1591] : memref<10x10x32xf32, #tpu.memory_space<vmem>>, vector<1x1x32xf32>
    %1336 = vector.shape_cast %1335 : vector<1x1x32xf32> to vector<1x32xf32>
    %c3_1592 = arith.constant 3 : index
    %c2_1593 = arith.constant 2 : index
    %c448_1594 = arith.constant 448 : index
    %1337 = vector.load %arg13[%c3_1592, %c2_1593, %c448_1594] : memref<4x4x512xf32, #tpu.memory_space<vmem>>, vector<1x1x32xf32>
    %1338 = vector.shape_cast %1337 : vector<1x1x32xf32> to vector<1x32xf32>
    %1339 = vector.shape_cast %1336 : vector<1x32xf32> to vector<1x1x32xf32>
    tpu.vector_store %arg13[%c3_1592, %c2_1593, %c448_1594], %1339 {strides = array<i32>} : memref<4x4x512xf32, #tpu.memory_space<vmem>>, vector<1x1x32xf32>,
    %c9_1595 = arith.constant 9 : index
    %c2_1596 = arith.constant 2 : index
    %c0_1597 = arith.constant 0 : index
    %1340 = vector.load %arg12[%c9_1595, %c2_1596, %c0_1597] : memref<10x10x32xf32, #tpu.memory_space<vmem>>, vector<1x1x32xf32>
    %1341 = vector.shape_cast %1340 : vector<1x1x32xf32> to vector<1x32xf32>
    %c0_1598 = arith.constant 0 : index
    %c3_1599 = arith.constant 3 : index
    %c448_1600 = arith.constant 448 : index
    %1342 = vector.load %arg13[%c0_1598, %c3_1599, %c448_1600] : memref<4x4x512xf32, #tpu.memory_space<vmem>>, vector<1x1x32xf32>
    %1343 = vector.shape_cast %1342 : vector<1x1x32xf32> to vector<1x32xf32>
    %1344 = vector.shape_cast %1341 : vector<1x32xf32> to vector<1x1x32xf32>
    tpu.vector_store %arg13[%c0_1598, %c3_1599, %c448_1600], %1344 {strides = array<i32>} : memref<4x4x512xf32, #tpu.memory_space<vmem>>, vector<1x1x32xf32>,
    %c9_1601 = arith.constant 9 : index
    %c4_1602 = arith.constant 4 : index
    %c0_1603 = arith.constant 0 : index
    %1345 = vector.load %arg12[%c9_1601, %c4_1602, %c0_1603] : memref<10x10x32xf32, #tpu.memory_space<vmem>>, vector<1x1x32xf32>
    %1346 = vector.shape_cast %1345 : vector<1x1x32xf32> to vector<1x32xf32>
    %c1_1604 = arith.constant 1 : index
    %c3_1605 = arith.constant 3 : index
    %c448_1606 = arith.constant 448 : index
    %1347 = vector.load %arg13[%c1_1604, %c3_1605, %c448_1606] : memref<4x4x512xf32, #tpu.memory_space<vmem>>, vector<1x1x32xf32>
    %1348 = vector.shape_cast %1347 : vector<1x1x32xf32> to vector<1x32xf32>
    %1349 = vector.shape_cast %1346 : vector<1x32xf32> to vector<1x1x32xf32>
    tpu.vector_store %arg13[%c1_1604, %c3_1605, %c448_1606], %1349 {strides = array<i32>} : memref<4x4x512xf32, #tpu.memory_space<vmem>>, vector<1x1x32xf32>,
    %c9_1607 = arith.constant 9 : index
    %c6_1608 = arith.constant 6 : index
    %c0_1609 = arith.constant 0 : index
    %1350 = vector.load %arg12[%c9_1607, %c6_1608, %c0_1609] : memref<10x10x32xf32, #tpu.memory_space<vmem>>, vector<1x1x32xf32>
    %1351 = vector.shape_cast %1350 : vector<1x1x32xf32> to vector<1x32xf32>
    %c2_1610 = arith.constant 2 : index
    %c3_1611 = arith.constant 3 : index
    %c448_1612 = arith.constant 448 : index
    %1352 = vector.load %arg13[%c2_1610, %c3_1611, %c448_1612] : memref<4x4x512xf32, #tpu.memory_space<vmem>>, vector<1x1x32xf32>
    %1353 = vector.shape_cast %1352 : vector<1x1x32xf32> to vector<1x32xf32>
    %1354 = vector.shape_cast %1351 : vector<1x32xf32> to vector<1x1x32xf32>
    tpu.vector_store %arg13[%c2_1610, %c3_1611, %c448_1612], %1354 {strides = array<i32>} : memref<4x4x512xf32, #tpu.memory_space<vmem>>, vector<1x1x32xf32>,
    %c9_1613 = arith.constant 9 : index
    %c8_1614 = arith.constant 8 : index
    %c0_1615 = arith.constant 0 : index
    %1355 = vector.load %arg12[%c9_1613, %c8_1614, %c0_1615] : memref<10x10x32xf32, #tpu.memory_space<vmem>>, vector<1x1x32xf32>
    %1356 = vector.shape_cast %1355 : vector<1x1x32xf32> to vector<1x32xf32>
    %c3_1616 = arith.constant 3 : index
    %c3_1617 = arith.constant 3 : index
    %c448_1618 = arith.constant 448 : index
    %1357 = vector.load %arg13[%c3_1616, %c3_1617, %c448_1618] : memref<4x4x512xf32, #tpu.memory_space<vmem>>, vector<1x1x32xf32>
    %1358 = vector.shape_cast %1357 : vector<1x1x32xf32> to vector<1x32xf32>
    %1359 = vector.shape_cast %1356 : vector<1x32xf32> to vector<1x1x32xf32>
    tpu.vector_store %arg13[%c3_1616, %c3_1617, %c448_1618], %1359 {strides = array<i32>} : memref<4x4x512xf32, #tpu.memory_space<vmem>>, vector<1x1x32xf32>,
    %c3_1619 = arith.constant 3 : index
    %c3_1620 = arith.constant 3 : index
    %c0_1621 = arith.constant 0 : index
    %1360 = vector.load %arg12[%c3_1619, %c3_1620, %c0_1621] : memref<10x10x32xf32, #tpu.memory_space<vmem>>, vector<1x1x32xf32>
    %1361 = vector.shape_cast %1360 : vector<1x1x32xf32> to vector<1x32xf32>
    %c0_1622 = arith.constant 0 : index
    %c0_1623 = arith.constant 0 : index
    %c480 = arith.constant 480 : index
    %1362 = vector.load %arg13[%c0_1622, %c0_1623, %c480] : memref<4x4x512xf32, #tpu.memory_space<vmem>>, vector<1x1x32xf32>
    %1363 = vector.shape_cast %1362 : vector<1x1x32xf32> to vector<1x32xf32>
    %1364 = vector.shape_cast %1361 : vector<1x32xf32> to vector<1x1x32xf32>
    tpu.vector_store %arg13[%c0_1622, %c0_1623, %c480], %1364 {strides = array<i32>} : memref<4x4x512xf32, #tpu.memory_space<vmem>>, vector<1x1x32xf32>,
    %c3_1624 = arith.constant 3 : index
    %c5_1625 = arith.constant 5 : index
    %c0_1626 = arith.constant 0 : index
    %1365 = vector.load %arg12[%c3_1624, %c5_1625, %c0_1626] : memref<10x10x32xf32, #tpu.memory_space<vmem>>, vector<1x1x32xf32>
    %1366 = vector.shape_cast %1365 : vector<1x1x32xf32> to vector<1x32xf32>
    %c1_1627 = arith.constant 1 : index
    %c0_1628 = arith.constant 0 : index
    %c480_1629 = arith.constant 480 : index
    %1367 = vector.load %arg13[%c1_1627, %c0_1628, %c480_1629] : memref<4x4x512xf32, #tpu.memory_space<vmem>>, vector<1x1x32xf32>
    %1368 = vector.shape_cast %1367 : vector<1x1x32xf32> to vector<1x32xf32>
    %1369 = vector.shape_cast %1366 : vector<1x32xf32> to vector<1x1x32xf32>
    tpu.vector_store %arg13[%c1_1627, %c0_1628, %c480_1629], %1369 {strides = array<i32>} : memref<4x4x512xf32, #tpu.memory_space<vmem>>, vector<1x1x32xf32>,
    %c3_1630 = arith.constant 3 : index
    %c7_1631 = arith.constant 7 : index
    %c0_1632 = arith.constant 0 : index
    %1370 = vector.load %arg12[%c3_1630, %c7_1631, %c0_1632] : memref<10x10x32xf32, #tpu.memory_space<vmem>>, vector<1x1x32xf32>
    %1371 = vector.shape_cast %1370 : vector<1x1x32xf32> to vector<1x32xf32>
    %c2_1633 = arith.constant 2 : index
    %c0_1634 = arith.constant 0 : index
    %c480_1635 = arith.constant 480 : index
    %1372 = vector.load %arg13[%c2_1633, %c0_1634, %c480_1635] : memref<4x4x512xf32, #tpu.memory_space<vmem>>, vector<1x1x32xf32>
    %1373 = vector.shape_cast %1372 : vector<1x1x32xf32> to vector<1x32xf32>
    %1374 = vector.shape_cast %1371 : vector<1x32xf32> to vector<1x1x32xf32>
    tpu.vector_store %arg13[%c2_1633, %c0_1634, %c480_1635], %1374 {strides = array<i32>} : memref<4x4x512xf32, #tpu.memory_space<vmem>>, vector<1x1x32xf32>,
    %c3_1636 = arith.constant 3 : index
    %c9_1637 = arith.constant 9 : index
    %c0_1638 = arith.constant 0 : index
    %1375 = vector.load %arg12[%c3_1636, %c9_1637, %c0_1638] : memref<10x10x32xf32, #tpu.memory_space<vmem>>, vector<1x1x32xf32>
    %1376 = vector.shape_cast %1375 : vector<1x1x32xf32> to vector<1x32xf32>
    %c3_1639 = arith.constant 3 : index
    %c0_1640 = arith.constant 0 : index
    %c480_1641 = arith.constant 480 : index
    %1377 = vector.load %arg13[%c3_1639, %c0_1640, %c480_1641] : memref<4x4x512xf32, #tpu.memory_space<vmem>>, vector<1x1x32xf32>
    %1378 = vector.shape_cast %1377 : vector<1x1x32xf32> to vector<1x32xf32>
    %1379 = vector.shape_cast %1376 : vector<1x32xf32> to vector<1x1x32xf32>
    tpu.vector_store %arg13[%c3_1639, %c0_1640, %c480_1641], %1379 {strides = array<i32>} : memref<4x4x512xf32, #tpu.memory_space<vmem>>, vector<1x1x32xf32>,
    %c5_1642 = arith.constant 5 : index
    %c3_1643 = arith.constant 3 : index
    %c0_1644 = arith.constant 0 : index
    %1380 = vector.load %arg12[%c5_1642, %c3_1643, %c0_1644] : memref<10x10x32xf32, #tpu.memory_space<vmem>>, vector<1x1x32xf32>
    %1381 = vector.shape_cast %1380 : vector<1x1x32xf32> to vector<1x32xf32>
    %c0_1645 = arith.constant 0 : index
    %c1_1646 = arith.constant 1 : index
    %c480_1647 = arith.constant 480 : index
    %1382 = vector.load %arg13[%c0_1645, %c1_1646, %c480_1647] : memref<4x4x512xf32, #tpu.memory_space<vmem>>, vector<1x1x32xf32>
    %1383 = vector.shape_cast %1382 : vector<1x1x32xf32> to vector<1x32xf32>
    %1384 = vector.shape_cast %1381 : vector<1x32xf32> to vector<1x1x32xf32>
    tpu.vector_store %arg13[%c0_1645, %c1_1646, %c480_1647], %1384 {strides = array<i32>} : memref<4x4x512xf32, #tpu.memory_space<vmem>>, vector<1x1x32xf32>,
    %c5_1648 = arith.constant 5 : index
    %c5_1649 = arith.constant 5 : index
    %c0_1650 = arith.constant 0 : index
    %1385 = vector.load %arg12[%c5_1648, %c5_1649, %c0_1650] : memref<10x10x32xf32, #tpu.memory_space<vmem>>, vector<1x1x32xf32>
    %1386 = vector.shape_cast %1385 : vector<1x1x32xf32> to vector<1x32xf32>
    %c1_1651 = arith.constant 1 : index
    %c1_1652 = arith.constant 1 : index
    %c480_1653 = arith.constant 480 : index
    %1387 = vector.load %arg13[%c1_1651, %c1_1652, %c480_1653] : memref<4x4x512xf32, #tpu.memory_space<vmem>>, vector<1x1x32xf32>
    %1388 = vector.shape_cast %1387 : vector<1x1x32xf32> to vector<1x32xf32>
    %1389 = vector.shape_cast %1386 : vector<1x32xf32> to vector<1x1x32xf32>
    tpu.vector_store %arg13[%c1_1651, %c1_1652, %c480_1653], %1389 {strides = array<i32>} : memref<4x4x512xf32, #tpu.memory_space<vmem>>, vector<1x1x32xf32>,
    %c5_1654 = arith.constant 5 : index
    %c7_1655 = arith.constant 7 : index
    %c0_1656 = arith.constant 0 : index
    %1390 = vector.load %arg12[%c5_1654, %c7_1655, %c0_1656] : memref<10x10x32xf32, #tpu.memory_space<vmem>>, vector<1x1x32xf32>
    %1391 = vector.shape_cast %1390 : vector<1x1x32xf32> to vector<1x32xf32>
    %c2_1657 = arith.constant 2 : index
    %c1_1658 = arith.constant 1 : index
    %c480_1659 = arith.constant 480 : index
    %1392 = vector.load %arg13[%c2_1657, %c1_1658, %c480_1659] : memref<4x4x512xf32, #tpu.memory_space<vmem>>, vector<1x1x32xf32>
    %1393 = vector.shape_cast %1392 : vector<1x1x32xf32> to vector<1x32xf32>
    %1394 = vector.shape_cast %1391 : vector<1x32xf32> to vector<1x1x32xf32>
    tpu.vector_store %arg13[%c2_1657, %c1_1658, %c480_1659], %1394 {strides = array<i32>} : memref<4x4x512xf32, #tpu.memory_space<vmem>>, vector<1x1x32xf32>,
    %c5_1660 = arith.constant 5 : index
    %c9_1661 = arith.constant 9 : index
    %c0_1662 = arith.constant 0 : index
    %1395 = vector.load %arg12[%c5_1660, %c9_1661, %c0_1662] : memref<10x10x32xf32, #tpu.memory_space<vmem>>, vector<1x1x32xf32>
    %1396 = vector.shape_cast %1395 : vector<1x1x32xf32> to vector<1x32xf32>
    %c3_1663 = arith.constant 3 : index
    %c1_1664 = arith.constant 1 : index
    %c480_1665 = arith.constant 480 : index
    %1397 = vector.load %arg13[%c3_1663, %c1_1664, %c480_1665] : memref<4x4x512xf32, #tpu.memory_space<vmem>>, vector<1x1x32xf32>
    %1398 = vector.shape_cast %1397 : vector<1x1x32xf32> to vector<1x32xf32>
    %1399 = vector.shape_cast %1396 : vector<1x32xf32> to vector<1x1x32xf32>
    tpu.vector_store %arg13[%c3_1663, %c1_1664, %c480_1665], %1399 {strides = array<i32>} : memref<4x4x512xf32, #tpu.memory_space<vmem>>, vector<1x1x32xf32>,
    %c7_1666 = arith.constant 7 : index
    %c3_1667 = arith.constant 3 : index
    %c0_1668 = arith.constant 0 : index
    %1400 = vector.load %arg12[%c7_1666, %c3_1667, %c0_1668] : memref<10x10x32xf32, #tpu.memory_space<vmem>>, vector<1x1x32xf32>
    %1401 = vector.shape_cast %1400 : vector<1x1x32xf32> to vector<1x32xf32>
    %c0_1669 = arith.constant 0 : index
    %c2_1670 = arith.constant 2 : index
    %c480_1671 = arith.constant 480 : index
    %1402 = vector.load %arg13[%c0_1669, %c2_1670, %c480_1671] : memref<4x4x512xf32, #tpu.memory_space<vmem>>, vector<1x1x32xf32>
    %1403 = vector.shape_cast %1402 : vector<1x1x32xf32> to vector<1x32xf32>
    %1404 = vector.shape_cast %1401 : vector<1x32xf32> to vector<1x1x32xf32>
    tpu.vector_store %arg13[%c0_1669, %c2_1670, %c480_1671], %1404 {strides = array<i32>} : memref<4x4x512xf32, #tpu.memory_space<vmem>>, vector<1x1x32xf32>,
    %c7_1672 = arith.constant 7 : index
    %c5_1673 = arith.constant 5 : index
    %c0_1674 = arith.constant 0 : index
    %1405 = vector.load %arg12[%c7_1672, %c5_1673, %c0_1674] : memref<10x10x32xf32, #tpu.memory_space<vmem>>, vector<1x1x32xf32>
    %1406 = vector.shape_cast %1405 : vector<1x1x32xf32> to vector<1x32xf32>
    %c1_1675 = arith.constant 1 : index
    %c2_1676 = arith.constant 2 : index
    %c480_1677 = arith.constant 480 : index
    %1407 = vector.load %arg13[%c1_1675, %c2_1676, %c480_1677] : memref<4x4x512xf32, #tpu.memory_space<vmem>>, vector<1x1x32xf32>
    %1408 = vector.shape_cast %1407 : vector<1x1x32xf32> to vector<1x32xf32>
    %1409 = vector.shape_cast %1406 : vector<1x32xf32> to vector<1x1x32xf32>
    tpu.vector_store %arg13[%c1_1675, %c2_1676, %c480_1677], %1409 {strides = array<i32>} : memref<4x4x512xf32, #tpu.memory_space<vmem>>, vector<1x1x32xf32>,
    %c7_1678 = arith.constant 7 : index
    %c7_1679 = arith.constant 7 : index
    %c0_1680 = arith.constant 0 : index
    %1410 = vector.load %arg12[%c7_1678, %c7_1679, %c0_1680] : memref<10x10x32xf32, #tpu.memory_space<vmem>>, vector<1x1x32xf32>
    %1411 = vector.shape_cast %1410 : vector<1x1x32xf32> to vector<1x32xf32>
    %c2_1681 = arith.constant 2 : index
    %c2_1682 = arith.constant 2 : index
    %c480_1683 = arith.constant 480 : index
    %1412 = vector.load %arg13[%c2_1681, %c2_1682, %c480_1683] : memref<4x4x512xf32, #tpu.memory_space<vmem>>, vector<1x1x32xf32>
    %1413 = vector.shape_cast %1412 : vector<1x1x32xf32> to vector<1x32xf32>
    %1414 = vector.shape_cast %1411 : vector<1x32xf32> to vector<1x1x32xf32>
    tpu.vector_store %arg13[%c2_1681, %c2_1682, %c480_1683], %1414 {strides = array<i32>} : memref<4x4x512xf32, #tpu.memory_space<vmem>>, vector<1x1x32xf32>,
    %c7_1684 = arith.constant 7 : index
    %c9_1685 = arith.constant 9 : index
    %c0_1686 = arith.constant 0 : index
    %1415 = vector.load %arg12[%c7_1684, %c9_1685, %c0_1686] : memref<10x10x32xf32, #tpu.memory_space<vmem>>, vector<1x1x32xf32>
    %1416 = vector.shape_cast %1415 : vector<1x1x32xf32> to vector<1x32xf32>
    %c3_1687 = arith.constant 3 : index
    %c2_1688 = arith.constant 2 : index
    %c480_1689 = arith.constant 480 : index
    %1417 = vector.load %arg13[%c3_1687, %c2_1688, %c480_1689] : memref<4x4x512xf32, #tpu.memory_space<vmem>>, vector<1x1x32xf32>
    %1418 = vector.shape_cast %1417 : vector<1x1x32xf32> to vector<1x32xf32>
    %1419 = vector.shape_cast %1416 : vector<1x32xf32> to vector<1x1x32xf32>
    tpu.vector_store %arg13[%c3_1687, %c2_1688, %c480_1689], %1419 {strides = array<i32>} : memref<4x4x512xf32, #tpu.memory_space<vmem>>, vector<1x1x32xf32>,
    %c9_1690 = arith.constant 9 : index
    %c3_1691 = arith.constant 3 : index
    %c0_1692 = arith.constant 0 : index
    %1420 = vector.load %arg12[%c9_1690, %c3_1691, %c0_1692] : memref<10x10x32xf32, #tpu.memory_space<vmem>>, vector<1x1x32xf32>
    %1421 = vector.shape_cast %1420 : vector<1x1x32xf32> to vector<1x32xf32>
    %c0_1693 = arith.constant 0 : index
    %c3_1694 = arith.constant 3 : index
    %c480_1695 = arith.constant 480 : index
    %1422 = vector.load %arg13[%c0_1693, %c3_1694, %c480_1695] : memref<4x4x512xf32, #tpu.memory_space<vmem>>, vector<1x1x32xf32>
    %1423 = vector.shape_cast %1422 : vector<1x1x32xf32> to vector<1x32xf32>
    %1424 = vector.shape_cast %1421 : vector<1x32xf32> to vector<1x1x32xf32>
    tpu.vector_store %arg13[%c0_1693, %c3_1694, %c480_1695], %1424 {strides = array<i32>} : memref<4x4x512xf32, #tpu.memory_space<vmem>>, vector<1x1x32xf32>,
    %c9_1696 = arith.constant 9 : index
    %c5_1697 = arith.constant 5 : index
    %c0_1698 = arith.constant 0 : index
    %1425 = vector.load %arg12[%c9_1696, %c5_1697, %c0_1698] : memref<10x10x32xf32, #tpu.memory_space<vmem>>, vector<1x1x32xf32>
    %1426 = vector.shape_cast %1425 : vector<1x1x32xf32> to vector<1x32xf32>
    %c1_1699 = arith.constant 1 : index
    %c3_1700 = arith.constant 3 : index
    %c480_1701 = arith.constant 480 : index
    %1427 = vector.load %arg13[%c1_1699, %c3_1700, %c480_1701] : memref<4x4x512xf32, #tpu.memory_space<vmem>>, vector<1x1x32xf32>
    %1428 = vector.shape_cast %1427 : vector<1x1x32xf32> to vector<1x32xf32>
    %1429 = vector.shape_cast %1426 : vector<1x32xf32> to vector<1x1x32xf32>
    tpu.vector_store %arg13[%c1_1699, %c3_1700, %c480_1701], %1429 {strides = array<i32>} : memref<4x4x512xf32, #tpu.memory_space<vmem>>, vector<1x1x32xf32>,
    %c9_1702 = arith.constant 9 : index
    %c7_1703 = arith.constant 7 : index
    %c0_1704 = arith.constant 0 : index
    %1430 = vector.load %arg12[%c9_1702, %c7_1703, %c0_1704] : memref<10x10x32xf32, #tpu.memory_space<vmem>>, vector<1x1x32xf32>
    %1431 = vector.shape_cast %1430 : vector<1x1x32xf32> to vector<1x32xf32>
    %c2_1705 = arith.constant 2 : index
    %c3_1706 = arith.constant 3 : index
    %c480_1707 = arith.constant 480 : index
    %1432 = vector.load %arg13[%c2_1705, %c3_1706, %c480_1707] : memref<4x4x512xf32, #tpu.memory_space<vmem>>, vector<1x1x32xf32>
    %1433 = vector.shape_cast %1432 : vector<1x1x32xf32> to vector<1x32xf32>
    %1434 = vector.shape_cast %1431 : vector<1x32xf32> to vector<1x1x32xf32>
    tpu.vector_store %arg13[%c2_1705, %c3_1706, %c480_1707], %1434 {strides = array<i32>} : memref<4x4x512xf32, #tpu.memory_space<vmem>>, vector<1x1x32xf32>,
    %c9_1708 = arith.constant 9 : index
    %c9_1709 = arith.constant 9 : index
    %c0_1710 = arith.constant 0 : index
    %1435 = vector.load %arg12[%c9_1708, %c9_1709, %c0_1710] : memref<10x10x32xf32, #tpu.memory_space<vmem>>, vector<1x1x32xf32>
    %1436 = vector.shape_cast %1435 : vector<1x1x32xf32> to vector<1x32xf32>
    %c3_1711 = arith.constant 3 : index
    %c3_1712 = arith.constant 3 : index
    %c480_1713 = arith.constant 480 : index
    %1437 = vector.load %arg13[%c3_1711, %c3_1712, %c480_1713] : memref<4x4x512xf32, #tpu.memory_space<vmem>>, vector<1x1x32xf32>
    %1438 = vector.shape_cast %1437 : vector<1x1x32xf32> to vector<1x32xf32>
    %1439 = vector.shape_cast %1436 : vector<1x32xf32> to vector<1x1x32xf32>
    tpu.vector_store %arg13[%c3_1711, %c3_1712, %c480_1713], %1439 {strides = array<i32>} : memref<4x4x512xf32, #tpu.memory_space<vmem>>, vector<1x1x32xf32>,
    %c0_1714 = arith.constant 0 : index
    %c0_1715 = arith.constant 0 : index
    %1440 = vector.load %arg4[%c0_1714, %c0_1715] : memref<512x64xbf16, #tpu.memory_space<vmem>>, vector<512x64xbf16>
    %c0_1716 = arith.constant 0 : index
    %c0_1717 = arith.constant 0 : index
    %1441 = vector.load %arg5[%c0_1716, %c0_1717] : memref<1x64xf32, #tpu.memory_space<vmem>>, vector<1x64xf32>
    %c0_1718 = arith.constant 0 : index
    %c0_1719 = arith.constant 0 : index
    %c0_1720 = arith.constant 0 : index
    %1442 = vector.load %arg13[%c0_1718, %c0_1719, %c0_1720] : memref<4x4x512xf32, #tpu.memory_space<vmem>>, vector<1x4x512xf32>
    %1443 = vector.shape_cast %1442 : vector<1x4x512xf32> to vector<4x512xf32>
    %1444 = arith.truncf %1443 : vector<4x512xf32> to vector<4x512xbf16>
    %cst_1721 = arith.constant dense<0.000000e+00> : vector<4x64xf32>
    %1445 = tpu.matmul %1444, %1440, %cst_1721 {dimension_numbers = #tpu.dot_dimension_numbers<[1], [0], [0], [1], [0, 0, 1, 1], [], []>} : vector<4x512xbf16>, vector<512x64xbf16>, vector<4x64xf32> -> vector<4x64xf32>
    %1446 = vector.broadcast %1441 : vector<1x64xf32> to vector<4x64xf32>
    %1447 = arith.addf %1445, %1446 : vector<4x64xf32>
    %cst_1722 = arith.constant 0.000000e+00 : f32
    %1448 = vector.broadcast %cst_1722 : f32 to vector<4x64xf32>
    %1449 = arith.maximumf %1447, %1448 : vector<4x64xf32>
    %c0_1723 = arith.constant 0 : index
    %c0_1724 = arith.constant 0 : index
    %c0_1725 = arith.constant 0 : index
    %1450 = vector.load %arg14[%c0_1723, %c0_1724, %c0_1725] : memref<4x4x64xf32, #tpu.memory_space<vmem>>, vector<1x4x64xf32>
    %1451 = vector.shape_cast %1450 : vector<1x4x64xf32> to vector<4x64xf32>
    %1452 = vector.shape_cast %1449 : vector<4x64xf32> to vector<1x4x64xf32>
    tpu.vector_store %arg14[%c0_1723, %c0_1724, %c0_1725], %1452 {strides = array<i32>} : memref<4x4x64xf32, #tpu.memory_space<vmem>>, vector<1x4x64xf32>,
    %c1_1726 = arith.constant 1 : index
    %c0_1727 = arith.constant 0 : index
    %c0_1728 = arith.constant 0 : index
    %1453 = vector.load %arg13[%c1_1726, %c0_1727, %c0_1728] : memref<4x4x512xf32, #tpu.memory_space<vmem>>, vector<1x4x512xf32>
    %1454 = vector.shape_cast %1453 : vector<1x4x512xf32> to vector<4x512xf32>
    %1455 = arith.truncf %1454 : vector<4x512xf32> to vector<4x512xbf16>
    %cst_1729 = arith.constant dense<0.000000e+00> : vector<4x64xf32>
    %1456 = tpu.matmul %1455, %1440, %cst_1729 {dimension_numbers = #tpu.dot_dimension_numbers<[1], [0], [0], [1], [0, 0, 1, 1], [], []>} : vector<4x512xbf16>, vector<512x64xbf16>, vector<4x64xf32> -> vector<4x64xf32>
    %1457 = vector.broadcast %1441 : vector<1x64xf32> to vector<4x64xf32>
    %1458 = arith.addf %1456, %1457 : vector<4x64xf32>
    %cst_1730 = arith.constant 0.000000e+00 : f32
    %1459 = vector.broadcast %cst_1730 : f32 to vector<4x64xf32>
    %1460 = arith.maximumf %1458, %1459 : vector<4x64xf32>
    %c1_1731 = arith.constant 1 : index
    %c0_1732 = arith.constant 0 : index
    %c0_1733 = arith.constant 0 : index
    %1461 = vector.load %arg14[%c1_1731, %c0_1732, %c0_1733] : memref<4x4x64xf32, #tpu.memory_space<vmem>>, vector<1x4x64xf32>
    %1462 = vector.shape_cast %1461 : vector<1x4x64xf32> to vector<4x64xf32>
    %1463 = vector.shape_cast %1460 : vector<4x64xf32> to vector<1x4x64xf32>
    tpu.vector_store %arg14[%c1_1731, %c0_1732, %c0_1733], %1463 {strides = array<i32>} : memref<4x4x64xf32, #tpu.memory_space<vmem>>, vector<1x4x64xf32>,
    %c2_1734 = arith.constant 2 : index
    %c0_1735 = arith.constant 0 : index
    %c0_1736 = arith.constant 0 : index
    %1464 = vector.load %arg13[%c2_1734, %c0_1735, %c0_1736] : memref<4x4x512xf32, #tpu.memory_space<vmem>>, vector<1x4x512xf32>
    %1465 = vector.shape_cast %1464 : vector<1x4x512xf32> to vector<4x512xf32>
    %1466 = arith.truncf %1465 : vector<4x512xf32> to vector<4x512xbf16>
    %cst_1737 = arith.constant dense<0.000000e+00> : vector<4x64xf32>
    %1467 = tpu.matmul %1466, %1440, %cst_1737 {dimension_numbers = #tpu.dot_dimension_numbers<[1], [0], [0], [1], [0, 0, 1, 1], [], []>} : vector<4x512xbf16>, vector<512x64xbf16>, vector<4x64xf32> -> vector<4x64xf32>
    %1468 = vector.broadcast %1441 : vector<1x64xf32> to vector<4x64xf32>
    %1469 = arith.addf %1467, %1468 : vector<4x64xf32>
    %cst_1738 = arith.constant 0.000000e+00 : f32
    %1470 = vector.broadcast %cst_1738 : f32 to vector<4x64xf32>
    %1471 = arith.maximumf %1469, %1470 : vector<4x64xf32>
    %c2_1739 = arith.constant 2 : index
    %c0_1740 = arith.constant 0 : index
    %c0_1741 = arith.constant 0 : index
    %1472 = vector.load %arg14[%c2_1739, %c0_1740, %c0_1741] : memref<4x4x64xf32, #tpu.memory_space<vmem>>, vector<1x4x64xf32>
    %1473 = vector.shape_cast %1472 : vector<1x4x64xf32> to vector<4x64xf32>
    %1474 = vector.shape_cast %1471 : vector<4x64xf32> to vector<1x4x64xf32>
    tpu.vector_store %arg14[%c2_1739, %c0_1740, %c0_1741], %1474 {strides = array<i32>} : memref<4x4x64xf32, #tpu.memory_space<vmem>>, vector<1x4x64xf32>,
    %c3_1742 = arith.constant 3 : index
    %c0_1743 = arith.constant 0 : index
    %c0_1744 = arith.constant 0 : index
    %1475 = vector.load %arg13[%c3_1742, %c0_1743, %c0_1744] : memref<4x4x512xf32, #tpu.memory_space<vmem>>, vector<1x4x512xf32>
    %1476 = vector.shape_cast %1475 : vector<1x4x512xf32> to vector<4x512xf32>
    %1477 = arith.truncf %1476 : vector<4x512xf32> to vector<4x512xbf16>
    %cst_1745 = arith.constant dense<0.000000e+00> : vector<4x64xf32>
    %1478 = tpu.matmul %1477, %1440, %cst_1745 {dimension_numbers = #tpu.dot_dimension_numbers<[1], [0], [0], [1], [0, 0, 1, 1], [], []>} : vector<4x512xbf16>, vector<512x64xbf16>, vector<4x64xf32> -> vector<4x64xf32>
    %1479 = vector.broadcast %1441 : vector<1x64xf32> to vector<4x64xf32>
    %1480 = arith.addf %1478, %1479 : vector<4x64xf32>
    %cst_1746 = arith.constant 0.000000e+00 : f32
    %1481 = vector.broadcast %cst_1746 : f32 to vector<4x64xf32>
    %1482 = arith.maximumf %1480, %1481 : vector<4x64xf32>
    %c3_1747 = arith.constant 3 : index
    %c0_1748 = arith.constant 0 : index
    %c0_1749 = arith.constant 0 : index
    %1483 = vector.load %arg14[%c3_1747, %c0_1748, %c0_1749] : memref<4x4x64xf32, #tpu.memory_space<vmem>>, vector<1x4x64xf32>
    %1484 = vector.shape_cast %1483 : vector<1x4x64xf32> to vector<4x64xf32>
    %1485 = vector.shape_cast %1482 : vector<4x64xf32> to vector<1x4x64xf32>
    tpu.vector_store %arg14[%c3_1747, %c0_1748, %c0_1749], %1485 {strides = array<i32>} : memref<4x4x64xf32, #tpu.memory_space<vmem>>, vector<1x4x64xf32>,
    %c0_1750 = arith.constant 0 : index
    %c0_1751 = arith.constant 0 : index
    %c0_1752 = arith.constant 0 : index
    %1486 = vector.load %arg14[%c0_1750, %c0_1751, %c0_1752] : memref<4x4x64xf32, #tpu.memory_space<vmem>>, vector<2x2x64xf32>
    %c0_1753 = arith.constant 0 : index
    %c0_1754 = arith.constant 0 : index
    %c0_1755 = arith.constant 0 : index
    %1487 = vector.load %arg15[%c0_1753, %c0_1754, %c0_1755] : memref<2x2x576xf32, #tpu.memory_space<vmem>>, vector<2x2x64xf32>
    tpu.vector_store %arg15[%c0_1753, %c0_1754, %c0_1755], %1486 {strides = array<i32>} : memref<2x2x576xf32, #tpu.memory_space<vmem>>, vector<2x2x64xf32>,
    %c1_1756 = arith.constant 1 : index
    %c0_1757 = arith.constant 0 : index
    %c0_1758 = arith.constant 0 : index
    %1488 = vector.load %arg14[%c1_1756, %c0_1757, %c0_1758] : memref<4x4x64xf32, #tpu.memory_space<vmem>>, vector<2x2x64xf32>
    %c0_1759 = arith.constant 0 : index
    %c0_1760 = arith.constant 0 : index
    %c64_1761 = arith.constant 64 : index
    %1489 = vector.load %arg15[%c0_1759, %c0_1760, %c64_1761] : memref<2x2x576xf32, #tpu.memory_space<vmem>>, vector<2x2x64xf32>
    tpu.vector_store %arg15[%c0_1759, %c0_1760, %c64_1761], %1488 {strides = array<i32>} : memref<2x2x576xf32, #tpu.memory_space<vmem>>, vector<2x2x64xf32>,
    %c2_1762 = arith.constant 2 : index
    %c0_1763 = arith.constant 0 : index
    %c0_1764 = arith.constant 0 : index
    %1490 = vector.load %arg14[%c2_1762, %c0_1763, %c0_1764] : memref<4x4x64xf32, #tpu.memory_space<vmem>>, vector<2x2x64xf32>
    %c0_1765 = arith.constant 0 : index
    %c0_1766 = arith.constant 0 : index
    %c128_1767 = arith.constant 128 : index
    %1491 = vector.load %arg15[%c0_1765, %c0_1766, %c128_1767] : memref<2x2x576xf32, #tpu.memory_space<vmem>>, vector<2x2x64xf32>
    tpu.vector_store %arg15[%c0_1765, %c0_1766, %c128_1767], %1490 {strides = array<i32>} : memref<2x2x576xf32, #tpu.memory_space<vmem>>, vector<2x2x64xf32>,
    %c0_1768 = arith.constant 0 : index
    %c1_1769 = arith.constant 1 : index
    %c0_1770 = arith.constant 0 : index
    %1492 = vector.load %arg14[%c0_1768, %c1_1769, %c0_1770] : memref<4x4x64xf32, #tpu.memory_space<vmem>>, vector<2x2x64xf32>
    %c0_1771 = arith.constant 0 : index
    %c0_1772 = arith.constant 0 : index
    %c192_1773 = arith.constant 192 : index
    %1493 = vector.load %arg15[%c0_1771, %c0_1772, %c192_1773] : memref<2x2x576xf32, #tpu.memory_space<vmem>>, vector<2x2x64xf32>
    tpu.vector_store %arg15[%c0_1771, %c0_1772, %c192_1773], %1492 {strides = array<i32>} : memref<2x2x576xf32, #tpu.memory_space<vmem>>, vector<2x2x64xf32>,
    %c1_1774 = arith.constant 1 : index
    %c1_1775 = arith.constant 1 : index
    %c0_1776 = arith.constant 0 : index
    %1494 = vector.load %arg14[%c1_1774, %c1_1775, %c0_1776] : memref<4x4x64xf32, #tpu.memory_space<vmem>>, vector<2x2x64xf32>
    %c0_1777 = arith.constant 0 : index
    %c0_1778 = arith.constant 0 : index
    %c256_1779 = arith.constant 256 : index
    %1495 = vector.load %arg15[%c0_1777, %c0_1778, %c256_1779] : memref<2x2x576xf32, #tpu.memory_space<vmem>>, vector<2x2x64xf32>
    tpu.vector_store %arg15[%c0_1777, %c0_1778, %c256_1779], %1494 {strides = array<i32>} : memref<2x2x576xf32, #tpu.memory_space<vmem>>, vector<2x2x64xf32>,
    %c2_1780 = arith.constant 2 : index
    %c1_1781 = arith.constant 1 : index
    %c0_1782 = arith.constant 0 : index
    %1496 = vector.load %arg14[%c2_1780, %c1_1781, %c0_1782] : memref<4x4x64xf32, #tpu.memory_space<vmem>>, vector<2x2x64xf32>
    %c0_1783 = arith.constant 0 : index
    %c0_1784 = arith.constant 0 : index
    %c320_1785 = arith.constant 320 : index
    %1497 = vector.load %arg15[%c0_1783, %c0_1784, %c320_1785] : memref<2x2x576xf32, #tpu.memory_space<vmem>>, vector<2x2x64xf32>
    tpu.vector_store %arg15[%c0_1783, %c0_1784, %c320_1785], %1496 {strides = array<i32>} : memref<2x2x576xf32, #tpu.memory_space<vmem>>, vector<2x2x64xf32>,
    %c0_1786 = arith.constant 0 : index
    %c2_1787 = arith.constant 2 : index
    %c0_1788 = arith.constant 0 : index
    %1498 = vector.load %arg14[%c0_1786, %c2_1787, %c0_1788] : memref<4x4x64xf32, #tpu.memory_space<vmem>>, vector<2x2x64xf32>
    %c0_1789 = arith.constant 0 : index
    %c0_1790 = arith.constant 0 : index
    %c384_1791 = arith.constant 384 : index
    %1499 = vector.load %arg15[%c0_1789, %c0_1790, %c384_1791] : memref<2x2x576xf32, #tpu.memory_space<vmem>>, vector<2x2x64xf32>
    tpu.vector_store %arg15[%c0_1789, %c0_1790, %c384_1791], %1498 {strides = array<i32>} : memref<2x2x576xf32, #tpu.memory_space<vmem>>, vector<2x2x64xf32>,
    %c1_1792 = arith.constant 1 : index
    %c2_1793 = arith.constant 2 : index
    %c0_1794 = arith.constant 0 : index
    %1500 = vector.load %arg14[%c1_1792, %c2_1793, %c0_1794] : memref<4x4x64xf32, #tpu.memory_space<vmem>>, vector<2x2x64xf32>
    %c0_1795 = arith.constant 0 : index
    %c0_1796 = arith.constant 0 : index
    %c448_1797 = arith.constant 448 : index
    %1501 = vector.load %arg15[%c0_1795, %c0_1796, %c448_1797] : memref<2x2x576xf32, #tpu.memory_space<vmem>>, vector<2x2x64xf32>
    tpu.vector_store %arg15[%c0_1795, %c0_1796, %c448_1797], %1500 {strides = array<i32>} : memref<2x2x576xf32, #tpu.memory_space<vmem>>, vector<2x2x64xf32>,
    %c2_1798 = arith.constant 2 : index
    %c2_1799 = arith.constant 2 : index
    %c0_1800 = arith.constant 0 : index
    %1502 = vector.load %arg14[%c2_1798, %c2_1799, %c0_1800] : memref<4x4x64xf32, #tpu.memory_space<vmem>>, vector<2x2x64xf32>
    %c0_1801 = arith.constant 0 : index
    %c0_1802 = arith.constant 0 : index
    %c512 = arith.constant 512 : index
    %1503 = vector.load %arg15[%c0_1801, %c0_1802, %c512] : memref<2x2x576xf32, #tpu.memory_space<vmem>>, vector<2x2x64xf32>
    tpu.vector_store %arg15[%c0_1801, %c0_1802, %c512], %1502 {strides = array<i32>} : memref<2x2x576xf32, #tpu.memory_space<vmem>>, vector<2x2x64xf32>,
    %c0_1803 = arith.constant 0 : index
    %c0_1804 = arith.constant 0 : index
    %1504 = vector.load %arg6[%c0_1803, %c0_1804] : memref<576x32xbf16, #tpu.memory_space<vmem>>, vector<576x32xbf16>
    %c0_1805 = arith.constant 0 : index
    %c0_1806 = arith.constant 0 : index
    %1505 = vector.load %arg7[%c0_1805, %c0_1806] : memref<1x32xf32, #tpu.memory_space<vmem>>, vector<1x32xf32>
    %c0_1807 = arith.constant 0 : index
    %c0_1808 = arith.constant 0 : index
    %c0_1809 = arith.constant 0 : index
    %1506 = vector.load %arg15[%c0_1807, %c0_1808, %c0_1809] : memref<2x2x576xf32, #tpu.memory_space<vmem>>, vector<1x2x576xf32>
    %1507 = vector.shape_cast %1506 : vector<1x2x576xf32> to vector<2x576xf32>
    %1508 = arith.truncf %1507 : vector<2x576xf32> to vector<2x576xbf16>
    %cst_1810 = arith.constant dense<0.000000e+00> : vector<2x32xf32>
    %1509 = tpu.matmul %1508, %1504, %cst_1810 {dimension_numbers = #tpu.dot_dimension_numbers<[1], [0], [0], [1], [0, 0, 1, 1], [], []>} : vector<2x576xbf16>, vector<576x32xbf16>, vector<2x32xf32> -> vector<2x32xf32>
    %1510 = vector.broadcast %1505 : vector<1x32xf32> to vector<2x32xf32>
    %1511 = arith.addf %1509, %1510 : vector<2x32xf32>
    %cst_1811 = arith.constant 0.000000e+00 : f32
    %1512 = vector.broadcast %cst_1811 : f32 to vector<2x32xf32>
    %1513 = arith.maximumf %1511, %1512 : vector<2x32xf32>
    %c0_1812 = arith.constant 0 : index
    %c0_1813 = arith.constant 0 : index
    %c0_1814 = arith.constant 0 : index
    %1514 = vector.load %arg16[%c0_1812, %c0_1813, %c0_1814] : memref<2x2x32xf32, #tpu.memory_space<vmem>>, vector<1x2x32xf32>
    %1515 = vector.shape_cast %1514 : vector<1x2x32xf32> to vector<2x32xf32>
    %1516 = vector.shape_cast %1513 : vector<2x32xf32> to vector<1x2x32xf32>
    tpu.vector_store %arg16[%c0_1812, %c0_1813, %c0_1814], %1516 {strides = array<i32>} : memref<2x2x32xf32, #tpu.memory_space<vmem>>, vector<1x2x32xf32>,
    %c1_1815 = arith.constant 1 : index
    %c0_1816 = arith.constant 0 : index
    %c0_1817 = arith.constant 0 : index
    %1517 = vector.load %arg15[%c1_1815, %c0_1816, %c0_1817] : memref<2x2x576xf32, #tpu.memory_space<vmem>>, vector<1x2x576xf32>
    %1518 = vector.shape_cast %1517 : vector<1x2x576xf32> to vector<2x576xf32>
    %1519 = arith.truncf %1518 : vector<2x576xf32> to vector<2x576xbf16>
    %cst_1818 = arith.constant dense<0.000000e+00> : vector<2x32xf32>
    %1520 = tpu.matmul %1519, %1504, %cst_1818 {dimension_numbers = #tpu.dot_dimension_numbers<[1], [0], [0], [1], [0, 0, 1, 1], [], []>} : vector<2x576xbf16>, vector<576x32xbf16>, vector<2x32xf32> -> vector<2x32xf32>
    %1521 = vector.broadcast %1505 : vector<1x32xf32> to vector<2x32xf32>
    %1522 = arith.addf %1520, %1521 : vector<2x32xf32>
    %cst_1819 = arith.constant 0.000000e+00 : f32
    %1523 = vector.broadcast %cst_1819 : f32 to vector<2x32xf32>
    %1524 = arith.maximumf %1522, %1523 : vector<2x32xf32>
    %c1_1820 = arith.constant 1 : index
    %c0_1821 = arith.constant 0 : index
    %c0_1822 = arith.constant 0 : index
    %1525 = vector.load %arg16[%c1_1820, %c0_1821, %c0_1822] : memref<2x2x32xf32, #tpu.memory_space<vmem>>, vector<1x2x32xf32>
    %1526 = vector.shape_cast %1525 : vector<1x2x32xf32> to vector<2x32xf32>
    %1527 = vector.shape_cast %1524 : vector<2x32xf32> to vector<1x2x32xf32>
    tpu.vector_store %arg16[%c1_1820, %c0_1821, %c0_1822], %1527 {strides = array<i32>} : memref<2x2x32xf32, #tpu.memory_space<vmem>>, vector<1x2x32xf32>,
    %c0_1823 = arith.constant 0 : index
    %c0_1824 = arith.constant 0 : index
    %1528 = vector.load %arg9[%c0_1823, %c0_1824] : memref<1x32xf32, #tpu.memory_space<vmem>>, vector<1x32xf32>
    %c0_1825 = arith.constant 0 : index
    %c0_1826 = arith.constant 0 : index
    %c0_1827 = arith.constant 0 : index
    %1529 = vector.load %arg16[%c0_1825, %c0_1826, %c0_1827] : memref<2x2x32xf32, #tpu.memory_space<vmem>>, vector<1x1x32xf32>
    %1530 = vector.shape_cast %1529 : vector<1x1x32xf32> to vector<1x32xf32>
    %1531 = arith.truncf %1530 : vector<1x32xf32> to vector<1x32xbf16>
    %c0_1828 = arith.constant 0 : index
    %c0_1829 = arith.constant 0 : index
    %c0_1830 = arith.constant 0 : index
    %c0_1831 = arith.constant 0 : index
    %1532 = vector.load %arg8[%c0_1828, %c0_1829, %c0_1830, %c0_1831] : memref<2x2x32x32xbf16, #tpu.memory_space<vmem>>, vector<1x1x32x32xbf16>
    %1533 = vector.shape_cast %1532 : vector<1x1x32x32xbf16> to vector<32x32xbf16>
    %cst_1832 = arith.constant dense<0.000000e+00> : vector<1x32xf32>
    %1534 = tpu.matmul %1531, %1533, %cst_1832 {dimension_numbers = #tpu.dot_dimension_numbers<[1], [0], [0], [1], [0, 0, 1, 1], [], []>} : vector<1x32xbf16>, vector<32x32xbf16>, vector<1x32xf32> -> vector<1x32xf32>
    %1535 = arith.addf %1528, %1534 : vector<1x32xf32>
    %c0_1833 = arith.constant 0 : index
    %c1_1834 = arith.constant 1 : index
    %c0_1835 = arith.constant 0 : index
    %1536 = vector.load %arg16[%c0_1833, %c1_1834, %c0_1835] : memref<2x2x32xf32, #tpu.memory_space<vmem>>, vector<1x1x32xf32>
    %1537 = vector.shape_cast %1536 : vector<1x1x32xf32> to vector<1x32xf32>
    %1538 = arith.truncf %1537 : vector<1x32xf32> to vector<1x32xbf16>
    %c0_1836 = arith.constant 0 : index
    %c1_1837 = arith.constant 1 : index
    %c0_1838 = arith.constant 0 : index
    %c0_1839 = arith.constant 0 : index
    %1539 = vector.load %arg8[%c0_1836, %c1_1837, %c0_1838, %c0_1839] : memref<2x2x32x32xbf16, #tpu.memory_space<vmem>>, vector<1x1x32x32xbf16>
    %1540 = vector.shape_cast %1539 : vector<1x1x32x32xbf16> to vector<32x32xbf16>
    %cst_1840 = arith.constant dense<0.000000e+00> : vector<1x32xf32>
    %1541 = tpu.matmul %1538, %1540, %cst_1840 {dimension_numbers = #tpu.dot_dimension_numbers<[1], [0], [0], [1], [0, 0, 1, 1], [], []>} : vector<1x32xbf16>, vector<32x32xbf16>, vector<1x32xf32> -> vector<1x32xf32>
    %1542 = arith.addf %1535, %1541 : vector<1x32xf32>
    %c1_1841 = arith.constant 1 : index
    %c0_1842 = arith.constant 0 : index
    %c0_1843 = arith.constant 0 : index
    %1543 = vector.load %arg16[%c1_1841, %c0_1842, %c0_1843] : memref<2x2x32xf32, #tpu.memory_space<vmem>>, vector<1x1x32xf32>
    %1544 = vector.shape_cast %1543 : vector<1x1x32xf32> to vector<1x32xf32>
    %1545 = arith.truncf %1544 : vector<1x32xf32> to vector<1x32xbf16>
    %c1_1844 = arith.constant 1 : index
    %c0_1845 = arith.constant 0 : index
    %c0_1846 = arith.constant 0 : index
    %c0_1847 = arith.constant 0 : index
    %1546 = vector.load %arg8[%c1_1844, %c0_1845, %c0_1846, %c0_1847] : memref<2x2x32x32xbf16, #tpu.memory_space<vmem>>, vector<1x1x32x32xbf16>
    %1547 = vector.shape_cast %1546 : vector<1x1x32x32xbf16> to vector<32x32xbf16>
    %cst_1848 = arith.constant dense<0.000000e+00> : vector<1x32xf32>
    %1548 = tpu.matmul %1545, %1547, %cst_1848 {dimension_numbers = #tpu.dot_dimension_numbers<[1], [0], [0], [1], [0, 0, 1, 1], [], []>} : vector<1x32xbf16>, vector<32x32xbf16>, vector<1x32xf32> -> vector<1x32xf32>
    %1549 = arith.addf %1542, %1548 : vector<1x32xf32>
    %c1_1849 = arith.constant 1 : index
    %c1_1850 = arith.constant 1 : index
    %c0_1851 = arith.constant 0 : index
    %1550 = vector.load %arg16[%c1_1849, %c1_1850, %c0_1851] : memref<2x2x32xf32, #tpu.memory_space<vmem>>, vector<1x1x32xf32>
    %1551 = vector.shape_cast %1550 : vector<1x1x32xf32> to vector<1x32xf32>
    %1552 = arith.truncf %1551 : vector<1x32xf32> to vector<1x32xbf16>
    %c1_1852 = arith.constant 1 : index
    %c1_1853 = arith.constant 1 : index
    %c0_1854 = arith.constant 0 : index
    %c0_1855 = arith.constant 0 : index
    %1553 = vector.load %arg8[%c1_1852, %c1_1853, %c0_1854, %c0_1855] : memref<2x2x32x32xbf16, #tpu.memory_space<vmem>>, vector<1x1x32x32xbf16>
    %1554 = vector.shape_cast %1553 : vector<1x1x32x32xbf16> to vector<32x32xbf16>
    %cst_1856 = arith.constant dense<0.000000e+00> : vector<1x32xf32>
    %1555 = tpu.matmul %1552, %1554, %cst_1856 {dimension_numbers = #tpu.dot_dimension_numbers<[1], [0], [0], [1], [0, 0, 1, 1], [], []>} : vector<1x32xbf16>, vector<32x32xbf16>, vector<1x32xf32> -> vector<1x32xf32>
    %1556 = arith.addf %1549, %1555 : vector<1x32xf32>
    %cst_1857 = arith.constant 0.000000e+00 : f32
    %1557 = vector.broadcast %cst_1857 : f32 to vector<1x32xf32>
    %1558 = arith.maximumf %1556, %1557 : vector<1x32xf32>
    %c0_1858 = arith.constant 0 : index
    %c0_1859 = arith.constant 0 : index
    %c0_1860 = arith.constant 0 : index
    %1559 = vector.load %arg10[%c0_1858, %c0_1859, %c0_1860] : memref<1x1x32xf32, #tpu.memory_space<vmem>>, vector<1x1x32xf32>
    %1560 = vector.shape_cast %1559 : vector<1x1x32xf32> to vector<1x32xf32>
    %1561 = vector.shape_cast %1558 : vector<1x32xf32> to vector<1x1x32xf32>
    tpu.vector_store %arg10[%c0_1858, %c0_1859, %c0_1860], %1561 {strides = array<i32>} : memref<1x1x32xf32, #tpu.memory_space<vmem>>, vector<1x1x32xf32>,
    return
  }
  func.func @transform_0(%arg0: i32) -> (i32, i32, i32, i32, i32) {
    %c0_i32 = arith.constant 0 : i32
    %c0_i32_0 = arith.constant 0 : i32
    %c0_i32_1 = arith.constant 0 : i32
    %c0_i32_2 = arith.constant 0 : i32
    %c0_i32_3 = arith.constant 0 : i32
    return %arg0, %c0_i32, %c0_i32_0, %c0_i32_1, %c0_i32_2 : i32, i32, i32, i32, i32
  }
  func.func @transform_1(%arg0: i32) -> (i32, i32) {
    %c0_i32 = arith.constant 0 : i32
    %c0_i32_0 = arith.constant 0 : i32
    %c0_i32_1 = arith.constant 0 : i32
    return %c0_i32, %c0_i32_0 : i32, i32
  }
  func.func @transform_2(%arg0: i32) -> (i32, i32) {
    %c0_i32 = arith.constant 0 : i32
    %c0_i32_0 = arith.constant 0 : i32
    %c0_i32_1 = arith.constant 0 : i32
    return %c0_i32, %c0_i32_0 : i32, i32
  }
  func.func @transform_3(%arg0: i32) -> (i32, i32) {
    %c0_i32 = arith.constant 0 : i32
    %c0_i32_0 = arith.constant 0 : i32
    %c0_i32_1 = arith.constant 0 : i32
    return %c0_i32, %c0_i32_0 : i32, i32
  }
  func.func @transform_4(%arg0: i32) -> (i32, i32) {
    %c0_i32 = arith.constant 0 : i32
    %c0_i32_0 = arith.constant 0 : i32
    %c0_i32_1 = arith.constant 0 : i32
    return %c0_i32, %c0_i32_0 : i32, i32
  }
  func.func @transform_5(%arg0: i32) -> (i32, i32) {
    %c0_i32 = arith.constant 0 : i32
    %c0_i32_0 = arith.constant 0 : i32
    %c0_i32_1 = arith.constant 0 : i32
    return %c0_i32, %c0_i32_0 : i32, i32
  }
  func.func @transform_6(%arg0: i32) -> (i32, i32) {
    %c0_i32 = arith.constant 0 : i32
    %c0_i32_0 = arith.constant 0 : i32
    %c0_i32_1 = arith.constant 0 : i32
    return %c0_i32, %c0_i32_0 : i32, i32
  }
  func.func @transform_7(%arg0: i32) -> (i32, i32, i32, i32) {
    %c0_i32 = arith.constant 0 : i32
    %c0_i32_0 = arith.constant 0 : i32
    %c0_i32_1 = arith.constant 0 : i32
    %c0_i32_2 = arith.constant 0 : i32
    %c0_i32_3 = arith.constant 0 : i32
    return %c0_i32, %c0_i32_0, %c0_i32_1, %c0_i32_2 : i32, i32, i32, i32
  }
  func.func @transform_8(%arg0: i32) -> (i32, i32) {
    %c0_i32 = arith.constant 0 : i32
    %c0_i32_0 = arith.constant 0 : i32
    %c0_i32_1 = arith.constant 0 : i32
    return %c0_i32, %c0_i32_0 : i32, i32
  }
  func.func @transform_9(%arg0: i32) -> (i32, i32, i32) {
    %c0_i32 = arith.constant 0 : i32
    %c0_i32_0 = arith.constant 0 : i32
    %c0_i32_1 = arith.constant 0 : i32
    return %arg0, %c0_i32, %c0_i32_0 : i32, i32, i32
  }
}

</mosaic_0001>

<llo_original>
// kernel: deepmind_enc_forward.1
$region0: #{deepmind_enc_forward.1}
  #allocation0 [shape = 'u32[]', space=smem, size = 0x4, offset = 0x4, fixed_abs, tag = 'smem constant byte address 0x4 - core index']
  #allocation1 [shape = 'u32[72,128]{1,0:T(1,128)}', space=vmem, size = 0x9000, scoped, tag = 'internal scratch']
  #allocation2 [shape = 'f32[10,10,256]{2,1,0:T(8,128)}', space=vmem, size = 0x28000, scoped, tag = 'scratch operand']
  #allocation3 [shape = 'f32[10,10,32]{2,1,0:T(8,128)}', space=vmem, size = 0x14000, scoped, tag = 'scratch operand']
  #allocation4 [shape = 'f32[4,4,512]{2,1,0:T(4,128)}', space=vmem, size = 0x8000, scoped, tag = 'scratch operand']
  #allocation5 [shape = 'f32[4,4,64]{2,1,0:T(4,128)}', space=vmem, size = 0x2000, scoped, tag = 'scratch operand']
  #allocation6 [shape = 'f32[2,2,576]{2,1,0:T(2,128)}', space=vmem, size = 0x2800, scoped, tag = 'scratch operand']
  #allocation7 [shape = 'f32[2,2,32]{2,1,0:T(2,128)}', space=vmem, size = 0x800, scoped, tag = 'scratch operand']
  %s0 = inlined_call_operand.vmem [shape: f32[2,11,4,11,16], index: 0, kind: input, shape index: {}]
  %s1 = inlined_call_operand.vmem [shape: bf16[256,32], index: 1, kind: input, shape index: {}]
  %s2 = inlined_call_operand.vmem [shape: f32[1,32], index: 2, kind: input, shape index: {}]
  %s3 = inlined_call_operand.vmem [shape: bf16[512,64], index: 3, kind: input, shape index: {}]
  %s4 = inlined_call_operand.vmem [shape: f32[1,64], index: 4, kind: input, shape index: {}]
  %s5 = inlined_call_operand.vmem [shape: bf16[576,32], index: 5, kind: input, shape index: {}]
  %s6 = inlined_call_operand.vmem [shape: f32[1,32], index: 6, kind: input, shape index: {}]
  %s7 = inlined_call_operand.vmem [shape: bf16[2,2,32,32], index: 7, kind: input, shape index: {}]
  %s8 = inlined_call_operand.vmem [shape: f32[1,32], index: 8, kind: input, shape index: {}]
  %s9 = inlined_call_operand.hbm [shape: f32[2,1,32], index: 9, kind: output, shape index: {}]
  %s10 = sld [smem:[#allocation0]]
  $region69: #{deepmind_enc_forward.1} parent=0
    _
  %s12 = ssub.s32 1, %s10
  %s13 = scalar_select 0, %s12, %s10
  $region1: #{deepmind_enc_forward.1} parent=0
    #allocation8 [shape = 'u8[1024]{0}', space=vmem, size = 0x400, scoped, tag = 'output window, operand 0']
    #allocation9 [shape = 's32[2]{0}', space=sflag, size = 0x8, scoped, tag = 'scoped memory for deepmind_enc_forward.1']
    %14 = vsyncpa [#allocation9], 0
    %s15 = scalar_lea.sflag [#allocation9], 1
    %16 = vsyncpa %s15, 0
    loop: start=0, step=1, limit=4
    $region2: #{deepmind_enc_forward.1} parent=1 // loop_pre_header
      _
    $region3: #{deepmind_enc_forward.1} parent=1 // loop_header
      %s18 = sphi 0, %s22
      %p19 = scmp.ge.s32.totalorder %s18, 4
      %s28 = sphi 0, %s30
      %s31 = sphi 0, %s28
      %s32 = sphi 0, %s31
      %s48 = sphi 0, %s32
      %s52 = sphi 0, %s52
      %s54 = sphi 0, %s52
      %s55 = sphi 0, %s54
      %s69 = sphi 0, %s55
      %s73 = sphi 0, %s73
      %s75 = sphi 0, %s73
      %s76 = sphi 0, %s75
      %s90 = sphi 0, %s76
      %s94 = sphi 0, %s94
      %s96 = sphi 0, %s94
      %s97 = sphi 0, %s96
      %s111 = sphi 0, %s97
      %s115 = sphi 0, %s115
      %s117 = sphi 0, %s115
      %s118 = sphi 0, %s117
      %s132 = sphi 0, %s118
      %s136 = sphi 0, %s136
      %s138 = sphi 0, %s136
      %s139 = sphi 0, %s138
      %s153 = sphi 0, %s139
      %s157 = sphi 0, %s157
      %s159 = sphi 0, %s157
      %s160 = sphi 0, %s159
      %s174 = sphi 0, %s160
      %s178 = sphi 0, %s178
      %s180 = sphi 0, %s178
      %s181 = sphi 0, %s180
      %s195 = sphi 0, %s181
      %s199 = sphi 0, %s199
      %s201 = sphi 0, %s199
      %s202 = sphi 0, %s201
      %s216 = sphi 0, %s202
      %s222 = sphi 0, %s224
      %s225 = sphi 0, %s222
      %s226 = sphi 0, %s225
      %s242 = sphi 0, %s226
    $region4: #{deepmind_enc_forward.1} parent=1 // loop_header_branch
      %21 = sbr.rel (%p19) target = $region8
    $region5: #{deepmind_enc_forward.1} parent=1 // loop_body
      %s23 = ssub.s32 %s18, 1
      %s24 = ssub.s32 %s18, 2
      %s25 = sadd.s32 %s18, 1
      %s26 = ssub.s32 %s18, %s25
      %p27 = scmp.eq.s32.totalorder %s26, 0
      %s29 = sadd.s32 %s28, 1
      %s30 = scalar_select %p27, %s28, %s29
      %p33 = pneg %p27
      %p34 = scmp.eq.s32.totalorder %s18, 1
      %p35 = por %p33, %p34
      %p36 = scmp.ne.s32.totalorder %s28, %s31
      %p37 = scmp.eq.s32.totalorder %s18, 0
      %p38 = por %p36, %p37
      %p39 = scmp.ne.s32.totalorder %s28, %s31
      %p40 = scmp.eq.s32.totalorder %s23, 1
      %p41 = por %p39, %p40
      %p42 = scmp.ne.s32.totalorder %s31, %s32
      %p43 = scmp.eq.s32.totalorder %s23, 0
      %p44 = por %p42, %p43
      %p45 = scmp.ne.s32.totalorder %s31, %s32
      %p46 = scmp.eq.s32.totalorder %s24, 1
      %p47 = por %p45, %p46
      %p49 = scmp.ne.s32.totalorder %s32, %s48
      %p50 = scmp.eq.s32.totalorder %s24, 0
      %p51 = por %p49, %p50
      %s53 = sadd.s32 %s52, 1
      %p56 = scmp.eq.s32.totalorder %s18, 1
      %p57 = scmp.ne.s32.totalorder %s52, %s54
      %p58 = scmp.eq.s32.totalorder %s18, 0
      %p59 = por %p57, %p58
      %p60 = scmp.ne.s32.totalorder %s52, %s54
      %p61 = scmp.eq.s32.totalorder %s23, 1
      %p62 = por %p60, %p61
      %p63 = scmp.ne.s32.totalorder %s54, %s55
      %p64 = scmp.eq.s32.totalorder %s23, 0
      %p65 = por %p63, %p64
      %p66 = scmp.ne.s32.totalorder %s54, %s55
      %p67 = scmp.eq.s32.totalorder %s24, 1
      %p68 = por %p66, %p67
      %p70 = scmp.ne.s32.totalorder %s55, %s69
      %p71 = scmp.eq.s32.totalorder %s24, 0
      %p72 = por %p70, %p71
      %s74 = sadd.s32 %s73, 1
      %p77 = scmp.eq.s32.totalorder %s18, 1
      %p78 = scmp.ne.s32.totalorder %s73, %s75
      %p79 = scmp.eq.s32.totalorder %s18, 0
      %p80 = por %p78, %p79
      %p81 = scmp.ne.s32.totalorder %s73, %s75
      %p82 = scmp.eq.s32.totalorder %s23, 1
      %p83 = por %p81, %p82
      %p84 = scmp.ne.s32.totalorder %s75, %s76
      %p85 = scmp.eq.s32.totalorder %s23, 0
      %p86 = por %p84, %p85
      %p87 = scmp.ne.s32.totalorder %s75, %s76
      %p88 = scmp.eq.s32.totalorder %s24, 1
      %p89 = por %p87, %p88
      %p91 = scmp.ne.s32.totalorder %s76, %s90
      %p92 = scmp.eq.s32.totalorder %s24, 0
      %p93 = por %p91, %p92
      %s95 = sadd.s32 %s94, 1
      %p98 = scmp.eq.s32.totalorder %s18, 1
      %p99 = scmp.ne.s32.totalorder %s94, %s96
      %p100 = scmp.eq.s32.totalorder %s18, 0
      %p101 = por %p99, %p100
      %p102 = scmp.ne.s32.totalorder %s94, %s96
      %p103 = scmp.eq.s32.totalorder %s23, 1
      %p104 = por %p102, %p103
      %p105 = scmp.ne.s32.totalorder %s96, %s97
      %p106 = scmp.eq.s32.totalorder %s23, 0
      %p107 = por %p105, %p106
      %p108 = scmp.ne.s32.totalorder %s96, %s97
      %p109 = scmp.eq.s32.totalorder %s24, 1
      %p110 = por %p108, %p109
      %p112 = scmp.ne.s32.totalorder %s97, %s111
      %p113 = scmp.eq.s32.totalorder %s24, 0
      %p114 = por %p112, %p113
      %s116 = sadd.s32 %s115, 1
      %p119 = scmp.eq.s32.totalorder %s18, 1
      %p120 = scmp.ne.s32.totalorder %s115, %s117
      %p121 = scmp.eq.s32.totalorder %s18, 0
      %p122 = por %p120, %p121
      %p123 = scmp.ne.s32.totalorder %s115, %s117
      %p124 = scmp.eq.s32.totalorder %s23, 1
      %p125 = por %p123, %p124
      %p126 = scmp.ne.s32.totalorder %s117, %s118
      %p127 = scmp.eq.s32.totalorder %s23, 0
      %p128 = por %p126, %p127
      %p129 = scmp.ne.s32.totalorder %s117, %s118
      %p130 = scmp.eq.s32.totalorder %s24, 1
      %p131 = por %p129, %p130
      %p133 = scmp.ne.s32.totalorder %s118, %s132
      %p134 = scmp.eq.s32.totalorder %s24, 0
      %p135 = por %p133, %p134
      %s137 = sadd.s32 %s136, 1
      %p140 = scmp.eq.s32.totalorder %s18, 1
      %p141 = scmp.ne.s32.totalorder %s136, %s138
      %p142 = scmp.eq.s32.totalorder %s18, 0
      %p143 = por %p141, %p142
      %p144 = scmp.ne.s32.totalorder %s136, %s138
      %p145 = scmp.eq.s32.totalorder %s23, 1
      %p146 = por %p144, %p145
      %p147 = scmp.ne.s32.totalorder %s138, %s139
      %p148 = scmp.eq.s32.totalorder %s23, 0
      %p149 = por %p147, %p148
      %p150 = scmp.ne.s32.totalorder %s138, %s139
      %p151 = scmp.eq.s32.totalorder %s24, 1
      %p152 = por %p150, %p151
      %p154 = scmp.ne.s32.totalorder %s139, %s153
      %p155 = scmp.eq.s32.totalorder %s24, 0
      %p156 = por %p154, %p155
      %s158 = sadd.s32 %s157, 1
      %p161 = scmp.eq.s32.totalorder %s18, 1
      %p162 = scmp.ne.s32.totalorder %s157, %s159
      %p163 = scmp.eq.s32.totalorder %s18, 0
      %p164 = por %p162, %p163
      %p165 = scmp.ne.s32.totalorder %s157, %s159
      %p166 = scmp.eq.s32.totalorder %s23, 1
      %p167 = por %p165, %p166
      %p168 = scmp.ne.s32.totalorder %s159, %s160
      %p169 = scmp.eq.s32.totalorder %s23, 0
      %p170 = por %p168, %p169
      %p171 = scmp.ne.s32.totalorder %s159, %s160
      %p172 = scmp.eq.s32.totalorder %s24, 1
      %p173 = por %p171, %p172
      %p175 = scmp.ne.s32.totalorder %s160, %s174
      %p176 = scmp.eq.s32.totalorder %s24, 0
      %p177 = por %p175, %p176
      %s179 = sadd.s32 %s178, 1
      %p182 = scmp.eq.s32.totalorder %s18, 1
      %p183 = scmp.ne.s32.totalorder %s178, %s180
      %p184 = scmp.eq.s32.totalorder %s18, 0
      %p185 = por %p183, %p184
      %p186 = scmp.ne.s32.totalorder %s178, %s180
      %p187 = scmp.eq.s32.totalorder %s23, 1
      %p188 = por %p186, %p187
      %p189 = scmp.ne.s32.totalorder %s180, %s181
      %p190 = scmp.eq.s32.totalorder %s23, 0
      %p191 = por %p189, %p190
      %p192 = scmp.ne.s32.totalorder %s180, %s181
      %p193 = scmp.eq.s32.totalorder %s24, 1
      %p194 = por %p192, %p193
      %p196 = scmp.ne.s32.totalorder %s181, %s195
      %p197 = scmp.eq.s32.totalorder %s24, 0
      %p198 = por %p196, %p197
      %s200 = sadd.s32 %s199, 1
      %p203 = scmp.eq.s32.totalorder %s18, 1
      %p204 = scmp.ne.s32.totalorder %s199, %s201
      %p205 = scmp.eq.s32.totalorder %s18, 0
      %p206 = por %p204, %p205
      %p207 = scmp.ne.s32.totalorder %s199, %s201
      %p208 = scmp.eq.s32.totalorder %s23, 1
      %p209 = por %p207, %p208
      %p210 = scmp.ne.s32.totalorder %s201, %s202
      %p211 = scmp.eq.s32.totalorder %s23, 0
      %p212 = por %p210, %p211
      %p213 = scmp.ne.s32.totalorder %s201, %s202
      %p214 = scmp.eq.s32.totalorder %s24, 1
      %p215 = por %p213, %p214
      %p217 = scmp.ne.s32.totalorder %s202, %s216
      %p218 = scmp.eq.s32.totalorder %s24, 0
      %p219 = por %p217, %p218
      %s220 = ssub.s32 %s18, %s25
      %p221 = scmp.eq.s32.totalorder %s220, 0
      %s223 = sadd.s32 %s222, 1
      %s224 = scalar_select %p221, %s222, %s223
      %p227 = pneg %p221
      %p228 = scmp.eq.s32.totalorder %s18, 1
      %p229 = por %p227, %p228
      %p230 = scmp.ne.s32.totalorder %s222, %s225
      %p231 = scmp.eq.s32.totalorder %s18, 0
      %p232 = por %p230, %p231
      %p233 = scmp.ne.s32.totalorder %s222, %s225
      %p234 = scmp.eq.s32.totalorder %s23, 1
      %p235 = por %p233, %p234
      %p236 = scmp.ne.s32.totalorder %s225, %s226
      %p237 = scmp.eq.s32.totalorder %s23, 0
      %p238 = por %p236, %p237
      %p239 = scmp.ne.s32.totalorder %s225, %s226
      %p240 = scmp.eq.s32.totalorder %s24, 1
      %p241 = por %p239, %p240
      %p243 = scmp.ne.s32.totalorder %s226, %s242
      %p244 = scmp.eq.s32.totalorder %s24, 0
      %p245 = por %p243, %p244
      %p246 = scmp.le.s32.totalorder 1, %s18
      %p247 = scmp.lt.s32.totalorder %s18, 3
      %p248 = pnand %p246, %p247
      %p249 = pneg %p248
      // Predicated region
      $region9: #{deepmind_enc_forward.1} parent=5 // pred_check
        _
      $region10: #{deepmind_enc_forward.1} parent=5 // pred_check_branch
        %251 = sbr.rel (%p248) target = $region12
      $region11: #{deepmind_enc_forward.1} parent=5 // pred_region
        %s252 = ssub.s32 %s18, 1
        // Predicated region
        $region13: #{deepmind_enc_forward.1} parent=11 // pred_check
          %p253 = pneg %p65
        $region14: #{deepmind_enc_forward.1} parent=11 // pred_check_branch
          %255 = sbr.rel (%p253) target = $region16
        $region15: #{deepmind_enc_forward.1} parent=11 // pred_region
          _
        $region16: #{deepmind_enc_forward.1} parent=11 // pred_fallthru
          _
        // Predicated region
        $region17: #{deepmind_enc_forward.1} parent=11 // pred_check
          %p256 = pneg %p86
        $region18: #{deepmind_enc_forward.1} parent=11 // pred_check_branch
          %258 = sbr.rel (%p256) target = $region20
        $region19: #{deepmind_enc_forward.1} parent=11 // pred_region
          _
        $region20: #{deepmind_enc_forward.1} parent=11 // pred_fallthru
          _
        // Predicated region
        $region21: #{deepmind_enc_forward.1} parent=11 // pred_check
          %p259 = pneg %p107
        $region22: #{deepmind_enc_forward.1} parent=11 // pred_check_branch
          %261 = sbr.rel (%p259) target = $region24
        $region23: #{deepmind_enc_forward.1} parent=11 // pred_region
          _
        $region24: #{deepmind_enc_forward.1} parent=11 // pred_fallthru
          _
        // Predicated region
        $region25: #{deepmind_enc_forward.1} parent=11 // pred_check
          %p262 = pneg %p128
        $region26: #{deepmind_enc_forward.1} parent=11 // pred_check_branch
          %264 = sbr.rel (%p262) target = $region28
        $region27: #{deepmind_enc_forward.1} parent=11 // pred_region
          _
        $region28: #{deepmind_enc_forward.1} parent=11 // pred_fallthru
          _
        // Predicated region
        $region29: #{deepmind_enc_forward.1} parent=11 // pred_check
          %p265 = pneg %p149
        $region30: #{deepmind_enc_forward.1} parent=11 // pred_check_branch
          %267 = sbr.rel (%p265) target = $region32
        $region31: #{deepmind_enc_forward.1} parent=11 // pred_region
          _
        $region32: #{deepmind_enc_forward.1} parent=11 // pred_fallthru
          _
        // Predicated region
        $region33: #{deepmind_enc_forward.1} parent=11 // pred_check
          %p268 = pneg %p170
        $region34: #{deepmind_enc_forward.1} parent=11 // pred_check_branch
          %270 = sbr.rel (%p268) target = $region36
        $region35: #{deepmind_enc_forward.1} parent=11 // pred_region
          _
        $region36: #{deepmind_enc_forward.1} parent=11 // pred_fallthru
          _
        // Predicated region
        $region37: #{deepmind_enc_forward.1} parent=11 // pred_check
          %p271 = pneg %p191
        $region38: #{deepmind_enc_forward.1} parent=11 // pred_check_branch
          %273 = sbr.rel (%p271) target = $region40
        $region39: #{deepmind_enc_forward.1} parent=11 // pred_region
          _
        $region40: #{deepmind_enc_forward.1} parent=11 // pred_fallthru
          _
        // Predicated region
        $region41: #{deepmind_enc_forward.1} parent=11 // pred_check
          %p274 = pneg %p212
        $region42: #{deepmind_enc_forward.1} parent=11 // pred_check_branch
          %276 = sbr.rel (%p274) target = $region44
        $region43: #{deepmind_enc_forward.1} parent=11 // pred_region
          _
        $region44: #{deepmind_enc_forward.1} parent=11 // pred_fallthru
          _
      $region12: #{deepmind_enc_forward.1} parent=5 // pred_fallthru
        _
      %p277 = scmp.lt.s32.totalorder %s18, 2
      // Predicated region
      $region45: #{deepmind_enc_forward.1} parent=5 // pred_check
        %p278 = pneg %p277
      $region46: #{deepmind_enc_forward.1} parent=5 // pred_check_branch
        %280 = sbr.rel (%p278) target = $region48
      $region47: #{deepmind_enc_forward.1} parent=5 // pred_region
        // Predicated region
        $region49: #{deepmind_enc_forward.1} parent=47 // pred_check
          %p281 = pneg %p38
        $region50: #{deepmind_enc_forward.1} parent=47 // pred_check_branch
          %283 = sbr.rel (%p281) target = $region52
        $region51: #{deepmind_enc_forward.1} parent=47 // pred_region
          %p284 = scmp.lt.s32.totalorder %s18, 1
          %s285 = scalar_select %p284, %s18, 1
          %s286 = smul.addr %s285, 88
          %s287 = smul.addr %s286, 8
          %s288 = scalar_lea.vmem %s0, %s287
        $region52: #{deepmind_enc_forward.1} parent=47 // pred_fallthru
          _
      $region48: #{deepmind_enc_forward.1} parent=5 // pred_fallthru
        _
      %p289 = scmp.le.s32.totalorder 1, %s18
      %p290 = scmp.lt.s32.totalorder %s18, 3
      %p291 = pnand %p289, %p290
      %p292 = pneg %p291
      // Predicated region
      $region53: #{deepmind_enc_forward.1} parent=5 // pred_check
        _
      $region54: #{deepmind_enc_forward.1} parent=5 // pred_check_branch
        %294 = sbr.rel (%p291) target = $region56
      $region55: #{deepmind_enc_forward.1} parent=5 // pred_region
        %s295 = ssub.s32 %s18, 1
        %p296 = scmp.lt.s32.totalorder %s23, 1
        %s297 = scalar_select %p296, %s23, 1
        %s298 = smul.addr %s297, 88
        %s299 = smul.addr %s298, 8
        %s300 = scalar_lea.vmem %s0, %s299
        %p301 = pneg %p44
        %p302 = pneg %p41
        %p303 = pneg %p65
        %p304 = pneg %p62
        %p305 = pneg %p86
        %p306 = pneg %p83
        %p307 = pneg %p107
        %p308 = pneg %p104
        %p309 = pneg %p128
        %p310 = pneg %p125
        %p311 = pneg %p149
        %p312 = pneg %p146
        %p313 = pneg %p170
        %p314 = pneg %p167
        %p315 = pneg %p191
        %p316 = pneg %p188
        %p317 = pneg %p212
        %p318 = pneg %p209
        %p319 = pneg %p238
        %p320 = pneg %p235
        %s321 = sand.u32 %s225, 1
        %s322 = scalar_lea.sflag [#allocation9], %s321
        %s323 = sand.u32 %s225, 1
        %s324 = scalar_lea.vmem [#allocation8], %s323
        %p325 = scmp.lt.s32.totalorder %s23, 1
        %s326 = scalar_select %p325, %s23, 1
        %s327 = smul.addr %s326, 88
        %s328 = smul.addr %s327, 8
        %s329 = scalar_lea.vmem %s0, %s328
        %v331 = vld [vmem:[%s329] sm:$0xff]
        %v332 = vld [vmem:[%s329 + $0x8] sm:$0x3]
        %v333 = vld [vmem:[%s329 + $0x40] sm:$0xff]
        %v334 = vld [vmem:[%s329 + $0x48] sm:$0x3]
        %v335 = vld [vmem:[%s329 + $0x80] sm:$0xff]
        %v336 = vld [vmem:[%s329 + $0x88] sm:$0x3]
        %v337 = vld [vmem:[%s329 + $0xc0] sm:$0xff]
        %v338 = vld [vmem:[%s329 + $0xc8] sm:$0x3]
        %v339 = vld [vmem:[%s329 + $0x100] sm:$0xff]
        %v340 = vld [vmem:[%s329 + $0x108] sm:$0x3]
        %v341 = vld [vmem:[%s329 + $0x140] sm:$0xff]
        %v342 = vld [vmem:[%s329 + $0x148] sm:$0x3]
        %v343 = vld [vmem:[%s329 + $0x180] sm:$0xff]
        %v344 = vld [vmem:[%s329 + $0x188] sm:$0x3]
        %v345 = vld [vmem:[%s329 + $0x1c0] sm:$0xff]
        %v346 = vld [vmem:[%s329 + $0x1c8] sm:$0x3]
        %v347 = vld [vmem:[%s329 + $0x200] sm:$0xff]
        %v348 = vld [vmem:[%s329 + $0x208] sm:$0x3]
        %v349 = vld [vmem:[%s329 + $0x240] sm:$0xff]
        %v350 = vld [vmem:[%s329 + $0x248] sm:$0x3]
        %vm351 = vcmask 130048
        %352 = vst.msk [vmem:[#allocation2] sm:$0xff] %vm351, %v331
        %vm353 = vcmask 123904
        %354 = vst.msk [vmem:[#allocation2 + $0x10] sm:$0x3] %vm353, %v332
        %355 = vst.msk [vmem:[#allocation2 + $0x20] sm:$0xff] %vm351, %v333
        %356 = vst.msk [vmem:[#allocation2 + $0x30] sm:$0x3] %vm353, %v334
        %357 = vst.msk [vmem:[#allocation2 + $0x40] sm:$0xff] %vm351, %v335
        %358 = vst.msk [vmem:[#allocation2 + $0x50] sm:$0x3] %vm353, %v336
        %359 = vst.msk [vmem:[#allocation2 + $0x60] sm:$0xff] %vm351, %v337
        %360 = vst.msk [vmem:[#allocation2 + $0x70] sm:$0x3] %vm353, %v338
        %361 = vst.msk [vmem:[#allocation2 + $0x80] sm:$0xff] %vm351, %v339
        %362 = vst.msk [vmem:[#allocation2 + $0x90] sm:$0x3] %vm353, %v340
        %363 = vst.msk [vmem:[#allocation2 + $0xa0] sm:$0xff] %vm351, %v341
        %364 = vst.msk [vmem:[#allocation2 + $0xb0] sm:$0x3] %vm353, %v342
        %365 = vst.msk [vmem:[#allocation2 + $0xc0] sm:$0xff] %vm351, %v343
        %366 = vst.msk [vmem:[#allocation2 + $0xd0] sm:$0x3] %vm353, %v344
        %367 = vst.msk [vmem:[#allocation2 + $0xe0] sm:$0xff] %vm351, %v345
        %368 = vst.msk [vmem:[#allocation2 + $0xf0] sm:$0x3] %vm353, %v346
        %369 = vst.msk [vmem:[#allocation2 + $0x100] sm:$0xff] %vm351, %v347
        %370 = vst.msk [vmem:[#allocation2 + $0x110] sm:$0x3] %vm353, %v348
        %371 = vst.msk [vmem:[#allocation2 + $0x120] sm:$0xff] %vm351, %v349
        %372 = vst.msk [vmem:[#allocation2 + $0x130] sm:$0x3] %vm353, %v350
        %v373 = vld [vmem:[%s329 + $0x1] sm:$0xff]
        %v374 = vld [vmem:[%s329 + $0x9] sm:$0x3]
        %v375 = vld [vmem:[%s329 + $0x41] sm:$0xff]
        %v376 = vld [vmem:[%s329 + $0x49] sm:$0x3]
        %v377 = vld [vmem:[%s329 + $0x81] sm:$0xff]
        %v378 = vld [vmem:[%s329 + $0x89] sm:$0x3]
        %v379 = vld [vmem:[%s329 + $0xc1] sm:$0xff]
        %v380 = vld [vmem:[%s329 + $0xc9] sm:$0x3]
        %v381 = vld [vmem:[%s329 + $0x101] sm:$0xff]
        %v382 = vld [vmem:[%s329 + $0x109] sm:$0x3]
        %v383 = vld [vmem:[%s329 + $0x141] sm:$0xff]
        %v384 = vld [vmem:[%s329 + $0x149] sm:$0x3]
        %v385 = vld [vmem:[%s329 + $0x181] sm:$0xff]
        %v386 = vld [vmem:[%s329 + $0x189] sm:$0x3]
        %v387 = vld [vmem:[%s329 + $0x1c1] sm:$0xff]
        %v388 = vld [vmem:[%s329 + $0x1c9] sm:$0x3]
        %v389 = vld [vmem:[%s329 + $0x201] sm:$0xff]
        %v390 = vld [vmem:[%s329 + $0x209] sm:$0x3]
        %v391 = vld [vmem:[%s329 + $0x241] sm:$0xff]
        %v392 = vld [vmem:[%s329 + $0x249] sm:$0x3]
        %413 = vrot.lane.b32.xlu0 %v373, 16
        %v414 = vpop.permute.xlu0 %413
        %415 = vrot.lane.b32.xlu0 %v374, 16
        %v416 = vpop.permute.xlu0 %415
        %417 = vrot.lane.b32.xlu0 %v375, 16
        %v418 = vpop.permute.xlu0 %417
        %419 = vrot.lane.b32.xlu0 %v376, 16
        %v420 = vpop.permute.xlu0 %419
        %421 = vrot.lane.b32.xlu0 %v377, 16
        %v422 = vpop.permute.xlu0 %421
        %423 = vrot.lane.b32.xlu0 %v378, 16
        %v424 = vpop.permute.xlu0 %423
        %425 = vrot.lane.b32.xlu0 %v379, 16
        %v426 = vpop.permute.xlu0 %425
        %427 = vrot.lane.b32.xlu0 %v380, 16
        %v428 = vpop.permute.xlu0 %427
        %429 = vrot.lane.b32.xlu0 %v381, 16
        %v430 = vpop.permute.xlu0 %429
        %431 = vrot.lane.b32.xlu0 %v382, 16
        %v432 = vpop.permute.xlu0 %431
        %433 = vrot.lane.b32.xlu0 %v383, 16
        %v434 = vpop.permute.xlu0 %433
        %435 = vrot.lane.b32.xlu0 %v384, 16
        %v436 = vpop.permute.xlu0 %435
        %437 = vrot.lane.b32.xlu0 %v385, 16
        %v438 = vpop.permute.xlu0 %437
        %439 = vrot.lane.b32.xlu0 %v386, 16
        %v440 = vpop.permute.xlu0 %439
        %441 = vrot.lane.b32.xlu0 %v387, 16
        %v442 = vpop.permute.xlu0 %441
        %443 = vrot.lane.b32.xlu0 %v388, 16
        %v444 = vpop.permute.xlu0 %443
        %445 = vrot.lane.b32.xlu0 %v389, 16
        %v446 = vpop.permute.xlu0 %445
        %447 = vrot.lane.b32.xlu0 %v390, 16
        %v448 = vpop.permute.xlu0 %447
        %449 = vrot.lane.b32.xlu0 %v391, 16
        %v450 = vpop.permute.xlu0 %449
        %451 = vrot.lane.b32.xlu0 %v392, 16
        %v452 = vpop.permute.xlu0 %451
        %vm473 = vcmask 261248
        %474 = vst.msk [vmem:[#allocation2] sm:$0xff] %vm473, %v414
        %vm475 = vcmask 255104
        %476 = vst.msk [vmem:[#allocation2 + $0x10] sm:$0x3] %vm475, %v416
        %477 = vst.msk [vmem:[#allocation2 + $0x20] sm:$0xff] %vm473, %v418
        %478 = vst.msk [vmem:[#allocation2 + $0x30] sm:$0x3] %vm475, %v420
        %479 = vst.msk [vmem:[#allocation2 + $0x40] sm:$0xff] %vm473, %v422
        %480 = vst.msk [vmem:[#allocation2 + $0x50] sm:$0x3] %vm475, %v424
        %481 = vst.msk [vmem:[#allocation2 + $0x60] sm:$0xff] %vm473, %v426
        %482 = vst.msk [vmem:[#allocation2 + $0x70] sm:$0x3] %vm475, %v428
        %483 = vst.msk [vmem:[#allocation2 + $0x80] sm:$0xff] %vm473, %v430
        %484 = vst.msk [vmem:[#allocation2 + $0x90] sm:$0x3] %vm475, %v432
        %485 = vst.msk [vmem:[#allocation2 + $0xa0] sm:$0xff] %vm473, %v434
        %486 = vst.msk [vmem:[#allocation2 + $0xb0] sm:$0x3] %vm475, %v436
        %487 = vst.msk [vmem:[#allocation2 + $0xc0] sm:$0xff] %vm473, %v438
        %488 = vst.msk [vmem:[#allocation2 + $0xd0] sm:$0x3] %vm475, %v440
        %489 = vst.msk [vmem:[#allocation2 + $0xe0] sm:$0xff] %vm473, %v442
        %490 = vst.msk [vmem:[#allocation2 + $0xf0] sm:$0x3] %vm475, %v444
        %491 = vst.msk [vmem:[#allocation2 + $0x100] sm:$0xff] %vm473, %v446
        %492 = vst.msk [vmem:[#allocation2 + $0x110] sm:$0x3] %vm475, %v448
        %493 = vst.msk [vmem:[#allocation2 + $0x120] sm:$0xff] %vm473, %v450
        %494 = vst.msk [vmem:[#allocation2 + $0x130] sm:$0x3] %vm475, %v452
        %s495 = scalar_lea.vmem %s329, 16
        %v496 = vld [vmem:[%s495] sm:$0xff]
        %v497 = vld [vmem:[%s495 + $0x8] sm:$0x3]
        %v498 = vld [vmem:[%s495 + $0x40] sm:$0xff]
        %v499 = vld [vmem:[%s495 + $0x48] sm:$0x3]
        %v500 = vld [vmem:[%s495 + $0x80] sm:$0xff]
        %v501 = vld [vmem:[%s495 + $0x88] sm:$0x3]
        %v502 = vld [vmem:[%s495 + $0xc0] sm:$0xff]
        %v503 = vld [vmem:[%s495 + $0xc8] sm:$0x3]
        %v504 = vld [vmem:[%s495 + $0x100] sm:$0xff]
        %v505 = vld [vmem:[%s495 + $0x108] sm:$0x3]
        %v506 = vld [vmem:[%s495 + $0x140] sm:$0xff]
        %v507 = vld [vmem:[%s495 + $0x148] sm:$0x3]
        %v508 = vld [vmem:[%s495 + $0x180] sm:$0xff]
        %v509 = vld [vmem:[%s495 + $0x188] sm:$0x3]
        %v510 = vld [vmem:[%s495 + $0x1c0] sm:$0xff]
        %v511 = vld [vmem:[%s495 + $0x1c8] sm:$0x3]
        %v512 = vld [vmem:[%s495 + $0x200] sm:$0xff]
        %v513 = vld [vmem:[%s495 + $0x208] sm:$0x3]
        %v514 = vld [vmem:[%s495 + $0x240] sm:$0xff]
        %v515 = vld [vmem:[%s495 + $0x248] sm:$0x3]
        %536 = vrot.lane.b32.xlu0 %v496, 32
        %v537 = vpop.permute.xlu0 %536
        %538 = vrot.lane.b32.xlu0 %v497, 32
        %v539 = vpop.permute.xlu0 %538
        %540 = vrot.lane.b32.xlu0 %v498, 32
        %v541 = vpop.permute.xlu0 %540
        %542 = vrot.lane.b32.xlu0 %v499, 32
        %v543 = vpop.permute.xlu0 %542
        %544 = vrot.lane.b32.xlu0 %v500, 32
        %v545 = vpop.permute.xlu0 %544
        %546 = vrot.lane.b32.xlu0 %v501, 32
        %v547 = vpop.permute.xlu0 %546
        %548 = vrot.lane.b32.xlu0 %v502, 32
        %v549 = vpop.permute.xlu0 %548
        %550 = vrot.lane.b32.xlu0 %v503, 32
        %v551 = vpop.permute.xlu0 %550
        %552 = vrot.lane.b32.xlu0 %v504, 32
        %v553 = vpop.permute.xlu0 %552
        %554 = vrot.lane.b32.xlu0 %v505, 32
        %v555 = vpop.permute.xlu0 %554
        %556 = vrot.lane.b32.xlu0 %v506, 32
        %v557 = vpop.permute.xlu0 %556
        %558 = vrot.lane.b32.xlu0 %v507, 32
        %v559 = vpop.permute.xlu0 %558
        %560 = vrot.lane.b32.xlu0 %v508, 32
        %v561 = vpop.permute.xlu0 %560
        %562 = vrot.lane.b32.xlu0 %v509, 32
        %v563 = vpop.permute.xlu0 %562
        %564 = vrot.lane.b32.xlu0 %v510, 32
        %v565 = vpop.permute.xlu0 %564
        %566 = vrot.lane.b32.xlu0 %v511, 32
        %v567 = vpop.permute.xlu0 %566
        %568 = vrot.lane.b32.xlu0 %v512, 32
        %v569 = vpop.permute.xlu0 %568
        %570 = vrot.lane.b32.xlu0 %v513, 32
        %v571 = vpop.permute.xlu0 %570
        %572 = vrot.lane.b32.xlu0 %v514, 32
        %v573 = vpop.permute.xlu0 %572
        %574 = vrot.lane.b32.xlu0 %v515, 32
        %v575 = vpop.permute.xlu0 %574
        %vm596 = vcmask 392448
        %597 = vst.msk [vmem:[#allocation2] sm:$0xff] %vm596, %v537
        %vm598 = vcmask 386304
        %599 = vst.msk [vmem:[#allocation2 + $0x10] sm:$0x3] %vm598, %v539
        %600 = vst.msk [vmem:[#allocation2 + $0x20] sm:$0xff] %vm596, %v541
        %601 = vst.msk [vmem:[#allocation2 + $0x30] sm:$0x3] %vm598, %v543
        %602 = vst.msk [vmem:[#allocation2 + $0x40] sm:$0xff] %vm596, %v545
        %603 = vst.msk [vmem:[#allocation2 + $0x50] sm:$0x3] %vm598, %v547
        %604 = vst.msk [vmem:[#allocation2 + $0x60] sm:$0xff] %vm596, %v549
        %605 = vst.msk [vmem:[#allocation2 + $0x70] sm:$0x3] %vm598, %v551
        %606 = vst.msk [vmem:[#allocation2 + $0x80] sm:$0xff] %vm596, %v553
        %607 = vst.msk [vmem:[#allocation2 + $0x90] sm:$0x3] %vm598, %v555
        %608 = vst.msk [vmem:[#allocation2 + $0xa0] sm:$0xff] %vm596, %v557
        %609 = vst.msk [vmem:[#allocation2 + $0xb0] sm:$0x3] %vm598, %v559
        %610 = vst.msk [vmem:[#allocation2 + $0xc0] sm:$0xff] %vm596, %v561
        %611 = vst.msk [vmem:[#allocation2 + $0xd0] sm:$0x3] %vm598, %v563
        %612 = vst.msk [vmem:[#allocation2 + $0xe0] sm:$0xff] %vm596, %v565
        %613 = vst.msk [vmem:[#allocation2 + $0xf0] sm:$0x3] %vm598, %v567
        %614 = vst.msk [vmem:[#allocation2 + $0x100] sm:$0xff] %vm596, %v569
        %615 = vst.msk [vmem:[#allocation2 + $0x110] sm:$0x3] %vm598, %v571
        %616 = vst.msk [vmem:[#allocation2 + $0x120] sm:$0xff] %vm596, %v573
        %617 = vst.msk [vmem:[#allocation2 + $0x130] sm:$0x3] %vm598, %v575
        %v618 = vld [vmem:[%s495 + $0x1] sm:$0xff]
        %v619 = vld [vmem:[%s495 + $0x9] sm:$0x3]
        %v620 = vld [vmem:[%s495 + $0x41] sm:$0xff]
        %v621 = vld [vmem:[%s495 + $0x49] sm:$0x3]
        %v622 = vld [vmem:[%s495 + $0x81] sm:$0xff]
        %v623 = vld [vmem:[%s495 + $0x89] sm:$0x3]
        %v624 = vld [vmem:[%s495 + $0xc1] sm:$0xff]
        %v625 = vld [vmem:[%s495 + $0xc9] sm:$0x3]
        %v626 = vld [vmem:[%s495 + $0x101] sm:$0xff]
        %v627 = vld [vmem:[%s495 + $0x109] sm:$0x3]
        %v628 = vld [vmem:[%s495 + $0x141] sm:$0xff]
        %v629 = vld [vmem:[%s495 + $0x149] sm:$0x3]
        %v630 = vld [vmem:[%s495 + $0x181] sm:$0xff]
        %v631 = vld [vmem:[%s495 + $0x189] sm:$0x3]
        %v632 = vld [vmem:[%s495 + $0x1c1] sm:$0xff]
        %v633 = vld [vmem:[%s495 + $0x1c9] sm:$0x3]
        %v634 = vld [vmem:[%s495 + $0x201] sm:$0xff]
        %v635 = vld [vmem:[%s495 + $0x209] sm:$0x3]
        %v636 = vld [vmem:[%s495 + $0x241] sm:$0xff]
        %v637 = vld [vmem:[%s495 + $0x249] sm:$0x3]
        %658 = vrot.lane.b32.xlu0 %v618, 48
        %v659 = vpop.permute.xlu0 %658
        %660 = vrot.lane.b32.xlu0 %v619, 48
        %v661 = vpop.permute.xlu0 %660
        %662 = vrot.lane.b32.xlu0 %v620, 48
        %v663 = vpop.permute.xlu0 %662
        %664 = vrot.lane.b32.xlu0 %v621, 48
        %v665 = vpop.permute.xlu0 %664
        %666 = vrot.lane.b32.xlu0 %v622, 48
        %v667 = vpop.permute.xlu0 %666
        %668 = vrot.lane.b32.xlu0 %v623, 48
        %v669 = vpop.permute.xlu0 %668
        %670 = vrot.lane.b32.xlu0 %v624, 48
        %v671 = vpop.permute.xlu0 %670
        %672 = vrot.lane.b32.xlu0 %v625, 48
        %v673 = vpop.permute.xlu0 %672
        %674 = vrot.lane.b32.xlu0 %v626, 48
        %v675 = vpop.permute.xlu0 %674
        %676 = vrot.lane.b32.xlu0 %v627, 48
        %v677 = vpop.permute.xlu0 %676
        %678 = vrot.lane.b32.xlu0 %v628, 48
        %v679 = vpop.permute.xlu0 %678
        %680 = vrot.lane.b32.xlu0 %v629, 48
        %v681 = vpop.permute.xlu0 %680
        %682 = vrot.lane.b32.xlu0 %v630, 48
        %v683 = vpop.permute.xlu0 %682
        %684 = vrot.lane.b32.xlu0 %v631, 48
        %v685 = vpop.permute.xlu0 %684
        %686 = vrot.lane.b32.xlu0 %v632, 48
        %v687 = vpop.permute.xlu0 %686
        %688 = vrot.lane.b32.xlu0 %v633, 48
        %v689 = vpop.permute.xlu0 %688
        %690 = vrot.lane.b32.xlu0 %v634, 48
        %v691 = vpop.permute.xlu0 %690
        %692 = vrot.lane.b32.xlu0 %v635, 48
        %v693 = vpop.permute.xlu0 %692
        %694 = vrot.lane.b32.xlu0 %v636, 48
        %v695 = vpop.permute.xlu0 %694
        %696 = vrot.lane.b32.xlu0 %v637, 48
        %v697 = vpop.permute.xlu0 %696
        %vm718 = vcmask 523648
        %719 = vst.msk [vmem:[#allocation2] sm:$0xff] %vm718, %v659
        %vm720 = vcmask 517504
        %721 = vst.msk [vmem:[#allocation2 + $0x10] sm:$0x3] %vm720, %v661
        %722 = vst.msk [vmem:[#allocation2 + $0x20] sm:$0xff] %vm718, %v663
        %723 = vst.msk [vmem:[#allocation2 + $0x30] sm:$0x3] %vm720, %v665
        %724 = vst.msk [vmem:[#allocation2 + $0x40] sm:$0xff] %vm718, %v667
        %725 = vst.msk [vmem:[#allocation2 + $0x50] sm:$0x3] %vm720, %v669
        %726 = vst.msk [vmem:[#allocation2 + $0x60] sm:$0xff] %vm718, %v671
        %727 = vst.msk [vmem:[#allocation2 + $0x70] sm:$0x3] %vm720, %v673
        %728 = vst.msk [vmem:[#allocation2 + $0x80] sm:$0xff] %vm718, %v675
        %729 = vst.msk [vmem:[#allocation2 + $0x90] sm:$0x3] %vm720, %v677
        %730 = vst.msk [vmem:[#allocation2 + $0xa0] sm:$0xff] %vm718, %v679
        %731 = vst.msk [vmem:[#allocation2 + $0xb0] sm:$0x3] %vm720, %v681
        %732 = vst.msk [vmem:[#allocation2 + $0xc0] sm:$0xff] %vm718, %v683
        %733 = vst.msk [vmem:[#allocation2 + $0xd0] sm:$0x3] %vm720, %v685
        %734 = vst.msk [vmem:[#allocation2 + $0xe0] sm:$0xff] %vm718, %v687
        %735 = vst.msk [vmem:[#allocation2 + $0xf0] sm:$0x3] %vm720, %v689
        %736 = vst.msk [vmem:[#allocation2 + $0x100] sm:$0xff] %vm718, %v691
        %737 = vst.msk [vmem:[#allocation2 + $0x110] sm:$0x3] %vm720, %v693
        %738 = vst.msk [vmem:[#allocation2 + $0x120] sm:$0xff] %vm718, %v695
        %739 = vst.msk [vmem:[#allocation2 + $0x130] sm:$0x3] %vm720, %v697
        %s740 = scalar_lea.vmem %s329, 32
        %v741 = vld [vmem:[%s740] sm:$0xff]
        %v742 = vld [vmem:[%s740 + $0x8] sm:$0x3]
        %v743 = vld [vmem:[%s740 + $0x40] sm:$0xff]
        %v744 = vld [vmem:[%s740 + $0x48] sm:$0x3]
        %v745 = vld [vmem:[%s740 + $0x80] sm:$0xff]
        %v746 = vld [vmem:[%s740 + $0x88] sm:$0x3]
        %v747 = vld [vmem:[%s740 + $0xc0] sm:$0xff]
        %v748 = vld [vmem:[%s740 + $0xc8] sm:$0x3]
        %v749 = vld [vmem:[%s740 + $0x100] sm:$0xff]
        %v750 = vld [vmem:[%s740 + $0x108] sm:$0x3]
        %v751 = vld [vmem:[%s740 + $0x140] sm:$0xff]
        %v752 = vld [vmem:[%s740 + $0x148] sm:$0x3]
        %v753 = vld [vmem:[%s740 + $0x180] sm:$0xff]
        %v754 = vld [vmem:[%s740 + $0x188] sm:$0x3]
        %v755 = vld [vmem:[%s740 + $0x1c0] sm:$0xff]
        %v756 = vld [vmem:[%s740 + $0x1c8] sm:$0x3]
        %v757 = vld [vmem:[%s740 + $0x200] sm:$0xff]
        %v758 = vld [vmem:[%s740 + $0x208] sm:$0x3]
        %v759 = vld [vmem:[%s740 + $0x240] sm:$0xff]
        %v760 = vld [vmem:[%s740 + $0x248] sm:$0x3]
        %781 = vrot.lane.b32.xlu0 %v741, 64
        %v782 = vpop.permute.xlu0 %781
        %783 = vrot.lane.b32.xlu0 %v742, 64
        %v784 = vpop.permute.xlu0 %783
        %785 = vrot.lane.b32.xlu0 %v743, 64
        %v786 = vpop.permute.xlu0 %785
        %787 = vrot.lane.b32.xlu0 %v744, 64
        %v788 = vpop.permute.xlu0 %787
        %789 = vrot.lane.b32.xlu0 %v745, 64
        %v790 = vpop.permute.xlu0 %789
        %791 = vrot.lane.b32.xlu0 %v746, 64
        %v792 = vpop.permute.xlu0 %791
        %793 = vrot.lane.b32.xlu0 %v747, 64
        %v794 = vpop.permute.xlu0 %793
        %795 = vrot.lane.b32.xlu0 %v748, 64
        %v796 = vpop.permute.xlu0 %795
        %797 = vrot.lane.b32.xlu0 %v749, 64
        %v798 = vpop.permute.xlu0 %797
        %799 = vrot.lane.b32.xlu0 %v750, 64
        %v800 = vpop.permute.xlu0 %799
        %801 = vrot.lane.b32.xlu0 %v751, 64
        %v802 = vpop.permute.xlu0 %801
        %803 = vrot.lane.b32.xlu0 %v752, 64
        %v804 = vpop.permute.xlu0 %803
        %805 = vrot.lane.b32.xlu0 %v753, 64
        %v806 = vpop.permute.xlu0 %805
        %807 = vrot.lane.b32.xlu0 %v754, 64
        %v808 = vpop.permute.xlu0 %807
        %809 = vrot.lane.b32.xlu0 %v755, 64
        %v810 = vpop.permute.xlu0 %809
        %811 = vrot.lane.b32.xlu0 %v756, 64
        %v812 = vpop.permute.xlu0 %811
        %813 = vrot.lane.b32.xlu0 %v757, 64
        %v814 = vpop.permute.xlu0 %813
        %815 = vrot.lane.b32.xlu0 %v758, 64
        %v816 = vpop.permute.xlu0 %815
        %817 = vrot.lane.b32.xlu0 %v759, 64
        %v818 = vpop.permute.xlu0 %817
        %819 = vrot.lane.b32.xlu0 %v760, 64
        %v820 = vpop.permute.xlu0 %819
        %vm841 = vcmask 654848
        %842 = vst.msk [vmem:[#allocation2] sm:$0xff] %vm841, %v782
        %vm843 = vcmask 648704
        %844 = vst.msk [vmem:[#allocation2 + $0x10] sm:$0x3] %vm843, %v784
        %845 = vst.msk [vmem:[#allocation2 + $0x20] sm:$0xff] %vm841, %v786
        %846 = vst.msk [vmem:[#allocation2 + $0x30] sm:$0x3] %vm843, %v788
        %847 = vst.msk [vmem:[#allocation2 + $0x40] sm:$0xff] %vm841, %v790
        %848 = vst.msk [vmem:[#allocation2 + $0x50] sm:$0x3] %vm843, %v792
        %849 = vst.msk [vmem:[#allocation2 + $0x60] sm:$0xff] %vm841, %v794
        %850 = vst.msk [vmem:[#allocation2 + $0x70] sm:$0x3] %vm843, %v796
        %851 = vst.msk [vmem:[#allocation2 + $0x80] sm:$0xff] %vm841, %v798
        %852 = vst.msk [vmem:[#allocation2 + $0x90] sm:$0x3] %vm843, %v800
        %853 = vst.msk [vmem:[#allocation2 + $0xa0] sm:$0xff] %vm841, %v802
        %854 = vst.msk [vmem:[#allocation2 + $0xb0] sm:$0x3] %vm843, %v804
        %855 = vst.msk [vmem:[#allocation2 + $0xc0] sm:$0xff] %vm841, %v806
        %856 = vst.msk [vmem:[#allocation2 + $0xd0] sm:$0x3] %vm843, %v808
        %857 = vst.msk [vmem:[#allocation2 + $0xe0] sm:$0xff] %vm841, %v810
        %858 = vst.msk [vmem:[#allocation2 + $0xf0] sm:$0x3] %vm843, %v812
        %859 = vst.msk [vmem:[#allocation2 + $0x100] sm:$0xff] %vm841, %v814
        %860 = vst.msk [vmem:[#allocation2 + $0x110] sm:$0x3] %vm843, %v816
        %861 = vst.msk [vmem:[#allocation2 + $0x120] sm:$0xff] %vm841, %v818
        %862 = vst.msk [vmem:[#allocation2 + $0x130] sm:$0x3] %vm843, %v820
        %v863 = vld [vmem:[%s740 + $0x1] sm:$0xff]
        %v864 = vld [vmem:[%s740 + $0x9] sm:$0x3]
        %v865 = vld [vmem:[%s740 + $0x41] sm:$0xff]
        %v866 = vld [vmem:[%s740 + $0x49] sm:$0x3]
        %v867 = vld [vmem:[%s740 + $0x81] sm:$0xff]
        %v868 = vld [vmem:[%s740 + $0x89] sm:$0x3]
        %v869 = vld [vmem:[%s740 + $0xc1] sm:$0xff]
        %v870 = vld [vmem:[%s740 + $0xc9] sm:$0x3]
        %v871 = vld [vmem:[%s740 + $0x101] sm:$0xff]
        %v872 = vld [vmem:[%s740 + $0x109] sm:$0x3]
        %v873 = vld [vmem:[%s740 + $0x141] sm:$0xff]
        %v874 = vld [vmem:[%s740 + $0x149] sm:$0x3]
        %v875 = vld [vmem:[%s740 + $0x181] sm:$0xff]
        %v876 = vld [vmem:[%s740 + $0x189] sm:$0x3]
        %v877 = vld [vmem:[%s740 + $0x1c1] sm:$0xff]
        %v878 = vld [vmem:[%s740 + $0x1c9] sm:$0x3]
        %v879 = vld [vmem:[%s740 + $0x201] sm:$0xff]
        %v880 = vld [vmem:[%s740 + $0x209] sm:$0x3]
        %v881 = vld [vmem:[%s740 + $0x241] sm:$0xff]
        %v882 = vld [vmem:[%s740 + $0x249] sm:$0x3]
        %903 = vrot.lane.b32.xlu0 %v863, 80
        %v904 = vpop.permute.xlu0 %903
        %905 = vrot.lane.b32.xlu0 %v864, 80
        %v906 = vpop.permute.xlu0 %905
        %907 = vrot.lane.b32.xlu0 %v865, 80
        %v908 = vpop.permute.xlu0 %907
        %909 = vrot.lane.b32.xlu0 %v866, 80
        %v910 = vpop.permute.xlu0 %909
        %911 = vrot.lane.b32.xlu0 %v867, 80
        %v912 = vpop.permute.xlu0 %911
        %913 = vrot.lane.b32.xlu0 %v868, 80
        %v914 = vpop.permute.xlu0 %913
        %915 = vrot.lane.b32.xlu0 %v869, 80
        %v916 = vpop.permute.xlu0 %915
        %917 = vrot.lane.b32.xlu0 %v870, 80
        %v918 = vpop.permute.xlu0 %917
        %919 = vrot.lane.b32.xlu0 %v871, 80
        %v920 = vpop.permute.xlu0 %919
        %921 = vrot.lane.b32.xlu0 %v872, 80
        %v922 = vpop.permute.xlu0 %921
        %923 = vrot.lane.b32.xlu0 %v873, 80
        %v924 = vpop.permute.xlu0 %923
        %925 = vrot.lane.b32.xlu0 %v874, 80
        %v926 = vpop.permute.xlu0 %925
        %927 = vrot.lane.b32.xlu0 %v875, 80
        %v928 = vpop.permute.xlu0 %927
        %929 = vrot.lane.b32.xlu0 %v876, 80
        %v930 = vpop.permute.xlu0 %929
        %931 = vrot.lane.b32.xlu0 %v877, 80
        %v932 = vpop.permute.xlu0 %931
        %933 = vrot.lane.b32.xlu0 %v878, 80
        %v934 = vpop.permute.xlu0 %933
        %935 = vrot.lane.b32.xlu0 %v879, 80
        %v936 = vpop.permute.xlu0 %935
        %937 = vrot.lane.b32.xlu0 %v880, 80
        %v938 = vpop.permute.xlu0 %937
        %939 = vrot.lane.b32.xlu0 %v881, 80
        %v940 = vpop.permute.xlu0 %939
        %941 = vrot.lane.b32.xlu0 %v882, 80
        %v942 = vpop.permute.xlu0 %941
        %vm963 = vcmask 786048
        %964 = vst.msk [vmem:[#allocation2] sm:$0xff] %vm963, %v904
        %vm965 = vcmask 779904
        %966 = vst.msk [vmem:[#allocation2 + $0x10] sm:$0x3] %vm965, %v906
        %967 = vst.msk [vmem:[#allocation2 + $0x20] sm:$0xff] %vm963, %v908
        %968 = vst.msk [vmem:[#allocation2 + $0x30] sm:$0x3] %vm965, %v910
        %969 = vst.msk [vmem:[#allocation2 + $0x40] sm:$0xff] %vm963, %v912
        %970 = vst.msk [vmem:[#allocation2 + $0x50] sm:$0x3] %vm965, %v914
        %971 = vst.msk [vmem:[#allocation2 + $0x60] sm:$0xff] %vm963, %v916
        %972 = vst.msk [vmem:[#allocation2 + $0x70] sm:$0x3] %vm965, %v918
        %973 = vst.msk [vmem:[#allocation2 + $0x80] sm:$0xff] %vm963, %v920
        %974 = vst.msk [vmem:[#allocation2 + $0x90] sm:$0x3] %vm965, %v922
        %975 = vst.msk [vmem:[#allocation2 + $0xa0] sm:$0xff] %vm963, %v924
        %976 = vst.msk [vmem:[#allocation2 + $0xb0] sm:$0x3] %vm965, %v926
        %977 = vst.msk [vmem:[#allocation2 + $0xc0] sm:$0xff] %vm963, %v928
        %978 = vst.msk [vmem:[#allocation2 + $0xd0] sm:$0x3] %vm965, %v930
        %979 = vst.msk [vmem:[#allocation2 + $0xe0] sm:$0xff] %vm963, %v932
        %980 = vst.msk [vmem:[#allocation2 + $0xf0] sm:$0x3] %vm965, %v934
        %981 = vst.msk [vmem:[#allocation2 + $0x100] sm:$0xff] %vm963, %v936
        %982 = vst.msk [vmem:[#allocation2 + $0x110] sm:$0x3] %vm965, %v938
        %983 = vst.msk [vmem:[#allocation2 + $0x120] sm:$0xff] %vm963, %v940
        %984 = vst.msk [vmem:[#allocation2 + $0x130] sm:$0x3] %vm965, %v942
        %s985 = scalar_lea.vmem %s329, 48
        %v986 = vld [vmem:[%s985] sm:$0xff]
        %v987 = vld [vmem:[%s985 + $0x8] sm:$0x3]
        %v988 = vld [vmem:[%s985 + $0x40] sm:$0xff]
        %v989 = vld [vmem:[%s985 + $0x48] sm:$0x3]
        %v990 = vld [vmem:[%s985 + $0x80] sm:$0xff]
        %v991 = vld [vmem:[%s985 + $0x88] sm:$0x3]
        %v992 = vld [vmem:[%s985 + $0xc0] sm:$0xff]
        %v993 = vld [vmem:[%s985 + $0xc8] sm:$0x3]
        %v994 = vld [vmem:[%s985 + $0x100] sm:$0xff]
        %v995 = vld [vmem:[%s985 + $0x108] sm:$0x3]
        %v996 = vld [vmem:[%s985 + $0x140] sm:$0xff]
        %v997 = vld [vmem:[%s985 + $0x148] sm:$0x3]
        %v998 = vld [vmem:[%s985 + $0x180] sm:$0xff]
        %v999 = vld [vmem:[%s985 + $0x188] sm:$0x3]
        %v1000 = vld [vmem:[%s985 + $0x1c0] sm:$0xff]
        %v1001 = vld [vmem:[%s985 + $0x1c8] sm:$0x3]
        %v1002 = vld [vmem:[%s985 + $0x200] sm:$0xff]
        %v1003 = vld [vmem:[%s985 + $0x208] sm:$0x3]
        %v1004 = vld [vmem:[%s985 + $0x240] sm:$0xff]
        %v1005 = vld [vmem:[%s985 + $0x248] sm:$0x3]
        %1026 = vrot.lane.b32.xlu0 %v986, 96
        %v1027 = vpop.permute.xlu0 %1026
        %1028 = vrot.lane.b32.xlu0 %v987, 96
        %v1029 = vpop.permute.xlu0 %1028
        %1030 = vrot.lane.b32.xlu0 %v988, 96
        %v1031 = vpop.permute.xlu0 %1030
        %1032 = vrot.lane.b32.xlu0 %v989, 96
        %v1033 = vpop.permute.xlu0 %1032
        %1034 = vrot.lane.b32.xlu0 %v990, 96
        %v1035 = vpop.permute.xlu0 %1034
        %1036 = vrot.lane.b32.xlu0 %v991, 96
        %v1037 = vpop.permute.xlu0 %1036
        %1038 = vrot.lane.b32.xlu0 %v992, 96
        %v1039 = vpop.permute.xlu0 %1038
        %1040 = vrot.lane.b32.xlu0 %v993, 96
        %v1041 = vpop.permute.xlu0 %1040
        %1042 = vrot.lane.b32.xlu0 %v994, 96
        %v1043 = vpop.permute.xlu0 %1042
        %1044 = vrot.lane.b32.xlu0 %v995, 96
        %v1045 = vpop.permute.xlu0 %1044
        %1046 = vrot.lane.b32.xlu0 %v996, 96
        %v1047 = vpop.permute.xlu0 %1046
        %1048 = vrot.lane.b32.xlu0 %v997, 96
        %v1049 = vpop.permute.xlu0 %1048
        %1050 = vrot.lane.b32.xlu0 %v998, 96
        %v1051 = vpop.permute.xlu0 %1050
        %1052 = vrot.lane.b32.xlu0 %v999, 96
        %v1053 = vpop.permute.xlu0 %1052
        %1054 = vrot.lane.b32.xlu0 %v1000, 96
        %v1055 = vpop.permute.xlu0 %1054
        %1056 = vrot.lane.b32.xlu0 %v1001, 96
        %v1057 = vpop.permute.xlu0 %1056
        %1058 = vrot.lane.b32.xlu0 %v1002, 96
        %v1059 = vpop.permute.xlu0 %1058
        %1060 = vrot.lane.b32.xlu0 %v1003, 96
        %v1061 = vpop.permute.xlu0 %1060
        %1062 = vrot.lane.b32.xlu0 %v1004, 96
        %v1063 = vpop.permute.xlu0 %1062
        %1064 = vrot.lane.b32.xlu0 %v1005, 96
        %v1065 = vpop.permute.xlu0 %1064
        %vm1086 = vcmask 917248
        %1087 = vst.msk [vmem:[#allocation2] sm:$0xff] %vm1086, %v1027
        %vm1088 = vcmask 911104
        %1089 = vst.msk [vmem:[#allocation2 + $0x10] sm:$0x3] %vm1088, %v1029
        %1090 = vst.msk [vmem:[#allocation2 + $0x20] sm:$0xff] %vm1086, %v1031
        %1091 = vst.msk [vmem:[#allocation2 + $0x30] sm:$0x3] %vm1088, %v1033
        %1092 = vst.msk [vmem:[#allocation2 + $0x40] sm:$0xff] %vm1086, %v1035
        %1093 = vst.msk [vmem:[#allocation2 + $0x50] sm:$0x3] %vm1088, %v1037
        %1094 = vst.msk [vmem:[#allocation2 + $0x60] sm:$0xff] %vm1086, %v1039
        %1095 = vst.msk [vmem:[#allocation2 + $0x70] sm:$0x3] %vm1088, %v1041
        %1096 = vst.msk [vmem:[#allocation2 + $0x80] sm:$0xff] %vm1086, %v1043
        %1097 = vst.msk [vmem:[#allocation2 + $0x90] sm:$0x3] %vm1088, %v1045
        %1098 = vst.msk [vmem:[#allocation2 + $0xa0] sm:$0xff] %vm1086, %v1047
        %1099 = vst.msk [vmem:[#allocation2 + $0xb0] sm:$0x3] %vm1088, %v1049
        %1100 = vst.msk [vmem:[#allocation2 + $0xc0] sm:$0xff] %vm1086, %v1051
        %1101 = vst.msk [vmem:[#allocation2 + $0xd0] sm:$0x3] %vm1088, %v1053
        %1102 = vst.msk [vmem:[#allocation2 + $0xe0] sm:$0xff] %vm1086, %v1055
        %1103 = vst.msk [vmem:[#allocation2 + $0xf0] sm:$0x3] %vm1088, %v1057
        %1104 = vst.msk [vmem:[#allocation2 + $0x100] sm:$0xff] %vm1086, %v1059
        %1105 = vst.msk [vmem:[#allocation2 + $0x110] sm:$0x3] %vm1088, %v1061
        %1106 = vst.msk [vmem:[#allocation2 + $0x120] sm:$0xff] %vm1086, %v1063
        %1107 = vst.msk [vmem:[#allocation2 + $0x130] sm:$0x3] %vm1088, %v1065
        %v1108 = vld [vmem:[%s985 + $0x1] sm:$0xff]
        %v1109 = vld [vmem:[%s985 + $0x9] sm:$0x3]
        %v1110 = vld [vmem:[%s985 + $0x41] sm:$0xff]
        %v1111 = vld [vmem:[%s985 + $0x49] sm:$0x3]
        %v1112 = vld [vmem:[%s985 + $0x81] sm:$0xff]
        %v1113 = vld [vmem:[%s985 + $0x89] sm:$0x3]
        %v1114 = vld [vmem:[%s985 + $0xc1] sm:$0xff]
        %v1115 = vld [vmem:[%s985 + $0xc9] sm:$0x3]
        %v1116 = vld [vmem:[%s985 + $0x101] sm:$0xff]
        %v1117 = vld [vmem:[%s985 + $0x109] sm:$0x3]
        %v1118 = vld [vmem:[%s985 + $0x141] sm:$0xff]
        %v1119 = vld [vmem:[%s985 + $0x149] sm:$0x3]
        %v1120 = vld [vmem:[%s985 + $0x181] sm:$0xff]
        %v1121 = vld [vmem:[%s985 + $0x189] sm:$0x3]
        %v1122 = vld [vmem:[%s985 + $0x1c1] sm:$0xff]
        %v1123 = vld [vmem:[%s985 + $0x1c9] sm:$0x3]
        %v1124 = vld [vmem:[%s985 + $0x201] sm:$0xff]
        %v1125 = vld [vmem:[%s985 + $0x209] sm:$0x3]
        %v1126 = vld [vmem:[%s985 + $0x241] sm:$0xff]
        %v1127 = vld [vmem:[%s985 + $0x249] sm:$0x3]
        %1148 = vrot.lane.b32.xlu0 %v1108, 112
        %v1149 = vpop.permute.xlu0 %1148
        %1150 = vrot.lane.b32.xlu0 %v1109, 112
        %v1151 = vpop.permute.xlu0 %1150
        %1152 = vrot.lane.b32.xlu0 %v1110, 112
        %v1153 = vpop.permute.xlu0 %1152
        %1154 = vrot.lane.b32.xlu0 %v1111, 112
        %v1155 = vpop.permute.xlu0 %1154
        %1156 = vrot.lane.b32.xlu0 %v1112, 112
        %v1157 = vpop.permute.xlu0 %1156
        %1158 = vrot.lane.b32.xlu0 %v1113, 112
        %v1159 = vpop.permute.xlu0 %1158
        %1160 = vrot.lane.b32.xlu0 %v1114, 112
        %v1161 = vpop.permute.xlu0 %1160
        %1162 = vrot.lane.b32.xlu0 %v1115, 112
        %v1163 = vpop.permute.xlu0 %1162
        %1164 = vrot.lane.b32.xlu0 %v1116, 112
        %v1165 = vpop.permute.xlu0 %1164
        %1166 = vrot.lane.b32.xlu0 %v1117, 112
        %v1167 = vpop.permute.xlu0 %1166
        %1168 = vrot.lane.b32.xlu0 %v1118, 112
        %v1169 = vpop.permute.xlu0 %1168
        %1170 = vrot.lane.b32.xlu0 %v1119, 112
        %v1171 = vpop.permute.xlu0 %1170
        %1172 = vrot.lane.b32.xlu0 %v1120, 112
        %v1173 = vpop.permute.xlu0 %1172
        %1174 = vrot.lane.b32.xlu0 %v1121, 112
        %v1175 = vpop.permute.xlu0 %1174
        %1176 = vrot.lane.b32.xlu0 %v1122, 112
        %v1177 = vpop.permute.xlu0 %1176
        %1178 = vrot.lane.b32.xlu0 %v1123, 112
        %v1179 = vpop.permute.xlu0 %1178
        %1180 = vrot.lane.b32.xlu0 %v1124, 112
        %v1181 = vpop.permute.xlu0 %1180
        %1182 = vrot.lane.b32.xlu0 %v1125, 112
        %v1183 = vpop.permute.xlu0 %1182
        %1184 = vrot.lane.b32.xlu0 %v1126, 112
        %v1185 = vpop.permute.xlu0 %1184
        %1186 = vrot.lane.b32.xlu0 %v1127, 112
        %v1187 = vpop.permute.xlu0 %1186
        %vm1208 = vcmask 1048448
        %1209 = vst.msk [vmem:[#allocation2] sm:$0xff] %vm1208, %v1149
        %vm1210 = vcmask 1042304
        %1211 = vst.msk [vmem:[#allocation2 + $0x10] sm:$0x3] %vm1210, %v1151
        %1212 = vst.msk [vmem:[#allocation2 + $0x20] sm:$0xff] %vm1208, %v1153
        %1213 = vst.msk [vmem:[#allocation2 + $0x30] sm:$0x3] %vm1210, %v1155
        %1214 = vst.msk [vmem:[#allocation2 + $0x40] sm:$0xff] %vm1208, %v1157
        %1215 = vst.msk [vmem:[#allocation2 + $0x50] sm:$0x3] %vm1210, %v1159
        %1216 = vst.msk [vmem:[#allocation2 + $0x60] sm:$0xff] %vm1208, %v1161
        %1217 = vst.msk [vmem:[#allocation2 + $0x70] sm:$0x3] %vm1210, %v1163
        %1218 = vst.msk [vmem:[#allocation2 + $0x80] sm:$0xff] %vm1208, %v1165
        %1219 = vst.msk [vmem:[#allocation2 + $0x90] sm:$0x3] %vm1210, %v1167
        %1220 = vst.msk [vmem:[#allocation2 + $0xa0] sm:$0xff] %vm1208, %v1169
        %1221 = vst.msk [vmem:[#allocation2 + $0xb0] sm:$0x3] %vm1210, %v1171
        %1222 = vst.msk [vmem:[#allocation2 + $0xc0] sm:$0xff] %vm1208, %v1173
        %1223 = vst.msk [vmem:[#allocation2 + $0xd0] sm:$0x3] %vm1210, %v1175
        %1224 = vst.msk [vmem:[#allocation2 + $0xe0] sm:$0xff] %vm1208, %v1177
        %1225 = vst.msk [vmem:[#allocation2 + $0xf0] sm:$0x3] %vm1210, %v1179
        %1226 = vst.msk [vmem:[#allocation2 + $0x100] sm:$0xff] %vm1208, %v1181
        %1227 = vst.msk [vmem:[#allocation2 + $0x110] sm:$0x3] %vm1210, %v1183
        %1228 = vst.msk [vmem:[#allocation2 + $0x120] sm:$0xff] %vm1208, %v1185
        %1229 = vst.msk [vmem:[#allocation2 + $0x130] sm:$0x3] %vm1210, %v1187
        %s1230 = scalar_lea.vmem %s329, 64
        %v1231 = vld [vmem:[%s1230] sm:$0xff]
        %v1232 = vld [vmem:[%s1230 + $0x8] sm:$0x3]
        %v1233 = vld [vmem:[%s1230 + $0x40] sm:$0xff]
        %v1234 = vld [vmem:[%s1230 + $0x48] sm:$0x3]
        %v1235 = vld [vmem:[%s1230 + $0x80] sm:$0xff]
        %v1236 = vld [vmem:[%s1230 + $0x88] sm:$0x3]
        %v1237 = vld [vmem:[%s1230 + $0xc0] sm:$0xff]
        %v1238 = vld [vmem:[%s1230 + $0xc8] sm:$0x3]
        %v1239 = vld [vmem:[%s1230 + $0x100] sm:$0xff]
        %v1240 = vld [vmem:[%s1230 + $0x108] sm:$0x3]
        %v1241 = vld [vmem:[%s1230 + $0x140] sm:$0xff]
        %v1242 = vld [vmem:[%s1230 + $0x148] sm:$0x3]
        %v1243 = vld [vmem:[%s1230 + $0x180] sm:$0xff]
        %v1244 = vld [vmem:[%s1230 + $0x188] sm:$0x3]
        %v1245 = vld [vmem:[%s1230 + $0x1c0] sm:$0xff]
        %v1246 = vld [vmem:[%s1230 + $0x1c8] sm:$0x3]
        %v1247 = vld [vmem:[%s1230 + $0x200] sm:$0xff]
        %v1248 = vld [vmem:[%s1230 + $0x208] sm:$0x3]
        %v1249 = vld [vmem:[%s1230 + $0x240] sm:$0xff]
        %v1250 = vld [vmem:[%s1230 + $0x248] sm:$0x3]
        %1251 = vst.msk [vmem:[#allocation2 + $0x8] sm:$0xff] %vm351, %v1231
        %1252 = vst.msk [vmem:[#allocation2 + $0x18] sm:$0x3] %vm353, %v1232
        %1253 = vst.msk [vmem:[#allocation2 + $0x28] sm:$0xff] %vm351, %v1233
        %1254 = vst.msk [vmem:[#allocation2 + $0x38] sm:$0x3] %vm353, %v1234
        %1255 = vst.msk [vmem:[#allocation2 + $0x48] sm:$0xff] %vm351, %v1235
        %1256 = vst.msk [vmem:[#allocation2 + $0x58] sm:$0x3] %vm353, %v1236
        %1257 = vst.msk [vmem:[#allocation2 + $0x68] sm:$0xff] %vm351, %v1237
        %1258 = vst.msk [vmem:[#allocation2 + $0x78] sm:$0x3] %vm353, %v1238
        %1259 = vst.msk [vmem:[#allocation2 + $0x88] sm:$0xff] %vm351, %v1239
        %1260 = vst.msk [vmem:[#allocation2 + $0x98] sm:$0x3] %vm353, %v1240
        %1261 = vst.msk [vmem:[#allocation2 + $0xa8] sm:$0xff] %vm351, %v1241
        %1262 = vst.msk [vmem:[#allocation2 + $0xb8] sm:$0x3] %vm353, %v1242
        %1263 = vst.msk [vmem:[#allocation2 + $0xc8] sm:$0xff] %vm351, %v1243
        %1264 = vst.msk [vmem:[#allocation2 + $0xd8] sm:$0x3] %vm353, %v1244
        %1265 = vst.msk [vmem:[#allocation2 + $0xe8] sm:$0xff] %vm351, %v1245
        %1266 = vst.msk [vmem:[#allocation2 + $0xf8] sm:$0x3] %vm353, %v1246
        %1267 = vst.msk [vmem:[#allocation2 + $0x108] sm:$0xff] %vm351, %v1247
        %1268 = vst.msk [vmem:[#allocation2 + $0x118] sm:$0x3] %vm353, %v1248
        %1269 = vst.msk [vmem:[#allocation2 + $0x128] sm:$0xff] %vm351, %v1249
        %1270 = vst.msk [vmem:[#allocation2 + $0x138] sm:$0x3] %vm353, %v1250
        %v1271 = vld [vmem:[%s1230 + $0x1] sm:$0xff]
        %v1272 = vld [vmem:[%s1230 + $0x9] sm:$0x3]
        %v1273 = vld [vmem:[%s1230 + $0x41] sm:$0xff]
        %v1274 = vld [vmem:[%s1230 + $0x49] sm:$0x3]
        %v1275 = vld [vmem:[%s1230 + $0x81] sm:$0xff]
        %v1276 = vld [vmem:[%s1230 + $0x89] sm:$0x3]
        %v1277 = vld [vmem:[%s1230 + $0xc1] sm:$0xff]
        %v1278 = vld [vmem:[%s1230 + $0xc9] sm:$0x3]
        %v1279 = vld [vmem:[%s1230 + $0x101] sm:$0xff]
        %v1280 = vld [vmem:[%s1230 + $0x109] sm:$0x3]
        %v1281 = vld [vmem:[%s1230 + $0x141] sm:$0xff]
        %v1282 = vld [vmem:[%s1230 + $0x149] sm:$0x3]
        %v1283 = vld [vmem:[%s1230 + $0x181] sm:$0xff]
        %v1284 = vld [vmem:[%s1230 + $0x189] sm:$0x3]
        %v1285 = vld [vmem:[%s1230 + $0x1c1] sm:$0xff]
        %v1286 = vld [vmem:[%s1230 + $0x1c9] sm:$0x3]
        %v1287 = vld [vmem:[%s1230 + $0x201] sm:$0xff]
        %v1288 = vld [vmem:[%s1230 + $0x209] sm:$0x3]
        %v1289 = vld [vmem:[%s1230 + $0x241] sm:$0xff]
        %v1290 = vld [vmem:[%s1230 + $0x249] sm:$0x3]
        %1311 = vrot.lane.b32.xlu0 %v1271, 16
        %v1312 = vpop.permute.xlu0 %1311
        %1313 = vrot.lane.b32.xlu0 %v1272, 16
        %v1314 = vpop.permute.xlu0 %1313
        %1315 = vrot.lane.b32.xlu0 %v1273, 16
        %v1316 = vpop.permute.xlu0 %1315
        %1317 = vrot.lane.b32.xlu0 %v1274, 16
        %v1318 = vpop.permute.xlu0 %1317
        %1319 = vrot.lane.b32.xlu0 %v1275, 16
        %v1320 = vpop.permute.xlu0 %1319
        %1321 = vrot.lane.b32.xlu0 %v1276, 16
        %v1322 = vpop.permute.xlu0 %1321
        %1323 = vrot.lane.b32.xlu0 %v1277, 16
        %v1324 = vpop.permute.xlu0 %1323
        %1325 = vrot.lane.b32.xlu0 %v1278, 16
        %v1326 = vpop.permute.xlu0 %1325
        %1327 = vrot.lane.b32.xlu0 %v1279, 16
        %v1328 = vpop.permute.xlu0 %1327
        %1329 = vrot.lane.b32.xlu0 %v1280, 16
        %v1330 = vpop.permute.xlu0 %1329
        %1331 = vrot.lane.b32.xlu0 %v1281, 16
        %v1332 = vpop.permute.xlu0 %1331
        %1333 = vrot.lane.b32.xlu0 %v1282, 16
        %v1334 = vpop.permute.xlu0 %1333
        %1335 = vrot.lane.b32.xlu0 %v1283, 16
        %v1336 = vpop.permute.xlu0 %1335
        %1337 = vrot.lane.b32.xlu0 %v1284, 16
        %v1338 = vpop.permute.xlu0 %1337
        %1339 = vrot.lane.b32.xlu0 %v1285, 16
        %v1340 = vpop.permute.xlu0 %1339
        %1341 = vrot.lane.b32.xlu0 %v1286, 16
        %v1342 = vpop.permute.xlu0 %1341
        %1343 = vrot.lane.b32.xlu0 %v1287, 16
        %v1344 = vpop.permute.xlu0 %1343
        %1345 = vrot.lane.b32.xlu0 %v1288, 16
        %v1346 = vpop.permute.xlu0 %1345
        %1347 = vrot.lane.b32.xlu0 %v1289, 16
        %v1348 = vpop.permute.xlu0 %1347
        %1349 = vrot.lane.b32.xlu0 %v1290, 16
        %v1350 = vpop.permute.xlu0 %1349
        %1371 = vst.msk [vmem:[#allocation2 + $0x8] sm:$0xff] %vm473, %v1312
        %1372 = vst.msk [vmem:[#allocation2 + $0x18] sm:$0x3] %vm475, %v1314
        %1373 = vst.msk [vmem:[#allocation2 + $0x28] sm:$0xff] %vm473, %v1316
        %1374 = vst.msk [vmem:[#allocation2 + $0x38] sm:$0x3] %vm475, %v1318
        %1375 = vst.msk [vmem:[#allocation2 + $0x48] sm:$0xff] %vm473, %v1320
        %1376 = vst.msk [vmem:[#allocation2 + $0x58] sm:$0x3] %vm475, %v1322
        %1377 = vst.msk [vmem:[#allocation2 + $0x68] sm:$0xff] %vm473, %v1324
        %1378 = vst.msk [vmem:[#allocation2 + $0x78] sm:$0x3] %vm475, %v1326
        %1379 = vst.msk [vmem:[#allocation2 + $0x88] sm:$0xff] %vm473, %v1328
        %1380 = vst.msk [vmem:[#allocation2 + $0x98] sm:$0x3] %vm475, %v1330
        %1381 = vst.msk [vmem:[#allocation2 + $0xa8] sm:$0xff] %vm473, %v1332
        %1382 = vst.msk [vmem:[#allocation2 + $0xb8] sm:$0x3] %vm475, %v1334
        %1383 = vst.msk [vmem:[#allocation2 + $0xc8] sm:$0xff] %vm473, %v1336
        %1384 = vst.msk [vmem:[#allocation2 + $0xd8] sm:$0x3] %vm475, %v1338
        %1385 = vst.msk [vmem:[#allocation2 + $0xe8] sm:$0xff] %vm473, %v1340
        %1386 = vst.msk [vmem:[#allocation2 + $0xf8] sm:$0x3] %vm475, %v1342
        %1387 = vst.msk [vmem:[#allocation2 + $0x108] sm:$0xff] %vm473, %v1344
        %1388 = vst.msk [vmem:[#allocation2 + $0x118] sm:$0x3] %vm475, %v1346
        %1389 = vst.msk [vmem:[#allocation2 + $0x128] sm:$0xff] %vm473, %v1348
        %1390 = vst.msk [vmem:[#allocation2 + $0x138] sm:$0x3] %vm475, %v1350
        %s1391 = scalar_lea.vmem %s329, 80
        %v1392 = vld [vmem:[%s1391] sm:$0xff]
        %v1393 = vld [vmem:[%s1391 + $0x8] sm:$0x3]
        %v1394 = vld [vmem:[%s1391 + $0x40] sm:$0xff]
        %v1395 = vld [vmem:[%s1391 + $0x48] sm:$0x3]
        %v1396 = vld [vmem:[%s1391 + $0x80] sm:$0xff]
        %v1397 = vld [vmem:[%s1391 + $0x88] sm:$0x3]
        %v1398 = vld [vmem:[%s1391 + $0xc0] sm:$0xff]
        %v1399 = vld [vmem:[%s1391 + $0xc8] sm:$0x3]
        %v1400 = vld [vmem:[%s1391 + $0x100] sm:$0xff]
        %v1401 = vld [vmem:[%s1391 + $0x108] sm:$0x3]
        %v1402 = vld [vmem:[%s1391 + $0x140] sm:$0xff]
        %v1403 = vld [vmem:[%s1391 + $0x148] sm:$0x3]
        %v1404 = vld [vmem:[%s1391 + $0x180] sm:$0xff]
        %v1405 = vld [vmem:[%s1391 + $0x188] sm:$0x3]
        %v1406 = vld [vmem:[%s1391 + $0x1c0] sm:$0xff]
        %v1407 = vld [vmem:[%s1391 + $0x1c8] sm:$0x3]
        %v1408 = vld [vmem:[%s1391 + $0x200] sm:$0xff]
        %v1409 = vld [vmem:[%s1391 + $0x208] sm:$0x3]
        %v1410 = vld [vmem:[%s1391 + $0x240] sm:$0xff]
        %v1411 = vld [vmem:[%s1391 + $0x248] sm:$0x3]
        %1432 = vrot.lane.b32.xlu0 %v1392, 32
        %v1433 = vpop.permute.xlu0 %1432
        %1434 = vrot.lane.b32.xlu0 %v1393, 32
        %v1435 = vpop.permute.xlu0 %1434
        %1436 = vrot.lane.b32.xlu0 %v1394, 32
        %v1437 = vpop.permute.xlu0 %1436
        %1438 = vrot.lane.b32.xlu0 %v1395, 32
        %v1439 = vpop.permute.xlu0 %1438
        %1440 = vrot.lane.b32.xlu0 %v1396, 32
        %v1441 = vpop.permute.xlu0 %1440
        %1442 = vrot.lane.b32.xlu0 %v1397, 32
        %v1443 = vpop.permute.xlu0 %1442
        %1444 = vrot.lane.b32.xlu0 %v1398, 32
        %v1445 = vpop.permute.xlu0 %1444
        %1446 = vrot.lane.b32.xlu0 %v1399, 32
        %v1447 = vpop.permute.xlu0 %1446
        %1448 = vrot.lane.b32.xlu0 %v1400, 32
        %v1449 = vpop.permute.xlu0 %1448
        %1450 = vrot.lane.b32.xlu0 %v1401, 32
        %v1451 = vpop.permute.xlu0 %1450
        %1452 = vrot.lane.b32.xlu0 %v1402, 32
        %v1453 = vpop.permute.xlu0 %1452
        %1454 = vrot.lane.b32.xlu0 %v1403, 32
        %v1455 = vpop.permute.xlu0 %1454
        %1456 = vrot.lane.b32.xlu0 %v1404, 32
        %v1457 = vpop.permute.xlu0 %1456
        %1458 = vrot.lane.b32.xlu0 %v1405, 32
        %v1459 = vpop.permute.xlu0 %1458
        %1460 = vrot.lane.b32.xlu0 %v1406, 32
        %v1461 = vpop.permute.xlu0 %1460
        %1462 = vrot.lane.b32.xlu0 %v1407, 32
        %v1463 = vpop.permute.xlu0 %1462
        %1464 = vrot.lane.b32.xlu0 %v1408, 32
        %v1465 = vpop.permute.xlu0 %1464
        %1466 = vrot.lane.b32.xlu0 %v1409, 32
        %v1467 = vpop.permute.xlu0 %1466
        %1468 = vrot.lane.b32.xlu0 %v1410, 32
        %v1469 = vpop.permute.xlu0 %1468
        %1470 = vrot.lane.b32.xlu0 %v1411, 32
        %v1471 = vpop.permute.xlu0 %1470
        %1492 = vst.msk [vmem:[#allocation2 + $0x8] sm:$0xff] %vm596, %v1433
        %1493 = vst.msk [vmem:[#allocation2 + $0x18] sm:$0x3] %vm598, %v1435
        %1494 = vst.msk [vmem:[#allocation2 + $0x28] sm:$0xff] %vm596, %v1437
        %1495 = vst.msk [vmem:[#allocation2 + $0x38] sm:$0x3] %vm598, %v1439
        %1496 = vst.msk [vmem:[#allocation2 + $0x48] sm:$0xff] %vm596, %v1441
        %1497 = vst.msk [vmem:[#allocation2 + $0x58] sm:$0x3] %vm598, %v1443
        %1498 = vst.msk [vmem:[#allocation2 + $0x68] sm:$0xff] %vm596, %v1445
        %1499 = vst.msk [vmem:[#allocation2 + $0x78] sm:$0x3] %vm598, %v1447
        %1500 = vst.msk [vmem:[#allocation2 + $0x88] sm:$0xff] %vm596, %v1449
        %1501 = vst.msk [vmem:[#allocation2 + $0x98] sm:$0x3] %vm598, %v1451
        %1502 = vst.msk [vmem:[#allocation2 + $0xa8] sm:$0xff] %vm596, %v1453
        %1503 = vst.msk [vmem:[#allocation2 + $0xb8] sm:$0x3] %vm598, %v1455
        %1504 = vst.msk [vmem:[#allocation2 + $0xc8] sm:$0xff] %vm596, %v1457
        %1505 = vst.msk [vmem:[#allocation2 + $0xd8] sm:$0x3] %vm598, %v1459
        %1506 = vst.msk [vmem:[#allocation2 + $0xe8] sm:$0xff] %vm596, %v1461
        %1507 = vst.msk [vmem:[#allocation2 + $0xf8] sm:$0x3] %vm598, %v1463
        %1508 = vst.msk [vmem:[#allocation2 + $0x108] sm:$0xff] %vm596, %v1465
        %1509 = vst.msk [vmem:[#allocation2 + $0x118] sm:$0x3] %vm598, %v1467
        %1510 = vst.msk [vmem:[#allocation2 + $0x128] sm:$0xff] %vm596, %v1469
        %1511 = vst.msk [vmem:[#allocation2 + $0x138] sm:$0x3] %vm598, %v1471
        %v1512 = vld [vmem:[%s1391 + $0x1] sm:$0xff]
        %v1513 = vld [vmem:[%s1391 + $0x9] sm:$0x3]
        %v1514 = vld [vmem:[%s1391 + $0x41] sm:$0xff]
        %v1515 = vld [vmem:[%s1391 + $0x49] sm:$0x3]
        %v1516 = vld [vmem:[%s1391 + $0x81] sm:$0xff]
        %v1517 = vld [vmem:[%s1391 + $0x89] sm:$0x3]
        %v1518 = vld [vmem:[%s1391 + $0xc1] sm:$0xff]
        %v1519 = vld [vmem:[%s1391 + $0xc9] sm:$0x3]
        %v1520 = vld [vmem:[%s1391 + $0x101] sm:$0xff]
        %v1521 = vld [vmem:[%s1391 + $0x109] sm:$0x3]
        %v1522 = vld [vmem:[%s1391 + $0x141] sm:$0xff]
        %v1523 = vld [vmem:[%s1391 + $0x149] sm:$0x3]
        %v1524 = vld [vmem:[%s1391 + $0x181] sm:$0xff]
        %v1525 = vld [vmem:[%s1391 + $0x189] sm:$0x3]
        %v1526 = vld [vmem:[%s1391 + $0x1c1] sm:$0xff]
        %v1527 = vld [vmem:[%s1391 + $0x1c9] sm:$0x3]
        %v1528 = vld [vmem:[%s1391 + $0x201] sm:$0xff]
        %v1529 = vld [vmem:[%s1391 + $0x209] sm:$0x3]
        %v1530 = vld [vmem:[%s1391 + $0x241] sm:$0xff]
        %v1531 = vld [vmem:[%s1391 + $0x249] sm:$0x3]
        %1552 = vrot.lane.b32.xlu0 %v1512, 48
        %v1553 = vpop.permute.xlu0 %1552
        %1554 = vrot.lane.b32.xlu0 %v1513, 48
        %v1555 = vpop.permute.xlu0 %1554
        %1556 = vrot.lane.b32.xlu0 %v1514, 48
        %v1557 = vpop.permute.xlu0 %1556
        %1558 = vrot.lane.b32.xlu0 %v1515, 48
        %v1559 = vpop.permute.xlu0 %1558
        %1560 = vrot.lane.b32.xlu0 %v1516, 48
        %v1561 = vpop.permute.xlu0 %1560
        %1562 = vrot.lane.b32.xlu0 %v1517, 48
        %v1563 = vpop.permute.xlu0 %1562
        %1564 = vrot.lane.b32.xlu0 %v1518, 48
        %v1565 = vpop.permute.xlu0 %1564
        %1566 = vrot.lane.b32.xlu0 %v1519, 48
        %v1567 = vpop.permute.xlu0 %1566
        %1568 = vrot.lane.b32.xlu0 %v1520, 48
        %v1569 = vpop.permute.xlu0 %1568
        %1570 = vrot.lane.b32.xlu0 %v1521, 48
        %v1571 = vpop.permute.xlu0 %1570
        %1572 = vrot.lane.b32.xlu0 %v1522, 48
        %v1573 = vpop.permute.xlu0 %1572
        %1574 = vrot.lane.b32.xlu0 %v1523, 48
        %v1575 = vpop.permute.xlu0 %1574
        %1576 = vrot.lane.b32.xlu0 %v1524, 48
        %v1577 = vpop.permute.xlu0 %1576
        %1578 = vrot.lane.b32.xlu0 %v1525, 48
        %v1579 = vpop.permute.xlu0 %1578
        %1580 = vrot.lane.b32.xlu0 %v1526, 48
        %v1581 = vpop.permute.xlu0 %1580
        %1582 = vrot.lane.b32.xlu0 %v1527, 48
        %v1583 = vpop.permute.xlu0 %1582
        %1584 = vrot.lane.b32.xlu0 %v1528, 48
        %v1585 = vpop.permute.xlu0 %1584
        %1586 = vrot.lane.b32.xlu0 %v1529, 48
        %v1587 = vpop.permute.xlu0 %1586
        %1588 = vrot.lane.b32.xlu0 %v1530, 48
        %v1589 = vpop.permute.xlu0 %1588
        %1590 = vrot.lane.b32.xlu0 %v1531, 48
        %v1591 = vpop.permute.xlu0 %1590
        %1612 = vst.msk [vmem:[#allocation2 + $0x8] sm:$0xff] %vm718, %v1553
        %1613 = vst.msk [vmem:[#allocation2 + $0x18] sm:$0x3] %vm720, %v1555
        %1614 = vst.msk [vmem:[#allocation2 + $0x28] sm:$0xff] %vm718, %v1557
        %1615 = vst.msk [vmem:[#allocation2 + $0x38] sm:$0x3] %vm720, %v1559
        %1616 = vst.msk [vmem:[#allocation2 + $0x48] sm:$0xff] %vm718, %v1561
        %1617 = vst.msk [vmem:[#allocation2 + $0x58] sm:$0x3] %vm720, %v1563
        %1618 = vst.msk [vmem:[#allocation2 + $0x68] sm:$0xff] %vm718, %v1565
        %1619 = vst.msk [vmem:[#allocation2 + $0x78] sm:$0x3] %vm720, %v1567
        %1620 = vst.msk [vmem:[#allocation2 + $0x88] sm:$0xff] %vm718, %v1569
        %1621 = vst.msk [vmem:[#allocation2 + $0x98] sm:$0x3] %vm720, %v1571
        %1622 = vst.msk [vmem:[#allocation2 + $0xa8] sm:$0xff] %vm718, %v1573
        %1623 = vst.msk [vmem:[#allocation2 + $0xb8] sm:$0x3] %vm720, %v1575
        %1624 = vst.msk [vmem:[#allocation2 + $0xc8] sm:$0xff] %vm718, %v1577
        %1625 = vst.msk [vmem:[#allocation2 + $0xd8] sm:$0x3] %vm720, %v1579
        %1626 = vst.msk [vmem:[#allocation2 + $0xe8] sm:$0xff] %vm718, %v1581
        %1627 = vst.msk [vmem:[#allocation2 + $0xf8] sm:$0x3] %vm720, %v1583
        %1628 = vst.msk [vmem:[#allocation2 + $0x108] sm:$0xff] %vm718, %v1585
        %1629 = vst.msk [vmem:[#allocation2 + $0x118] sm:$0x3] %vm720, %v1587
        %1630 = vst.msk [vmem:[#allocation2 + $0x128] sm:$0xff] %vm718, %v1589
        %1631 = vst.msk [vmem:[#allocation2 + $0x138] sm:$0x3] %vm720, %v1591
        %s1632 = scalar_lea.vmem %s329, 96
        %v1633 = vld [vmem:[%s1632] sm:$0xff]
        %v1634 = vld [vmem:[%s1632 + $0x8] sm:$0x3]
        %v1635 = vld [vmem:[%s1632 + $0x40] sm:$0xff]
        %v1636 = vld [vmem:[%s1632 + $0x48] sm:$0x3]
        %v1637 = vld [vmem:[%s1632 + $0x80] sm:$0xff]
        %v1638 = vld [vmem:[%s1632 + $0x88] sm:$0x3]
        %v1639 = vld [vmem:[%s1632 + $0xc0] sm:$0xff]
        %v1640 = vld [vmem:[%s1632 + $0xc8] sm:$0x3]
        %v1641 = vld [vmem:[%s1632 + $0x100] sm:$0xff]
        %v1642 = vld [vmem:[%s1632 + $0x108] sm:$0x3]
        %v1643 = vld [vmem:[%s1632 + $0x140] sm:$0xff]
        %v1644 = vld [vmem:[%s1632 + $0x148] sm:$0x3]
        %v1645 = vld [vmem:[%s1632 + $0x180] sm:$0xff]
        %v1646 = vld [vmem:[%s1632 + $0x188] sm:$0x3]
        %v1647 = vld [vmem:[%s1632 + $0x1c0] sm:$0xff]
        %v1648 = vld [vmem:[%s1632 + $0x1c8] sm:$0x3]
        %v1649 = vld [vmem:[%s1632 + $0x200] sm:$0xff]
        %v1650 = vld [vmem:[%s1632 + $0x208] sm:$0x3]
        %v1651 = vld [vmem:[%s1632 + $0x240] sm:$0xff]
        %v1652 = vld [vmem:[%s1632 + $0x248] sm:$0x3]
        %1673 = vrot.lane.b32.xlu0 %v1633, 64
        %v1674 = vpop.permute.xlu0 %1673
        %1675 = vrot.lane.b32.xlu0 %v1634, 64
        %v1676 = vpop.permute.xlu0 %1675
        %1677 = vrot.lane.b32.xlu0 %v1635, 64
        %v1678 = vpop.permute.xlu0 %1677
        %1679 = vrot.lane.b32.xlu0 %v1636, 64
        %v1680 = vpop.permute.xlu0 %1679
        %1681 = vrot.lane.b32.xlu0 %v1637, 64
        %v1682 = vpop.permute.xlu0 %1681
        %1683 = vrot.lane.b32.xlu0 %v1638, 64
        %v1684 = vpop.permute.xlu0 %1683
        %1685 = vrot.lane.b32.xlu0 %v1639, 64
        %v1686 = vpop.permute.xlu0 %1685
        %1687 = vrot.lane.b32.xlu0 %v1640, 64
        %v1688 = vpop.permute.xlu0 %1687
        %1689 = vrot.lane.b32.xlu0 %v1641, 64
        %v1690 = vpop.permute.xlu0 %1689
        %1691 = vrot.lane.b32.xlu0 %v1642, 64
        %v1692 = vpop.permute.xlu0 %1691
        %1693 = vrot.lane.b32.xlu0 %v1643, 64
        %v1694 = vpop.permute.xlu0 %1693
        %1695 = vrot.lane.b32.xlu0 %v1644, 64
        %v1696 = vpop.permute.xlu0 %1695
        %1697 = vrot.lane.b32.xlu0 %v1645, 64
        %v1698 = vpop.permute.xlu0 %1697
        %1699 = vrot.lane.b32.xlu0 %v1646, 64
        %v1700 = vpop.permute.xlu0 %1699
        %1701 = vrot.lane.b32.xlu0 %v1647, 64
        %v1702 = vpop.permute.xlu0 %1701
        %1703 = vrot.lane.b32.xlu0 %v1648, 64
        %v1704 = vpop.permute.xlu0 %1703
        %1705 = vrot.lane.b32.xlu0 %v1649, 64
        %v1706 = vpop.permute.xlu0 %1705
        %1707 = vrot.lane.b32.xlu0 %v1650, 64
        %v1708 = vpop.permute.xlu0 %1707
        %1709 = vrot.lane.b32.xlu0 %v1651, 64
        %v1710 = vpop.permute.xlu0 %1709
        %1711 = vrot.lane.b32.xlu0 %v1652, 64
        %v1712 = vpop.permute.xlu0 %1711
        %1733 = vst.msk [vmem:[#allocation2 + $0x8] sm:$0xff] %vm841, %v1674
        %1734 = vst.msk [vmem:[#allocation2 + $0x18] sm:$0x3] %vm843, %v1676
        %1735 = vst.msk [vmem:[#allocation2 + $0x28] sm:$0xff] %vm841, %v1678
        %1736 = vst.msk [vmem:[#allocation2 + $0x38] sm:$0x3] %vm843, %v1680
        %1737 = vst.msk [vmem:[#allocation2 + $0x48] sm:$0xff] %vm841, %v1682
        %1738 = vst.msk [vmem:[#allocation2 + $0x58] sm:$0x3] %vm843, %v1684
        %1739 = vst.msk [vmem:[#allocation2 + $0x68] sm:$0xff] %vm841, %v1686
        %1740 = vst.msk [vmem:[#allocation2 + $0x78] sm:$0x3] %vm843, %v1688
        %1741 = vst.msk [vmem:[#allocation2 + $0x88] sm:$0xff] %vm841, %v1690
        %1742 = vst.msk [vmem:[#allocation2 + $0x98] sm:$0x3] %vm843, %v1692
        %1743 = vst.msk [vmem:[#allocation2 + $0xa8] sm:$0xff] %vm841, %v1694
        %1744 = vst.msk [vmem:[#allocation2 + $0xb8] sm:$0x3] %vm843, %v1696
        %1745 = vst.msk [vmem:[#allocation2 + $0xc8] sm:$0xff] %vm841, %v1698
        %1746 = vst.msk [vmem:[#allocation2 + $0xd8] sm:$0x3] %vm843, %v1700
        %1747 = vst.msk [vmem:[#allocation2 + $0xe8] sm:$0xff] %vm841, %v1702
        %1748 = vst.msk [vmem:[#allocation2 + $0xf8] sm:$0x3] %vm843, %v1704
        %1749 = vst.msk [vmem:[#allocation2 + $0x108] sm:$0xff] %vm841, %v1706
        %1750 = vst.msk [vmem:[#allocation2 + $0x118] sm:$0x3] %vm843, %v1708
        %1751 = vst.msk [vmem:[#allocation2 + $0x128] sm:$0xff] %vm841, %v1710
        %1752 = vst.msk [vmem:[#allocation2 + $0x138] sm:$0x3] %vm843, %v1712
        %v1753 = vld [vmem:[%s1632 + $0x1] sm:$0xff]
        %v1754 = vld [vmem:[%s1632 + $0x9] sm:$0x3]
        %v1755 = vld [vmem:[%s1632 + $0x41] sm:$0xff]
        %v1756 = vld [vmem:[%s1632 + $0x49] sm:$0x3]
        %v1757 = vld [vmem:[%s1632 + $0x81] sm:$0xff]
        %v1758 = vld [vmem:[%s1632 + $0x89] sm:$0x3]
        %v1759 = vld [vmem:[%s1632 + $0xc1] sm:$0xff]
        %v1760 = vld [vmem:[%s1632 + $0xc9] sm:$0x3]
        %v1761 = vld [vmem:[%s1632 + $0x101] sm:$0xff]
        %v1762 = vld [vmem:[%s1632 + $0x109] sm:$0x3]
        %v1763 = vld [vmem:[%s1632 + $0x141] sm:$0xff]
        %v1764 = vld [vmem:[%s1632 + $0x149] sm:$0x3]
        %v1765 = vld [vmem:[%s1632 + $0x181] sm:$0xff]
        %v1766 = vld [vmem:[%s1632 + $0x189] sm:$0x3]
        %v1767 = vld [vmem:[%s1632 + $0x1c1] sm:$0xff]
        %v1768 = vld [vmem:[%s1632 + $0x1c9] sm:$0x3]
        %v1769 = vld [vmem:[%s1632 + $0x201] sm:$0xff]
        %v1770 = vld [vmem:[%s1632 + $0x209] sm:$0x3]
        %v1771 = vld [vmem:[%s1632 + $0x241] sm:$0xff]
        %v1772 = vld [vmem:[%s1632 + $0x249] sm:$0x3]
        %1793 = vrot.lane.b32.xlu0 %v1753, 80
        %v1794 = vpop.permute.xlu0 %1793
        %1795 = vrot.lane.b32.xlu0 %v1754, 80
        %v1796 = vpop.permute.xlu0 %1795
        %1797 = vrot.lane.b32.xlu0 %v1755, 80
        %v1798 = vpop.permute.xlu0 %1797
        %1799 = vrot.lane.b32.xlu0 %v1756, 80
        %v1800 = vpop.permute.xlu0 %1799
        %1801 = vrot.lane.b32.xlu0 %v1757, 80
        %v1802 = vpop.permute.xlu0 %1801
        %1803 = vrot.lane.b32.xlu0 %v1758, 80
        %v1804 = vpop.permute.xlu0 %1803
        %1805 = vrot.lane.b32.xlu0 %v1759, 80
        %v1806 = vpop.permute.xlu0 %1805
        %1807 = vrot.lane.b32.xlu0 %v1760, 80
        %v1808 = vpop.permute.xlu0 %1807
        %1809 = vrot.lane.b32.xlu0 %v1761, 80
        %v1810 = vpop.permute.xlu0 %1809
        %1811 = vrot.lane.b32.xlu0 %v1762, 80
        %v1812 = vpop.permute.xlu0 %1811
        %1813 = vrot.lane.b32.xlu0 %v1763, 80
        %v1814 = vpop.permute.xlu0 %1813
        %1815 = vrot.lane.b32.xlu0 %v1764, 80
        %v1816 = vpop.permute.xlu0 %1815
        %1817 = vrot.lane.b32.xlu0 %v1765, 80
        %v1818 = vpop.permute.xlu0 %1817
        %1819 = vrot.lane.b32.xlu0 %v1766, 80
        %v1820 = vpop.permute.xlu0 %1819
        %1821 = vrot.lane.b32.xlu0 %v1767, 80
        %v1822 = vpop.permute.xlu0 %1821
        %1823 = vrot.lane.b32.xlu0 %v1768, 80
        %v1824 = vpop.permute.xlu0 %1823
        %1825 = vrot.lane.b32.xlu0 %v1769, 80
        %v1826 = vpop.permute.xlu0 %1825
        %1827 = vrot.lane.b32.xlu0 %v1770, 80
        %v1828 = vpop.permute.xlu0 %1827
        %1829 = vrot.lane.b32.xlu0 %v1771, 80
        %v1830 = vpop.permute.xlu0 %1829
        %1831 = vrot.lane.b32.xlu0 %v1772, 80
        %v1832 = vpop.permute.xlu0 %1831
        %1853 = vst.msk [vmem:[#allocation2 + $0x8] sm:$0xff] %vm963, %v1794
        %1854 = vst.msk [vmem:[#allocation2 + $0x18] sm:$0x3] %vm965, %v1796
        %1855 = vst.msk [vmem:[#allocation2 + $0x28] sm:$0xff] %vm963, %v1798
        %1856 = vst.msk [vmem:[#allocation2 + $0x38] sm:$0x3] %vm965, %v1800
        %1857 = vst.msk [vmem:[#allocation2 + $0x48] sm:$0xff] %vm963, %v1802
        %1858 = vst.msk [vmem:[#allocation2 + $0x58] sm:$0x3] %vm965, %v1804
        %1859 = vst.msk [vmem:[#allocation2 + $0x68] sm:$0xff] %vm963, %v1806
        %1860 = vst.msk [vmem:[#allocation2 + $0x78] sm:$0x3] %vm965, %v1808
        %1861 = vst.msk [vmem:[#allocation2 + $0x88] sm:$0xff] %vm963, %v1810
        %1862 = vst.msk [vmem:[#allocation2 + $0x98] sm:$0x3] %vm965, %v1812
        %1863 = vst.msk [vmem:[#allocation2 + $0xa8] sm:$0xff] %vm963, %v1814
        %1864 = vst.msk [vmem:[#allocation2 + $0xb8] sm:$0x3] %vm965, %v1816
        %1865 = vst.msk [vmem:[#allocation2 + $0xc8] sm:$0xff] %vm963, %v1818
        %1866 = vst.msk [vmem:[#allocation2 + $0xd8] sm:$0x3] %vm965, %v1820
        %1867 = vst.msk [vmem:[#allocation2 + $0xe8] sm:$0xff] %vm963, %v1822
        %1868 = vst.msk [vmem:[#allocation2 + $0xf8] sm:$0x3] %vm965, %v1824
        %1869 = vst.msk [vmem:[#allocation2 + $0x108] sm:$0xff] %vm963, %v1826
        %1870 = vst.msk [vmem:[#allocation2 + $0x118] sm:$0x3] %vm965, %v1828
        %1871 = vst.msk [vmem:[#allocation2 + $0x128] sm:$0xff] %vm963, %v1830
        %1872 = vst.msk [vmem:[#allocation2 + $0x138] sm:$0x3] %vm965, %v1832
        %s1873 = scalar_lea.vmem %s329, 112
        %v1874 = vld [vmem:[%s1873] sm:$0xff]
        %v1875 = vld [vmem:[%s1873 + $0x8] sm:$0x3]
        %v1876 = vld [vmem:[%s1873 + $0x40] sm:$0xff]
        %v1877 = vld [vmem:[%s1873 + $0x48] sm:$0x3]
        %v1878 = vld [vmem:[%s1873 + $0x80] sm:$0xff]
        %v1879 = vld [vmem:[%s1873 + $0x88] sm:$0x3]
        %v1880 = vld [vmem:[%s1873 + $0xc0] sm:$0xff]
        %v1881 = vld [vmem:[%s1873 + $0xc8] sm:$0x3]
        %v1882 = vld [vmem:[%s1873 + $0x100] sm:$0xff]
        %v1883 = vld [vmem:[%s1873 + $0x108] sm:$0x3]
        %v1884 = vld [vmem:[%s1873 + $0x140] sm:$0xff]
        %v1885 = vld [vmem:[%s1873 + $0x148] sm:$0x3]
        %v1886 = vld [vmem:[%s1873 + $0x180] sm:$0xff]
        %v1887 = vld [vmem:[%s1873 + $0x188] sm:$0x3]
        %v1888 = vld [vmem:[%s1873 + $0x1c0] sm:$0xff]
        %v1889 = vld [vmem:[%s1873 + $0x1c8] sm:$0x3]
        %v1890 = vld [vmem:[%s1873 + $0x200] sm:$0xff]
        %v1891 = vld [vmem:[%s1873 + $0x208] sm:$0x3]
        %v1892 = vld [vmem:[%s1873 + $0x240] sm:$0xff]
        %v1893 = vld [vmem:[%s1873 + $0x248] sm:$0x3]
        %1914 = vrot.lane.b32.xlu0 %v1874, 96
        %v1915 = vpop.permute.xlu0 %1914
        %1916 = vrot.lane.b32.xlu0 %v1875, 96
        %v1917 = vpop.permute.xlu0 %1916
        %1918 = vrot.lane.b32.xlu0 %v1876, 96
        %v1919 = vpop.permute.xlu0 %1918
        %1920 = vrot.lane.b32.xlu0 %v1877, 96
        %v1921 = vpop.permute.xlu0 %1920
        %1922 = vrot.lane.b32.xlu0 %v1878, 96
        %v1923 = vpop.permute.xlu0 %1922
        %1924 = vrot.lane.b32.xlu0 %v1879, 96
        %v1925 = vpop.permute.xlu0 %1924
        %1926 = vrot.lane.b32.xlu0 %v1880, 96
        %v1927 = vpop.permute.xlu0 %1926
        %1928 = vrot.lane.b32.xlu0 %v1881, 96
        %v1929 = vpop.permute.xlu0 %1928
        %1930 = vrot.lane.b32.xlu0 %v1882, 96
        %v1931 = vpop.permute.xlu0 %1930
        %1932 = vrot.lane.b32.xlu0 %v1883, 96
        %v1933 = vpop.permute.xlu0 %1932
        %1934 = vrot.lane.b32.xlu0 %v1884, 96
        %v1935 = vpop.permute.xlu0 %1934
        %1936 = vrot.lane.b32.xlu0 %v1885, 96
        %v1937 = vpop.permute.xlu0 %1936
        %1938 = vrot.lane.b32.xlu0 %v1886, 96
        %v1939 = vpop.permute.xlu0 %1938
        %1940 = vrot.lane.b32.xlu0 %v1887, 96
        %v1941 = vpop.permute.xlu0 %1940
        %1942 = vrot.lane.b32.xlu0 %v1888, 96
        %v1943 = vpop.permute.xlu0 %1942
        %1944 = vrot.lane.b32.xlu0 %v1889, 96
        %v1945 = vpop.permute.xlu0 %1944
        %1946 = vrot.lane.b32.xlu0 %v1890, 96
        %v1947 = vpop.permute.xlu0 %1946
        %1948 = vrot.lane.b32.xlu0 %v1891, 96
        %v1949 = vpop.permute.xlu0 %1948
        %1950 = vrot.lane.b32.xlu0 %v1892, 96
        %v1951 = vpop.permute.xlu0 %1950
        %1952 = vrot.lane.b32.xlu0 %v1893, 96
        %v1953 = vpop.permute.xlu0 %1952
        %1974 = vst.msk [vmem:[#allocation2 + $0x8] sm:$0xff] %vm1086, %v1915
        %1975 = vst.msk [vmem:[#allocation2 + $0x18] sm:$0x3] %vm1088, %v1917
        %1976 = vst.msk [vmem:[#allocation2 + $0x28] sm:$0xff] %vm1086, %v1919
        %1977 = vst.msk [vmem:[#allocation2 + $0x38] sm:$0x3] %vm1088, %v1921
        %1978 = vst.msk [vmem:[#allocation2 + $0x48] sm:$0xff] %vm1086, %v1923
        %1979 = vst.msk [vmem:[#allocation2 + $0x58] sm:$0x3] %vm1088, %v1925
        %1980 = vst.msk [vmem:[#allocation2 + $0x68] sm:$0xff] %vm1086, %v1927
        %1981 = vst.msk [vmem:[#allocation2 + $0x78] sm:$0x3] %vm1088, %v1929
        %1982 = vst.msk [vmem:[#allocation2 + $0x88] sm:$0xff] %vm1086, %v1931
        %1983 = vst.msk [vmem:[#allocation2 + $0x98] sm:$0x3] %vm1088, %v1933
        %1984 = vst.msk [vmem:[#allocation2 + $0xa8] sm:$0xff] %vm1086, %v1935
        %1985 = vst.msk [vmem:[#allocation2 + $0xb8] sm:$0x3] %vm1088, %v1937
        %1986 = vst.msk [vmem:[#allocation2 + $0xc8] sm:$0xff] %vm1086, %v1939
        %1987 = vst.msk [vmem:[#allocation2 + $0xd8] sm:$0x3] %vm1088, %v1941
        %1988 = vst.msk [vmem:[#allocation2 + $0xe8] sm:$0xff] %vm1086, %v1943
        %1989 = vst.msk [vmem:[#allocation2 + $0xf8] sm:$0x3] %vm1088, %v1945
        %1990 = vst.msk [vmem:[#allocation2 + $0x108] sm:$0xff] %vm1086, %v1947
        %1991 = vst.msk [vmem:[#allocation2 + $0x118] sm:$0x3] %vm1088, %v1949
        %1992 = vst.msk [vmem:[#allocation2 + $0x128] sm:$0xff] %vm1086, %v1951
        %1993 = vst.msk [vmem:[#allocation2 + $0x138] sm:$0x3] %vm1088, %v1953
        %v1994 = vld [vmem:[%s1873 + $0x1] sm:$0xff]
        %v1995 = vld [vmem:[%s1873 + $0x9] sm:$0x3]
        %v1996 = vld [vmem:[%s1873 + $0x41] sm:$0xff]
        %v1997 = vld [vmem:[%s1873 + $0x49] sm:$0x3]
        %v1998 = vld [vmem:[%s1873 + $0x81] sm:$0xff]
        %v1999 = vld [vmem:[%s1873 + $0x89] sm:$0x3]
        %v2000 = vld [vmem:[%s1873 + $0xc1] sm:$0xff]
        %v2001 = vld [vmem:[%s1873 + $0xc9] sm:$0x3]
        %v2002 = vld [vmem:[%s1873 + $0x101] sm:$0xff]
        %v2003 = vld [vmem:[%s1873 + $0x109] sm:$0x3]
        %v2004 = vld [vmem:[%s1873 + $0x141] sm:$0xff]
        %v2005 = vld [vmem:[%s1873 + $0x149] sm:$0x3]
        %v2006 = vld [vmem:[%s1873 + $0x181] sm:$0xff]
        %v2007 = vld [vmem:[%s1873 + $0x189] sm:$0x3]
        %v2008 = vld [vmem:[%s1873 + $0x1c1] sm:$0xff]
        %v2009 = vld [vmem:[%s1873 + $0x1c9] sm:$0x3]
        %v2010 = vld [vmem:[%s1873 + $0x201] sm:$0xff]
        %v2011 = vld [vmem:[%s1873 + $0x209] sm:$0x3]
        %v2012 = vld [vmem:[%s1873 + $0x241] sm:$0xff]
        %v2013 = vld [vmem:[%s1873 + $0x249] sm:$0x3]
        %2034 = vrot.lane.b32.xlu0 %v1994, 112
        %v2035 = vpop.permute.xlu0 %2034
        %2036 = vrot.lane.b32.xlu0 %v1995, 112
        %v2037 = vpop.permute.xlu0 %2036
        %2038 = vrot.lane.b32.xlu0 %v1996, 112
        %v2039 = vpop.permute.xlu0 %2038
        %2040 = vrot.lane.b32.xlu0 %v1997, 112
        %v2041 = vpop.permute.xlu0 %2040
        %2042 = vrot.lane.b32.xlu0 %v1998, 112
        %v2043 = vpop.permute.xlu0 %2042
        %2044 = vrot.lane.b32.xlu0 %v1999, 112
        %v2045 = vpop.permute.xlu0 %2044
        %2046 = vrot.lane.b32.xlu0 %v2000, 112
        %v2047 = vpop.permute.xlu0 %2046
        %2048 = vrot.lane.b32.xlu0 %v2001, 112
        %v2049 = vpop.permute.xlu0 %2048
        %2050 = vrot.lane.b32.xlu0 %v2002, 112
        %v2051 = vpop.permute.xlu0 %2050
        %2052 = vrot.lane.b32.xlu0 %v2003, 112
        %v2053 = vpop.permute.xlu0 %2052
        %2054 = vrot.lane.b32.xlu0 %v2004, 112
        %v2055 = vpop.permute.xlu0 %2054
        %2056 = vrot.lane.b32.xlu0 %v2005, 112
        %v2057 = vpop.permute.xlu0 %2056
        %2058 = vrot.lane.b32.xlu0 %v2006, 112
        %v2059 = vpop.permute.xlu0 %2058
        %2060 = vrot.lane.b32.xlu0 %v2007, 112
        %v2061 = vpop.permute.xlu0 %2060
        %2062 = vrot.lane.b32.xlu0 %v2008, 112
        %v2063 = vpop.permute.xlu0 %2062
        %2064 = vrot.lane.b32.xlu0 %v2009, 112
        %v2065 = vpop.permute.xlu0 %2064
        %2066 = vrot.lane.b32.xlu0 %v2010, 112
        %v2067 = vpop.permute.xlu0 %2066
        %2068 = vrot.lane.b32.xlu0 %v2011, 112
        %v2069 = vpop.permute.xlu0 %2068
        %2070 = vrot.lane.b32.xlu0 %v2012, 112
        %v2071 = vpop.permute.xlu0 %2070
        %2072 = vrot.lane.b32.xlu0 %v2013, 112
        %v2073 = vpop.permute.xlu0 %2072
        %2094 = vst.msk [vmem:[#allocation2 + $0x8] sm:$0xff] %vm1208, %v2035
        %2095 = vst.msk [vmem:[#allocation2 + $0x18] sm:$0x3] %vm1210, %v2037
        %2096 = vst.msk [vmem:[#allocation2 + $0x28] sm:$0xff] %vm1208, %v2039
        %2097 = vst.msk [vmem:[#allocation2 + $0x38] sm:$0x3] %vm1210, %v2041
        %2098 = vst.msk [vmem:[#allocation2 + $0x48] sm:$0xff] %vm1208, %v2043
        %2099 = vst.msk [vmem:[#allocation2 + $0x58] sm:$0x3] %vm1210, %v2045
        %2100 = vst.msk [vmem:[#allocation2 + $0x68] sm:$0xff] %vm1208, %v2047
        %2101 = vst.msk [vmem:[#allocation2 + $0x78] sm:$0x3] %vm1210, %v2049
        %2102 = vst.msk [vmem:[#allocation2 + $0x88] sm:$0xff] %vm1208, %v2051
        %2103 = vst.msk [vmem:[#allocation2 + $0x98] sm:$0x3] %vm1210, %v2053
        %2104 = vst.msk [vmem:[#allocation2 + $0xa8] sm:$0xff] %vm1208, %v2055
        %2105 = vst.msk [vmem:[#allocation2 + $0xb8] sm:$0x3] %vm1210, %v2057
        %2106 = vst.msk [vmem:[#allocation2 + $0xc8] sm:$0xff] %vm1208, %v2059
        %2107 = vst.msk [vmem:[#allocation2 + $0xd8] sm:$0x3] %vm1210, %v2061
        %2108 = vst.msk [vmem:[#allocation2 + $0xe8] sm:$0xff] %vm1208, %v2063
        %2109 = vst.msk [vmem:[#allocation2 + $0xf8] sm:$0x3] %vm1210, %v2065
        %2110 = vst.msk [vmem:[#allocation2 + $0x108] sm:$0xff] %vm1208, %v2067
        %2111 = vst.msk [vmem:[#allocation2 + $0x118] sm:$0x3] %vm1210, %v2069
        %2112 = vst.msk [vmem:[#allocation2 + $0x128] sm:$0xff] %vm1208, %v2071
        %2113 = vst.msk [vmem:[#allocation2 + $0x138] sm:$0x3] %vm1210, %v2073
        %v2114 = vld [vmem:[%s1] sm:$0xf]
        %v2115 = vld [vmem:[%s1 + $0x4] sm:$0xf]
        %v2116 = vld [vmem:[%s1 + $0x8] sm:$0xf]
        %v2117 = vld [vmem:[%s1 + $0xc] sm:$0xf]
        %v2118 = vld [vmem:[%s1 + $0x10] sm:$0xf]
        %v2119 = vld [vmem:[%s1 + $0x14] sm:$0xf]
        %v2120 = vld [vmem:[%s1 + $0x18] sm:$0xf]
        %v2121 = vld [vmem:[%s1 + $0x1c] sm:$0xf]
        %v2122 = vld [vmem:[%s1 + $0x20] sm:$0xf]
        %v2123 = vld [vmem:[%s1 + $0x24] sm:$0xf]
        %v2124 = vld [vmem:[%s1 + $0x28] sm:$0xf]
        %v2125 = vld [vmem:[%s1 + $0x2c] sm:$0xf]
        %v2126 = vld [vmem:[%s1 + $0x30] sm:$0xf]
        %v2127 = vld [vmem:[%s1 + $0x34] sm:$0xf]
        %v2128 = vld [vmem:[%s1 + $0x38] sm:$0xf]
        %v2129 = vld [vmem:[%s1 + $0x3c] sm:$0xf]
        %v2130 = vld [vmem:[%s1 + $0x40] sm:$0xf]
        %v2131 = vld [vmem:[%s1 + $0x44] sm:$0xf]
        %v2132 = vld [vmem:[%s1 + $0x48] sm:$0xf]
        %v2133 = vld [vmem:[%s1 + $0x4c] sm:$0xf]
        %v2134 = vld [vmem:[%s1 + $0x50] sm:$0xf]
        %v2135 = vld [vmem:[%s1 + $0x54] sm:$0xf]
        %v2136 = vld [vmem:[%s1 + $0x58] sm:$0xf]
        %v2137 = vld [vmem:[%s1 + $0x5c] sm:$0xf]
        %v2138 = vld [vmem:[%s1 + $0x60] sm:$0xf]
        %v2139 = vld [vmem:[%s1 + $0x64] sm:$0xf]
        %v2140 = vld [vmem:[%s1 + $0x68] sm:$0xf]
        %v2141 = vld [vmem:[%s1 + $0x6c] sm:$0xf]
        %v2142 = vld [vmem:[%s1 + $0x70] sm:$0xf]
        %v2143 = vld [vmem:[%s1 + $0x74] sm:$0xf]
        %v2144 = vld [vmem:[%s1 + $0x78] sm:$0xf]
        %v2145 = vld [vmem:[%s1 + $0x7c] sm:$0xf]
        %v2146 = vld [vmem:[%s2] sm:$0x1]
        %v2147 = vld [vmem:[#allocation2] sm:$0xff]
        %v2148 = vld [vmem:[#allocation2 + $0x8] sm:$0xff]
        %v2149 = vld [vmem:[#allocation2 + $0x10] sm:$0x3]
        %v2150 = vld [vmem:[#allocation2 + $0x18] sm:$0x3]
        %v2151 = vpack.c.bf16 %v2149, %v2147
        %v2152 = vpack.c.bf16 %v2150, %v2148
        %v2154 = vperm.slane %v2146, 0
        %v2188 = vunpack.c.l.b16 %v2114
        %v2189 = vunpack.c.l.b16 %v2115
        %v2190 = vunpack.c.l.b16 %v2116
        %v2191 = vunpack.c.l.b16 %v2117
        %v2192 = vunpack.c.l.b16 %v2118
        %v2193 = vunpack.c.l.b16 %v2119
        %v2194 = vunpack.c.l.b16 %v2120
        %v2195 = vunpack.c.l.b16 %v2121
        %v2196 = vunpack.c.l.b16 %v2122
        %v2197 = vunpack.c.l.b16 %v2123
        %v2198 = vunpack.c.l.b16 %v2124
        %v2199 = vunpack.c.l.b16 %v2125
        %v2200 = vunpack.c.l.b16 %v2126
        %v2201 = vunpack.c.l.b16 %v2127
        %v2202 = vunpack.c.l.b16 %v2128
        %v2203 = vunpack.c.l.b16 %v2129
        %v2204 = vunpack.c.l.b16 %v2130
        %v2205 = vunpack.c.l.b16 %v2131
        %v2206 = vunpack.c.l.b16 %v2132
        %v2207 = vunpack.c.l.b16 %v2133
        %v2208 = vunpack.c.l.b16 %v2134
        %v2209 = vunpack.c.l.b16 %v2135
        %v2210 = vunpack.c.l.b16 %v2136
        %v2211 = vunpack.c.l.b16 %v2137
        %v2212 = vunpack.c.l.b16 %v2138
        %v2213 = vunpack.c.l.b16 %v2139
        %v2214 = vunpack.c.l.b16 %v2140
        %v2215 = vunpack.c.l.b16 %v2141
        %v2216 = vunpack.c.l.b16 %v2142
        %v2217 = vunpack.c.l.b16 %v2143
        %v2218 = vunpack.c.l.b16 %v2144
        %v2219 = vunpack.c.l.b16 %v2145
        %v2220 = vpack.c.b16 %v2189, %v2188
        %v2221 = vpack.c.b16 %v2191, %v2190
        %v2222 = vpack.c.b16 %v2193, %v2192
        %v2223 = vpack.c.b16 %v2195, %v2194
        %v2224 = vpack.c.b16 %v2197, %v2196
        %v2225 = vpack.c.b16 %v2199, %v2198
        %v2226 = vpack.c.b16 %v2201, %v2200
        %v2227 = vpack.c.b16 %v2203, %v2202
        %v2228 = vpack.c.b16 %v2205, %v2204
        %v2229 = vpack.c.b16 %v2207, %v2206
        %v2230 = vpack.c.b16 %v2209, %v2208
        %v2231 = vpack.c.b16 %v2211, %v2210
        %v2232 = vpack.c.b16 %v2213, %v2212
        %v2233 = vpack.c.b16 %v2215, %v2214
        %v2234 = vpack.c.b16 %v2217, %v2216
        %v2235 = vpack.c.b16 %v2219, %v2218
        %2252 = vmatpush.bf16.msra.mxu0 %v2227
        %2253 = vmatpush.bf16.msra.mxu0 %v2226
        %2254 = vmatpush.bf16.msra.mxu0 %v2225
        %2255 = vmatpush.bf16.msra.mxu0 %v2224
        %2256 = vmatpush.bf16.msra.mxu0 %v2223
        %2257 = vmatpush.bf16.msra.mxu0 %v2222
        %2258 = vmatpush.bf16.msra.mxu0 %v2221
        %2259 = vmatpush.bf16.msra.mxu0 %v2220
        %2260 = vmatmul.bf16.gmra.mxu0 %v2151
        %v2261 = vpop.f32.mrf.mxu0
        %v2262 = vadd.f32 %v2154, %v2261
        %v2263 = vpop.f32.mrf.mxu0
        %v2264 = vadd.f32 %v2154, %v2263
        %2265 = vdwg.mxu0
        %2266 = vmatpush.bf16.msra.mxu0 %v2235
        %2267 = vmatpush.bf16.msra.mxu0 %v2234
        %2268 = vmatpush.bf16.msra.mxu0 %v2233
        %2269 = vmatpush.bf16.msra.mxu0 %v2232
        %2270 = vmatpush.bf16.msra.mxu0 %v2231
        %2271 = vmatpush.bf16.msra.mxu0 %v2230
        %2272 = vmatpush.bf16.msra.mxu0 %v2229
        %2273 = vmatpush.bf16.msra.mxu0 %v2228
        %2274 = vmatmul.bf16.gmra.mxu0 %v2152
        %v2275 = vpop.f32.mrf.mxu0
        %v2276 = vadd.f32 %v2262, %v2275
        %v2277 = vpop.f32.mrf.mxu0
        %v2278 = vadd.f32 %v2264, %v2277
        %2279 = vdwg.mxu0
        %v2280 = vmax.f32 %v2276, 0.0
        %v2281 = vmax.f32 %v2278, 0.0
        %vm2282 = vcmask 261120
        %2283 = vst.msk [vmem:[#allocation3] sm:$0xff] %vm2282, %v2280
        %vm2284 = vcmask 254976
        %2285 = vst.msk [vmem:[#allocation3 + $0x8] sm:$0x3] %vm2284, %v2281
        %s2286 = scalar_lea.vmem [#allocation2], 32
        %v2287 = vld [vmem:[%s2286] sm:$0xff]
        %v2288 = vld [vmem:[%s2286 + $0x8] sm:$0xff]
        %v2289 = vld [vmem:[%s2286 + $0x10] sm:$0x3]
        %v2290 = vld [vmem:[%s2286 + $0x18] sm:$0x3]
        %v2291 = vpack.c.bf16 %v2289, %v2287
        %v2292 = vpack.c.bf16 %v2290, %v2288
        %2293 = vmatpush.bf16.msra.mxu0 %v2227
        %2294 = vmatpush.bf16.msra.mxu0 %v2226
        %2295 = vmatpush.bf16.msra.mxu0 %v2225
        %2296 = vmatpush.bf16.msra.mxu0 %v2224
        %2297 = vmatpush.bf16.msra.mxu0 %v2223
        %2298 = vmatpush.bf16.msra.mxu0 %v2222
        %2299 = vmatpush.bf16.msra.mxu0 %v2221
        %2300 = vmatpush.bf16.msra.mxu0 %v2220
        %2301 = vmatmul.bf16.gmra.mxu0 %v2291
        %v2302 = vpop.f32.mrf.mxu0
        %v2303 = vadd.f32 %v2154, %v2302
        %v2304 = vpop.f32.mrf.mxu0
        %v2305 = vadd.f32 %v2154, %v2304
        %2306 = vdwg.mxu0
        %2307 = vmatpush.bf16.msra.mxu0 %v2235
        %2308 = vmatpush.bf16.msra.mxu0 %v2234
        %2309 = vmatpush.bf16.msra.mxu0 %v2233
        %2310 = vmatpush.bf16.msra.mxu0 %v2232
        %2311 = vmatpush.bf16.msra.mxu0 %v2231
        %2312 = vmatpush.bf16.msra.mxu0 %v2230
        %2313 = vmatpush.bf16.msra.mxu0 %v2229
        %2314 = vmatpush.bf16.msra.mxu0 %v2228
        %2315 = vmatmul.bf16.gmra.mxu0 %v2292
        %v2316 = vpop.f32.mrf.mxu0
        %v2317 = vadd.f32 %v2303, %v2316
        %v2318 = vpop.f32.mrf.mxu0
        %v2319 = vadd.f32 %v2305, %v2318
        %2320 = vdwg.mxu0
        %v2321 = vmax.f32 %v2317, 0.0
        %v2322 = vmax.f32 %v2319, 0.0
        %s2323 = scalar_lea.vmem [#allocation3], 16
        %2324 = vst.msk [vmem:[%s2323] sm:$0xff] %vm2282, %v2321
        %2325 = vst.msk [vmem:[%s2323 + $0x8] sm:$0x3] %vm2284, %v2322
        %s2326 = scalar_lea.vmem [#allocation2], 64
        %v2327 = vld [vmem:[%s2326] sm:$0xff]
        %v2328 = vld [vmem:[%s2326 + $0x8] sm:$0xff]
        %v2329 = vld [vmem:[%s2326 + $0x10] sm:$0x3]
        %v2330 = vld [vmem:[%s2326 + $0x18] sm:$0x3]
        %v2331 = vpack.c.bf16 %v2329, %v2327
        %v2332 = vpack.c.bf16 %v2330, %v2328
        %2333 = vmatpush.bf16.msra.mxu0 %v2227
        %2334 = vmatpush.bf16.msra.mxu0 %v2226
        %2335 = vmatpush.bf16.msra.mxu0 %v2225
        %2336 = vmatpush.bf16.msra.mxu0 %v2224
        %2337 = vmatpush.bf16.msra.mxu0 %v2223
        %2338 = vmatpush.bf16.msra.mxu0 %v2222
        %2339 = vmatpush.bf16.msra.mxu0 %v2221
        %2340 = vmatpush.bf16.msra.mxu0 %v2220
        %2341 = vmatmul.bf16.gmra.mxu0 %v2331
        %v2342 = vpop.f32.mrf.mxu0
        %v2343 = vadd.f32 %v2154, %v2342
        %v2344 = vpop.f32.mrf.mxu0
        %v2345 = vadd.f32 %v2154, %v2344
        %2346 = vdwg.mxu0
        %2347 = vmatpush.bf16.msra.mxu0 %v2235
        %2348 = vmatpush.bf16.msra.mxu0 %v2234
        %2349 = vmatpush.bf16.msra.mxu0 %v2233
        %2350 = vmatpush.bf16.msra.mxu0 %v2232
        %2351 = vmatpush.bf16.msra.mxu0 %v2231
        %2352 = vmatpush.bf16.msra.mxu0 %v2230
        %2353 = vmatpush.bf16.msra.mxu0 %v2229
        %2354 = vmatpush.bf16.msra.mxu0 %v2228
        %2355 = vmatmul.bf16.gmra.mxu0 %v2332
        %v2356 = vpop.f32.mrf.mxu0
        %v2357 = vadd.f32 %v2343, %v2356
        %v2358 = vpop.f32.mrf.mxu0
        %v2359 = vadd.f32 %v2345, %v2358
        %2360 = vdwg.mxu0
        %v2361 = vmax.f32 %v2357, 0.0
        %v2362 = vmax.f32 %v2359, 0.0
        %s2363 = scalar_lea.vmem [#allocation3], 32
        %2364 = vst.msk [vmem:[%s2363] sm:$0xff] %vm2282, %v2361
        %2365 = vst.msk [vmem:[%s2363 + $0x8] sm:$0x3] %vm2284, %v2362
        %s2366 = scalar_lea.vmem [#allocation2], 96
        %v2367 = vld [vmem:[%s2366] sm:$0xff]
        %v2368 = vld [vmem:[%s2366 + $0x8] sm:$0xff]
        %v2369 = vld [vmem:[%s2366 + $0x10] sm:$0x3]
        %v2370 = vld [vmem:[%s2366 + $0x18] sm:$0x3]
        %v2371 = vpack.c.bf16 %v2369, %v2367
        %v2372 = vpack.c.bf16 %v2370, %v2368
        %2373 = vmatpush.bf16.msra.mxu0 %v2227
        %2374 = vmatpush.bf16.msra.mxu0 %v2226
        %2375 = vmatpush.bf16.msra.mxu0 %v2225
        %2376 = vmatpush.bf16.msra.mxu0 %v2224
        %2377 = vmatpush.bf16.msra.mxu0 %v2223
        %2378 = vmatpush.bf16.msra.mxu0 %v2222
        %2379 = vmatpush.bf16.msra.mxu0 %v2221
        %2380 = vmatpush.bf16.msra.mxu0 %v2220
        %2381 = vmatmul.bf16.gmra.mxu0 %v2371
        %v2382 = vpop.f32.mrf.mxu0
        %v2383 = vadd.f32 %v2154, %v2382
        %v2384 = vpop.f32.mrf.mxu0
        %v2385 = vadd.f32 %v2154, %v2384
        %2386 = vdwg.mxu0
        %2387 = vmatpush.bf16.msra.mxu0 %v2235
        %2388 = vmatpush.bf16.msra.mxu0 %v2234
        %2389 = vmatpush.bf16.msra.mxu0 %v2233
        %2390 = vmatpush.bf16.msra.mxu0 %v2232
        %2391 = vmatpush.bf16.msra.mxu0 %v2231
        %2392 = vmatpush.bf16.msra.mxu0 %v2230
        %2393 = vmatpush.bf16.msra.mxu0 %v2229
        %2394 = vmatpush.bf16.msra.mxu0 %v2228
        %2395 = vmatmul.bf16.gmra.mxu0 %v2372
        %v2396 = vpop.f32.mrf.mxu0
        %v2397 = vadd.f32 %v2383, %v2396
        %v2398 = vpop.f32.mrf.mxu0
        %v2399 = vadd.f32 %v2385, %v2398
        %2400 = vdwg.mxu0
        %v2401 = vmax.f32 %v2397, 0.0
        %v2402 = vmax.f32 %v2399, 0.0
        %s2403 = scalar_lea.vmem [#allocation3], 48
        %2404 = vst.msk [vmem:[%s2403] sm:$0xff] %vm2282, %v2401
        %2405 = vst.msk [vmem:[%s2403 + $0x8] sm:$0x3] %vm2284, %v2402
        %s2406 = scalar_lea.vmem [#allocation2], 128
        %v2407 = vld [vmem:[%s2406] sm:$0xff]
        %v2408 = vld [vmem:[%s2406 + $0x8] sm:$0xff]
        %v2409 = vld [vmem:[%s2406 + $0x10] sm:$0x3]
        %v2410 = vld [vmem:[%s2406 + $0x18] sm:$0x3]
        %v2411 = vpack.c.bf16 %v2409, %v2407
        %v2412 = vpack.c.bf16 %v2410, %v2408
        %2413 = vmatpush.bf16.msra.mxu0 %v2227
        %2414 = vmatpush.bf16.msra.mxu0 %v2226
        %2415 = vmatpush.bf16.msra.mxu0 %v2225
        %2416 = vmatpush.bf16.msra.mxu0 %v2224
        %2417 = vmatpush.bf16.msra.mxu0 %v2223
        %2418 = vmatpush.bf16.msra.mxu0 %v2222
        %2419 = vmatpush.bf16.msra.mxu0 %v2221
        %2420 = vmatpush.bf16.msra.mxu0 %v2220
        %2421 = vmatmul.bf16.gmra.mxu0 %v2411
        %v2422 = vpop.f32.mrf.mxu0
        %v2423 = vadd.f32 %v2154, %v2422
        %v2424 = vpop.f32.mrf.mxu0
        %v2425 = vadd.f32 %v2154, %v2424
        %2426 = vdwg.mxu0
        %2427 = vmatpush.bf16.msra.mxu0 %v2235
        %2428 = vmatpush.bf16.msra.mxu0 %v2234
        %2429 = vmatpush.bf16.msra.mxu0 %v2233
        %2430 = vmatpush.bf16.msra.mxu0 %v2232
        %2431 = vmatpush.bf16.msra.mxu0 %v2231
        %2432 = vmatpush.bf16.msra.mxu0 %v2230
        %2433 = vmatpush.bf16.msra.mxu0 %v2229
        %2434 = vmatpush.bf16.msra.mxu0 %v2228
        %2435 = vmatmul.bf16.gmra.mxu0 %v2412
        %v2436 = vpop.f32.mrf.mxu0
        %v2437 = vadd.f32 %v2423, %v2436
        %v2438 = vpop.f32.mrf.mxu0
        %v2439 = vadd.f32 %v2425, %v2438
        %2440 = vdwg.mxu0
        %v2441 = vmax.f32 %v2437, 0.0
        %v2442 = vmax.f32 %v2439, 0.0
        %s2443 = scalar_lea.vmem [#allocation3], 64
        %2444 = vst.msk [vmem:[%s2443] sm:$0xff] %vm2282, %v2441
        %2445 = vst.msk [vmem:[%s2443 + $0x8] sm:$0x3] %vm2284, %v2442
        %s2446 = scalar_lea.vmem [#allocation2], 160
        %v2447 = vld [vmem:[%s2446] sm:$0xff]
        %v2448 = vld [vmem:[%s2446 + $0x8] sm:$0xff]
        %v2449 = vld [vmem:[%s2446 + $0x10] sm:$0x3]
        %v2450 = vld [vmem:[%s2446 + $0x18] sm:$0x3]
        %v2451 = vpack.c.bf16 %v2449, %v2447
        %v2452 = vpack.c.bf16 %v2450, %v2448
        %2453 = vmatpush.bf16.msra.mxu0 %v2227
        %2454 = vmatpush.bf16.msra.mxu0 %v2226
        %2455 = vmatpush.bf16.msra.mxu0 %v2225
        %2456 = vmatpush.bf16.msra.mxu0 %v2224
        %2457 = vmatpush.bf16.msra.mxu0 %v2223
        %2458 = vmatpush.bf16.msra.mxu0 %v2222
        %2459 = vmatpush.bf16.msra.mxu0 %v2221
        %2460 = vmatpush.bf16.msra.mxu0 %v2220
        %2461 = vmatmul.bf16.gmra.mxu0 %v2451
        %v2462 = vpop.f32.mrf.mxu0
        %v2463 = vadd.f32 %v2154, %v2462
        %v2464 = vpop.f32.mrf.mxu0
        %v2465 = vadd.f32 %v2154, %v2464
        %2466 = vdwg.mxu0
        %2467 = vmatpush.bf16.msra.mxu0 %v2235
        %2468 = vmatpush.bf16.msra.mxu0 %v2234
        %2469 = vmatpush.bf16.msra.mxu0 %v2233
        %2470 = vmatpush.bf16.msra.mxu0 %v2232
        %2471 = vmatpush.bf16.msra.mxu0 %v2231
        %2472 = vmatpush.bf16.msra.mxu0 %v2230
        %2473 = vmatpush.bf16.msra.mxu0 %v2229
        %2474 = vmatpush.bf16.msra.mxu0 %v2228
        %2475 = vmatmul.bf16.gmra.mxu0 %v2452
        %v2476 = vpop.f32.mrf.mxu0
        %v2477 = vadd.f32 %v2463, %v2476
        %v2478 = vpop.f32.mrf.mxu0
        %v2479 = vadd.f32 %v2465, %v2478
        %2480 = vdwg.mxu0
        %v2481 = vmax.f32 %v2477, 0.0
        %v2482 = vmax.f32 %v2479, 0.0
        %s2483 = scalar_lea.vmem [#allocation3], 80
        %2484 = vst.msk [vmem:[%s2483] sm:$0xff] %vm2282, %v2481
        %2485 = vst.msk [vmem:[%s2483 + $0x8] sm:$0x3] %vm2284, %v2482
        %s2486 = scalar_lea.vmem [#allocation2], 192
        %v2487 = vld [vmem:[%s2486] sm:$0xff]
        %v2488 = vld [vmem:[%s2486 + $0x8] sm:$0xff]
        %v2489 = vld [vmem:[%s2486 + $0x10] sm:$0x3]
        %v2490 = vld [vmem:[%s2486 + $0x18] sm:$0x3]
        %v2491 = vpack.c.bf16 %v2489, %v2487
        %v2492 = vpack.c.bf16 %v2490, %v2488
        %2493 = vmatpush.bf16.msra.mxu0 %v2227
        %2494 = vmatpush.bf16.msra.mxu0 %v2226
        %2495 = vmatpush.bf16.msra.mxu0 %v2225
        %2496 = vmatpush.bf16.msra.mxu0 %v2224
        %2497 = vmatpush.bf16.msra.mxu0 %v2223
        %2498 = vmatpush.bf16.msra.mxu0 %v2222
        %2499 = vmatpush.bf16.msra.mxu0 %v2221
        %2500 = vmatpush.bf16.msra.mxu0 %v2220
        %2501 = vmatmul.bf16.gmra.mxu0 %v2491
        %v2502 = vpop.f32.mrf.mxu0
        %v2503 = vadd.f32 %v2154, %v2502
        %v2504 = vpop.f32.mrf.mxu0
        %v2505 = vadd.f32 %v2154, %v2504
        %2506 = vdwg.mxu0
        %2507 = vmatpush.bf16.msra.mxu0 %v2235
        %2508 = vmatpush.bf16.msra.mxu0 %v2234
        %2509 = vmatpush.bf16.msra.mxu0 %v2233
        %2510 = vmatpush.bf16.msra.mxu0 %v2232
        %2511 = vmatpush.bf16.msra.mxu0 %v2231
        %2512 = vmatpush.bf16.msra.mxu0 %v2230
        %2513 = vmatpush.bf16.msra.mxu0 %v2229
        %2514 = vmatpush.bf16.msra.mxu0 %v2228
        %2515 = vmatmul.bf16.gmra.mxu0 %v2492
        %v2516 = vpop.f32.mrf.mxu0
        %v2517 = vadd.f32 %v2503, %v2516
        %v2518 = vpop.f32.mrf.mxu0
        %v2519 = vadd.f32 %v2505, %v2518
        %2520 = vdwg.mxu0
        %v2521 = vmax.f32 %v2517, 0.0
        %v2522 = vmax.f32 %v2519, 0.0
        %s2523 = scalar_lea.vmem [#allocation3], 96
        %2524 = vst.msk [vmem:[%s2523] sm:$0xff] %vm2282, %v2521
        %2525 = vst.msk [vmem:[%s2523 + $0x8] sm:$0x3] %vm2284, %v2522
        %s2526 = scalar_lea.vmem [#allocation2], 224
        %v2527 = vld [vmem:[%s2526] sm:$0xff]
        %v2528 = vld [vmem:[%s2526 + $0x8] sm:$0xff]
        %v2529 = vld [vmem:[%s2526 + $0x10] sm:$0x3]
        %v2530 = vld [vmem:[%s2526 + $0x18] sm:$0x3]
        %v2531 = vpack.c.bf16 %v2529, %v2527
        %v2532 = vpack.c.bf16 %v2530, %v2528
        %2533 = vmatpush.bf16.msra.mxu0 %v2227
        %2534 = vmatpush.bf16.msra.mxu0 %v2226
        %2535 = vmatpush.bf16.msra.mxu0 %v2225
        %2536 = vmatpush.bf16.msra.mxu0 %v2224
        %2537 = vmatpush.bf16.msra.mxu0 %v2223
        %2538 = vmatpush.bf16.msra.mxu0 %v2222
        %2539 = vmatpush.bf16.msra.mxu0 %v2221
        %2540 = vmatpush.bf16.msra.mxu0 %v2220
        %2541 = vmatmul.bf16.gmra.mxu0 %v2531
        %v2542 = vpop.f32.mrf.mxu0
        %v2543 = vadd.f32 %v2154, %v2542
        %v2544 = vpop.f32.mrf.mxu0
        %v2545 = vadd.f32 %v2154, %v2544
        %2546 = vdwg.mxu0
        %2547 = vmatpush.bf16.msra.mxu0 %v2235
        %2548 = vmatpush.bf16.msra.mxu0 %v2234
        %2549 = vmatpush.bf16.msra.mxu0 %v2233
        %2550 = vmatpush.bf16.msra.mxu0 %v2232
        %2551 = vmatpush.bf16.msra.mxu0 %v2231
        %2552 = vmatpush.bf16.msra.mxu0 %v2230
        %2553 = vmatpush.bf16.msra.mxu0 %v2229
        %2554 = vmatpush.bf16.msra.mxu0 %v2228
        %2555 = vmatmul.bf16.gmra.mxu0 %v2532
        %v2556 = vpop.f32.mrf.mxu0
        %v2557 = vadd.f32 %v2543, %v2556
        %v2558 = vpop.f32.mrf.mxu0
        %v2559 = vadd.f32 %v2545, %v2558
        %2560 = vdwg.mxu0
        %v2561 = vmax.f32 %v2557, 0.0
        %v2562 = vmax.f32 %v2559, 0.0
        %s2563 = scalar_lea.vmem [#allocation3], 112
        %2564 = vst.msk [vmem:[%s2563] sm:$0xff] %vm2282, %v2561
        %2565 = vst.msk [vmem:[%s2563 + $0x8] sm:$0x3] %vm2284, %v2562
        %s2566 = scalar_lea.vmem [#allocation2], 256
        %v2567 = vld [vmem:[%s2566] sm:$0xff]
        %v2568 = vld [vmem:[%s2566 + $0x8] sm:$0xff]
        %v2569 = vld [vmem:[%s2566 + $0x10] sm:$0x3]
        %v2570 = vld [vmem:[%s2566 + $0x18] sm:$0x3]
        %v2571 = vpack.c.bf16 %v2569, %v2567
        %v2572 = vpack.c.bf16 %v2570, %v2568
        %2573 = vmatpush.bf16.msra.mxu0 %v2227
        %2574 = vmatpush.bf16.msra.mxu0 %v2226
        %2575 = vmatpush.bf16.msra.mxu0 %v2225
        %2576 = vmatpush.bf16.msra.mxu0 %v2224
        %2577 = vmatpush.bf16.msra.mxu0 %v2223
        %2578 = vmatpush.bf16.msra.mxu0 %v2222
        %2579 = vmatpush.bf16.msra.mxu0 %v2221
        %2580 = vmatpush.bf16.msra.mxu0 %v2220
        %2581 = vmatmul.bf16.gmra.mxu0 %v2571
        %v2582 = vpop.f32.mrf.mxu0
        %v2583 = vadd.f32 %v2154, %v2582
        %v2584 = vpop.f32.mrf.mxu0
        %v2585 = vadd.f32 %v2154, %v2584
        %2586 = vdwg.mxu0
        %2587 = vmatpush.bf16.msra.mxu0 %v2235
        %2588 = vmatpush.bf16.msra.mxu0 %v2234
        %2589 = vmatpush.bf16.msra.mxu0 %v2233
        %2590 = vmatpush.bf16.msra.mxu0 %v2232
        %2591 = vmatpush.bf16.msra.mxu0 %v2231
        %2592 = vmatpush.bf16.msra.mxu0 %v2230
        %2593 = vmatpush.bf16.msra.mxu0 %v2229
        %2594 = vmatpush.bf16.msra.mxu0 %v2228
        %2595 = vmatmul.bf16.gmra.mxu0 %v2572
        %v2596 = vpop.f32.mrf.mxu0
        %v2597 = vadd.f32 %v2583, %v2596
        %v2598 = vpop.f32.mrf.mxu0
        %v2599 = vadd.f32 %v2585, %v2598
        %2600 = vdwg.mxu0
        %v2601 = vmax.f32 %v2597, 0.0
        %v2602 = vmax.f32 %v2599, 0.0
        %s2603 = scalar_lea.vmem [#allocation3], 128
        %2604 = vst.msk [vmem:[%s2603] sm:$0xff] %vm2282, %v2601
        %2605 = vst.msk [vmem:[%s2603 + $0x8] sm:$0x3] %vm2284, %v2602
        %s2606 = scalar_lea.vmem [#allocation2], 288
        %v2607 = vld [vmem:[%s2606] sm:$0xff]
        %v2608 = vld [vmem:[%s2606 + $0x8] sm:$0xff]
        %v2609 = vld [vmem:[%s2606 + $0x10] sm:$0x3]
        %v2610 = vld [vmem:[%s2606 + $0x18] sm:$0x3]
        %v2611 = vpack.c.bf16 %v2609, %v2607
        %v2612 = vpack.c.bf16 %v2610, %v2608
        %2613 = vmatpush.bf16.msra.mxu0 %v2227
        %2614 = vmatpush.bf16.msra.mxu0 %v2226
        %2615 = vmatpush.bf16.msra.mxu0 %v2225
        %2616 = vmatpush.bf16.msra.mxu0 %v2224
        %2617 = vmatpush.bf16.msra.mxu0 %v2223
        %2618 = vmatpush.bf16.msra.mxu0 %v2222
        %2619 = vmatpush.bf16.msra.mxu0 %v2221
        %2620 = vmatpush.bf16.msra.mxu0 %v2220
        %2621 = vmatmul.bf16.gmra.mxu0 %v2611
        %v2622 = vpop.f32.mrf.mxu0
        %v2623 = vadd.f32 %v2154, %v2622
        %v2624 = vpop.f32.mrf.mxu0
        %v2625 = vadd.f32 %v2154, %v2624
        %2626 = vdwg.mxu0
        %2627 = vmatpush.bf16.msra.mxu0 %v2235
        %2628 = vmatpush.bf16.msra.mxu0 %v2234
        %2629 = vmatpush.bf16.msra.mxu0 %v2233
        %2630 = vmatpush.bf16.msra.mxu0 %v2232
        %2631 = vmatpush.bf16.msra.mxu0 %v2231
        %2632 = vmatpush.bf16.msra.mxu0 %v2230
        %2633 = vmatpush.bf16.msra.mxu0 %v2229
        %2634 = vmatpush.bf16.msra.mxu0 %v2228
        %2635 = vmatmul.bf16.gmra.mxu0 %v2612
        %v2636 = vpop.f32.mrf.mxu0
        %v2637 = vadd.f32 %v2623, %v2636
        %v2638 = vpop.f32.mrf.mxu0
        %v2639 = vadd.f32 %v2625, %v2638
        %2640 = vdwg.mxu0
        %v2641 = vmax.f32 %v2637, 0.0
        %v2642 = vmax.f32 %v2639, 0.0
        %s2643 = scalar_lea.vmem [#allocation3], 144
        %2644 = vst.msk [vmem:[%s2643] sm:$0xff] %vm2282, %v2641
        %2645 = vst.msk [vmem:[%s2643 + $0x8] sm:$0x3] %vm2284, %v2642
        %v2646 = vld [vmem:[#allocation3] sm:$0x1]
        %vm2647 = vcmask 253952
        %2648 = vst.msk [vmem:[#allocation4] sm:$0x1] %vm2647, %v2646
        %v2649 = vld [vmem:[#allocation3 + $0x2] sm:$0x1]
        %s2650 = scalar_lea.vmem [#allocation4], 16
        %2651 = vst.msk [vmem:[%s2650] sm:$0x1] %vm2647, %v2649
        %v2652 = vld [vmem:[#allocation3 + $0x4] sm:$0x1]
        %s2653 = scalar_lea.vmem [#allocation4], 32
        %2654 = vst.msk [vmem:[%s2653] sm:$0x1] %vm2647, %v2652
        %v2655 = vld [vmem:[#allocation3 + $0x6] sm:$0x1]
        %s2656 = scalar_lea.vmem [#allocation4], 48
        %2657 = vst.msk [vmem:[%s2656] sm:$0x1] %vm2647, %v2655
        %v2658 = vld [vmem:[%s2363] sm:$0x1]
        %2659 = vst.msk [vmem:[#allocation4 + $0x1] sm:$0x1] %vm2647, %v2658
        %v2660 = vld [vmem:[%s2363 + $0x2] sm:$0x1]
        %2661 = vst.msk [vmem:[%s2650 + $0x1] sm:$0x1] %vm2647, %v2660
        %v2662 = vld [vmem:[%s2363 + $0x4] sm:$0x1]
        %2663 = vst.msk [vmem:[%s2653 + $0x1] sm:$0x1] %vm2647, %v2662
        %v2664 = vld [vmem:[%s2363 + $0x6] sm:$0x1]
        %2665 = vst.msk [vmem:[%s2656 + $0x1] sm:$0x1] %vm2647, %v2664
        %v2666 = vld [vmem:[%s2443] sm:$0x1]
        %2667 = vst.msk [vmem:[#allocation4 + $0x2] sm:$0x1] %vm2647, %v2666
        %v2668 = vld [vmem:[%s2443 + $0x2] sm:$0x1]
        %2669 = vst.msk [vmem:[%s2650 + $0x2] sm:$0x1] %vm2647, %v2668
        %v2670 = vld [vmem:[%s2443 + $0x4] sm:$0x1]
        %2671 = vst.msk [vmem:[%s2653 + $0x2] sm:$0x1] %vm2647, %v2670
        %v2672 = vld [vmem:[%s2443 + $0x6] sm:$0x1]
        %2673 = vst.msk [vmem:[%s2656 + $0x2] sm:$0x1] %vm2647, %v2672
        %v2674 = vld [vmem:[%s2523] sm:$0x1]
        %2675 = vst.msk [vmem:[#allocation4 + $0x3] sm:$0x1] %vm2647, %v2674
        %v2676 = vld [vmem:[%s2523 + $0x2] sm:$0x1]
        %2677 = vst.msk [vmem:[%s2650 + $0x3] sm:$0x1] %vm2647, %v2676
        %v2678 = vld [vmem:[%s2523 + $0x4] sm:$0x1]
        %2679 = vst.msk [vmem:[%s2653 + $0x3] sm:$0x1] %vm2647, %v2678
        %v2680 = vld [vmem:[%s2523 + $0x6] sm:$0x1]
        %2681 = vst.msk [vmem:[%s2656 + $0x3] sm:$0x1] %vm2647, %v2680
        %v2682 = vld [vmem:[#allocation3 + $0x1] sm:$0x1]
        %2684 = vrot.lane.b32.xlu0 %v2682, 32
        %v2685 = vpop.permute.xlu0 %2684
        %vm2687 = vcmask 516352
        %2688 = vst.msk [vmem:[#allocation4] sm:$0x1] %vm2687, %v2685
        %v2689 = vld [vmem:[#allocation3 + $0x3] sm:$0x1]
        %2691 = vrot.lane.b32.xlu0 %v2689, 32
        %v2692 = vpop.permute.xlu0 %2691
        %2694 = vst.msk [vmem:[%s2650] sm:$0x1] %vm2687, %v2692
        %v2695 = vld [vmem:[#allocation3 + $0x5] sm:$0x1]
        %2697 = vrot.lane.b32.xlu0 %v2695, 32
        %v2698 = vpop.permute.xlu0 %2697
        %2700 = vst.msk [vmem:[%s2653] sm:$0x1] %vm2687, %v2698
        %v2701 = vld [vmem:[#allocation3 + $0x7] sm:$0x1]
        %2703 = vrot.lane.b32.xlu0 %v2701, 32
        %v2704 = vpop.permute.xlu0 %2703
        %2706 = vst.msk [vmem:[%s2656] sm:$0x1] %vm2687, %v2704
        %v2707 = vld [vmem:[%s2363 + $0x1] sm:$0x1]
        %2709 = vrot.lane.b32.xlu0 %v2707, 32
        %v2710 = vpop.permute.xlu0 %2709
        %2712 = vst.msk [vmem:[#allocation4 + $0x1] sm:$0x1] %vm2687, %v2710
        %v2713 = vld [vmem:[%s2363 + $0x3] sm:$0x1]
        %2715 = vrot.lane.b32.xlu0 %v2713, 32
        %v2716 = vpop.permute.xlu0 %2715
        %2718 = vst.msk [vmem:[%s2650 + $0x1] sm:$0x1] %vm2687, %v2716
        %v2719 = vld [vmem:[%s2363 + $0x5] sm:$0x1]
        %2721 = vrot.lane.b32.xlu0 %v2719, 32
        %v2722 = vpop.permute.xlu0 %2721
        %2724 = vst.msk [vmem:[%s2653 + $0x1] sm:$0x1] %vm2687, %v2722
        %v2725 = vld [vmem:[%s2363 + $0x7] sm:$0x1]
        %2727 = vrot.lane.b32.xlu0 %v2725, 32
        %v2728 = vpop.permute.xlu0 %2727
        %2730 = vst.msk [vmem:[%s2656 + $0x1] sm:$0x1] %vm2687, %v2728
        %v2731 = vld [vmem:[%s2443 + $0x1] sm:$0x1]
        %2733 = vrot.lane.b32.xlu0 %v2731, 32
        %v2734 = vpop.permute.xlu0 %2733
        %2736 = vst.msk [vmem:[#allocation4 + $0x2] sm:$0x1] %vm2687, %v2734
        %v2737 = vld [vmem:[%s2443 + $0x3] sm:$0x1]
        %2739 = vrot.lane.b32.xlu0 %v2737, 32
        %v2740 = vpop.permute.xlu0 %2739
        %2742 = vst.msk [vmem:[%s2650 + $0x2] sm:$0x1] %vm2687, %v2740
        %v2743 = vld [vmem:[%s2443 + $0x5] sm:$0x1]
        %2745 = vrot.lane.b32.xlu0 %v2743, 32
        %v2746 = vpop.permute.xlu0 %2745
        %2748 = vst.msk [vmem:[%s2653 + $0x2] sm:$0x1] %vm2687, %v2746
        %v2749 = vld [vmem:[%s2443 + $0x7] sm:$0x1]
        %2751 = vrot.lane.b32.xlu0 %v2749, 32
        %v2752 = vpop.permute.xlu0 %2751
        %2754 = vst.msk [vmem:[%s2656 + $0x2] sm:$0x1] %vm2687, %v2752
        %v2755 = vld [vmem:[%s2523 + $0x1] sm:$0x1]
        %2757 = vrot.lane.b32.xlu0 %v2755, 32
        %v2758 = vpop.permute.xlu0 %2757
        %2760 = vst.msk [vmem:[#allocation4 + $0x3] sm:$0x1] %vm2687, %v2758
        %v2761 = vld [vmem:[%s2523 + $0x3] sm:$0x1]
        %2763 = vrot.lane.b32.xlu0 %v2761, 32
        %v2764 = vpop.permute.xlu0 %2763
        %2766 = vst.msk [vmem:[%s2650 + $0x3] sm:$0x1] %vm2687, %v2764
        %v2767 = vld [vmem:[%s2523 + $0x5] sm:$0x1]
        %2769 = vrot.lane.b32.xlu0 %v2767, 32
        %v2770 = vpop.permute.xlu0 %2769
        %2772 = vst.msk [vmem:[%s2653 + $0x3] sm:$0x1] %vm2687, %v2770
        %v2773 = vld [vmem:[%s2523 + $0x7] sm:$0x1]
        %2775 = vrot.lane.b32.xlu0 %v2773, 32
        %v2776 = vpop.permute.xlu0 %2775
        %2778 = vst.msk [vmem:[%s2656 + $0x3] sm:$0x1] %vm2687, %v2776
        %v2779 = vld [vmem:[#allocation3 + $0x2] sm:$0x1]
        %2781 = vrot.lane.b32.xlu0 %v2779, 64
        %v2782 = vpop.permute.xlu0 %2781
        %vm2784 = vcmask 778752
        %2785 = vst.msk [vmem:[#allocation4] sm:$0x1] %vm2784, %v2782
        %v2786 = vld [vmem:[#allocation3 + $0x4] sm:$0x1]
        %2788 = vrot.lane.b32.xlu0 %v2786, 64
        %v2789 = vpop.permute.xlu0 %2788
        %2791 = vst.msk [vmem:[%s2650] sm:$0x1] %vm2784, %v2789
        %v2792 = vld [vmem:[#allocation3 + $0x6] sm:$0x1]
        %2794 = vrot.lane.b32.xlu0 %v2792, 64
        %v2795 = vpop.permute.xlu0 %2794
        %2797 = vst.msk [vmem:[%s2653] sm:$0x1] %vm2784, %v2795
        %v2798 = vld [vmem:[#allocation3 + $0x8] sm:$0x1]
        %2800 = vrot.lane.b32.xlu0 %v2798, 64
        %v2801 = vpop.permute.xlu0 %2800
        %2803 = vst.msk [vmem:[%s2656] sm:$0x1] %vm2784, %v2801
        %v2804 = vld [vmem:[%s2363 + $0x2] sm:$0x1]
        %2806 = vrot.lane.b32.xlu0 %v2804, 64
        %v2807 = vpop.permute.xlu0 %2806
        %2809 = vst.msk [vmem:[#allocation4 + $0x1] sm:$0x1] %vm2784, %v2807
        %v2810 = vld [vmem:[%s2363 + $0x4] sm:$0x1]
        %2812 = vrot.lane.b32.xlu0 %v2810, 64
        %v2813 = vpop.permute.xlu0 %2812
        %2815 = vst.msk [vmem:[%s2650 + $0x1] sm:$0x1] %vm2784, %v2813
        %v2816 = vld [vmem:[%s2363 + $0x6] sm:$0x1]
        %2818 = vrot.lane.b32.xlu0 %v2816, 64
        %v2819 = vpop.permute.xlu0 %2818
        %2821 = vst.msk [vmem:[%s2653 + $0x1] sm:$0x1] %vm2784, %v2819
        %v2822 = vld [vmem:[%s2363 + $0x8] sm:$0x1]
        %2824 = vrot.lane.b32.xlu0 %v2822, 64
        %v2825 = vpop.permute.xlu0 %2824
        %2827 = vst.msk [vmem:[%s2656 + $0x1] sm:$0x1] %vm2784, %v2825
        %v2828 = vld [vmem:[%s2443 + $0x2] sm:$0x1]
        %2830 = vrot.lane.b32.xlu0 %v2828, 64
        %v2831 = vpop.permute.xlu0 %2830
        %2833 = vst.msk [vmem:[#allocation4 + $0x2] sm:$0x1] %vm2784, %v2831
        %v2834 = vld [vmem:[%s2443 + $0x4] sm:$0x1]
        %2836 = vrot.lane.b32.xlu0 %v2834, 64
        %v2837 = vpop.permute.xlu0 %2836
        %2839 = vst.msk [vmem:[%s2650 + $0x2] sm:$0x1] %vm2784, %v2837
        %v2840 = vld [vmem:[%s2443 + $0x6] sm:$0x1]
        %2842 = vrot.lane.b32.xlu0 %v2840, 64
        %v2843 = vpop.permute.xlu0 %2842
        %2845 = vst.msk [vmem:[%s2653 + $0x2] sm:$0x1] %vm2784, %v2843
        %v2846 = vld [vmem:[%s2443 + $0x8] sm:$0x1]
        %2848 = vrot.lane.b32.xlu0 %v2846, 64
        %v2849 = vpop.permute.xlu0 %2848
        %2851 = vst.msk [vmem:[%s2656 + $0x2] sm:$0x1] %vm2784, %v2849
        %v2852 = vld [vmem:[%s2523 + $0x2] sm:$0x1]
        %2854 = vrot.lane.b32.xlu0 %v2852, 64
        %v2855 = vpop.permute.xlu0 %2854
        %2857 = vst.msk [vmem:[#allocation4 + $0x3] sm:$0x1] %vm2784, %v2855
        %v2858 = vld [vmem:[%s2523 + $0x4] sm:$0x1]
        %2860 = vrot.lane.b32.xlu0 %v2858, 64
        %v2861 = vpop.permute.xlu0 %2860
        %2863 = vst.msk [vmem:[%s2650 + $0x3] sm:$0x1] %vm2784, %v2861
        %v2864 = vld [vmem:[%s2523 + $0x6] sm:$0x1]
        %2866 = vrot.lane.b32.xlu0 %v2864, 64
        %v2867 = vpop.permute.xlu0 %2866
        %2869 = vst.msk [vmem:[%s2653 + $0x3] sm:$0x1] %vm2784, %v2867
        %v2870 = vld [vmem:[%s2523 + $0x8] sm:$0x1]
        %2872 = vrot.lane.b32.xlu0 %v2870, 64
        %v2873 = vpop.permute.xlu0 %2872
        %2875 = vst.msk [vmem:[%s2656 + $0x3] sm:$0x1] %vm2784, %v2873
        %v2876 = vld [vmem:[#allocation3 + $0x3] sm:$0x1]
        %2878 = vrot.lane.b32.xlu0 %v2876, 96
        %v2879 = vpop.permute.xlu0 %2878
        %vm2881 = vcmask 1041152
        %2882 = vst.msk [vmem:[#allocation4] sm:$0x1] %vm2881, %v2879
        %v2883 = vld [vmem:[#allocation3 + $0x5] sm:$0x1]
        %2885 = vrot.lane.b32.xlu0 %v2883, 96
        %v2886 = vpop.permute.xlu0 %2885
        %2888 = vst.msk [vmem:[%s2650] sm:$0x1] %vm2881, %v2886
        %v2889 = vld [vmem:[#allocation3 + $0x7] sm:$0x1]
        %2891 = vrot.lane.b32.xlu0 %v2889, 96
        %v2892 = vpop.permute.xlu0 %2891
        %2894 = vst.msk [vmem:[%s2653] sm:$0x1] %vm2881, %v2892
        %v2895 = vld [vmem:[#allocation3 + $0x9] sm:$0x1]
        %2897 = vrot.lane.b32.xlu0 %v2895, 96
        %v2898 = vpop.permute.xlu0 %2897
        %2900 = vst.msk [vmem:[%s2656] sm:$0x1] %vm2881, %v2898
        %v2901 = vld [vmem:[%s2363 + $0x3] sm:$0x1]
        %2903 = vrot.lane.b32.xlu0 %v2901, 96
        %v2904 = vpop.permute.xlu0 %2903
        %2906 = vst.msk [vmem:[#allocation4 + $0x1] sm:$0x1] %vm2881, %v2904
        %v2907 = vld [vmem:[%s2363 + $0x5] sm:$0x1]
        %2909 = vrot.lane.b32.xlu0 %v2907, 96
        %v2910 = vpop.permute.xlu0 %2909
        %2912 = vst.msk [vmem:[%s2650 + $0x1] sm:$0x1] %vm2881, %v2910
        %v2913 = vld [vmem:[%s2363 + $0x7] sm:$0x1]
        %2915 = vrot.lane.b32.xlu0 %v2913, 96
        %v2916 = vpop.permute.xlu0 %2915
        %2918 = vst.msk [vmem:[%s2653 + $0x1] sm:$0x1] %vm2881, %v2916
        %v2919 = vld [vmem:[%s2363 + $0x9] sm:$0x1]
        %2921 = vrot.lane.b32.xlu0 %v2919, 96
        %v2922 = vpop.permute.xlu0 %2921
        %2924 = vst.msk [vmem:[%s2656 + $0x1] sm:$0x1] %vm2881, %v2922
        %v2925 = vld [vmem:[%s2443 + $0x3] sm:$0x1]
        %2927 = vrot.lane.b32.xlu0 %v2925, 96
        %v2928 = vpop.permute.xlu0 %2927
        %2930 = vst.msk [vmem:[#allocation4 + $0x2] sm:$0x1] %vm2881, %v2928
        %v2931 = vld [vmem:[%s2443 + $0x5] sm:$0x1]
        %2933 = vrot.lane.b32.xlu0 %v2931, 96
        %v2934 = vpop.permute.xlu0 %2933
        %2936 = vst.msk [vmem:[%s2650 + $0x2] sm:$0x1] %vm2881, %v2934
        %v2937 = vld [vmem:[%s2443 + $0x7] sm:$0x1]
        %2939 = vrot.lane.b32.xlu0 %v2937, 96
        %v2940 = vpop.permute.xlu0 %2939
        %2942 = vst.msk [vmem:[%s2653 + $0x2] sm:$0x1] %vm2881, %v2940
        %v2943 = vld [vmem:[%s2443 + $0x9] sm:$0x1]
        %2945 = vrot.lane.b32.xlu0 %v2943, 96
        %v2946 = vpop.permute.xlu0 %2945
        %2948 = vst.msk [vmem:[%s2656 + $0x2] sm:$0x1] %vm2881, %v2946
        %v2949 = vld [vmem:[%s2523 + $0x3] sm:$0x1]
        %2951 = vrot.lane.b32.xlu0 %v2949, 96
        %v2952 = vpop.permute.xlu0 %2951
        %2954 = vst.msk [vmem:[#allocation4 + $0x3] sm:$0x1] %vm2881, %v2952
        %v2955 = vld [vmem:[%s2523 + $0x5] sm:$0x1]
        %2957 = vrot.lane.b32.xlu0 %v2955, 96
        %v2958 = vpop.permute.xlu0 %2957
        %2960 = vst.msk [vmem:[%s2650 + $0x3] sm:$0x1] %vm2881, %v2958
        %v2961 = vld [vmem:[%s2523 + $0x7] sm:$0x1]
        %2963 = vrot.lane.b32.xlu0 %v2961, 96
        %v2964 = vpop.permute.xlu0 %2963
        %2966 = vst.msk [vmem:[%s2653 + $0x3] sm:$0x1] %vm2881, %v2964
        %v2967 = vld [vmem:[%s2523 + $0x9] sm:$0x1]
        %2969 = vrot.lane.b32.xlu0 %v2967, 96
        %v2970 = vpop.permute.xlu0 %2969
        %2972 = vst.msk [vmem:[%s2656 + $0x3] sm:$0x1] %vm2881, %v2970
        %v2973 = vld [vmem:[%s2323] sm:$0x1]
        %2974 = vst.msk [vmem:[#allocation4 + $0x4] sm:$0x1] %vm2647, %v2973
        %v2975 = vld [vmem:[%s2323 + $0x2] sm:$0x1]
        %2976 = vst.msk [vmem:[%s2650 + $0x4] sm:$0x1] %vm2647, %v2975
        %v2977 = vld [vmem:[%s2323 + $0x4] sm:$0x1]
        %2978 = vst.msk [vmem:[%s2653 + $0x4] sm:$0x1] %vm2647, %v2977
        %v2979 = vld [vmem:[%s2323 + $0x6] sm:$0x1]
        %2980 = vst.msk [vmem:[%s2656 + $0x4] sm:$0x1] %vm2647, %v2979
        %v2981 = vld [vmem:[%s2403] sm:$0x1]
        %2982 = vst.msk [vmem:[#allocation4 + $0x5] sm:$0x1] %vm2647, %v2981
        %v2983 = vld [vmem:[%s2403 + $0x2] sm:$0x1]
        %2984 = vst.msk [vmem:[%s2650 + $0x5] sm:$0x1] %vm2647, %v2983
        %v2985 = vld [vmem:[%s2403 + $0x4] sm:$0x1]
        %2986 = vst.msk [vmem:[%s2653 + $0x5] sm:$0x1] %vm2647, %v2985
        %v2987 = vld [vmem:[%s2403 + $0x6] sm:$0x1]
        %2988 = vst.msk [vmem:[%s2656 + $0x5] sm:$0x1] %vm2647, %v2987
        %v2989 = vld [vmem:[%s2483] sm:$0x1]
        %2990 = vst.msk [vmem:[#allocation4 + $0x6] sm:$0x1] %vm2647, %v2989
        %v2991 = vld [vmem:[%s2483 + $0x2] sm:$0x1]
        %2992 = vst.msk [vmem:[%s2650 + $0x6] sm:$0x1] %vm2647, %v2991
        %v2993 = vld [vmem:[%s2483 + $0x4] sm:$0x1]
        %2994 = vst.msk [vmem:[%s2653 + $0x6] sm:$0x1] %vm2647, %v2993
        %v2995 = vld [vmem:[%s2483 + $0x6] sm:$0x1]
        %2996 = vst.msk [vmem:[%s2656 + $0x6] sm:$0x1] %vm2647, %v2995
        %v2997 = vld [vmem:[%s2563] sm:$0x1]
        %2998 = vst.msk [vmem:[#allocation4 + $0x7] sm:$0x1] %vm2647, %v2997
        %v2999 = vld [vmem:[%s2563 + $0x2] sm:$0x1]
        %3000 = vst.msk [vmem:[%s2650 + $0x7] sm:$0x1] %vm2647, %v2999
        %v3001 = vld [vmem:[%s2563 + $0x4] sm:$0x1]
        %3002 = vst.msk [vmem:[%s2653 + $0x7] sm:$0x1] %vm2647, %v3001
        %v3003 = vld [vmem:[%s2563 + $0x6] sm:$0x1]
        %3004 = vst.msk [vmem:[%s2656 + $0x7] sm:$0x1] %vm2647, %v3003
        %v3005 = vld [vmem:[%s2323 + $0x1] sm:$0x1]
        %3007 = vrot.lane.b32.xlu0 %v3005, 32
        %v3008 = vpop.permute.xlu0 %3007
        %3010 = vst.msk [vmem:[#allocation4 + $0x4] sm:$0x1] %vm2687, %v3008
        %v3011 = vld [vmem:[%s2323 + $0x3] sm:$0x1]
        %3013 = vrot.lane.b32.xlu0 %v3011, 32
        %v3014 = vpop.permute.xlu0 %3013
        %3016 = vst.msk [vmem:[%s2650 + $0x4] sm:$0x1] %vm2687, %v3014
        %v3017 = vld [vmem:[%s2323 + $0x5] sm:$0x1]
        %3019 = vrot.lane.b32.xlu0 %v3017, 32
        %v3020 = vpop.permute.xlu0 %3019
        %3022 = vst.msk [vmem:[%s2653 + $0x4] sm:$0x1] %vm2687, %v3020
        %v3023 = vld [vmem:[%s2323 + $0x7] sm:$0x1]
        %3025 = vrot.lane.b32.xlu0 %v3023, 32
        %v3026 = vpop.permute.xlu0 %3025
        %3028 = vst.msk [vmem:[%s2656 + $0x4] sm:$0x1] %vm2687, %v3026
        %v3029 = vld [vmem:[%s2403 + $0x1] sm:$0x1]
        %3031 = vrot.lane.b32.xlu0 %v3029, 32
        %v3032 = vpop.permute.xlu0 %3031
        %3034 = vst.msk [vmem:[#allocation4 + $0x5] sm:$0x1] %vm2687, %v3032
        %v3035 = vld [vmem:[%s2403 + $0x3] sm:$0x1]
        %3037 = vrot.lane.b32.xlu0 %v3035, 32
        %v3038 = vpop.permute.xlu0 %3037
        %3040 = vst.msk [vmem:[%s2650 + $0x5] sm:$0x1] %vm2687, %v3038
        %v3041 = vld [vmem:[%s2403 + $0x5] sm:$0x1]
        %3043 = vrot.lane.b32.xlu0 %v3041, 32
        %v3044 = vpop.permute.xlu0 %3043
        %3046 = vst.msk [vmem:[%s2653 + $0x5] sm:$0x1] %vm2687, %v3044
        %v3047 = vld [vmem:[%s2403 + $0x7] sm:$0x1]
        %3049 = vrot.lane.b32.xlu0 %v3047, 32
        %v3050 = vpop.permute.xlu0 %3049
        %3052 = vst.msk [vmem:[%s2656 + $0x5] sm:$0x1] %vm2687, %v3050
        %v3053 = vld [vmem:[%s2483 + $0x1] sm:$0x1]
        %3055 = vrot.lane.b32.xlu0 %v3053, 32
        %v3056 = vpop.permute.xlu0 %3055
        %3058 = vst.msk [vmem:[#allocation4 + $0x6] sm:$0x1] %vm2687, %v3056
        %v3059 = vld [vmem:[%s2483 + $0x3] sm:$0x1]
        %3061 = vrot.lane.b32.xlu0 %v3059, 32
        %v3062 = vpop.permute.xlu0 %3061
        %3064 = vst.msk [vmem:[%s2650 + $0x6] sm:$0x1] %vm2687, %v3062
        %v3065 = vld [vmem:[%s2483 + $0x5] sm:$0x1]
        %3067 = vrot.lane.b32.xlu0 %v3065, 32
        %v3068 = vpop.permute.xlu0 %3067
        %3070 = vst.msk [vmem:[%s2653 + $0x6] sm:$0x1] %vm2687, %v3068
        %v3071 = vld [vmem:[%s2483 + $0x7] sm:$0x1]
        %3073 = vrot.lane.b32.xlu0 %v3071, 32
        %v3074 = vpop.permute.xlu0 %3073
        %3076 = vst.msk [vmem:[%s2656 + $0x6] sm:$0x1] %vm2687, %v3074
        %v3077 = vld [vmem:[%s2563 + $0x1] sm:$0x1]
        %3079 = vrot.lane.b32.xlu0 %v3077, 32
        %v3080 = vpop.permute.xlu0 %3079
        %3082 = vst.msk [vmem:[#allocation4 + $0x7] sm:$0x1] %vm2687, %v3080
        %v3083 = vld [vmem:[%s2563 + $0x3] sm:$0x1]
        %3085 = vrot.lane.b32.xlu0 %v3083, 32
        %v3086 = vpop.permute.xlu0 %3085
        %3088 = vst.msk [vmem:[%s2650 + $0x7] sm:$0x1] %vm2687, %v3086
        %v3089 = vld [vmem:[%s2563 + $0x5] sm:$0x1]
        %3091 = vrot.lane.b32.xlu0 %v3089, 32
        %v3092 = vpop.permute.xlu0 %3091
        %3094 = vst.msk [vmem:[%s2653 + $0x7] sm:$0x1] %vm2687, %v3092
        %v3095 = vld [vmem:[%s2563 + $0x7] sm:$0x1]
        %3097 = vrot.lane.b32.xlu0 %v3095, 32
        %v3098 = vpop.permute.xlu0 %3097
        %3100 = vst.msk [vmem:[%s2656 + $0x7] sm:$0x1] %vm2687, %v3098
        %v3101 = vld [vmem:[%s2323 + $0x2] sm:$0x1]
        %3103 = vrot.lane.b32.xlu0 %v3101, 64
        %v3104 = vpop.permute.xlu0 %3103
        %3106 = vst.msk [vmem:[#allocation4 + $0x4] sm:$0x1] %vm2784, %v3104
        %v3107 = vld [vmem:[%s2323 + $0x4] sm:$0x1]
        %3109 = vrot.lane.b32.xlu0 %v3107, 64
        %v3110 = vpop.permute.xlu0 %3109
        %3112 = vst.msk [vmem:[%s2650 + $0x4] sm:$0x1] %vm2784, %v3110
        %v3113 = vld [vmem:[%s2323 + $0x6] sm:$0x1]
        %3115 = vrot.lane.b32.xlu0 %v3113, 64
        %v3116 = vpop.permute.xlu0 %3115
        %3118 = vst.msk [vmem:[%s2653 + $0x4] sm:$0x1] %vm2784, %v3116
        %v3119 = vld [vmem:[%s2323 + $0x8] sm:$0x1]
        %3121 = vrot.lane.b32.xlu0 %v3119, 64
        %v3122 = vpop.permute.xlu0 %3121
        %3124 = vst.msk [vmem:[%s2656 + $0x4] sm:$0x1] %vm2784, %v3122
        %v3125 = vld [vmem:[%s2403 + $0x2] sm:$0x1]
        %3127 = vrot.lane.b32.xlu0 %v3125, 64
        %v3128 = vpop.permute.xlu0 %3127
        %3130 = vst.msk [vmem:[#allocation4 + $0x5] sm:$0x1] %vm2784, %v3128
        %v3131 = vld [vmem:[%s2403 + $0x4] sm:$0x1]
        %3133 = vrot.lane.b32.xlu0 %v3131, 64
        %v3134 = vpop.permute.xlu0 %3133
        %3136 = vst.msk [vmem:[%s2650 + $0x5] sm:$0x1] %vm2784, %v3134
        %v3137 = vld [vmem:[%s2403 + $0x6] sm:$0x1]
        %3139 = vrot.lane.b32.xlu0 %v3137, 64
        %v3140 = vpop.permute.xlu0 %3139
        %3142 = vst.msk [vmem:[%s2653 + $0x5] sm:$0x1] %vm2784, %v3140
        %v3143 = vld [vmem:[%s2403 + $0x8] sm:$0x1]
        %3145 = vrot.lane.b32.xlu0 %v3143, 64
        %v3146 = vpop.permute.xlu0 %3145
        %3148 = vst.msk [vmem:[%s2656 + $0x5] sm:$0x1] %vm2784, %v3146
        %v3149 = vld [vmem:[%s2483 + $0x2] sm:$0x1]
        %3151 = vrot.lane.b32.xlu0 %v3149, 64
        %v3152 = vpop.permute.xlu0 %3151
        %3154 = vst.msk [vmem:[#allocation4 + $0x6] sm:$0x1] %vm2784, %v3152
        %v3155 = vld [vmem:[%s2483 + $0x4] sm:$0x1]
        %3157 = vrot.lane.b32.xlu0 %v3155, 64
        %v3158 = vpop.permute.xlu0 %3157
        %3160 = vst.msk [vmem:[%s2650 + $0x6] sm:$0x1] %vm2784, %v3158
        %v3161 = vld [vmem:[%s2483 + $0x6] sm:$0x1]
        %3163 = vrot.lane.b32.xlu0 %v3161, 64
        %v3164 = vpop.permute.xlu0 %3163
        %3166 = vst.msk [vmem:[%s2653 + $0x6] sm:$0x1] %vm2784, %v3164
        %v3167 = vld [vmem:[%s2483 + $0x8] sm:$0x1]
        %3169 = vrot.lane.b32.xlu0 %v3167, 64
        %v3170 = vpop.permute.xlu0 %3169
        %3172 = vst.msk [vmem:[%s2656 + $0x6] sm:$0x1] %vm2784, %v3170
        %v3173 = vld [vmem:[%s2563 + $0x2] sm:$0x1]
        %3175 = vrot.lane.b32.xlu0 %v3173, 64
        %v3176 = vpop.permute.xlu0 %3175
        %3178 = vst.msk [vmem:[#allocation4 + $0x7] sm:$0x1] %vm2784, %v3176
        %v3179 = vld [vmem:[%s2563 + $0x4] sm:$0x1]
        %3181 = vrot.lane.b32.xlu0 %v3179, 64
        %v3182 = vpop.permute.xlu0 %3181
        %3184 = vst.msk [vmem:[%s2650 + $0x7] sm:$0x1] %vm2784, %v3182
        %v3185 = vld [vmem:[%s2563 + $0x6] sm:$0x1]
        %3187 = vrot.lane.b32.xlu0 %v3185, 64
        %v3188 = vpop.permute.xlu0 %3187
        %3190 = vst.msk [vmem:[%s2653 + $0x7] sm:$0x1] %vm2784, %v3188
        %v3191 = vld [vmem:[%s2563 + $0x8] sm:$0x1]
        %3193 = vrot.lane.b32.xlu0 %v3191, 64
        %v3194 = vpop.permute.xlu0 %3193
        %3196 = vst.msk [vmem:[%s2656 + $0x7] sm:$0x1] %vm2784, %v3194
        %v3197 = vld [vmem:[%s2323 + $0x3] sm:$0x1]
        %3199 = vrot.lane.b32.xlu0 %v3197, 96
        %v3200 = vpop.permute.xlu0 %3199
        %3202 = vst.msk [vmem:[#allocation4 + $0x4] sm:$0x1] %vm2881, %v3200
        %v3203 = vld [vmem:[%s2323 + $0x5] sm:$0x1]
        %3205 = vrot.lane.b32.xlu0 %v3203, 96
        %v3206 = vpop.permute.xlu0 %3205
        %3208 = vst.msk [vmem:[%s2650 + $0x4] sm:$0x1] %vm2881, %v3206
        %v3209 = vld [vmem:[%s2323 + $0x7] sm:$0x1]
        %3211 = vrot.lane.b32.xlu0 %v3209, 96
        %v3212 = vpop.permute.xlu0 %3211
        %3214 = vst.msk [vmem:[%s2653 + $0x4] sm:$0x1] %vm2881, %v3212
        %v3215 = vld [vmem:[%s2323 + $0x9] sm:$0x1]
        %3217 = vrot.lane.b32.xlu0 %v3215, 96
        %v3218 = vpop.permute.xlu0 %3217
        %3220 = vst.msk [vmem:[%s2656 + $0x4] sm:$0x1] %vm2881, %v3218
        %v3221 = vld [vmem:[%s2403 + $0x3] sm:$0x1]
        %3223 = vrot.lane.b32.xlu0 %v3221, 96
        %v3224 = vpop.permute.xlu0 %3223
        %3226 = vst.msk [vmem:[#allocation4 + $0x5] sm:$0x1] %vm2881, %v3224
        %v3227 = vld [vmem:[%s2403 + $0x5] sm:$0x1]
        %3229 = vrot.lane.b32.xlu0 %v3227, 96
        %v3230 = vpop.permute.xlu0 %3229
        %3232 = vst.msk [vmem:[%s2650 + $0x5] sm:$0x1] %vm2881, %v3230
        %v3233 = vld [vmem:[%s2403 + $0x7] sm:$0x1]
        %3235 = vrot.lane.b32.xlu0 %v3233, 96
        %v3236 = vpop.permute.xlu0 %3235
        %3238 = vst.msk [vmem:[%s2653 + $0x5] sm:$0x1] %vm2881, %v3236
        %v3239 = vld [vmem:[%s2403 + $0x9] sm:$0x1]
        %3241 = vrot.lane.b32.xlu0 %v3239, 96
        %v3242 = vpop.permute.xlu0 %3241
        %3244 = vst.msk [vmem:[%s2656 + $0x5] sm:$0x1] %vm2881, %v3242
        %v3245 = vld [vmem:[%s2483 + $0x3] sm:$0x1]
        %3247 = vrot.lane.b32.xlu0 %v3245, 96
        %v3248 = vpop.permute.xlu0 %3247
        %3250 = vst.msk [vmem:[#allocation4 + $0x6] sm:$0x1] %vm2881, %v3248
        %v3251 = vld [vmem:[%s2483 + $0x5] sm:$0x1]
        %3253 = vrot.lane.b32.xlu0 %v3251, 96
        %v3254 = vpop.permute.xlu0 %3253
        %3256 = vst.msk [vmem:[%s2650 + $0x6] sm:$0x1] %vm2881, %v3254
        %v3257 = vld [vmem:[%s2483 + $0x7] sm:$0x1]
        %3259 = vrot.lane.b32.xlu0 %v3257, 96
        %v3260 = vpop.permute.xlu0 %3259
        %3262 = vst.msk [vmem:[%s2653 + $0x6] sm:$0x1] %vm2881, %v3260
        %v3263 = vld [vmem:[%s2483 + $0x9] sm:$0x1]
        %3265 = vrot.lane.b32.xlu0 %v3263, 96
        %v3266 = vpop.permute.xlu0 %3265
        %3268 = vst.msk [vmem:[%s2656 + $0x6] sm:$0x1] %vm2881, %v3266
        %v3269 = vld [vmem:[%s2563 + $0x3] sm:$0x1]
        %3271 = vrot.lane.b32.xlu0 %v3269, 96
        %v3272 = vpop.permute.xlu0 %3271
        %3274 = vst.msk [vmem:[#allocation4 + $0x7] sm:$0x1] %vm2881, %v3272
        %v3275 = vld [vmem:[%s2563 + $0x5] sm:$0x1]
        %3277 = vrot.lane.b32.xlu0 %v3275, 96
        %v3278 = vpop.permute.xlu0 %3277
        %3280 = vst.msk [vmem:[%s2650 + $0x7] sm:$0x1] %vm2881, %v3278
        %v3281 = vld [vmem:[%s2563 + $0x7] sm:$0x1]
        %3283 = vrot.lane.b32.xlu0 %v3281, 96
        %v3284 = vpop.permute.xlu0 %3283
        %3286 = vst.msk [vmem:[%s2653 + $0x7] sm:$0x1] %vm2881, %v3284
        %v3287 = vld [vmem:[%s2563 + $0x9] sm:$0x1]
        %3289 = vrot.lane.b32.xlu0 %v3287, 96
        %v3290 = vpop.permute.xlu0 %3289
        %3292 = vst.msk [vmem:[%s2656 + $0x7] sm:$0x1] %vm2881, %v3290
        %v3293 = vld [vmem:[%s2363] sm:$0x1]
        %3294 = vst.msk [vmem:[#allocation4 + $0x8] sm:$0x1] %vm2647, %v3293
        %v3295 = vld [vmem:[%s2363 + $0x2] sm:$0x1]
        %3296 = vst.msk [vmem:[%s2650 + $0x8] sm:$0x1] %vm2647, %v3295
        %v3297 = vld [vmem:[%s2363 + $0x4] sm:$0x1]
        %3298 = vst.msk [vmem:[%s2653 + $0x8] sm:$0x1] %vm2647, %v3297
        %v3299 = vld [vmem:[%s2363 + $0x6] sm:$0x1]
        %3300 = vst.msk [vmem:[%s2656 + $0x8] sm:$0x1] %vm2647, %v3299
        %v3301 = vld [vmem:[%s2443] sm:$0x1]
        %3302 = vst.msk [vmem:[#allocation4 + $0x9] sm:$0x1] %vm2647, %v3301
        %v3303 = vld [vmem:[%s2443 + $0x2] sm:$0x1]
        %3304 = vst.msk [vmem:[%s2650 + $0x9] sm:$0x1] %vm2647, %v3303
        %v3305 = vld [vmem:[%s2443 + $0x4] sm:$0x1]
        %3306 = vst.msk [vmem:[%s2653 + $0x9] sm:$0x1] %vm2647, %v3305
        %v3307 = vld [vmem:[%s2443 + $0x6] sm:$0x1]
        %3308 = vst.msk [vmem:[%s2656 + $0x9] sm:$0x1] %vm2647, %v3307
        %v3309 = vld [vmem:[%s2523] sm:$0x1]
        %3310 = vst.msk [vmem:[#allocation4 + $0xa] sm:$0x1] %vm2647, %v3309
        %v3311 = vld [vmem:[%s2523 + $0x2] sm:$0x1]
        %3312 = vst.msk [vmem:[%s2650 + $0xa] sm:$0x1] %vm2647, %v3311
        %v3313 = vld [vmem:[%s2523 + $0x4] sm:$0x1]
        %3314 = vst.msk [vmem:[%s2653 + $0xa] sm:$0x1] %vm2647, %v3313
        %v3315 = vld [vmem:[%s2523 + $0x6] sm:$0x1]
        %3316 = vst.msk [vmem:[%s2656 + $0xa] sm:$0x1] %vm2647, %v3315
        %v3317 = vld [vmem:[%s2603] sm:$0x1]
        %3318 = vst.msk [vmem:[#allocation4 + $0xb] sm:$0x1] %vm2647, %v3317
        %v3319 = vld [vmem:[%s2603 + $0x2] sm:$0x1]
        %3320 = vst.msk [vmem:[%s2650 + $0xb] sm:$0x1] %vm2647, %v3319
        %v3321 = vld [vmem:[%s2603 + $0x4] sm:$0x1]
        %3322 = vst.msk [vmem:[%s2653 + $0xb] sm:$0x1] %vm2647, %v3321
        %v3323 = vld [vmem:[%s2603 + $0x6] sm:$0x1]
        %3324 = vst.msk [vmem:[%s2656 + $0xb] sm:$0x1] %vm2647, %v3323
        %v3325 = vld [vmem:[%s2363 + $0x1] sm:$0x1]
        %3327 = vrot.lane.b32.xlu0 %v3325, 32
        %v3328 = vpop.permute.xlu0 %3327
        %3330 = vst.msk [vmem:[#allocation4 + $0x8] sm:$0x1] %vm2687, %v3328
        %v3331 = vld [vmem:[%s2363 + $0x3] sm:$0x1]
        %3333 = vrot.lane.b32.xlu0 %v3331, 32
        %v3334 = vpop.permute.xlu0 %3333
        %3336 = vst.msk [vmem:[%s2650 + $0x8] sm:$0x1] %vm2687, %v3334
        %v3337 = vld [vmem:[%s2363 + $0x5] sm:$0x1]
        %3339 = vrot.lane.b32.xlu0 %v3337, 32
        %v3340 = vpop.permute.xlu0 %3339
        %3342 = vst.msk [vmem:[%s2653 + $0x8] sm:$0x1] %vm2687, %v3340
        %v3343 = vld [vmem:[%s2363 + $0x7] sm:$0x1]
        %3345 = vrot.lane.b32.xlu0 %v3343, 32
        %v3346 = vpop.permute.xlu0 %3345
        %3348 = vst.msk [vmem:[%s2656 + $0x8] sm:$0x1] %vm2687, %v3346
        %v3349 = vld [vmem:[%s2443 + $0x1] sm:$0x1]
        %3351 = vrot.lane.b32.xlu0 %v3349, 32
        %v3352 = vpop.permute.xlu0 %3351
        %3354 = vst.msk [vmem:[#allocation4 + $0x9] sm:$0x1] %vm2687, %v3352
        %v3355 = vld [vmem:[%s2443 + $0x3] sm:$0x1]
        %3357 = vrot.lane.b32.xlu0 %v3355, 32
        %v3358 = vpop.permute.xlu0 %3357
        %3360 = vst.msk [vmem:[%s2650 + $0x9] sm:$0x1] %vm2687, %v3358
        %v3361 = vld [vmem:[%s2443 + $0x5] sm:$0x1]
        %3363 = vrot.lane.b32.xlu0 %v3361, 32
        %v3364 = vpop.permute.xlu0 %3363
        %3366 = vst.msk [vmem:[%s2653 + $0x9] sm:$0x1] %vm2687, %v3364
        %v3367 = vld [vmem:[%s2443 + $0x7] sm:$0x1]
        %3369 = vrot.lane.b32.xlu0 %v3367, 32
        %v3370 = vpop.permute.xlu0 %3369
        %3372 = vst.msk [vmem:[%s2656 + $0x9] sm:$0x1] %vm2687, %v3370
        %v3373 = vld [vmem:[%s2523 + $0x1] sm:$0x1]
        %3375 = vrot.lane.b32.xlu0 %v3373, 32
        %v3376 = vpop.permute.xlu0 %3375
        %3378 = vst.msk [vmem:[#allocation4 + $0xa] sm:$0x1] %vm2687, %v3376
        %v3379 = vld [vmem:[%s2523 + $0x3] sm:$0x1]
        %3381 = vrot.lane.b32.xlu0 %v3379, 32
        %v3382 = vpop.permute.xlu0 %3381
        %3384 = vst.msk [vmem:[%s2650 + $0xa] sm:$0x1] %vm2687, %v3382
        %v3385 = vld [vmem:[%s2523 + $0x5] sm:$0x1]
        %3387 = vrot.lane.b32.xlu0 %v3385, 32
        %v3388 = vpop.permute.xlu0 %3387
        %3390 = vst.msk [vmem:[%s2653 + $0xa] sm:$0x1] %vm2687, %v3388
        %v3391 = vld [vmem:[%s2523 + $0x7] sm:$0x1]
        %3393 = vrot.lane.b32.xlu0 %v3391, 32
        %v3394 = vpop.permute.xlu0 %3393
        %3396 = vst.msk [vmem:[%s2656 + $0xa] sm:$0x1] %vm2687, %v3394
        %v3397 = vld [vmem:[%s2603 + $0x1] sm:$0x1]
        %3399 = vrot.lane.b32.xlu0 %v3397, 32
        %v3400 = vpop.permute.xlu0 %3399
        %3402 = vst.msk [vmem:[#allocation4 + $0xb] sm:$0x1] %vm2687, %v3400
        %v3403 = vld [vmem:[%s2603 + $0x3] sm:$0x1]
        %3405 = vrot.lane.b32.xlu0 %v3403, 32
        %v3406 = vpop.permute.xlu0 %3405
        %3408 = vst.msk [vmem:[%s2650 + $0xb] sm:$0x1] %vm2687, %v3406
        %v3409 = vld [vmem:[%s2603 + $0x5] sm:$0x1]
        %3411 = vrot.lane.b32.xlu0 %v3409, 32
        %v3412 = vpop.permute.xlu0 %3411
        %3414 = vst.msk [vmem:[%s2653 + $0xb] sm:$0x1] %vm2687, %v3412
        %v3415 = vld [vmem:[%s2603 + $0x7] sm:$0x1]
        %3417 = vrot.lane.b32.xlu0 %v3415, 32
        %v3418 = vpop.permute.xlu0 %3417
        %3420 = vst.msk [vmem:[%s2656 + $0xb] sm:$0x1] %vm2687, %v3418
        %v3421 = vld [vmem:[%s2363 + $0x2] sm:$0x1]
        %3423 = vrot.lane.b32.xlu0 %v3421, 64
        %v3424 = vpop.permute.xlu0 %3423
        %3426 = vst.msk [vmem:[#allocation4 + $0x8] sm:$0x1] %vm2784, %v3424
        %v3427 = vld [vmem:[%s2363 + $0x4] sm:$0x1]
        %3429 = vrot.lane.b32.xlu0 %v3427, 64
        %v3430 = vpop.permute.xlu0 %3429
        %3432 = vst.msk [vmem:[%s2650 + $0x8] sm:$0x1] %vm2784, %v3430
        %v3433 = vld [vmem:[%s2363 + $0x6] sm:$0x1]
        %3435 = vrot.lane.b32.xlu0 %v3433, 64
        %v3436 = vpop.permute.xlu0 %3435
        %3438 = vst.msk [vmem:[%s2653 + $0x8] sm:$0x1] %vm2784, %v3436
        %v3439 = vld [vmem:[%s2363 + $0x8] sm:$0x1]
        %3441 = vrot.lane.b32.xlu0 %v3439, 64
        %v3442 = vpop.permute.xlu0 %3441
        %3444 = vst.msk [vmem:[%s2656 + $0x8] sm:$0x1] %vm2784, %v3442
        %v3445 = vld [vmem:[%s2443 + $0x2] sm:$0x1]
        %3447 = vrot.lane.b32.xlu0 %v3445, 64
        %v3448 = vpop.permute.xlu0 %3447
        %3450 = vst.msk [vmem:[#allocation4 + $0x9] sm:$0x1] %vm2784, %v3448
        %v3451 = vld [vmem:[%s2443 + $0x4] sm:$0x1]
        %3453 = vrot.lane.b32.xlu0 %v3451, 64
        %v3454 = vpop.permute.xlu0 %3453
        %3456 = vst.msk [vmem:[%s2650 + $0x9] sm:$0x1] %vm2784, %v3454
        %v3457 = vld [vmem:[%s2443 + $0x6] sm:$0x1]
        %3459 = vrot.lane.b32.xlu0 %v3457, 64
        %v3460 = vpop.permute.xlu0 %3459
        %3462 = vst.msk [vmem:[%s2653 + $0x9] sm:$0x1] %vm2784, %v3460
        %v3463 = vld [vmem:[%s2443 + $0x8] sm:$0x1]
        %3465 = vrot.lane.b32.xlu0 %v3463, 64
        %v3466 = vpop.permute.xlu0 %3465
        %3468 = vst.msk [vmem:[%s2656 + $0x9] sm:$0x1] %vm2784, %v3466
        %v3469 = vld [vmem:[%s2523 + $0x2] sm:$0x1]
        %3471 = vrot.lane.b32.xlu0 %v3469, 64
        %v3472 = vpop.permute.xlu0 %3471
        %3474 = vst.msk [vmem:[#allocation4 + $0xa] sm:$0x1] %vm2784, %v3472
        %v3475 = vld [vmem:[%s2523 + $0x4] sm:$0x1]
        %3477 = vrot.lane.b32.xlu0 %v3475, 64
        %v3478 = vpop.permute.xlu0 %3477
        %3480 = vst.msk [vmem:[%s2650 + $0xa] sm:$0x1] %vm2784, %v3478
        %v3481 = vld [vmem:[%s2523 + $0x6] sm:$0x1]
        %3483 = vrot.lane.b32.xlu0 %v3481, 64
        %v3484 = vpop.permute.xlu0 %3483
        %3486 = vst.msk [vmem:[%s2653 + $0xa] sm:$0x1] %vm2784, %v3484
        %v3487 = vld [vmem:[%s2523 + $0x8] sm:$0x1]
        %3489 = vrot.lane.b32.xlu0 %v3487, 64
        %v3490 = vpop.permute.xlu0 %3489
        %3492 = vst.msk [vmem:[%s2656 + $0xa] sm:$0x1] %vm2784, %v3490
        %v3493 = vld [vmem:[%s2603 + $0x2] sm:$0x1]
        %3495 = vrot.lane.b32.xlu0 %v3493, 64
        %v3496 = vpop.permute.xlu0 %3495
        %3498 = vst.msk [vmem:[#allocation4 + $0xb] sm:$0x1] %vm2784, %v3496
        %v3499 = vld [vmem:[%s2603 + $0x4] sm:$0x1]
        %3501 = vrot.lane.b32.xlu0 %v3499, 64
        %v3502 = vpop.permute.xlu0 %3501
        %3504 = vst.msk [vmem:[%s2650 + $0xb] sm:$0x1] %vm2784, %v3502
        %v3505 = vld [vmem:[%s2603 + $0x6] sm:$0x1]
        %3507 = vrot.lane.b32.xlu0 %v3505, 64
        %v3508 = vpop.permute.xlu0 %3507
        %3510 = vst.msk [vmem:[%s2653 + $0xb] sm:$0x1] %vm2784, %v3508
        %v3511 = vld [vmem:[%s2603 + $0x8] sm:$0x1]
        %3513 = vrot.lane.b32.xlu0 %v3511, 64
        %v3514 = vpop.permute.xlu0 %3513
        %3516 = vst.msk [vmem:[%s2656 + $0xb] sm:$0x1] %vm2784, %v3514
        %v3517 = vld [vmem:[%s2363 + $0x3] sm:$0x1]
        %3519 = vrot.lane.b32.xlu0 %v3517, 96
        %v3520 = vpop.permute.xlu0 %3519
        %3522 = vst.msk [vmem:[#allocation4 + $0x8] sm:$0x1] %vm2881, %v3520
        %v3523 = vld [vmem:[%s2363 + $0x5] sm:$0x1]
        %3525 = vrot.lane.b32.xlu0 %v3523, 96
        %v3526 = vpop.permute.xlu0 %3525
        %3528 = vst.msk [vmem:[%s2650 + $0x8] sm:$0x1] %vm2881, %v3526
        %v3529 = vld [vmem:[%s2363 + $0x7] sm:$0x1]
        %3531 = vrot.lane.b32.xlu0 %v3529, 96
        %v3532 = vpop.permute.xlu0 %3531
        %3534 = vst.msk [vmem:[%s2653 + $0x8] sm:$0x1] %vm2881, %v3532
        %v3535 = vld [vmem:[%s2363 + $0x9] sm:$0x1]
        %3537 = vrot.lane.b32.xlu0 %v3535, 96
        %v3538 = vpop.permute.xlu0 %3537
        %3540 = vst.msk [vmem:[%s2656 + $0x8] sm:$0x1] %vm2881, %v3538
        %v3541 = vld [vmem:[%s2443 + $0x3] sm:$0x1]
        %3543 = vrot.lane.b32.xlu0 %v3541, 96
        %v3544 = vpop.permute.xlu0 %3543
        %3546 = vst.msk [vmem:[#allocation4 + $0x9] sm:$0x1] %vm2881, %v3544
        %v3547 = vld [vmem:[%s2443 + $0x5] sm:$0x1]
        %3549 = vrot.lane.b32.xlu0 %v3547, 96
        %v3550 = vpop.permute.xlu0 %3549
        %3552 = vst.msk [vmem:[%s2650 + $0x9] sm:$0x1] %vm2881, %v3550
        %v3553 = vld [vmem:[%s2443 + $0x7] sm:$0x1]
        %3555 = vrot.lane.b32.xlu0 %v3553, 96
        %v3556 = vpop.permute.xlu0 %3555
        %3558 = vst.msk [vmem:[%s2653 + $0x9] sm:$0x1] %vm2881, %v3556
        %v3559 = vld [vmem:[%s2443 + $0x9] sm:$0x1]
        %3561 = vrot.lane.b32.xlu0 %v3559, 96
        %v3562 = vpop.permute.xlu0 %3561
        %3564 = vst.msk [vmem:[%s2656 + $0x9] sm:$0x1] %vm2881, %v3562
        %v3565 = vld [vmem:[%s2523 + $0x3] sm:$0x1]
        %3567 = vrot.lane.b32.xlu0 %v3565, 96
        %v3568 = vpop.permute.xlu0 %3567
        %3570 = vst.msk [vmem:[#allocation4 + $0xa] sm:$0x1] %vm2881, %v3568
        %v3571 = vld [vmem:[%s2523 + $0x5] sm:$0x1]
        %3573 = vrot.lane.b32.xlu0 %v3571, 96
        %v3574 = vpop.permute.xlu0 %3573
        %3576 = vst.msk [vmem:[%s2650 + $0xa] sm:$0x1] %vm2881, %v3574
        %v3577 = vld [vmem:[%s2523 + $0x7] sm:$0x1]
        %3579 = vrot.lane.b32.xlu0 %v3577, 96
        %v3580 = vpop.permute.xlu0 %3579
        %3582 = vst.msk [vmem:[%s2653 + $0xa] sm:$0x1] %vm2881, %v3580
        %v3583 = vld [vmem:[%s2523 + $0x9] sm:$0x1]
        %3585 = vrot.lane.b32.xlu0 %v3583, 96
        %v3586 = vpop.permute.xlu0 %3585
        %3588 = vst.msk [vmem:[%s2656 + $0xa] sm:$0x1] %vm2881, %v3586
        %v3589 = vld [vmem:[%s2603 + $0x3] sm:$0x1]
        %3591 = vrot.lane.b32.xlu0 %v3589, 96
        %v3592 = vpop.permute.xlu0 %3591
        %3594 = vst.msk [vmem:[#allocation4 + $0xb] sm:$0x1] %vm2881, %v3592
        %v3595 = vld [vmem:[%s2603 + $0x5] sm:$0x1]
        %3597 = vrot.lane.b32.xlu0 %v3595, 96
        %v3598 = vpop.permute.xlu0 %3597
        %3600 = vst.msk [vmem:[%s2650 + $0xb] sm:$0x1] %vm2881, %v3598
        %v3601 = vld [vmem:[%s2603 + $0x7] sm:$0x1]
        %3603 = vrot.lane.b32.xlu0 %v3601, 96
        %v3604 = vpop.permute.xlu0 %3603
        %3606 = vst.msk [vmem:[%s2653 + $0xb] sm:$0x1] %vm2881, %v3604
        %v3607 = vld [vmem:[%s2603 + $0x9] sm:$0x1]
        %3609 = vrot.lane.b32.xlu0 %v3607, 96
        %v3610 = vpop.permute.xlu0 %3609
        %3612 = vst.msk [vmem:[%s2656 + $0xb] sm:$0x1] %vm2881, %v3610
        %v3613 = vld [vmem:[%s2403] sm:$0x1]
        %3614 = vst.msk [vmem:[#allocation4 + $0xc] sm:$0x1] %vm2647, %v3613
        %v3615 = vld [vmem:[%s2403 + $0x2] sm:$0x1]
        %3616 = vst.msk [vmem:[%s2650 + $0xc] sm:$0x1] %vm2647, %v3615
        %v3617 = vld [vmem:[%s2403 + $0x4] sm:$0x1]
        %3618 = vst.msk [vmem:[%s2653 + $0xc] sm:$0x1] %vm2647, %v3617
        %v3619 = vld [vmem:[%s2403 + $0x6] sm:$0x1]
        %3620 = vst.msk [vmem:[%s2656 + $0xc] sm:$0x1] %vm2647, %v3619
        %v3621 = vld [vmem:[%s2483] sm:$0x1]
        %3622 = vst.msk [vmem:[#allocation4 + $0xd] sm:$0x1] %vm2647, %v3621
        %v3623 = vld [vmem:[%s2483 + $0x2] sm:$0x1]
        %3624 = vst.msk [vmem:[%s2650 + $0xd] sm:$0x1] %vm2647, %v3623
        %v3625 = vld [vmem:[%s2483 + $0x4] sm:$0x1]
        %3626 = vst.msk [vmem:[%s2653 + $0xd] sm:$0x1] %vm2647, %v3625
        %v3627 = vld [vmem:[%s2483 + $0x6] sm:$0x1]
        %3628 = vst.msk [vmem:[%s2656 + $0xd] sm:$0x1] %vm2647, %v3627
        %v3629 = vld [vmem:[%s2563] sm:$0x1]
        %3630 = vst.msk [vmem:[#allocation4 + $0xe] sm:$0x1] %vm2647, %v3629
        %v3631 = vld [vmem:[%s2563 + $0x2] sm:$0x1]
        %3632 = vst.msk [vmem:[%s2650 + $0xe] sm:$0x1] %vm2647, %v3631
        %v3633 = vld [vmem:[%s2563 + $0x4] sm:$0x1]
        %3634 = vst.msk [vmem:[%s2653 + $0xe] sm:$0x1] %vm2647, %v3633
        %v3635 = vld [vmem:[%s2563 + $0x6] sm:$0x1]
        %3636 = vst.msk [vmem:[%s2656 + $0xe] sm:$0x1] %vm2647, %v3635
        %v3637 = vld [vmem:[%s2643] sm:$0x1]
        %3638 = vst.msk [vmem:[#allocation4 + $0xf] sm:$0x1] %vm2647, %v3637
        %v3639 = vld [vmem:[%s2643 + $0x2] sm:$0x1]
        %3640 = vst.msk [vmem:[%s2650 + $0xf] sm:$0x1] %vm2647, %v3639
        %v3641 = vld [vmem:[%s2643 + $0x4] sm:$0x1]
        %3642 = vst.msk [vmem:[%s2653 + $0xf] sm:$0x1] %vm2647, %v3641
        %v3643 = vld [vmem:[%s2643 + $0x6] sm:$0x1]
        %3644 = vst.msk [vmem:[%s2656 + $0xf] sm:$0x1] %vm2647, %v3643
        %v3645 = vld [vmem:[%s2403 + $0x1] sm:$0x1]
        %3647 = vrot.lane.b32.xlu0 %v3645, 32
        %v3648 = vpop.permute.xlu0 %3647
        %3650 = vst.msk [vmem:[#allocation4 + $0xc] sm:$0x1] %vm2687, %v3648
        %v3651 = vld [vmem:[%s2403 + $0x3] sm:$0x1]
        %3653 = vrot.lane.b32.xlu0 %v3651, 32
        %v3654 = vpop.permute.xlu0 %3653
        %3656 = vst.msk [vmem:[%s2650 + $0xc] sm:$0x1] %vm2687, %v3654
        %v3657 = vld [vmem:[%s2403 + $0x5] sm:$0x1]
        %3659 = vrot.lane.b32.xlu0 %v3657, 32
        %v3660 = vpop.permute.xlu0 %3659
        %3662 = vst.msk [vmem:[%s2653 + $0xc] sm:$0x1] %vm2687, %v3660
        %v3663 = vld [vmem:[%s2403 + $0x7] sm:$0x1]
        %3665 = vrot.lane.b32.xlu0 %v3663, 32
        %v3666 = vpop.permute.xlu0 %3665
        %3668 = vst.msk [vmem:[%s2656 + $0xc] sm:$0x1] %vm2687, %v3666
        %v3669 = vld [vmem:[%s2483 + $0x1] sm:$0x1]
        %3671 = vrot.lane.b32.xlu0 %v3669, 32
        %v3672 = vpop.permute.xlu0 %3671
        %3674 = vst.msk [vmem:[#allocation4 + $0xd] sm:$0x1] %vm2687, %v3672
        %v3675 = vld [vmem:[%s2483 + $0x3] sm:$0x1]
        %3677 = vrot.lane.b32.xlu0 %v3675, 32
        %v3678 = vpop.permute.xlu0 %3677
        %3680 = vst.msk [vmem:[%s2650 + $0xd] sm:$0x1] %vm2687, %v3678
        %v3681 = vld [vmem:[%s2483 + $0x5] sm:$0x1]
        %3683 = vrot.lane.b32.xlu0 %v3681, 32
        %v3684 = vpop.permute.xlu0 %3683
        %3686 = vst.msk [vmem:[%s2653 + $0xd] sm:$0x1] %vm2687, %v3684
        %v3687 = vld [vmem:[%s2483 + $0x7] sm:$0x1]
        %3689 = vrot.lane.b32.xlu0 %v3687, 32
        %v3690 = vpop.permute.xlu0 %3689
        %3692 = vst.msk [vmem:[%s2656 + $0xd] sm:$0x1] %vm2687, %v3690
        %v3693 = vld [vmem:[%s2563 + $0x1] sm:$0x1]
        %3695 = vrot.lane.b32.xlu0 %v3693, 32
        %v3696 = vpop.permute.xlu0 %3695
        %3698 = vst.msk [vmem:[#allocation4 + $0xe] sm:$0x1] %vm2687, %v3696
        %v3699 = vld [vmem:[%s2563 + $0x3] sm:$0x1]
        %3701 = vrot.lane.b32.xlu0 %v3699, 32
        %v3702 = vpop.permute.xlu0 %3701
        %3704 = vst.msk [vmem:[%s2650 + $0xe] sm:$0x1] %vm2687, %v3702
        %v3705 = vld [vmem:[%s2563 + $0x5] sm:$0x1]
        %3707 = vrot.lane.b32.xlu0 %v3705, 32
        %v3708 = vpop.permute.xlu0 %3707
        %3710 = vst.msk [vmem:[%s2653 + $0xe] sm:$0x1] %vm2687, %v3708
        %v3711 = vld [vmem:[%s2563 + $0x7] sm:$0x1]
        %3713 = vrot.lane.b32.xlu0 %v3711, 32
        %v3714 = vpop.permute.xlu0 %3713
        %3716 = vst.msk [vmem:[%s2656 + $0xe] sm:$0x1] %vm2687, %v3714
        %v3717 = vld [vmem:[%s2643 + $0x1] sm:$0x1]
        %3719 = vrot.lane.b32.xlu0 %v3717, 32
        %v3720 = vpop.permute.xlu0 %3719
        %3722 = vst.msk [vmem:[#allocation4 + $0xf] sm:$0x1] %vm2687, %v3720
        %v3723 = vld [vmem:[%s2643 + $0x3] sm:$0x1]
        %3725 = vrot.lane.b32.xlu0 %v3723, 32
        %v3726 = vpop.permute.xlu0 %3725
        %3728 = vst.msk [vmem:[%s2650 + $0xf] sm:$0x1] %vm2687, %v3726
        %v3729 = vld [vmem:[%s2643 + $0x5] sm:$0x1]
        %3731 = vrot.lane.b32.xlu0 %v3729, 32
        %v3732 = vpop.permute.xlu0 %3731
        %3734 = vst.msk [vmem:[%s2653 + $0xf] sm:$0x1] %vm2687, %v3732
        %v3735 = vld [vmem:[%s2643 + $0x7] sm:$0x1]
        %3737 = vrot.lane.b32.xlu0 %v3735, 32
        %v3738 = vpop.permute.xlu0 %3737
        %3740 = vst.msk [vmem:[%s2656 + $0xf] sm:$0x1] %vm2687, %v3738
        %v3741 = vld [vmem:[%s2403 + $0x2] sm:$0x1]
        %3743 = vrot.lane.b32.xlu0 %v3741, 64
        %v3744 = vpop.permute.xlu0 %3743
        %3746 = vst.msk [vmem:[#allocation4 + $0xc] sm:$0x1] %vm2784, %v3744
        %v3747 = vld [vmem:[%s2403 + $0x4] sm:$0x1]
        %3749 = vrot.lane.b32.xlu0 %v3747, 64
        %v3750 = vpop.permute.xlu0 %3749
        %3752 = vst.msk [vmem:[%s2650 + $0xc] sm:$0x1] %vm2784, %v3750
        %v3753 = vld [vmem:[%s2403 + $0x6] sm:$0x1]
        %3755 = vrot.lane.b32.xlu0 %v3753, 64
        %v3756 = vpop.permute.xlu0 %3755
        %3758 = vst.msk [vmem:[%s2653 + $0xc] sm:$0x1] %vm2784, %v3756
        %v3759 = vld [vmem:[%s2403 + $0x8] sm:$0x1]
        %3761 = vrot.lane.b32.xlu0 %v3759, 64
        %v3762 = vpop.permute.xlu0 %3761
        %3764 = vst.msk [vmem:[%s2656 + $0xc] sm:$0x1] %vm2784, %v3762
        %v3765 = vld [vmem:[%s2483 + $0x2] sm:$0x1]
        %3767 = vrot.lane.b32.xlu0 %v3765, 64
        %v3768 = vpop.permute.xlu0 %3767
        %3770 = vst.msk [vmem:[#allocation4 + $0xd] sm:$0x1] %vm2784, %v3768
        %v3771 = vld [vmem:[%s2483 + $0x4] sm:$0x1]
        %3773 = vrot.lane.b32.xlu0 %v3771, 64
        %v3774 = vpop.permute.xlu0 %3773
        %3776 = vst.msk [vmem:[%s2650 + $0xd] sm:$0x1] %vm2784, %v3774
        %v3777 = vld [vmem:[%s2483 + $0x6] sm:$0x1]
        %3779 = vrot.lane.b32.xlu0 %v3777, 64
        %v3780 = vpop.permute.xlu0 %3779
        %3782 = vst.msk [vmem:[%s2653 + $0xd] sm:$0x1] %vm2784, %v3780
        %v3783 = vld [vmem:[%s2483 + $0x8] sm:$0x1]
        %3785 = vrot.lane.b32.xlu0 %v3783, 64
        %v3786 = vpop.permute.xlu0 %3785
        %3788 = vst.msk [vmem:[%s2656 + $0xd] sm:$0x1] %vm2784, %v3786
        %v3789 = vld [vmem:[%s2563 + $0x2] sm:$0x1]
        %3791 = vrot.lane.b32.xlu0 %v3789, 64
        %v3792 = vpop.permute.xlu0 %3791
        %3794 = vst.msk [vmem:[#allocation4 + $0xe] sm:$0x1] %vm2784, %v3792
        %v3795 = vld [vmem:[%s2563 + $0x4] sm:$0x1]
        %3797 = vrot.lane.b32.xlu0 %v3795, 64
        %v3798 = vpop.permute.xlu0 %3797
        %3800 = vst.msk [vmem:[%s2650 + $0xe] sm:$0x1] %vm2784, %v3798
        %v3801 = vld [vmem:[%s2563 + $0x6] sm:$0x1]
        %3803 = vrot.lane.b32.xlu0 %v3801, 64
        %v3804 = vpop.permute.xlu0 %3803
        %3806 = vst.msk [vmem:[%s2653 + $0xe] sm:$0x1] %vm2784, %v3804
        %v3807 = vld [vmem:[%s2563 + $0x8] sm:$0x1]
        %3809 = vrot.lane.b32.xlu0 %v3807, 64
        %v3810 = vpop.permute.xlu0 %3809
        %3812 = vst.msk [vmem:[%s2656 + $0xe] sm:$0x1] %vm2784, %v3810
        %v3813 = vld [vmem:[%s2643 + $0x2] sm:$0x1]
        %3815 = vrot.lane.b32.xlu0 %v3813, 64
        %v3816 = vpop.permute.xlu0 %3815
        %3818 = vst.msk [vmem:[#allocation4 + $0xf] sm:$0x1] %vm2784, %v3816
        %v3819 = vld [vmem:[%s2643 + $0x4] sm:$0x1]
        %3821 = vrot.lane.b32.xlu0 %v3819, 64
        %v3822 = vpop.permute.xlu0 %3821
        %3824 = vst.msk [vmem:[%s2650 + $0xf] sm:$0x1] %vm2784, %v3822
        %v3825 = vld [vmem:[%s2643 + $0x6] sm:$0x1]
        %3827 = vrot.lane.b32.xlu0 %v3825, 64
        %v3828 = vpop.permute.xlu0 %3827
        %3830 = vst.msk [vmem:[%s2653 + $0xf] sm:$0x1] %vm2784, %v3828
        %v3831 = vld [vmem:[%s2643 + $0x8] sm:$0x1]
        %3833 = vrot.lane.b32.xlu0 %v3831, 64
        %v3834 = vpop.permute.xlu0 %3833
        %3836 = vst.msk [vmem:[%s2656 + $0xf] sm:$0x1] %vm2784, %v3834
        %v3837 = vld [vmem:[%s2403 + $0x3] sm:$0x1]
        %3839 = vrot.lane.b32.xlu0 %v3837, 96
        %v3840 = vpop.permute.xlu0 %3839
        %3842 = vst.msk [vmem:[#allocation4 + $0xc] sm:$0x1] %vm2881, %v3840
        %v3843 = vld [vmem:[%s2403 + $0x5] sm:$0x1]
        %3845 = vrot.lane.b32.xlu0 %v3843, 96
        %v3846 = vpop.permute.xlu0 %3845
        %3848 = vst.msk [vmem:[%s2650 + $0xc] sm:$0x1] %vm2881, %v3846
        %v3849 = vld [vmem:[%s2403 + $0x7] sm:$0x1]
        %3851 = vrot.lane.b32.xlu0 %v3849, 96
        %v3852 = vpop.permute.xlu0 %3851
        %3854 = vst.msk [vmem:[%s2653 + $0xc] sm:$0x1] %vm2881, %v3852
        %v3855 = vld [vmem:[%s2403 + $0x9] sm:$0x1]
        %3857 = vrot.lane.b32.xlu0 %v3855, 96
        %v3858 = vpop.permute.xlu0 %3857
        %3860 = vst.msk [vmem:[%s2656 + $0xc] sm:$0x1] %vm2881, %v3858
        %v3861 = vld [vmem:[%s2483 + $0x3] sm:$0x1]
        %3863 = vrot.lane.b32.xlu0 %v3861, 96
        %v3864 = vpop.permute.xlu0 %3863
        %3866 = vst.msk [vmem:[#allocation4 + $0xd] sm:$0x1] %vm2881, %v3864
        %v3867 = vld [vmem:[%s2483 + $0x5] sm:$0x1]
        %3869 = vrot.lane.b32.xlu0 %v3867, 96
        %v3870 = vpop.permute.xlu0 %3869
        %3872 = vst.msk [vmem:[%s2650 + $0xd] sm:$0x1] %vm2881, %v3870
        %v3873 = vld [vmem:[%s2483 + $0x7] sm:$0x1]
        %3875 = vrot.lane.b32.xlu0 %v3873, 96
        %v3876 = vpop.permute.xlu0 %3875
        %3878 = vst.msk [vmem:[%s2653 + $0xd] sm:$0x1] %vm2881, %v3876
        %v3879 = vld [vmem:[%s2483 + $0x9] sm:$0x1]
        %3881 = vrot.lane.b32.xlu0 %v3879, 96
        %v3882 = vpop.permute.xlu0 %3881
        %3884 = vst.msk [vmem:[%s2656 + $0xd] sm:$0x1] %vm2881, %v3882
        %v3885 = vld [vmem:[%s2563 + $0x3] sm:$0x1]
        %3887 = vrot.lane.b32.xlu0 %v3885, 96
        %v3888 = vpop.permute.xlu0 %3887
        %3890 = vst.msk [vmem:[#allocation4 + $0xe] sm:$0x1] %vm2881, %v3888
        %v3891 = vld [vmem:[%s2563 + $0x5] sm:$0x1]
        %3893 = vrot.lane.b32.xlu0 %v3891, 96
        %v3894 = vpop.permute.xlu0 %3893
        %3896 = vst.msk [vmem:[%s2650 + $0xe] sm:$0x1] %vm2881, %v3894
        %v3897 = vld [vmem:[%s2563 + $0x7] sm:$0x1]
        %3899 = vrot.lane.b32.xlu0 %v3897, 96
        %v3900 = vpop.permute.xlu0 %3899
        %3902 = vst.msk [vmem:[%s2653 + $0xe] sm:$0x1] %vm2881, %v3900
        %v3903 = vld [vmem:[%s2563 + $0x9] sm:$0x1]
        %3905 = vrot.lane.b32.xlu0 %v3903, 96
        %v3906 = vpop.permute.xlu0 %3905
        %3908 = vst.msk [vmem:[%s2656 + $0xe] sm:$0x1] %vm2881, %v3906
        %v3909 = vld [vmem:[%s2643 + $0x3] sm:$0x1]
        %3911 = vrot.lane.b32.xlu0 %v3909, 96
        %v3912 = vpop.permute.xlu0 %3911
        %3914 = vst.msk [vmem:[#allocation4 + $0xf] sm:$0x1] %vm2881, %v3912
        %v3915 = vld [vmem:[%s2643 + $0x5] sm:$0x1]
        %3917 = vrot.lane.b32.xlu0 %v3915, 96
        %v3918 = vpop.permute.xlu0 %3917
        %3920 = vst.msk [vmem:[%s2650 + $0xf] sm:$0x1] %vm2881, %v3918
        %v3921 = vld [vmem:[%s2643 + $0x7] sm:$0x1]
        %3923 = vrot.lane.b32.xlu0 %v3921, 96
        %v3924 = vpop.permute.xlu0 %3923
        %3926 = vst.msk [vmem:[%s2653 + $0xf] sm:$0x1] %vm2881, %v3924
        %v3927 = vld [vmem:[%s2643 + $0x9] sm:$0x1]
        %3929 = vrot.lane.b32.xlu0 %v3927, 96
        %v3930 = vpop.permute.xlu0 %3929
        %3932 = vst.msk [vmem:[%s2656 + $0xf] sm:$0x1] %vm2881, %v3930
        %v3933 = vld [vmem:[%s3] sm:$0xf]
        %v3934 = vld [vmem:[%s3 + $0x4] sm:$0xf]
        %v3935 = vld [vmem:[%s3 + $0x8] sm:$0xf]
        %v3936 = vld [vmem:[%s3 + $0xc] sm:$0xf]
        %v3937 = vld [vmem:[%s3 + $0x10] sm:$0xf]
        %v3938 = vld [vmem:[%s3 + $0x14] sm:$0xf]
        %v3939 = vld [vmem:[%s3 + $0x18] sm:$0xf]
        %v3940 = vld [vmem:[%s3 + $0x1c] sm:$0xf]
        %v3941 = vld [vmem:[%s3 + $0x20] sm:$0xf]
        %v3942 = vld [vmem:[%s3 + $0x24] sm:$0xf]
        %v3943 = vld [vmem:[%s3 + $0x28] sm:$0xf]
        %v3944 = vld [vmem:[%s3 + $0x2c] sm:$0xf]
        %v3945 = vld [vmem:[%s3 + $0x30] sm:$0xf]
        %v3946 = vld [vmem:[%s3 + $0x34] sm:$0xf]
        %v3947 = vld [vmem:[%s3 + $0x38] sm:$0xf]
        %v3948 = vld [vmem:[%s3 + $0x3c] sm:$0xf]
        %v3949 = vld [vmem:[%s3 + $0x40] sm:$0xf]
        %v3950 = vld [vmem:[%s3 + $0x44] sm:$0xf]
        %v3951 = vld [vmem:[%s3 + $0x48] sm:$0xf]
        %v3952 = vld [vmem:[%s3 + $0x4c] sm:$0xf]
        %v3953 = vld [vmem:[%s3 + $0x50] sm:$0xf]
        %v3954 = vld [vmem:[%s3 + $0x54] sm:$0xf]
        %v3955 = vld [vmem:[%s3 + $0x58] sm:$0xf]
        %v3956 = vld [vmem:[%s3 + $0x5c] sm:$0xf]
        %v3957 = vld [vmem:[%s3 + $0x60] sm:$0xf]
        %v3958 = vld [vmem:[%s3 + $0x64] sm:$0xf]
        %v3959 = vld [vmem:[%s3 + $0x68] sm:$0xf]
        %v3960 = vld [vmem:[%s3 + $0x6c] sm:$0xf]
        %v3961 = vld [vmem:[%s3 + $0x70] sm:$0xf]
        %v3962 = vld [vmem:[%s3 + $0x74] sm:$0xf]
        %v3963 = vld [vmem:[%s3 + $0x78] sm:$0xf]
        %v3964 = vld [vmem:[%s3 + $0x7c] sm:$0xf]
        %v3965 = vld [vmem:[%s3 + $0x80] sm:$0xf]
        %v3966 = vld [vmem:[%s3 + $0x84] sm:$0xf]
        %v3967 = vld [vmem:[%s3 + $0x88] sm:$0xf]
        %v3968 = vld [vmem:[%s3 + $0x8c] sm:$0xf]
        %v3969 = vld [vmem:[%s3 + $0x90] sm:$0xf]
        %v3970 = vld [vmem:[%s3 + $0x94] sm:$0xf]
        %v3971 = vld [vmem:[%s3 + $0x98] sm:$0xf]
        %v3972 = vld [vmem:[%s3 + $0x9c] sm:$0xf]
        %v3973 = vld [vmem:[%s3 + $0xa0] sm:$0xf]
        %v3974 = vld [vmem:[%s3 + $0xa4] sm:$0xf]
        %v3975 = vld [vmem:[%s3 + $0xa8] sm:$0xf]
        %v3976 = vld [vmem:[%s3 + $0xac] sm:$0xf]
        %v3977 = vld [vmem:[%s3 + $0xb0] sm:$0xf]
        %v3978 = vld [vmem:[%s3 + $0xb4] sm:$0xf]
        %v3979 = vld [vmem:[%s3 + $0xb8] sm:$0xf]
        %v3980 = vld [vmem:[%s3 + $0xbc] sm:$0xf]
        %v3981 = vld [vmem:[%s3 + $0xc0] sm:$0xf]
        %v3982 = vld [vmem:[%s3 + $0xc4] sm:$0xf]
        %v3983 = vld [vmem:[%s3 + $0xc8] sm:$0xf]
        %v3984 = vld [vmem:[%s3 + $0xcc] sm:$0xf]
        %v3985 = vld [vmem:[%s3 + $0xd0] sm:$0xf]
        %v3986 = vld [vmem:[%s3 + $0xd4] sm:$0xf]
        %v3987 = vld [vmem:[%s3 + $0xd8] sm:$0xf]
        %v3988 = vld [vmem:[%s3 + $0xdc] sm:$0xf]
        %v3989 = vld [vmem:[%s3 + $0xe0] sm:$0xf]
        %v3990 = vld [vmem:[%s3 + $0xe4] sm:$0xf]
        %v3991 = vld [vmem:[%s3 + $0xe8] sm:$0xf]
        %v3992 = vld [vmem:[%s3 + $0xec] sm:$0xf]
        %v3993 = vld [vmem:[%s3 + $0xf0] sm:$0xf]
        %v3994 = vld [vmem:[%s3 + $0xf4] sm:$0xf]
        %v3995 = vld [vmem:[%s3 + $0xf8] sm:$0xf]
        %v3996 = vld [vmem:[%s3 + $0xfc] sm:$0xf]
        %v3997 = vld [vmem:[%s4] sm:$0x1]
        %v3998 = vld [vmem:[#allocation4] sm:$0xff]
        %v3999 = vld [vmem:[#allocation4 + $0x8] sm:$0xff]
        %4002 = vst [vmem:[#allocation1] ss:$2 sm:$0xff] %v3998
        %s4003 = scalar_lea.vmem [#allocation1], 16
        %4004 = vst [vmem:[%s4003] ss:$2 sm:$0xff] %v3999
        %v4005 = vld.sshfl [vmem:[#allocation1] sm:$0xff pattern:$0x75316420]
        %v4006 = vld.sshfl [vmem:[#allocation1 + $0x8] sm:$0xff pattern:$0x75316420]
        %v4007 = vld.sshfl [vmem:[#allocation1 + $0x10] sm:$0xff pattern:$0x75316420]
        %v4008 = vld.sshfl [vmem:[#allocation1 + $0x18] sm:$0xff pattern:$0x75316420]
        %v4013 = vpack.c.bf16 %v4005, %v4005
        %v4014 = vpack.c.bf16 %v4006, %v4006
        %v4015 = vpack.c.bf16 %v4007, %v4007
        %v4016 = vpack.c.bf16 %v4008, %v4008
        %v4018 = vperm.slane %v3997, 0
        %v4084 = vunpack.c.l.b16 %v3933
        %v4085 = vunpack.c.l.b16 %v3934
        %v4086 = vunpack.c.l.b16 %v3935
        %v4087 = vunpack.c.l.b16 %v3936
        %v4088 = vunpack.c.l.b16 %v3937
        %v4089 = vunpack.c.l.b16 %v3938
        %v4090 = vunpack.c.l.b16 %v3939
        %v4091 = vunpack.c.l.b16 %v3940
        %v4092 = vunpack.c.l.b16 %v3941
        %v4093 = vunpack.c.l.b16 %v3942
        %v4094 = vunpack.c.l.b16 %v3943
        %v4095 = vunpack.c.l.b16 %v3944
        %v4096 = vunpack.c.l.b16 %v3945
        %v4097 = vunpack.c.l.b16 %v3946
        %v4098 = vunpack.c.l.b16 %v3947
        %v4099 = vunpack.c.l.b16 %v3948
        %v4100 = vunpack.c.l.b16 %v3949
        %v4101 = vunpack.c.l.b16 %v3950
        %v4102 = vunpack.c.l.b16 %v3951
        %v4103 = vunpack.c.l.b16 %v3952
        %v4104 = vunpack.c.l.b16 %v3953
        %v4105 = vunpack.c.l.b16 %v3954
        %v4106 = vunpack.c.l.b16 %v3955
        %v4107 = vunpack.c.l.b16 %v3956
        %v4108 = vunpack.c.l.b16 %v3957
        %v4109 = vunpack.c.l.b16 %v3958
        %v4110 = vunpack.c.l.b16 %v3959
        %v4111 = vunpack.c.l.b16 %v3960
        %v4112 = vunpack.c.l.b16 %v3961
        %v4113 = vunpack.c.l.b16 %v3962
        %v4114 = vunpack.c.l.b16 %v3963
        %v4115 = vunpack.c.l.b16 %v3964
        %v4116 = vunpack.c.l.b16 %v3965
        %v4117 = vunpack.c.l.b16 %v3966
        %v4118 = vunpack.c.l.b16 %v3967
        %v4119 = vunpack.c.l.b16 %v3968
        %v4120 = vunpack.c.l.b16 %v3969
        %v4121 = vunpack.c.l.b16 %v3970
        %v4122 = vunpack.c.l.b16 %v3971
        %v4123 = vunpack.c.l.b16 %v3972
        %v4124 = vunpack.c.l.b16 %v3973
        %v4125 = vunpack.c.l.b16 %v3974
        %v4126 = vunpack.c.l.b16 %v3975
        %v4127 = vunpack.c.l.b16 %v3976
        %v4128 = vunpack.c.l.b16 %v3977
        %v4129 = vunpack.c.l.b16 %v3978
        %v4130 = vunpack.c.l.b16 %v3979
        %v4131 = vunpack.c.l.b16 %v3980
        %v4132 = vunpack.c.l.b16 %v3981
        %v4133 = vunpack.c.l.b16 %v3982
        %v4134 = vunpack.c.l.b16 %v3983
        %v4135 = vunpack.c.l.b16 %v3984
        %v4136 = vunpack.c.l.b16 %v3985
        %v4137 = vunpack.c.l.b16 %v3986
        %v4138 = vunpack.c.l.b16 %v3987
        %v4139 = vunpack.c.l.b16 %v3988
        %v4140 = vunpack.c.l.b16 %v3989
        %v4141 = vunpack.c.l.b16 %v3990
        %v4142 = vunpack.c.l.b16 %v3991
        %v4143 = vunpack.c.l.b16 %v3992
        %v4144 = vunpack.c.l.b16 %v3993
        %v4145 = vunpack.c.l.b16 %v3994
        %v4146 = vunpack.c.l.b16 %v3995
        %v4147 = vunpack.c.l.b16 %v3996
        %v4148 = vpack.c.b16 %v4085, %v4084
        %v4149 = vpack.c.b16 %v4087, %v4086
        %v4150 = vpack.c.b16 %v4089, %v4088
        %v4151 = vpack.c.b16 %v4091, %v4090
        %v4152 = vpack.c.b16 %v4093, %v4092
        %v4153 = vpack.c.b16 %v4095, %v4094
        %v4154 = vpack.c.b16 %v4097, %v4096
        %v4155 = vpack.c.b16 %v4099, %v4098
        %v4156 = vpack.c.b16 %v4101, %v4100
        %v4157 = vpack.c.b16 %v4103, %v4102
        %v4158 = vpack.c.b16 %v4105, %v4104
        %v4159 = vpack.c.b16 %v4107, %v4106
        %v4160 = vpack.c.b16 %v4109, %v4108
        %v4161 = vpack.c.b16 %v4111, %v4110
        %v4162 = vpack.c.b16 %v4113, %v4112
        %v4163 = vpack.c.b16 %v4115, %v4114
        %v4164 = vpack.c.b16 %v4117, %v4116
        %v4165 = vpack.c.b16 %v4119, %v4118
        %v4166 = vpack.c.b16 %v4121, %v4120
        %v4167 = vpack.c.b16 %v4123, %v4122
        %v4168 = vpack.c.b16 %v4125, %v4124
        %v4169 = vpack.c.b16 %v4127, %v4126
        %v4170 = vpack.c.b16 %v4129, %v4128
        %v4171 = vpack.c.b16 %v4131, %v4130
        %v4172 = vpack.c.b16 %v4133, %v4132
        %v4173 = vpack.c.b16 %v4135, %v4134
        %v4174 = vpack.c.b16 %v4137, %v4136
        %v4175 = vpack.c.b16 %v4139, %v4138
        %v4176 = vpack.c.b16 %v4141, %v4140
        %v4177 = vpack.c.b16 %v4143, %v4142
        %v4178 = vpack.c.b16 %v4145, %v4144
        %v4179 = vpack.c.b16 %v4147, %v4146
        %4212 = vmatpush.bf16.msra.mxu0 %v4155
        %4213 = vmatpush.bf16.msra.mxu0 %v4154
        %4214 = vmatpush.bf16.msra.mxu0 %v4153
        %4215 = vmatpush.bf16.msra.mxu0 %v4152
        %4216 = vmatpush.bf16.msra.mxu0 %v4151
        %4217 = vmatpush.bf16.msra.mxu0 %v4150
        %4218 = vmatpush.bf16.msra.mxu0 %v4149
        %4219 = vmatpush.bf16.msra.mxu0 %v4148
        %4220 = vmatmul.bf16.gmra.mxu0 %v4013
        %v4221 = vpop.f32.mrf.mxu0
        %v4222 = vadd.f32 %v4018, %v4221
        %v4223 = vpop.f32.mrf.mxu0
        %4224 = vdwg.mxu0
        %4225 = vmatpush.bf16.msra.mxu0 %v4163
        %4226 = vmatpush.bf16.msra.mxu0 %v4162
        %4227 = vmatpush.bf16.msra.mxu0 %v4161
        %4228 = vmatpush.bf16.msra.mxu0 %v4160
        %4229 = vmatpush.bf16.msra.mxu0 %v4159
        %4230 = vmatpush.bf16.msra.mxu0 %v4158
        %4231 = vmatpush.bf16.msra.mxu0 %v4157
        %4232 = vmatpush.bf16.msra.mxu0 %v4156
        %4233 = vmatmul.bf16.gmra.mxu0 %v4014
        %v4234 = vpop.f32.mrf.mxu0
        %v4235 = vadd.f32 %v4222, %v4234
        %v4236 = vpop.f32.mrf.mxu0
        %4237 = vdwg.mxu0
        %4238 = vmatpush.bf16.msra.mxu0 %v4171
        %4239 = vmatpush.bf16.msra.mxu0 %v4170
        %4240 = vmatpush.bf16.msra.mxu0 %v4169
        %4241 = vmatpush.bf16.msra.mxu0 %v4168
        %4242 = vmatpush.bf16.msra.mxu0 %v4167
        %4243 = vmatpush.bf16.msra.mxu0 %v4166
        %4244 = vmatpush.bf16.msra.mxu0 %v4165
        %4245 = vmatpush.bf16.msra.mxu0 %v4164
        %4246 = vmatmul.bf16.gmra.mxu0 %v4015
        %v4247 = vpop.f32.mrf.mxu0
        %v4248 = vadd.f32 %v4235, %v4247
        %v4249 = vpop.f32.mrf.mxu0
        %4250 = vdwg.mxu0
        %4251 = vmatpush.bf16.msra.mxu0 %v4179
        %4252 = vmatpush.bf16.msra.mxu0 %v4178
        %4253 = vmatpush.bf16.msra.mxu0 %v4177
        %4254 = vmatpush.bf16.msra.mxu0 %v4176
        %4255 = vmatpush.bf16.msra.mxu0 %v4175
        %4256 = vmatpush.bf16.msra.mxu0 %v4174
        %4257 = vmatpush.bf16.msra.mxu0 %v4173
        %4258 = vmatpush.bf16.msra.mxu0 %v4172
        %4259 = vmatmul.bf16.gmra.mxu0 %v4016
        %v4260 = vpop.f32.mrf.mxu0
        %v4261 = vadd.f32 %v4248, %v4260
        %v4262 = vpop.f32.mrf.mxu0
        %4263 = vdwg.mxu0
        %v4264 = vmax.f32 %v4261, 0.0
        %vm4265 = vcmask 519168
        %4266 = vst.msk [vmem:[#allocation5] sm:$0xf] %vm4265, %v4264
        %v4267 = vld [vmem:[%s2650] sm:$0xff]
        %v4268 = vld [vmem:[%s2650 + $0x8] sm:$0xff]
        %4271 = vst [vmem:[#allocation1] ss:$2 sm:$0xff] %v4267
        %s4272 = scalar_lea.vmem [#allocation1], 16
        %4273 = vst [vmem:[%s4272] ss:$2 sm:$0xff] %v4268
        %v4274 = vld.sshfl [vmem:[#allocation1] sm:$0xff pattern:$0x75316420]
        %v4275 = vld.sshfl [vmem:[#allocation1 + $0x8] sm:$0xff pattern:$0x75316420]
        %v4276 = vld.sshfl [vmem:[#allocation1 + $0x10] sm:$0xff pattern:$0x75316420]
        %v4277 = vld.sshfl [vmem:[#allocation1 + $0x18] sm:$0xff pattern:$0x75316420]
        %v4282 = vpack.c.bf16 %v4274, %v4274
        %v4283 = vpack.c.bf16 %v4275, %v4275
        %v4284 = vpack.c.bf16 %v4276, %v4276
        %v4285 = vpack.c.bf16 %v4277, %v4277
        %4286 = vmatpush.bf16.msra.mxu0 %v4155
        %4287 = vmatpush.bf16.msra.mxu0 %v4154
        %4288 = vmatpush.bf16.msra.mxu0 %v4153
        %4289 = vmatpush.bf16.msra.mxu0 %v4152
        %4290 = vmatpush.bf16.msra.mxu0 %v4151
        %4291 = vmatpush.bf16.msra.mxu0 %v4150
        %4292 = vmatpush.bf16.msra.mxu0 %v4149
        %4293 = vmatpush.bf16.msra.mxu0 %v4148
        %4294 = vmatmul.bf16.gmra.mxu0 %v4282
        %v4295 = vpop.f32.mrf.mxu0
        %v4296 = vadd.f32 %v4018, %v4295
        %v4297 = vpop.f32.mrf.mxu0
        %4298 = vdwg.mxu0
        %4299 = vmatpush.bf16.msra.mxu0 %v4163
        %4300 = vmatpush.bf16.msra.mxu0 %v4162
        %4301 = vmatpush.bf16.msra.mxu0 %v4161
        %4302 = vmatpush.bf16.msra.mxu0 %v4160
        %4303 = vmatpush.bf16.msra.mxu0 %v4159
        %4304 = vmatpush.bf16.msra.mxu0 %v4158
        %4305 = vmatpush.bf16.msra.mxu0 %v4157
        %4306 = vmatpush.bf16.msra.mxu0 %v4156
        %4307 = vmatmul.bf16.gmra.mxu0 %v4283
        %v4308 = vpop.f32.mrf.mxu0
        %v4309 = vadd.f32 %v4296, %v4308
        %v4310 = vpop.f32.mrf.mxu0
        %4311 = vdwg.mxu0
        %4312 = vmatpush.bf16.msra.mxu0 %v4171
        %4313 = vmatpush.bf16.msra.mxu0 %v4170
        %4314 = vmatpush.bf16.msra.mxu0 %v4169
        %4315 = vmatpush.bf16.msra.mxu0 %v4168
        %4316 = vmatpush.bf16.msra.mxu0 %v4167
        %4317 = vmatpush.bf16.msra.mxu0 %v4166
        %4318 = vmatpush.bf16.msra.mxu0 %v4165
        %4319 = vmatpush.bf16.msra.mxu0 %v4164
        %4320 = vmatmul.bf16.gmra.mxu0 %v4284
        %v4321 = vpop.f32.mrf.mxu0
        %v4322 = vadd.f32 %v4309, %v4321
        %v4323 = vpop.f32.mrf.mxu0
        %4324 = vdwg.mxu0
        %4325 = vmatpush.bf16.msra.mxu0 %v4179
        %4326 = vmatpush.bf16.msra.mxu0 %v4178
        %4327 = vmatpush.bf16.msra.mxu0 %v4177
        %4328 = vmatpush.bf16.msra.mxu0 %v4176
        %4329 = vmatpush.bf16.msra.mxu0 %v4175
        %4330 = vmatpush.bf16.msra.mxu0 %v4174
        %4331 = vmatpush.bf16.msra.mxu0 %v4173
        %4332 = vmatpush.bf16.msra.mxu0 %v4172
        %4333 = vmatmul.bf16.gmra.mxu0 %v4285
        %v4334 = vpop.f32.mrf.mxu0
        %v4335 = vadd.f32 %v4322, %v4334
        %v4336 = vpop.f32.mrf.mxu0
        %4337 = vdwg.mxu0
        %v4338 = vmax.f32 %v4335, 0.0
        %s4339 = scalar_lea.vmem [#allocation5], 4
        %4340 = vst.msk [vmem:[%s4339] sm:$0xf] %vm4265, %v4338
        %v4341 = vld [vmem:[%s2653] sm:$0xff]
        %v4342 = vld [vmem:[%s2653 + $0x8] sm:$0xff]
        %4345 = vst [vmem:[#allocation1] ss:$2 sm:$0xff] %v4341
        %s4346 = scalar_lea.vmem [#allocation1], 16
        %4347 = vst [vmem:[%s4346] ss:$2 sm:$0xff] %v4342
        %v4348 = vld.sshfl [vmem:[#allocation1] sm:$0xff pattern:$0x75316420]
        %v4349 = vld.sshfl [vmem:[#allocation1 + $0x8] sm:$0xff pattern:$0x75316420]
        %v4350 = vld.sshfl [vmem:[#allocation1 + $0x10] sm:$0xff pattern:$0x75316420]
        %v4351 = vld.sshfl [vmem:[#allocation1 + $0x18] sm:$0xff pattern:$0x75316420]
        %v4356 = vpack.c.bf16 %v4348, %v4348
        %v4357 = vpack.c.bf16 %v4349, %v4349
        %v4358 = vpack.c.bf16 %v4350, %v4350
        %v4359 = vpack.c.bf16 %v4351, %v4351
        %4360 = vmatpush.bf16.msra.mxu0 %v4155
        %4361 = vmatpush.bf16.msra.mxu0 %v4154
        %4362 = vmatpush.bf16.msra.mxu0 %v4153
        %4363 = vmatpush.bf16.msra.mxu0 %v4152
        %4364 = vmatpush.bf16.msra.mxu0 %v4151
        %4365 = vmatpush.bf16.msra.mxu0 %v4150
        %4366 = vmatpush.bf16.msra.mxu0 %v4149
        %4367 = vmatpush.bf16.msra.mxu0 %v4148
        %4368 = vmatmul.bf16.gmra.mxu0 %v4356
        %v4369 = vpop.f32.mrf.mxu0
        %v4370 = vadd.f32 %v4018, %v4369
        %v4371 = vpop.f32.mrf.mxu0
        %4372 = vdwg.mxu0
        %4373 = vmatpush.bf16.msra.mxu0 %v4163
        %4374 = vmatpush.bf16.msra.mxu0 %v4162
        %4375 = vmatpush.bf16.msra.mxu0 %v4161
        %4376 = vmatpush.bf16.msra.mxu0 %v4160
        %4377 = vmatpush.bf16.msra.mxu0 %v4159
        %4378 = vmatpush.bf16.msra.mxu0 %v4158
        %4379 = vmatpush.bf16.msra.mxu0 %v4157
        %4380 = vmatpush.bf16.msra.mxu0 %v4156
        %4381 = vmatmul.bf16.gmra.mxu0 %v4357
        %v4382 = vpop.f32.mrf.mxu0
        %v4383 = vadd.f32 %v4370, %v4382
        %v4384 = vpop.f32.mrf.mxu0
        %4385 = vdwg.mxu0
        %4386 = vmatpush.bf16.msra.mxu0 %v4171
        %4387 = vmatpush.bf16.msra.mxu0 %v4170
        %4388 = vmatpush.bf16.msra.mxu0 %v4169
        %4389 = vmatpush.bf16.msra.mxu0 %v4168
        %4390 = vmatpush.bf16.msra.mxu0 %v4167
        %4391 = vmatpush.bf16.msra.mxu0 %v4166
        %4392 = vmatpush.bf16.msra.mxu0 %v4165
        %4393 = vmatpush.bf16.msra.mxu0 %v4164
        %4394 = vmatmul.bf16.gmra.mxu0 %v4358
        %v4395 = vpop.f32.mrf.mxu0
        %v4396 = vadd.f32 %v4383, %v4395
        %v4397 = vpop.f32.mrf.mxu0
        %4398 = vdwg.mxu0
        %4399 = vmatpush.bf16.msra.mxu0 %v4179
        %4400 = vmatpush.bf16.msra.mxu0 %v4178
        %4401 = vmatpush.bf16.msra.mxu0 %v4177
        %4402 = vmatpush.bf16.msra.mxu0 %v4176
        %4403 = vmatpush.bf16.msra.mxu0 %v4175
        %4404 = vmatpush.bf16.msra.mxu0 %v4174
        %4405 = vmatpush.bf16.msra.mxu0 %v4173
        %4406 = vmatpush.bf16.msra.mxu0 %v4172
        %4407 = vmatmul.bf16.gmra.mxu0 %v4359
        %v4408 = vpop.f32.mrf.mxu0
        %v4409 = vadd.f32 %v4396, %v4408
        %v4410 = vpop.f32.mrf.mxu0
        %4411 = vdwg.mxu0
        %v4412 = vmax.f32 %v4409, 0.0
        %s4413 = scalar_lea.vmem [#allocation5], 8
        %4414 = vst.msk [vmem:[%s4413] sm:$0xf] %vm4265, %v4412
        %v4415 = vld [vmem:[%s2656] sm:$0xff]
        %v4416 = vld [vmem:[%s2656 + $0x8] sm:$0xff]
        %4419 = vst [vmem:[#allocation1] ss:$2 sm:$0xff] %v4415
        %s4420 = scalar_lea.vmem [#allocation1], 16
        %4421 = vst [vmem:[%s4420] ss:$2 sm:$0xff] %v4416
        %v4422 = vld.sshfl [vmem:[#allocation1] sm:$0xff pattern:$0x75316420]
        %v4423 = vld.sshfl [vmem:[#allocation1 + $0x8] sm:$0xff pattern:$0x75316420]
        %v4424 = vld.sshfl [vmem:[#allocation1 + $0x10] sm:$0xff pattern:$0x75316420]
        %v4425 = vld.sshfl [vmem:[#allocation1 + $0x18] sm:$0xff pattern:$0x75316420]
        %v4430 = vpack.c.bf16 %v4422, %v4422
        %v4431 = vpack.c.bf16 %v4423, %v4423
        %v4432 = vpack.c.bf16 %v4424, %v4424
        %v4433 = vpack.c.bf16 %v4425, %v4425
        %4434 = vmatpush.bf16.msra.mxu0 %v4155
        %4435 = vmatpush.bf16.msra.mxu0 %v4154
        %4436 = vmatpush.bf16.msra.mxu0 %v4153
        %4437 = vmatpush.bf16.msra.mxu0 %v4152
        %4438 = vmatpush.bf16.msra.mxu0 %v4151
        %4439 = vmatpush.bf16.msra.mxu0 %v4150
        %4440 = vmatpush.bf16.msra.mxu0 %v4149
        %4441 = vmatpush.bf16.msra.mxu0 %v4148
        %4442 = vmatmul.bf16.gmra.mxu0 %v4430
        %v4443 = vpop.f32.mrf.mxu0
        %v4444 = vadd.f32 %v4018, %v4443
        %v4445 = vpop.f32.mrf.mxu0
        %4446 = vdwg.mxu0
        %4447 = vmatpush.bf16.msra.mxu0 %v4163
        %4448 = vmatpush.bf16.msra.mxu0 %v4162
        %4449 = vmatpush.bf16.msra.mxu0 %v4161
        %4450 = vmatpush.bf16.msra.mxu0 %v4160
        %4451 = vmatpush.bf16.msra.mxu0 %v4159
        %4452 = vmatpush.bf16.msra.mxu0 %v4158
        %4453 = vmatpush.bf16.msra.mxu0 %v4157
        %4454 = vmatpush.bf16.msra.mxu0 %v4156
        %4455 = vmatmul.bf16.gmra.mxu0 %v4431
        %v4456 = vpop.f32.mrf.mxu0
        %v4457 = vadd.f32 %v4444, %v4456
        %v4458 = vpop.f32.mrf.mxu0
        %4459 = vdwg.mxu0
        %4460 = vmatpush.bf16.msra.mxu0 %v4171
        %4461 = vmatpush.bf16.msra.mxu0 %v4170
        %4462 = vmatpush.bf16.msra.mxu0 %v4169
        %4463 = vmatpush.bf16.msra.mxu0 %v4168
        %4464 = vmatpush.bf16.msra.mxu0 %v4167
        %4465 = vmatpush.bf16.msra.mxu0 %v4166
        %4466 = vmatpush.bf16.msra.mxu0 %v4165
        %4467 = vmatpush.bf16.msra.mxu0 %v4164
        %4468 = vmatmul.bf16.gmra.mxu0 %v4432
        %v4469 = vpop.f32.mrf.mxu0
        %v4470 = vadd.f32 %v4457, %v4469
        %v4471 = vpop.f32.mrf.mxu0
        %4472 = vdwg.mxu0
        %4473 = vmatpush.bf16.msra.mxu0 %v4179
        %4474 = vmatpush.bf16.msra.mxu0 %v4178
        %4475 = vmatpush.bf16.msra.mxu0 %v4177
        %4476 = vmatpush.bf16.msra.mxu0 %v4176
        %4477 = vmatpush.bf16.msra.mxu0 %v4175
        %4478 = vmatpush.bf16.msra.mxu0 %v4174
        %4479 = vmatpush.bf16.msra.mxu0 %v4173
        %4480 = vmatpush.bf16.msra.mxu0 %v4172
        %4481 = vmatmul.bf16.gmra.mxu0 %v4433
        %v4482 = vpop.f32.mrf.mxu0
        %v4483 = vadd.f32 %v4470, %v4482
        %v4484 = vpop.f32.mrf.mxu0
        %4485 = vdwg.mxu0
        %v4486 = vmax.f32 %v4483, 0.0
        %s4487 = scalar_lea.vmem [#allocation5], 12
        %4488 = vst.msk [vmem:[%s4487] sm:$0xf] %vm4265, %v4486
        %v4489 = vld [vmem:[#allocation5] sm:$0x3]
        %v4490 = vld [vmem:[#allocation5 + $0x4] sm:$0x3]
        %vm4491 = vcmask 517120
        %4492 = vst.msk [vmem:[#allocation6] sm:$0x3] %vm4491, %v4489
        %4493 = vst.msk [vmem:[#allocation6 + $0xa] sm:$0x3] %vm4491, %v4490
        %v4494 = vld [vmem:[%s4339] sm:$0x3]
        %v4495 = vld [vmem:[%s4339 + $0x4] sm:$0x3]
        %4498 = vrot.lane.b32.xlu0 %v4494, 64
        %v4499 = vpop.permute.xlu0 %4498
        %4500 = vrot.lane.b32.xlu0 %v4495, 64
        %v4501 = vpop.permute.xlu0 %4500
        %vm4504 = vcmask 1041920
        %4505 = vst.msk [vmem:[#allocation6] sm:$0x3] %vm4504, %v4499
        %4506 = vst.msk [vmem:[#allocation6 + $0xa] sm:$0x3] %vm4504, %v4501
        %v4507 = vld [vmem:[%s4413] sm:$0x3]
        %v4508 = vld [vmem:[%s4413 + $0x4] sm:$0x3]
        %4509 = vst.msk [vmem:[#allocation6 + $0x2] sm:$0x3] %vm4491, %v4507
        %4510 = vst.msk [vmem:[#allocation6 + $0xc] sm:$0x3] %vm4491, %v4508
        %v4511 = vld [vmem:[#allocation5 + $0x1] sm:$0x3]
        %v4512 = vld [vmem:[#allocation5 + $0x5] sm:$0x3]
        %4515 = vrot.lane.b32.xlu0 %v4511, 64
        %v4516 = vpop.permute.xlu0 %4515
        %4517 = vrot.lane.b32.xlu0 %v4512, 64
        %v4518 = vpop.permute.xlu0 %4517
        %4521 = vst.msk [vmem:[#allocation6 + $0x2] sm:$0x3] %vm4504, %v4516
        %4522 = vst.msk [vmem:[#allocation6 + $0xc] sm:$0x3] %vm4504, %v4518
        %v4523 = vld [vmem:[%s4339 + $0x1] sm:$0x3]
        %v4524 = vld [vmem:[%s4339 + $0x5] sm:$0x3]
        %4525 = vst.msk [vmem:[#allocation6 + $0x4] sm:$0x3] %vm4491, %v4523
        %4526 = vst.msk [vmem:[#allocation6 + $0xe] sm:$0x3] %vm4491, %v4524
        %v4527 = vld [vmem:[%s4413 + $0x1] sm:$0x3]
        %v4528 = vld [vmem:[%s4413 + $0x5] sm:$0x3]
        %4531 = vrot.lane.b32.xlu0 %v4527, 64
        %v4532 = vpop.permute.xlu0 %4531
        %4533 = vrot.lane.b32.xlu0 %v4528, 64
        %v4534 = vpop.permute.xlu0 %4533
        %4537 = vst.msk [vmem:[#allocation6 + $0x4] sm:$0x3] %vm4504, %v4532
        %4538 = vst.msk [vmem:[#allocation6 + $0xe] sm:$0x3] %vm4504, %v4534
        %v4539 = vld [vmem:[#allocation5 + $0x2] sm:$0x3]
        %v4540 = vld [vmem:[#allocation5 + $0x6] sm:$0x3]
        %4541 = vst.msk [vmem:[#allocation6 + $0x6] sm:$0x3] %vm4491, %v4539
        %4542 = vst.msk [vmem:[#allocation6 + $0x10] sm:$0x3] %vm4491, %v4540
        %v4543 = vld [vmem:[%s4339 + $0x2] sm:$0x3]
        %v4544 = vld [vmem:[%s4339 + $0x6] sm:$0x3]
        %4547 = vrot.lane.b32.xlu0 %v4543, 64
        %v4548 = vpop.permute.xlu0 %4547
        %4549 = vrot.lane.b32.xlu0 %v4544, 64
        %v4550 = vpop.permute.xlu0 %4549
        %4553 = vst.msk [vmem:[#allocation6 + $0x6] sm:$0x3] %vm4504, %v4548
        %4554 = vst.msk [vmem:[#allocation6 + $0x10] sm:$0x3] %vm4504, %v4550
        %v4555 = vld [vmem:[%s4413 + $0x2] sm:$0x3]
        %v4556 = vld [vmem:[%s4413 + $0x6] sm:$0x3]
        %4557 = vst.msk [vmem:[#allocation6 + $0x8] sm:$0x3] %vm4491, %v4555
        %4558 = vst.msk [vmem:[#allocation6 + $0x12] sm:$0x3] %vm4491, %v4556
        %v4559 = vld [vmem:[%s5] sm:$0xf]
        %v4560 = vld [vmem:[%s5 + $0x4] sm:$0xf]
        %v4561 = vld [vmem:[%s5 + $0x8] sm:$0xf]
        %v4562 = vld [vmem:[%s5 + $0xc] sm:$0xf]
        %v4563 = vld [vmem:[%s5 + $0x10] sm:$0xf]
        %v4564 = vld [vmem:[%s5 + $0x14] sm:$0xf]
        %v4565 = vld [vmem:[%s5 + $0x18] sm:$0xf]
        %v4566 = vld [vmem:[%s5 + $0x1c] sm:$0xf]
        %v4567 = vld [vmem:[%s5 + $0x20] sm:$0xf]
        %v4568 = vld [vmem:[%s5 + $0x24] sm:$0xf]
        %v4569 = vld [vmem:[%s5 + $0x28] sm:$0xf]
        %v4570 = vld [vmem:[%s5 + $0x2c] sm:$0xf]
        %v4571 = vld [vmem:[%s5 + $0x30] sm:$0xf]
        %v4572 = vld [vmem:[%s5 + $0x34] sm:$0xf]
        %v4573 = vld [vmem:[%s5 + $0x38] sm:$0xf]
        %v4574 = vld [vmem:[%s5 + $0x3c] sm:$0xf]
        %v4575 = vld [vmem:[%s5 + $0x40] sm:$0xf]
        %v4576 = vld [vmem:[%s5 + $0x44] sm:$0xf]
        %v4577 = vld [vmem:[%s5 + $0x48] sm:$0xf]
        %v4578 = vld [vmem:[%s5 + $0x4c] sm:$0xf]
        %v4579 = vld [vmem:[%s5 + $0x50] sm:$0xf]
        %v4580 = vld [vmem:[%s5 + $0x54] sm:$0xf]
        %v4581 = vld [vmem:[%s5 + $0x58] sm:$0xf]
        %v4582 = vld [vmem:[%s5 + $0x5c] sm:$0xf]
        %v4583 = vld [vmem:[%s5 + $0x60] sm:$0xf]
        %v4584 = vld [vmem:[%s5 + $0x64] sm:$0xf]
        %v4585 = vld [vmem:[%s5 + $0x68] sm:$0xf]
        %v4586 = vld [vmem:[%s5 + $0x6c] sm:$0xf]
        %v4587 = vld [vmem:[%s5 + $0x70] sm:$0xf]
        %v4588 = vld [vmem:[%s5 + $0x74] sm:$0xf]
        %v4589 = vld [vmem:[%s5 + $0x78] sm:$0xf]
        %v4590 = vld [vmem:[%s5 + $0x7c] sm:$0xf]
        %v4591 = vld [vmem:[%s5 + $0x80] sm:$0xf]
        %v4592 = vld [vmem:[%s5 + $0x84] sm:$0xf]
        %v4593 = vld [vmem:[%s5 + $0x88] sm:$0xf]
        %v4594 = vld [vmem:[%s5 + $0x8c] sm:$0xf]
        %v4595 = vld [vmem:[%s5 + $0x90] sm:$0xf]
        %v4596 = vld [vmem:[%s5 + $0x94] sm:$0xf]
        %v4597 = vld [vmem:[%s5 + $0x98] sm:$0xf]
        %v4598 = vld [vmem:[%s5 + $0x9c] sm:$0xf]
        %v4599 = vld [vmem:[%s5 + $0xa0] sm:$0xf]
        %v4600 = vld [vmem:[%s5 + $0xa4] sm:$0xf]
        %v4601 = vld [vmem:[%s5 + $0xa8] sm:$0xf]
        %v4602 = vld [vmem:[%s5 + $0xac] sm:$0xf]
        %v4603 = vld [vmem:[%s5 + $0xb0] sm:$0xf]
        %v4604 = vld [vmem:[%s5 + $0xb4] sm:$0xf]
        %v4605 = vld [vmem:[%s5 + $0xb8] sm:$0xf]
        %v4606 = vld [vmem:[%s5 + $0xbc] sm:$0xf]
        %v4607 = vld [vmem:[%s5 + $0xc0] sm:$0xf]
        %v4608 = vld [vmem:[%s5 + $0xc4] sm:$0xf]
        %v4609 = vld [vmem:[%s5 + $0xc8] sm:$0xf]
        %v4610 = vld [vmem:[%s5 + $0xcc] sm:$0xf]
        %v4611 = vld [vmem:[%s5 + $0xd0] sm:$0xf]
        %v4612 = vld [vmem:[%s5 + $0xd4] sm:$0xf]
        %v4613 = vld [vmem:[%s5 + $0xd8] sm:$0xf]
        %v4614 = vld [vmem:[%s5 + $0xdc] sm:$0xf]
        %v4615 = vld [vmem:[%s5 + $0xe0] sm:$0xf]
        %v4616 = vld [vmem:[%s5 + $0xe4] sm:$0xf]
        %v4617 = vld [vmem:[%s5 + $0xe8] sm:$0xf]
        %v4618 = vld [vmem:[%s5 + $0xec] sm:$0xf]
        %v4619 = vld [vmem:[%s5 + $0xf0] sm:$0xf]
        %v4620 = vld [vmem:[%s5 + $0xf4] sm:$0xf]
        %v4621 = vld [vmem:[%s5 + $0xf8] sm:$0xf]
        %v4622 = vld [vmem:[%s5 + $0xfc] sm:$0xf]
        %v4623 = vld [vmem:[%s5 + $0x100] sm:$0xf]
        %v4624 = vld [vmem:[%s5 + $0x104] sm:$0xf]
        %v4625 = vld [vmem:[%s5 + $0x108] sm:$0xf]
        %v4626 = vld [vmem:[%s5 + $0x10c] sm:$0xf]
        %v4627 = vld [vmem:[%s5 + $0x110] sm:$0xf]
        %v4628 = vld [vmem:[%s5 + $0x114] sm:$0xf]
        %v4629 = vld [vmem:[%s5 + $0x118] sm:$0xf]
        %v4630 = vld [vmem:[%s5 + $0x11c] sm:$0xf]
        %v4631 = vld [vmem:[%s6] sm:$0x1]
        %v4632 = vld [vmem:[#allocation6] sm:$0xff]
        %v4633 = vld [vmem:[#allocation6 + $0x8] sm:$0x3]
        %4636 = vst [vmem:[#allocation1] ss:$4 sm:$0xff] %v4632
        %s4637 = scalar_lea.vmem [#allocation1], 32
        %4638 = vst [vmem:[%s4637] ss:$4 sm:$0xff] %v4633
        %v4639 = vld.sshfl [vmem:[#allocation1] sm:$0xff pattern:$0x73625140]
        %v4640 = vld.sshfl [vmem:[#allocation1 + $0x8] sm:$0xff pattern:$0x73625140]
        %v4641 = vld.sshfl [vmem:[#allocation1 + $0x10] sm:$0xff pattern:$0x73625140]
        %v4642 = vld.sshfl [vmem:[#allocation1 + $0x18] sm:$0xff pattern:$0x73625140]
        %v4643 = vld.sshfl [vmem:[#allocation1 + $0x20] sm:$0xff pattern:$0x73625140]
        %v4649 = vpack.c.bf16 %v4639, %v4639
        %v4650 = vpack.c.bf16 %v4640, %v4640
        %v4651 = vpack.c.bf16 %v4641, %v4641
        %v4652 = vpack.c.bf16 %v4642, %v4642
        %v4653 = vpack.c.bf16 %v4643, %v4643
        %v4655 = vperm.slane %v4631, 0
        %v4729 = vunpack.c.l.b16 %v4559
        %v4730 = vunpack.c.l.b16 %v4560
        %v4731 = vunpack.c.l.b16 %v4561
        %v4732 = vunpack.c.l.b16 %v4562
        %v4733 = vunpack.c.l.b16 %v4563
        %v4734 = vunpack.c.l.b16 %v4564
        %v4735 = vunpack.c.l.b16 %v4565
        %v4736 = vunpack.c.l.b16 %v4566
        %v4737 = vunpack.c.l.b16 %v4567
        %v4738 = vunpack.c.l.b16 %v4568
        %v4739 = vunpack.c.l.b16 %v4569
        %v4740 = vunpack.c.l.b16 %v4570
        %v4741 = vunpack.c.l.b16 %v4571
        %v4742 = vunpack.c.l.b16 %v4572
        %v4743 = vunpack.c.l.b16 %v4573
        %v4744 = vunpack.c.l.b16 %v4574
        %v4745 = vunpack.c.l.b16 %v4575
        %v4746 = vunpack.c.l.b16 %v4576
        %v4747 = vunpack.c.l.b16 %v4577
        %v4748 = vunpack.c.l.b16 %v4578
        %v4749 = vunpack.c.l.b16 %v4579
        %v4750 = vunpack.c.l.b16 %v4580
        %v4751 = vunpack.c.l.b16 %v4581
        %v4752 = vunpack.c.l.b16 %v4582
        %v4753 = vunpack.c.l.b16 %v4583
        %v4754 = vunpack.c.l.b16 %v4584
        %v4755 = vunpack.c.l.b16 %v4585
        %v4756 = vunpack.c.l.b16 %v4586
        %v4757 = vunpack.c.l.b16 %v4587
        %v4758 = vunpack.c.l.b16 %v4588
        %v4759 = vunpack.c.l.b16 %v4589
        %v4760 = vunpack.c.l.b16 %v4590
        %v4761 = vunpack.c.l.b16 %v4591
        %v4762 = vunpack.c.l.b16 %v4592
        %v4763 = vunpack.c.l.b16 %v4593
        %v4764 = vunpack.c.l.b16 %v4594
        %v4765 = vunpack.c.l.b16 %v4595
        %v4766 = vunpack.c.l.b16 %v4596
        %v4767 = vunpack.c.l.b16 %v4597
        %v4768 = vunpack.c.l.b16 %v4598
        %v4769 = vunpack.c.l.b16 %v4599
        %v4770 = vunpack.c.l.b16 %v4600
        %v4771 = vunpack.c.l.b16 %v4601
        %v4772 = vunpack.c.l.b16 %v4602
        %v4773 = vunpack.c.l.b16 %v4603
        %v4774 = vunpack.c.l.b16 %v4604
        %v4775 = vunpack.c.l.b16 %v4605
        %v4776 = vunpack.c.l.b16 %v4606
        %v4777 = vunpack.c.l.b16 %v4607
        %v4778 = vunpack.c.l.b16 %v4608
        %v4779 = vunpack.c.l.b16 %v4609
        %v4780 = vunpack.c.l.b16 %v4610
        %v4781 = vunpack.c.l.b16 %v4611
        %v4782 = vunpack.c.l.b16 %v4612
        %v4783 = vunpack.c.l.b16 %v4613
        %v4784 = vunpack.c.l.b16 %v4614
        %v4785 = vunpack.c.l.b16 %v4615
        %v4786 = vunpack.c.l.b16 %v4616
        %v4787 = vunpack.c.l.b16 %v4617
        %v4788 = vunpack.c.l.b16 %v4618
        %v4789 = vunpack.c.l.b16 %v4619
        %v4790 = vunpack.c.l.b16 %v4620
        %v4791 = vunpack.c.l.b16 %v4621
        %v4792 = vunpack.c.l.b16 %v4622
        %v4793 = vunpack.c.l.b16 %v4623
        %v4794 = vunpack.c.l.b16 %v4624
        %v4795 = vunpack.c.l.b16 %v4625
        %v4796 = vunpack.c.l.b16 %v4626
        %v4797 = vunpack.c.l.b16 %v4627
        %v4798 = vunpack.c.l.b16 %v4628
        %v4799 = vunpack.c.l.b16 %v4629
        %v4800 = vunpack.c.l.b16 %v4630
        %v4801 = vpack.c.b16 %v4730, %v4729
        %v4802 = vpack.c.b16 %v4732, %v4731
        %v4803 = vpack.c.b16 %v4734, %v4733
        %v4804 = vpack.c.b16 %v4736, %v4735
        %v4805 = vpack.c.b16 %v4738, %v4737
        %v4806 = vpack.c.b16 %v4740, %v4739
        %v4807 = vpack.c.b16 %v4742, %v4741
        %v4808 = vpack.c.b16 %v4744, %v4743
        %v4809 = vpack.c.b16 %v4746, %v4745
        %v4810 = vpack.c.b16 %v4748, %v4747
        %v4811 = vpack.c.b16 %v4750, %v4749
        %v4812 = vpack.c.b16 %v4752, %v4751
        %v4813 = vpack.c.b16 %v4754, %v4753
        %v4814 = vpack.c.b16 %v4756, %v4755
        %v4815 = vpack.c.b16 %v4758, %v4757
        %v4816 = vpack.c.b16 %v4760, %v4759
        %v4817 = vpack.c.b16 %v4762, %v4761
        %v4818 = vpack.c.b16 %v4764, %v4763
        %v4819 = vpack.c.b16 %v4766, %v4765
        %v4820 = vpack.c.b16 %v4768, %v4767
        %v4821 = vpack.c.b16 %v4770, %v4769
        %v4822 = vpack.c.b16 %v4772, %v4771
        %v4823 = vpack.c.b16 %v4774, %v4773
        %v4824 = vpack.c.b16 %v4776, %v4775
        %v4825 = vpack.c.b16 %v4778, %v4777
        %v4826 = vpack.c.b16 %v4780, %v4779
        %v4827 = vpack.c.b16 %v4782, %v4781
        %v4828 = vpack.c.b16 %v4784, %v4783
        %v4829 = vpack.c.b16 %v4786, %v4785
        %v4830 = vpack.c.b16 %v4788, %v4787
        %v4831 = vpack.c.b16 %v4790, %v4789
        %v4832 = vpack.c.b16 %v4792, %v4791
        %v4833 = vpack.c.b16 %v4794, %v4793
        %v4834 = vpack.c.b16 %v4796, %v4795
        %v4835 = vpack.c.b16 %v4798, %v4797
        %v4836 = vpack.c.b16 %v4800, %v4799
        %vm4873 = vcmask 523264
        %v4875 = vsel %vm4873, %v4653, 0
        %4877 = vmatpush.bf16.msra.mxu0 %v4808
        %4878 = vmatpush.bf16.msra.mxu0 %v4807
        %4879 = vmatpush.bf16.msra.mxu0 %v4806
        %4880 = vmatpush.bf16.msra.mxu0 %v4805
        %4881 = vmatpush.bf16.msra.mxu0 %v4804
        %4882 = vmatpush.bf16.msra.mxu0 %v4803
        %4883 = vmatpush.bf16.msra.mxu0 %v4802
        %4884 = vmatpush.bf16.msra.mxu0 %v4801
        %4885 = vmatmul.bf16.gmra.mxu0 %v4649
        %v4886 = vpop.f32.mrf.mxu0
        %v4887 = vadd.f32 %v4655, %v4886
        %v4888 = vpop.f32.mrf.mxu0
        %4889 = vdwg.mxu0
        %4890 = vmatpush.bf16.msra.mxu0 %v4816
        %4891 = vmatpush.bf16.msra.mxu0 %v4815
        %4892 = vmatpush.bf16.msra.mxu0 %v4814
        %4893 = vmatpush.bf16.msra.mxu0 %v4813
        %4894 = vmatpush.bf16.msra.mxu0 %v4812
        %4895 = vmatpush.bf16.msra.mxu0 %v4811
        %4896 = vmatpush.bf16.msra.mxu0 %v4810
        %4897 = vmatpush.bf16.msra.mxu0 %v4809
        %4898 = vmatmul.bf16.gmra.mxu0 %v4650
        %v4899 = vpop.f32.mrf.mxu0
        %v4900 = vadd.f32 %v4887, %v4899
        %v4901 = vpop.f32.mrf.mxu0
        %4902 = vdwg.mxu0
        %4903 = vmatpush.bf16.msra.mxu0 %v4824
        %4904 = vmatpush.bf16.msra.mxu0 %v4823
        %4905 = vmatpush.bf16.msra.mxu0 %v4822
        %4906 = vmatpush.bf16.msra.mxu0 %v4821
        %4907 = vmatpush.bf16.msra.mxu0 %v4820
        %4908 = vmatpush.bf16.msra.mxu0 %v4819
        %4909 = vmatpush.bf16.msra.mxu0 %v4818
        %4910 = vmatpush.bf16.msra.mxu0 %v4817
        %4911 = vmatmul.bf16.gmra.mxu0 %v4651
        %v4912 = vpop.f32.mrf.mxu0
        %v4913 = vadd.f32 %v4900, %v4912
        %v4914 = vpop.f32.mrf.mxu0
        %4915 = vdwg.mxu0
        %4916 = vmatpush.bf16.msra.mxu0 %v4832
        %4917 = vmatpush.bf16.msra.mxu0 %v4831
        %4918 = vmatpush.bf16.msra.mxu0 %v4830
        %4919 = vmatpush.bf16.msra.mxu0 %v4829
        %4920 = vmatpush.bf16.msra.mxu0 %v4828
        %4921 = vmatpush.bf16.msra.mxu0 %v4827
        %4922 = vmatpush.bf16.msra.mxu0 %v4826
        %4923 = vmatpush.bf16.msra.mxu0 %v4825
        %4924 = vmatmul.bf16.gmra.mxu0 %v4652
        %v4925 = vpop.f32.mrf.mxu0
        %v4926 = vadd.f32 %v4913, %v4925
        %v4927 = vpop.f32.mrf.mxu0
        %4928 = vdwg.mxu0
        %4929 = vmatpush.bf16.msra.mxu0 0
        %4930 = vmatpush.bf16.msra.mxu0 0
        %4931 = vmatpush.bf16.msra.mxu0 0
        %4932 = vmatpush.bf16.msra.mxu0 0
        %4933 = vmatpush.bf16.msra.mxu0 %v4836
        %4934 = vmatpush.bf16.msra.mxu0 %v4835
        %4935 = vmatpush.bf16.msra.mxu0 %v4834
        %4936 = vmatpush.bf16.msra.mxu0 %v4833
        %4937 = vmatmul.bf16.gmra.mxu0 %v4875
        %v4938 = vpop.f32.mrf.mxu0
        %v4939 = vadd.f32 %v4926, %v4938
        %v4940 = vpop.f32.mrf.mxu0
        %4941 = vdwg.mxu0
        %v4942 = vmax.f32 %v4939, 0.0
        %4943 = vst.msk [vmem:[#allocation7] sm:$0x3] %vm2284, %v4942
        %s4944 = scalar_lea.vmem [#allocation6], 10
        %v4945 = vld [vmem:[%s4944] sm:$0xff]
        %v4946 = vld [vmem:[%s4944 + $0x8] sm:$0x3]
        %4949 = vst [vmem:[#allocation1] ss:$4 sm:$0xff] %v4945
        %s4950 = scalar_lea.vmem [#allocation1], 32
        %4951 = vst [vmem:[%s4950] ss:$4 sm:$0xff] %v4946
        %v4952 = vld.sshfl [vmem:[#allocation1] sm:$0xff pattern:$0x73625140]
        %v4953 = vld.sshfl [vmem:[#allocation1 + $0x8] sm:$0xff pattern:$0x73625140]
        %v4954 = vld.sshfl [vmem:[#allocation1 + $0x10] sm:$0xff pattern:$0x73625140]
        %v4955 = vld.sshfl [vmem:[#allocation1 + $0x18] sm:$0xff pattern:$0x73625140]
        %v4956 = vld.sshfl [vmem:[#allocation1 + $0x20] sm:$0xff pattern:$0x73625140]
        %v4962 = vpack.c.bf16 %v4952, %v4952
        %v4963 = vpack.c.bf16 %v4953, %v4953
        %v4964 = vpack.c.bf16 %v4954, %v4954
        %v4965 = vpack.c.bf16 %v4955, %v4955
        %v4966 = vpack.c.bf16 %v4956, %v4956
        %v4968 = vsel %vm4873, %v4966, 0
        %4970 = vmatpush.bf16.msra.mxu0 %v4808
        %4971 = vmatpush.bf16.msra.mxu0 %v4807
        %4972 = vmatpush.bf16.msra.mxu0 %v4806
        %4973 = vmatpush.bf16.msra.mxu0 %v4805
        %4974 = vmatpush.bf16.msra.mxu0 %v4804
        %4975 = vmatpush.bf16.msra.mxu0 %v4803
        %4976 = vmatpush.bf16.msra.mxu0 %v4802
        %4977 = vmatpush.bf16.msra.mxu0 %v4801
        %4978 = vmatmul.bf16.gmra.mxu0 %v4962
        %v4979 = vpop.f32.mrf.mxu0
        %v4980 = vadd.f32 %v4655, %v4979
        %v4981 = vpop.f32.mrf.mxu0
        %4982 = vdwg.mxu0
        %4983 = vmatpush.bf16.msra.mxu0 %v4816
        %4984 = vmatpush.bf16.msra.mxu0 %v4815
        %4985 = vmatpush.bf16.msra.mxu0 %v4814
        %4986 = vmatpush.bf16.msra.mxu0 %v4813
        %4987 = vmatpush.bf16.msra.mxu0 %v4812
        %4988 = vmatpush.bf16.msra.mxu0 %v4811
        %4989 = vmatpush.bf16.msra.mxu0 %v4810
        %4990 = vmatpush.bf16.msra.mxu0 %v4809
        %4991 = vmatmul.bf16.gmra.mxu0 %v4963
        %v4992 = vpop.f32.mrf.mxu0
        %v4993 = vadd.f32 %v4980, %v4992
        %v4994 = vpop.f32.mrf.mxu0
        %4995 = vdwg.mxu0
        %4996 = vmatpush.bf16.msra.mxu0 %v4824
        %4997 = vmatpush.bf16.msra.mxu0 %v4823
        %4998 = vmatpush.bf16.msra.mxu0 %v4822
        %4999 = vmatpush.bf16.msra.mxu0 %v4821
        %5000 = vmatpush.bf16.msra.mxu0 %v4820
        %5001 = vmatpush.bf16.msra.mxu0 %v4819
        %5002 = vmatpush.bf16.msra.mxu0 %v4818
        %5003 = vmatpush.bf16.msra.mxu0 %v4817
        %5004 = vmatmul.bf16.gmra.mxu0 %v4964
        %v5005 = vpop.f32.mrf.mxu0
        %v5006 = vadd.f32 %v4993, %v5005
        %v5007 = vpop.f32.mrf.mxu0
        %5008 = vdwg.mxu0
        %5009 = vmatpush.bf16.msra.mxu0 %v4832
        %5010 = vmatpush.bf16.msra.mxu0 %v4831
        %5011 = vmatpush.bf16.msra.mxu0 %v4830
        %5012 = vmatpush.bf16.msra.mxu0 %v4829
        %5013 = vmatpush.bf16.msra.mxu0 %v4828
        %5014 = vmatpush.bf16.msra.mxu0 %v4827
        %5015 = vmatpush.bf16.msra.mxu0 %v4826
        %5016 = vmatpush.bf16.msra.mxu0 %v4825
        %5017 = vmatmul.bf16.gmra.mxu0 %v4965
        %v5018 = vpop.f32.mrf.mxu0
        %v5019 = vadd.f32 %v5006, %v5018
        %v5020 = vpop.f32.mrf.mxu0
        %5021 = vdwg.mxu0
        %5022 = vmatpush.bf16.msra.mxu0 0
        %5023 = vmatpush.bf16.msra.mxu0 0
        %5024 = vmatpush.bf16.msra.mxu0 0
        %5025 = vmatpush.bf16.msra.mxu0 0
        %5026 = vmatpush.bf16.msra.mxu0 %v4836
        %5027 = vmatpush.bf16.msra.mxu0 %v4835
        %5028 = vmatpush.bf16.msra.mxu0 %v4834
        %5029 = vmatpush.bf16.msra.mxu0 %v4833
        %5030 = vmatmul.bf16.gmra.mxu0 %v4968
        %v5031 = vpop.f32.mrf.mxu0
        %v5032 = vadd.f32 %v5019, %v5031
        %v5033 = vpop.f32.mrf.mxu0
        %5034 = vdwg.mxu0
        %v5035 = vmax.f32 %v5032, 0.0
        %s5036 = scalar_lea.vmem [#allocation7], 2
        %5037 = vst.msk [vmem:[%s5036] sm:$0x3] %vm2284, %v5035
        %v5038 = vld [vmem:[%s8] sm:$0x1]
        %v5039 = vld [vmem:[#allocation7] sm:$0x1]
        %v5040 = vpack.c.bf16 %v5039, %v5039
        %v5041 = vld [vmem:[%s7] sm:$0xf]
        %v5042 = vld [vmem:[%s7 + $0x4] sm:$0xf]
        %v5043 = vld [vmem:[%s7 + $0x8] sm:$0xf]
        %v5044 = vld [vmem:[%s7 + $0xc] sm:$0xf]
        %v5049 = vunpack.c.l.b16 %v5041
        %v5050 = vunpack.c.l.b16 %v5042
        %v5051 = vunpack.c.l.b16 %v5043
        %v5052 = vunpack.c.l.b16 %v5044
        %v5053 = vpack.c.b16 %v5050, %v5049
        %v5054 = vpack.c.b16 %v5052, %v5051
        %v5058 = vsel %vm2282, %v5040, 0
        %5060 = vmatpush.bf16.msra.mxu0 0
        %5061 = vmatpush.bf16.msra.mxu0 0
        %5062 = vmatpush.bf16.msra.mxu0 0
        %5063 = vmatpush.bf16.msra.mxu0 0
        %5064 = vmatpush.bf16.msra.mxu0 0
        %5065 = vmatpush.bf16.msra.mxu0 0
        %5066 = vmatpush.bf16.msra.mxu0 %v5054
        %5067 = vmatpush.bf16.msra.mxu0 %v5053
        %5068 = vmatmul.bf16.gmra.mxu0 %v5058
        %v5069 = vpop.f32.mrf.mxu0
        %v5070 = vadd.f32 0.0, %v5069
        %v5071 = vpop.f32.mrf.mxu0
        %5072 = vdwg.mxu0
        %v5073 = vadd.f32 %v5038, %v5070
        %v5074 = vld [vmem:[#allocation7 + $0x1] sm:$0x1]
        %v5075 = vpack.c.bf16 %v5074, %v5074
        %s5076 = scalar_lea.vmem %s7, 16
        %v5077 = vld [vmem:[%s5076] sm:$0xf]
        %v5078 = vld [vmem:[%s5076 + $0x4] sm:$0xf]
        %v5079 = vld [vmem:[%s5076 + $0x8] sm:$0xf]
        %v5080 = vld [vmem:[%s5076 + $0xc] sm:$0xf]
        %v5085 = vunpack.c.l.b16 %v5077
        %v5086 = vunpack.c.l.b16 %v5078
        %v5087 = vunpack.c.l.b16 %v5079
        %v5088 = vunpack.c.l.b16 %v5080
        %v5089 = vpack.c.b16 %v5086, %v5085
        %v5090 = vpack.c.b16 %v5088, %v5087
        %v5094 = vsel %vm2282, %v5075, 0
        %5096 = vmatpush.bf16.msra.mxu0 0
        %5097 = vmatpush.bf16.msra.mxu0 0
        %5098 = vmatpush.bf16.msra.mxu0 0
        %5099 = vmatpush.bf16.msra.mxu0 0
        %5100 = vmatpush.bf16.msra.mxu0 0
        %5101 = vmatpush.bf16.msra.mxu0 0
        %5102 = vmatpush.bf16.msra.mxu0 %v5090
        %5103 = vmatpush.bf16.msra.mxu0 %v5089
        %5104 = vmatmul.bf16.gmra.mxu0 %v5094
        %v5105 = vpop.f32.mrf.mxu0
        %v5106 = vadd.f32 0.0, %v5105
        %v5107 = vpop.f32.mrf.mxu0
        %5108 = vdwg.mxu0
        %v5109 = vadd.f32 %v5073, %v5106
        %v5110 = vld [vmem:[%s5036] sm:$0x1]
        %v5111 = vpack.c.bf16 %v5110, %v5110
        %s5112 = scalar_lea.vmem %s7, 32
        %v5113 = vld [vmem:[%s5112] sm:$0xf]
        %v5114 = vld [vmem:[%s5112 + $0x4] sm:$0xf]
        %v5115 = vld [vmem:[%s5112 + $0x8] sm:$0xf]
        %v5116 = vld [vmem:[%s5112 + $0xc] sm:$0xf]
        %v5121 = vunpack.c.l.b16 %v5113
        %v5122 = vunpack.c.l.b16 %v5114
        %v5123 = vunpack.c.l.b16 %v5115
        %v5124 = vunpack.c.l.b16 %v5116
        %v5125 = vpack.c.b16 %v5122, %v5121
        %v5126 = vpack.c.b16 %v5124, %v5123
        %v5130 = vsel %vm2282, %v5111, 0
        %5132 = vmatpush.bf16.msra.mxu0 0
        %5133 = vmatpush.bf16.msra.mxu0 0
        %5134 = vmatpush.bf16.msra.mxu0 0
        %5135 = vmatpush.bf16.msra.mxu0 0
        %5136 = vmatpush.bf16.msra.mxu0 0
        %5137 = vmatpush.bf16.msra.mxu0 0
        %5138 = vmatpush.bf16.msra.mxu0 %v5126
        %5139 = vmatpush.bf16.msra.mxu0 %v5125
        %5140 = vmatmul.bf16.gmra.mxu0 %v5130
        %v5141 = vpop.f32.mrf.mxu0
        %v5142 = vadd.f32 0.0, %v5141
        %v5143 = vpop.f32.mrf.mxu0
        %5144 = vdwg.mxu0
        %v5145 = vadd.f32 %v5109, %v5142
        %v5146 = vld [vmem:[%s5036 + $0x1] sm:$0x1]
        %v5147 = vpack.c.bf16 %v5146, %v5146
        %s5148 = scalar_lea.vmem %s7, 48
        %v5149 = vld [vmem:[%s5148] sm:$0xf]
        %v5150 = vld [vmem:[%s5148 + $0x4] sm:$0xf]
        %v5151 = vld [vmem:[%s5148 + $0x8] sm:$0xf]
        %v5152 = vld [vmem:[%s5148 + $0xc] sm:$0xf]
        %v5157 = vunpack.c.l.b16 %v5149
        %v5158 = vunpack.c.l.b16 %v5150
        %v5159 = vunpack.c.l.b16 %v5151
        %v5160 = vunpack.c.l.b16 %v5152
        %v5161 = vpack.c.b16 %v5158, %v5157
        %v5162 = vpack.c.b16 %v5160, %v5159
        %v5166 = vsel %vm2282, %v5147, 0
        %5168 = vmatpush.bf16.msra.mxu0 0
        %5169 = vmatpush.bf16.msra.mxu0 0
        %5170 = vmatpush.bf16.msra.mxu0 0
        %5171 = vmatpush.bf16.msra.mxu0 0
        %5172 = vmatpush.bf16.msra.mxu0 0
        %5173 = vmatpush.bf16.msra.mxu0 0
        %5174 = vmatpush.bf16.msra.mxu0 %v5162
        %5175 = vmatpush.bf16.msra.mxu0 %v5161
        %5176 = vmatmul.bf16.gmra.mxu0 %v5166
        %v5177 = vpop.f32.mrf.mxu0
        %v5178 = vadd.f32 0.0, %v5177
        %v5179 = vpop.f32.mrf.mxu0
        %5180 = vdwg.mxu0
        %v5181 = vadd.f32 %v5145, %v5178
        %v5182 = vmax.f32 %v5181, 0.0
        %5183 = vst.msk [vmem:[%s324] sm:$0x1] %vm2647, %v5182
        %s5184 = sand.u32 %s225, 1
        %s5185 = scalar_lea.sflag [#allocation9], %s5184
        %s5186 = sand.u32 %s225, 1
        %s5187 = scalar_lea.vmem [#allocation8], %s5186
        // Predicated region
        $region57: #{deepmind_enc_forward.1} parent=55 // pred_check
          %p5188 = pneg %p235
        $region58: #{deepmind_enc_forward.1} parent=55 // pred_check_branch
          %5190 = sbr.rel (%p5188) target = $region60
        $region59: #{deepmind_enc_forward.1} parent=55 // pred_region
          %5192 = vsyncadd %s5185, 0
          %s5193 = scalar_lea.hbm %s9, %s23
          %s5195 = sshll.u32 %s5187, 4
          %s5196 = int_to_ptr.vmem [resolvable:$true] %s5195
          %s5197 = sshll.u32 %s5193, 4
          %s5198 = int_to_ptr.hbm [resolvable:$true] %s5197
          %5200 = dma.vmem_to_hbm [thread:$0]  %s5196, 16, %s5198, %s5185
        $region60: #{deepmind_enc_forward.1} parent=55 // pred_fallthru
          _
      $region56: #{deepmind_enc_forward.1} parent=5 // pred_fallthru
        _
      %p5201 = scmp.le.s32.totalorder 2, %s18
      // Predicated region
      $region61: #{deepmind_enc_forward.1} parent=5 // pred_check
        %p5202 = pneg %p5201
      $region62: #{deepmind_enc_forward.1} parent=5 // pred_check_branch
        %5204 = sbr.rel (%p5202) target = $region64
      $region63: #{deepmind_enc_forward.1} parent=5 // pred_region
        %s5205 = ssub.s32 %s18, 2
        // Predicated region
        $region65: #{deepmind_enc_forward.1} parent=63 // pred_check
          %p5206 = pneg %p241
        $region66: #{deepmind_enc_forward.1} parent=63 // pred_check_branch
          %5208 = sbr.rel (%p5206) target = $region68
        $region67: #{deepmind_enc_forward.1} parent=63 // pred_region
          %s5209 = sand.u32 %s226, 1
          %s5210 = scalar_lea.sflag [#allocation9], %s5209
          %s5211 = sand.u32 %s226, 1
          %s5212 = scalar_lea.vmem [#allocation8], %s5211
          %5214 = dma.done %s5210, 16
        $region68: #{deepmind_enc_forward.1} parent=63 // pred_fallthru
          _
      $region64: #{deepmind_enc_forward.1} parent=5 // pred_fallthru
        _
    $region6: #{deepmind_enc_forward.1} parent=1 // loop_footer
      %s22 = sadd.s32 1, %s18
    $region7: #{deepmind_enc_forward.1} parent=1 // loop_footer_branch
      %17 = sbr.rel target = $region3
    $region8: #{deepmind_enc_forward.1} parent=1 // loop_exit
      _
    %5215 = vsyncpa [#allocation9], 1
    %s5216 = scalar_lea.sflag [#allocation9], 1
    %5217 = vsyncpa %s5216, 1

</llo_original>
